<compile_context>
chip_gen: v6e
topology: v6e:2x2x1
jax: 0.10.0
libtpu: 0.0.40
codegen_flags: <defaults>
</compile_context>

<pallas_src>
import functools
import math

import jax
import jax.numpy as jnp
import numpy as np
from jax import lax
from jax.experimental import pallas as pl
from jax.experimental.pallas import tpu as pltpu


# ----------------------------- Pallas kernel --------------------------------
def rits_kernel(
    # per-batch-chunk sequences (T, BC, D)
    values_ref, masks_ref,
    # packed per-feature vectors: rows = [diag(W_x), b_x, b_hist, b_feat, b_comb]
    dvec_ref,
    # temp_decay_h
    w_h_ref, b_h_ref,
    # hist_reg, feat_reg (off-diagonal masked)
    w_hist_ref, w_feat_ref,
    # weight_combine split into its two (D, D) halves (gamma_x part, m part)
    w_comb_g_ref, w_comb_m_ref,
    # LSTM projections split (c_c part, m part, h part) + fused bias, dense gates
    w_gx_ref, w_gm_ref, w_gh_ref, b_gates_ref,
    # outputs
    imp_ref, loss_ref,
):
    T, BC, D = values_ref.shape
    H = w_h_ref.shape[1]
    G = 4 * H                       # dense gate width: [i | f | g | o], H lanes each

    # ---- load weights once; hoist every broadcast out of the time loop ----
    dv = dvec_ref[...]                                        # (8, D)
    w_x_diag = jnp.broadcast_to(dv[0:1, :], (BC, D))
    b_x      = jnp.broadcast_to(dv[1:2, :], (BC, D))
    b_hist   = jnp.broadcast_to(dv[2:3, :], (BC, D))
    b_feat   = jnp.broadcast_to(dv[3:4, :], (BC, D))
    b_comb   = jnp.broadcast_to(dv[4:5, :], (BC, D))

    w_h      = w_h_ref[...]                                   # (D, H)
    b_h      = jnp.broadcast_to(b_h_ref[...], (BC, H))        # (BC, H)
    w_hist   = w_hist_ref[...]                                 # (H, D)
    w_feat   = w_feat_ref[...]                                 # (D, D)
    w_comb_g = w_comb_g_ref[...]                               # (D, D)
    w_comb_m = w_comb_m_ref[...]                               # (D, D)
    w_gx     = w_gx_ref[...]                                   # (D, G)
    w_gm     = w_gm_ref[...]                                   # (D, G)
    w_gh     = w_gh_ref[...]                                   # (H, G)
    b_gates  = jnp.broadcast_to(b_gates_ref[...], (BC, G))     # (BC, G)

    # lane mask selecting the tanh ('g') block inside the dense [i|f|g|o] packing
    lane = lax.broadcasted_iota(jnp.int32, (BC, G), 1)
    is_g = jnp.logical_and(lane >= 2 * H, lane < 3 * H)

    def step(t, carry):
        h, c, delta, loss_a = carry

        x = values_ref[t]           # (BC, D)
        m = masks_ref[t]            # (BC, D)  (aug='none': mixed_masks == masks)

        # parse_delta: delta_0 = 1 (carry starts at 0), delta_t = 1 + (1-m_t)*delta_{t-1}
        delta = 1.0 + (1.0 - m) * delta

        # gamma_h = exp(-relu(d @ W_h^T + b_h)) ; gamma_x = exp(-relu(d*diag(W_x)+b_x))
        gamma_h = jnp.exp(-jnp.maximum(
            jnp.dot(delta, w_h, preferred_element_type=jnp.float32) + b_h, 0.0))
        gamma_x = jnp.exp(-jnp.maximum(delta * w_x_diag + b_x, 0.0))

        h = h * gamma_h
        x_h = jnp.dot(h, w_hist, preferred_element_type=jnp.float32) + b_hist

        x_c = m * x + (1.0 - m) * x_h
        z_h = jnp.dot(x_c, w_feat, preferred_element_type=jnp.float32) + b_feat

        # alpha = Linear([gamma_x, m])  -- concat split into two dots
        alpha = (jnp.dot(gamma_x, w_comb_g, preferred_element_type=jnp.float32)
                 + jnp.dot(m, w_comb_m, preferred_element_type=jnp.float32)
                 + b_comb)
        c_h = alpha * z_h + (1.0 - alpha) * x_h

        # identical loss weights for all three terms -> sum errors first.
        # (the x_loss_b term is identically zero under aug='none' and is dropped)
        err = jnp.abs(x - x_h) + jnp.abs(x - z_h) + jnp.abs(x - c_h)
        loss_a = loss_a + jnp.sum(err * m, axis=1, keepdims=True)

        # LSTM cell: dense [i|f|g|o] gates, concat split into three dots
        c_c = m * x + (1.0 - m) * c_h
        gates = (jnp.dot(c_c, w_gx, preferred_element_type=jnp.float32)
                 + jnp.dot(m, w_gm, preferred_element_type=jnp.float32)
                 + jnp.dot(h, w_gh, preferred_element_type=jnp.float32)
                 + b_gates)                                   # (BC, 4H)
        # one sigmoid pass + one tanh pass over the packed vreg, lane-select 'g'
        act = jnp.where(is_g, jnp.tanh(gates), jax.nn.sigmoid(gates))
        i_g = act[:, 0:H]
        f_g = act[:, H:2 * H]
        g_g = act[:, 2 * H:3 * H]
        o_g = act[:, 3 * H:4 * H]
        c_new = f_g * c + i_g * g_g
        h_new = o_g * jnp.tanh(c_new)

        # imputed uses the original masks (== m under aug='none')
        imp_ref[t] = m * x + (1.0 - m) * c_h

        return h_new, c_new, delta, loss_a

    init = (jnp.zeros((BC, H), jnp.float32),   # h
            jnp.zeros((BC, H), jnp.float32),   # c
            jnp.zeros((BC, D), jnp.float32),   # delta carry (so delta_0 == 1)
            jnp.zeros((BC, 1), jnp.float32))   # x_loss_a

    unroll = True if T <= 8 else 8             # bounded unroll for long sequences
    _, _, _, loss_a = lax.fori_loop(0, T, step, init, unroll=unroll)
    loss_ref[...] = loss_a


# ------------------------------ wrapper --------------------------------------
@functools.partial(jax.jit, static_argnames=())
def rits_forward(values, masks, params):
    """values, masks: (B, T, D) float32. aug='none' -> mixed_masks = masks."""
    B, T, D = values.shape
    H = params["W_h"].shape[0]
    f32 = jnp.float32

    # time-major for the kernel (leading dim = time -> cheap dynamic indexing)
    values_t = jnp.transpose(values, (1, 0, 2))
    masks_t = jnp.transpose(masks, (1, 0, 2))

    eye = jnp.eye(D, dtype=f32)

    # pack the five (D,) vectors into one operand
    dvecs = jnp.zeros((8, D), f32)
    dvecs = dvecs.at[0].set(jnp.diag(params["W_x"]))
    dvecs = dvecs.at[1].set(params["b_x"])
    dvecs = dvecs.at[2].set(params["b_hist"])
    dvecs = dvecs.at[3].set(params["b_feat"])
    dvecs = dvecs.at[4].set(params["b_comb"])

    w_h = params["W_h"].T                                   # (D, H)
    b_h = params["b_h"].reshape(1, H)
    w_hist = params["W_hist"].T                             # (H, D)
    w_feat = (params["W_feat"] * (1.0 - eye)).T             # (D, D)
    w_comb_g = params["W_comb"][:, :D].T                    # (D, D)  gamma_x half
    w_comb_m = params["W_comb"][:, D:].T                    # (D, D)  m half
    # dense gate packing [i|f|g|o] (native PyTorch LSTMCell row order), split LHS
    w_gx = params["W_ih"][:, :D].T                          # (D, 4H)  c_c half
    w_gm = params["W_ih"][:, D:].T                          # (D, 4H)  m half
    w_gh = params["W_hh"].T                                 # (H, 4H)
    b_gates = (params["b_ih"] + params["b_hh"]).reshape(1, 4 * H)

    # batch-chunked grid (independent chunks -> "parallel" semantics / megacore)
    BC = 8 if (B % 8 == 0) else B
    n_blocks = B // BC

    seq_spec = pl.BlockSpec((T, BC, D), lambda b: (0, b, 0))

    def full(shape):
        return pl.BlockSpec(shape, lambda b, _n=len(shape): (0,) * _n)

    imp_t, loss_a = pl.pallas_call(
        rits_kernel,
        out_shape=(
            jax.ShapeDtypeStruct((T, B, D), f32),
            jax.ShapeDtypeStruct((B, 1), f32),
        ),
        grid=(n_blocks,),
        in_specs=[
            seq_spec, seq_spec,
            full((8, D)),
            full((D, H)), full((1, H)),
            full((H, D)), full((D, D)),
            full((D, D)), full((D, D)),
            full((D, 4 * H)), full((D, 4 * H)), full((H, 4 * H)),
            full((1, 4 * H)),
        ],
        out_specs=(
            seq_spec,
            pl.BlockSpec((BC, 1), lambda b: (b, 0)),
        ),
        compiler_params=pltpu.CompilerParams(
            dimension_semantics=("parallel",),
            vmem_limit_bytes=48 * 1024 * 1024,   # fits v7x 64 MiB; raises v5e 16 MiB default
        ),
    )(values_t, masks_t, dvecs, w_h, b_h, w_hist, w_feat,
      w_comb_g, w_comb_m, w_gx, w_gm, w_gh, b_gates)

    loss_a = loss_a[:, 0]

    # aug='none' => mixed == masks, so sum_m == sum_masks and the x_loss_b term
    # (err * (masks - mixed)) is exactly zero and omitted.
    sum_m = jnp.sum(masks, axis=(1, 2))
    x_loss = loss_a / (sum_m + 1e-5) / (sum_m + 1e-5) * sum_m
    x_loss = jnp.mean(x_loss)

    # The source applies torch.cat(imputations, dim=1) twice; the second cat on a
    # (B,T,D) tensor yields (T, B*D) — replicated literally here.
    imputations = imp_t.reshape(T, B * D)

    return {"loss": x_loss, "imputations": imputations,
            "values": values, "masks": masks}


# --------------------------- pure-JAX reference -------------------------------
def rits_reference(values, masks, params):
    B, T, D = values.shape
    H = params["W_h"].shape[0]
    mixed = masks
    eye = jnp.eye(D, dtype=jnp.float32)

    deltas = [jnp.ones((B, D), jnp.float32)]
    for t in range(1, T):
        deltas.append(1.0 + (1.0 - mixed[:, t]) * deltas[-1])

    h = jnp.zeros((B, H), jnp.float32)
    c = jnp.zeros((B, H), jnp.float32)
    loss_a = jnp.zeros((B,), jnp.float32)
    loss_b = jnp.zeros((B,), jnp.float32)
    imps = []
    for t in range(T):
        x = values[:, t]
        m = mixed[:, t]
        mk = masks[:, t]
        d = deltas[t]
        gamma_h = jnp.exp(-jax.nn.relu(d @ params["W_h"].T + params["b_h"]))
        gamma_x = jnp.exp(-jax.nn.relu(d @ (params["W_x"] * eye).T + params["b_x"]))
        h = h * gamma_h
        x_h = h @ params["W_hist"].T + params["b_hist"]
        loss_a += jnp.sum(jnp.abs(x - x_h) * m, axis=1)
        loss_b += jnp.sum(jnp.abs(x - x_h) * (mk - m), axis=1)
        x_c = m * x + (1.0 - m) * x_h
        z_h = x_c @ (params["W_feat"] * (1.0 - eye)).T + params["b_feat"]
        loss_a += jnp.sum(jnp.abs(x - z_h) * m, axis=1)
        loss_b += jnp.sum(jnp.abs(x - z_h) * (mk - m), axis=1)
        alpha = jnp.concatenate([gamma_x, m], axis=1) @ params["W_comb"].T + params["b_comb"]
        c_h = alpha * z_h + (1.0 - alpha) * x_h
        loss_a += jnp.sum(jnp.abs(x - c_h) * m, axis=1)
        loss_b += jnp.sum(jnp.abs(x - c_h) * (mk - m), axis=1)
        c_c = m * x + (1.0 - m) * c_h
        inp = jnp.concatenate([c_c, m], axis=1)
        gates = inp @ params["W_ih"].T + params["b_ih"] + h @ params["W_hh"].T + params["b_hh"]
        i_g = jax.nn.sigmoid(gates[:, 0:H])
        f_g = jax.nn.sigmoid(gates[:, H:2 * H])
        g_g = jnp.tanh(gates[:, 2 * H:3 * H])
        o_g = jax.nn.sigmoid(gates[:, 3 * H:4 * H])
        c = f_g * c + i_g * g_g
        h = o_g * jnp.tanh(c)
        imps.append(mk * x + (1.0 - mk) * c_h)

    imputations = jnp.stack(imps, axis=1)                      # (B, T, D)
    sum_m = jnp.sum(mixed, axis=(1, 2))
    sum_mk = jnp.sum(masks, axis=(1, 2))
    sum_df = jnp.sum(masks - mixed, axis=(1, 2))
    x_loss = loss_a / (sum_m + 1e-5) / (sum_mk + 1e-5) * sum_m
    x_loss = x_loss + loss_b / (sum_df + 1e-5) / (sum_mk + 1e-5) * sum_df
    x_loss = jnp.mean(x_loss)
    imputations2 = jnp.transpose(imputations, (1, 0, 2)).reshape(T, B * D)
    return x_loss, imputations2


# ------------------------------ param init ------------------------------------
def init_params(key, D, H):
    ks = jax.random.split(key, 12)
    u = lambda k, shape, s: jax.random.uniform(k, shape, jnp.float32, -s, s)
    return {
        "W_h": u(ks[0], (H, D), 1.0 / math.sqrt(H)),
        "b_h": u(ks[1], (H,), 1.0 / math.sqrt(H)),
        "W_x": u(ks[2], (D, D), 1.0 / math.sqrt(D)),
        "b_x": u(ks[3], (D,), 1.0 / math.sqrt(D)),
        "W_hist": u(ks[4], (D, H), 1.0 / math.sqrt(H)),
        "b_hist": u(ks[5], (D,), 1.0 / math.sqrt(H)),
        "W_feat": u(ks[6], (D, D), 1.0 / math.sqrt(D)),
        "b_feat": u(ks[7], (D,), 1.0 / math.sqrt(D)),
        "W_comb": u(ks[8], (D, 2 * D), 1.0 / math.sqrt(2 * D)),
        "b_comb": u(ks[9], (D,), 1.0 / math.sqrt(2 * D)),
        "W_ih": u(ks[10], (4 * H, 2 * D), 1.0 / math.sqrt(H)),
        "W_hh": u(ks[11], (4 * H, H), 1.0 / math.sqrt(H)),
        "b_ih": jnp.full((4 * H,), 0.01, jnp.float32),
        "b_hh": jnp.full((4 * H,), -0.01, jnp.float32),
    }


if __name__ == "__main__":
    B, T, D, H = 8, 8, 16, 32
    key = jax.random.PRNGKey(0)
    k_p, k_v, k_m = jax.random.split(key, 3)

    params = init_params(k_p, D, H)
    values = jax.random.normal(k_v, (B, T, D), jnp.float32)
    masks = (jax.random.uniform(k_m, (B, T, D)) > 0.2).astype(jnp.float32)

    out = rits_forward(values, masks, params)
    jax.block_until_ready(out)

    ref_loss, ref_imp = rits_reference(values, masks, params)
    np.testing.assert_allclose(np.asarray(out["loss"]), np.asarray(ref_loss),
                               rtol=2e-4, atol=2e-4)
    np.testing.assert_allclose(np.asarray(out["imputations"]), np.asarray(ref_imp),
                               rtol=2e-4, atol=2e-4)

    print("KERNEL_OK")
</pallas_src>

<mosaic_0001>
module attributes {stable_mosaic.version = 11 : i64} {
  func.func @rits_kernel(%arg0: i32, %arg1: memref<8x8x16xf32, #tpu.memory_space<vmem>>, %arg2: memref<8x8x16xf32, #tpu.memory_space<vmem>>, %arg3: memref<8x16xf32, #tpu.memory_space<vmem>>, %arg4: memref<16x32xf32, #tpu.memory_space<vmem>>, %arg5: memref<1x32xf32, #tpu.memory_space<vmem>>, %arg6: memref<32x16xf32, #tpu.memory_space<vmem>>, %arg7: memref<16x16xf32, #tpu.memory_space<vmem>>, %arg8: memref<16x16xf32, #tpu.memory_space<vmem>>, %arg9: memref<16x16xf32, #tpu.memory_space<vmem>>, %arg10: memref<16x128xf32, #tpu.memory_space<vmem>>, %arg11: memref<16x128xf32, #tpu.memory_space<vmem>>, %arg12: memref<32x128xf32, #tpu.memory_space<vmem>>, %arg13: memref<1x128xf32, #tpu.memory_space<vmem>>, %arg14: memref<8x8x16xf32, #tpu.memory_space<vmem>>, %arg15: memref<8x1xf32, #tpu.memory_space<vmem>>) attributes {dimension_semantics = [#tpu.dimension_semantics<parallel>], iteration_bounds = array<i64: 1>, scalar_prefetch = 0 : i64, scratch_operands = 0 : i64, tpu.core_type = #tpu.core_type<tc>, window_params = [{transform_indices = @transform_0, window_bounds = array<i64: 8, 8, 16>}, {transform_indices = @transform_1, window_bounds = array<i64: 8, 8, 16>}, {pipeline_mode = #tpu.pipeline_mode<synchronous>, transform_indices = @transform_2, window_bounds = array<i64: 8, 16>}, {pipeline_mode = #tpu.pipeline_mode<synchronous>, transform_indices = @transform_3, window_bounds = array<i64: 16, 32>}, {pipeline_mode = #tpu.pipeline_mode<synchronous>, transform_indices = @transform_4, window_bounds = array<i64: 1, 32>}, {pipeline_mode = #tpu.pipeline_mode<synchronous>, transform_indices = @transform_5, window_bounds = array<i64: 32, 16>}, {pipeline_mode = #tpu.pipeline_mode<synchronous>, transform_indices = @transform_6, window_bounds = array<i64: 16, 16>}, {pipeline_mode = #tpu.pipeline_mode<synchronous>, transform_indices = @transform_7, window_bounds = array<i64: 16, 16>}, {pipeline_mode = #tpu.pipeline_mode<synchronous>, transform_indices = @transform_8, window_bounds = array<i64: 16, 16>}, {pipeline_mode = #tpu.pipeline_mode<synchronous>, transform_indices = @transform_9, window_bounds = array<i64: 16, 128>}, {pipeline_mode = #tpu.pipeline_mode<synchronous>, transform_indices = @transform_10, window_bounds = array<i64: 16, 128>}, {pipeline_mode = #tpu.pipeline_mode<synchronous>, transform_indices = @transform_11, window_bounds = array<i64: 32, 128>}, {pipeline_mode = #tpu.pipeline_mode<synchronous>, transform_indices = @transform_12, window_bounds = array<i64: 1, 128>}, {transform_indices = @transform_13, window_bounds = array<i64: 8, 8, 16>}, {transform_indices = @transform_14, window_bounds = array<i64: 8, 1>}]} {
    %c0 = arith.constant 0 : index
    %c0_0 = arith.constant 0 : index
    %0 = vector.load %arg3[%c0, %c0_0] : memref<8x16xf32, #tpu.memory_space<vmem>>, vector<8x16xf32>
    %1 = vector.extract_strided_slice %0 {offsets = [0, 0], sizes = [1, 16], strides = [1, 1]} : vector<8x16xf32> to vector<1x16xf32>
    %2 = vector.shape_cast %1 : vector<1x16xf32> to vector<1x16xf32>
    %3 = vector.broadcast %2 : vector<1x16xf32> to vector<8x16xf32>
    %4 = vector.extract_strided_slice %0 {offsets = [1, 0], sizes = [1, 16], strides = [1, 1]} : vector<8x16xf32> to vector<1x16xf32>
    %5 = vector.shape_cast %4 : vector<1x16xf32> to vector<1x16xf32>
    %6 = vector.broadcast %5 : vector<1x16xf32> to vector<8x16xf32>
    %7 = vector.extract_strided_slice %0 {offsets = [2, 0], sizes = [1, 16], strides = [1, 1]} : vector<8x16xf32> to vector<1x16xf32>
    %8 = vector.shape_cast %7 : vector<1x16xf32> to vector<1x16xf32>
    %9 = vector.broadcast %8 : vector<1x16xf32> to vector<8x16xf32>
    %10 = vector.extract_strided_slice %0 {offsets = [3, 0], sizes = [1, 16], strides = [1, 1]} : vector<8x16xf32> to vector<1x16xf32>
    %11 = vector.shape_cast %10 : vector<1x16xf32> to vector<1x16xf32>
    %12 = vector.broadcast %11 : vector<1x16xf32> to vector<8x16xf32>
    %13 = vector.extract_strided_slice %0 {offsets = [4, 0], sizes = [1, 16], strides = [1, 1]} : vector<8x16xf32> to vector<1x16xf32>
    %14 = vector.shape_cast %13 : vector<1x16xf32> to vector<1x16xf32>
    %15 = vector.broadcast %14 : vector<1x16xf32> to vector<8x16xf32>
    %c0_1 = arith.constant 0 : index
    %c0_2 = arith.constant 0 : index
    %16 = vector.load %arg4[%c0_1, %c0_2] : memref<16x32xf32, #tpu.memory_space<vmem>>, vector<16x32xf32>
    %c0_3 = arith.constant 0 : index
    %c0_4 = arith.constant 0 : index
    %17 = vector.load %arg5[%c0_3, %c0_4] : memref<1x32xf32, #tpu.memory_space<vmem>>, vector<1x32xf32>
    %18 = vector.shape_cast %17 : vector<1x32xf32> to vector<1x32xf32>
    %19 = vector.broadcast %18 : vector<1x32xf32> to vector<8x32xf32>
    %c0_5 = arith.constant 0 : index
    %c0_6 = arith.constant 0 : index
    %20 = vector.load %arg6[%c0_5, %c0_6] : memref<32x16xf32, #tpu.memory_space<vmem>>, vector<32x16xf32>
    %c0_7 = arith.constant 0 : index
    %c0_8 = arith.constant 0 : index
    %21 = vector.load %arg7[%c0_7, %c0_8] : memref<16x16xf32, #tpu.memory_space<vmem>>, vector<16x16xf32>
    %c0_9 = arith.constant 0 : index
    %c0_10 = arith.constant 0 : index
    %22 = vector.load %arg8[%c0_9, %c0_10] : memref<16x16xf32, #tpu.memory_space<vmem>>, vector<16x16xf32>
    %c0_11 = arith.constant 0 : index
    %c0_12 = arith.constant 0 : index
    %23 = vector.load %arg9[%c0_11, %c0_12] : memref<16x16xf32, #tpu.memory_space<vmem>>, vector<16x16xf32>
    %c0_13 = arith.constant 0 : index
    %c0_14 = arith.constant 0 : index
    %24 = vector.load %arg10[%c0_13, %c0_14] : memref<16x128xf32, #tpu.memory_space<vmem>>, vector<16x128xf32>
    %c0_15 = arith.constant 0 : index
    %c0_16 = arith.constant 0 : index
    %25 = vector.load %arg11[%c0_15, %c0_16] : memref<16x128xf32, #tpu.memory_space<vmem>>, vector<16x128xf32>
    %c0_17 = arith.constant 0 : index
    %c0_18 = arith.constant 0 : index
    %26 = vector.load %arg12[%c0_17, %c0_18] : memref<32x128xf32, #tpu.memory_space<vmem>>, vector<32x128xf32>
    %c0_19 = arith.constant 0 : index
    %c0_20 = arith.constant 0 : index
    %27 = vector.load %arg13[%c0_19, %c0_20] : memref<1x128xf32, #tpu.memory_space<vmem>>, vector<1x128xf32>
    %28 = vector.shape_cast %27 : vector<1x128xf32> to vector<1x128xf32>
    %29 = vector.broadcast %28 : vector<1x128xf32> to vector<8x128xf32>
    %30 = tpu.iota {dimensions = array<i32: 1>} : vector<8x128xi32>
    %c64_i32 = arith.constant 64 : i32
    %31 = vector.broadcast %c64_i32 : i32 to vector<8x128xi32>
    %32 = arith.cmpi sge, %30, %31 : vector<8x128xi32>
    %c96_i32 = arith.constant 96 : i32
    %33 = vector.broadcast %c96_i32 : i32 to vector<8x128xi32>
    %34 = arith.cmpi slt, %30, %33 : vector<8x128xi32>
    %35 = arith.andi %32, %34 : vector<8x128xi1>
    %cst = arith.constant 0.000000e+00 : f32
    %36 = vector.broadcast %cst : f32 to vector<8x32xf32>
    %cst_21 = arith.constant 0.000000e+00 : f32
    %37 = vector.broadcast %cst_21 : f32 to vector<8x32xf32>
    %cst_22 = arith.constant 0.000000e+00 : f32
    %38 = vector.broadcast %cst_22 : f32 to vector<8x16xf32>
    %cst_23 = arith.constant 0.000000e+00 : f32
    %39 = vector.broadcast %cst_23 : f32 to vector<8x1xf32>
    %c0_i32 = arith.constant 0 : i32
    %40 = arith.index_cast %c0_i32 : i32 to index
    %c0_24 = arith.constant 0 : index
    %c0_25 = arith.constant 0 : index
    %41 = vector.load %arg1[%40, %c0_24, %c0_25] : memref<8x8x16xf32, #tpu.memory_space<vmem>>, vector<1x8x16xf32>
    %42 = vector.shape_cast %41 : vector<1x8x16xf32> to vector<8x16xf32>
    %43 = arith.index_cast %c0_i32 : i32 to index
    %c0_26 = arith.constant 0 : index
    %c0_27 = arith.constant 0 : index
    %44 = vector.load %arg2[%43, %c0_26, %c0_27] : memref<8x8x16xf32, #tpu.memory_space<vmem>>, vector<1x8x16xf32>
    %45 = vector.shape_cast %44 : vector<1x8x16xf32> to vector<8x16xf32>
    %cst_28 = arith.constant 1.000000e+00 : f32
    %46 = vector.broadcast %cst_28 : f32 to vector<8x16xf32>
    %47 = arith.subf %46, %45 : vector<8x16xf32>
    %48 = arith.mulf %47, %38 : vector<8x16xf32>
    %cst_29 = arith.constant 1.000000e+00 : f32
    %49 = vector.broadcast %cst_29 : f32 to vector<8x16xf32>
    %50 = arith.addf %49, %48 : vector<8x16xf32>
    %cst_30 = arith.constant dense<0.000000e+00> : vector<8x32xf32>
    %51 = tpu.matmul %50, %16, %cst_30 {dimension_numbers = #tpu.dot_dimension_numbers<[1], [0], [0], [1], [0, 0, 1, 1], [], []>} : vector<8x16xf32>, vector<16x32xf32>, vector<8x32xf32> -> vector<8x32xf32>
    %52 = arith.addf %51, %19 : vector<8x32xf32>
    %cst_31 = arith.constant 0.000000e+00 : f32
    %53 = vector.broadcast %cst_31 : f32 to vector<8x32xf32>
    %54 = arith.maximumf %52, %53 : vector<8x32xf32>
    %cst_32 = arith.constant 0.000000e+00 : f32
    %55 = vector.broadcast %cst_32 : f32 to vector<8x32xf32>
    %56 = arith.subf %55, %54 : vector<8x32xf32>
    %57 = math.exp %56 : vector<8x32xf32>
    %58 = arith.mulf %50, %3 : vector<8x16xf32>
    %59 = arith.addf %58, %6 : vector<8x16xf32>
    %cst_33 = arith.constant 0.000000e+00 : f32
    %60 = vector.broadcast %cst_33 : f32 to vector<8x16xf32>
    %61 = arith.maximumf %59, %60 : vector<8x16xf32>
    %cst_34 = arith.constant 0.000000e+00 : f32
    %62 = vector.broadcast %cst_34 : f32 to vector<8x16xf32>
    %63 = arith.subf %62, %61 : vector<8x16xf32>
    %64 = math.exp %63 : vector<8x16xf32>
    %65 = arith.mulf %36, %57 : vector<8x32xf32>
    %cst_35 = arith.constant dense<0.000000e+00> : vector<8x16xf32>
    %66 = tpu.matmul %65, %20, %cst_35 {dimension_numbers = #tpu.dot_dimension_numbers<[1], [0], [0], [1], [0, 0, 1, 1], [], []>} : vector<8x32xf32>, vector<32x16xf32>, vector<8x16xf32> -> vector<8x16xf32>
    %67 = arith.addf %66, %9 : vector<8x16xf32>
    %68 = arith.mulf %45, %42 : vector<8x16xf32>
    %cst_36 = arith.constant 1.000000e+00 : f32
    %69 = vector.broadcast %cst_36 : f32 to vector<8x16xf32>
    %70 = arith.subf %69, %45 : vector<8x16xf32>
    %71 = arith.mulf %70, %67 : vector<8x16xf32>
    %72 = arith.addf %68, %71 : vector<8x16xf32>
    %cst_37 = arith.constant dense<0.000000e+00> : vector<8x16xf32>
    %73 = tpu.matmul %72, %21, %cst_37 {dimension_numbers = #tpu.dot_dimension_numbers<[1], [0], [0], [1], [0, 0, 1, 1], [], []>} : vector<8x16xf32>, vector<16x16xf32>, vector<8x16xf32> -> vector<8x16xf32>
    %74 = arith.addf %73, %12 : vector<8x16xf32>
    %cst_38 = arith.constant dense<0.000000e+00> : vector<8x16xf32>
    %75 = tpu.matmul %64, %22, %cst_38 {dimension_numbers = #tpu.dot_dimension_numbers<[1], [0], [0], [1], [0, 0, 1, 1], [], []>} : vector<8x16xf32>, vector<16x16xf32>, vector<8x16xf32> -> vector<8x16xf32>
    %cst_39 = arith.constant dense<0.000000e+00> : vector<8x16xf32>
    %76 = tpu.matmul %45, %23, %cst_39 {dimension_numbers = #tpu.dot_dimension_numbers<[1], [0], [0], [1], [0, 0, 1, 1], [], []>} : vector<8x16xf32>, vector<16x16xf32>, vector<8x16xf32> -> vector<8x16xf32>
    %77 = arith.addf %75, %76 : vector<8x16xf32>
    %78 = arith.addf %77, %15 : vector<8x16xf32>
    %79 = arith.mulf %78, %74 : vector<8x16xf32>
    %cst_40 = arith.constant 1.000000e+00 : f32
    %80 = vector.broadcast %cst_40 : f32 to vector<8x16xf32>
    %81 = arith.subf %80, %78 : vector<8x16xf32>
    %82 = arith.mulf %81, %67 : vector<8x16xf32>
    %83 = arith.addf %79, %82 : vector<8x16xf32>
    %84 = arith.subf %42, %67 : vector<8x16xf32>
    %85 = math.absf %84 : vector<8x16xf32>
    %86 = arith.subf %42, %74 : vector<8x16xf32>
    %87 = math.absf %86 : vector<8x16xf32>
    %88 = arith.addf %85, %87 : vector<8x16xf32>
    %89 = arith.subf %42, %83 : vector<8x16xf32>
    %90 = math.absf %89 : vector<8x16xf32>
    %91 = arith.addf %88, %90 : vector<8x16xf32>
    %92 = arith.mulf %91, %45 : vector<8x16xf32>
    %cst_41 = arith.constant dense<0.000000e+00> : vector<8xf32>
    %93 = vector.multi_reduction <add>, %92, %cst_41 [1] : vector<8x16xf32> to vector<8xf32>
    %94 = vector.shape_cast %93 : vector<8xf32> to vector<8x1xf32>
    %95 = arith.addf %39, %94 : vector<8x1xf32>
    %96 = arith.mulf %45, %42 : vector<8x16xf32>
    %cst_42 = arith.constant 1.000000e+00 : f32
    %97 = vector.broadcast %cst_42 : f32 to vector<8x16xf32>
    %98 = arith.subf %97, %45 : vector<8x16xf32>
    %99 = arith.mulf %98, %83 : vector<8x16xf32>
    %100 = arith.addf %96, %99 : vector<8x16xf32>
    %cst_43 = arith.constant dense<0.000000e+00> : vector<8x128xf32>
    %101 = tpu.matmul %100, %24, %cst_43 {dimension_numbers = #tpu.dot_dimension_numbers<[1], [0], [0], [1], [0, 0, 1, 1], [], []>} : vector<8x16xf32>, vector<16x128xf32>, vector<8x128xf32> -> vector<8x128xf32>
    %cst_44 = arith.constant dense<0.000000e+00> : vector<8x128xf32>
    %102 = tpu.matmul %45, %25, %cst_44 {dimension_numbers = #tpu.dot_dimension_numbers<[1], [0], [0], [1], [0, 0, 1, 1], [], []>} : vector<8x16xf32>, vector<16x128xf32>, vector<8x128xf32> -> vector<8x128xf32>
    %103 = arith.addf %101, %102 : vector<8x128xf32>
    %cst_45 = arith.constant dense<0.000000e+00> : vector<8x128xf32>
    %104 = tpu.matmul %65, %26, %cst_45 {dimension_numbers = #tpu.dot_dimension_numbers<[1], [0], [0], [1], [0, 0, 1, 1], [], []>} : vector<8x32xf32>, vector<32x128xf32>, vector<8x128xf32> -> vector<8x128xf32>
    %105 = arith.addf %103, %104 : vector<8x128xf32>
    %106 = arith.addf %105, %29 : vector<8x128xf32>
    %107 = math.tanh %106 : vector<8x128xf32>
    %108 = arith.negf %106 : vector<8x128xf32>
    %109 = math.exp %108 : vector<8x128xf32>
    %cst_46 = arith.constant 1.000000e+00 : f32
    %110 = vector.broadcast %cst_46 : f32 to vector<8x128xf32>
    %111 = arith.addf %110, %109 : vector<8x128xf32>
    %112 = arith.divf %110, %111 : vector<8x128xf32>
    %113 = arith.select %35, %107, %112 : vector<8x128xi1>, vector<8x128xf32>
    %114 = vector.extract_strided_slice %113 {offsets = [0, 0], sizes = [8, 32], strides = [1, 1]} : vector<8x128xf32> to vector<8x32xf32>
    %115 = vector.extract_strided_slice %113 {offsets = [0, 32], sizes = [8, 32], strides = [1, 1]} : vector<8x128xf32> to vector<8x32xf32>
    %116 = vector.extract_strided_slice %113 {offsets = [0, 64], sizes = [8, 32], strides = [1, 1]} : vector<8x128xf32> to vector<8x32xf32>
    %117 = vector.extract_strided_slice %113 {offsets = [0, 96], sizes = [8, 32], strides = [1, 1]} : vector<8x128xf32> to vector<8x32xf32>
    %118 = arith.mulf %115, %37 : vector<8x32xf32>
    %119 = arith.mulf %114, %116 : vector<8x32xf32>
    %120 = arith.addf %118, %119 : vector<8x32xf32>
    %121 = math.tanh %120 : vector<8x32xf32>
    %122 = arith.mulf %117, %121 : vector<8x32xf32>
    %123 = arith.mulf %45, %42 : vector<8x16xf32>
    %cst_47 = arith.constant 1.000000e+00 : f32
    %124 = vector.broadcast %cst_47 : f32 to vector<8x16xf32>
    %125 = arith.subf %124, %45 : vector<8x16xf32>
    %126 = arith.mulf %125, %83 : vector<8x16xf32>
    %127 = arith.addf %123, %126 : vector<8x16xf32>
    %128 = arith.index_cast %c0_i32 : i32 to index
    %c0_48 = arith.constant 0 : index
    %c0_49 = arith.constant 0 : index
    %129 = vector.load %arg14[%128, %c0_48, %c0_49] : memref<8x8x16xf32, #tpu.memory_space<vmem>>, vector<1x8x16xf32>
    %130 = vector.shape_cast %129 : vector<1x8x16xf32> to vector<8x16xf32>
    %131 = vector.shape_cast %127 : vector<8x16xf32> to vector<1x8x16xf32>
    tpu.vector_store %arg14[%128, %c0_48, %c0_49], %131 {strides = array<i32>} : memref<8x8x16xf32, #tpu.memory_space<vmem>>, vector<1x8x16xf32>,
    %c1_i32 = arith.constant 1 : i32
    %132 = arith.index_cast %c1_i32 : i32 to index
    %c0_50 = arith.constant 0 : index
    %c0_51 = arith.constant 0 : index
    %133 = vector.load %arg1[%132, %c0_50, %c0_51] : memref<8x8x16xf32, #tpu.memory_space<vmem>>, vector<1x8x16xf32>
    %134 = vector.shape_cast %133 : vector<1x8x16xf32> to vector<8x16xf32>
    %135 = arith.index_cast %c1_i32 : i32 to index
    %c0_52 = arith.constant 0 : index
    %c0_53 = arith.constant 0 : index
    %136 = vector.load %arg2[%135, %c0_52, %c0_53] : memref<8x8x16xf32, #tpu.memory_space<vmem>>, vector<1x8x16xf32>
    %137 = vector.shape_cast %136 : vector<1x8x16xf32> to vector<8x16xf32>
    %cst_54 = arith.constant 1.000000e+00 : f32
    %138 = vector.broadcast %cst_54 : f32 to vector<8x16xf32>
    %139 = arith.subf %138, %137 : vector<8x16xf32>
    %140 = arith.mulf %139, %50 : vector<8x16xf32>
    %cst_55 = arith.constant 1.000000e+00 : f32
    %141 = vector.broadcast %cst_55 : f32 to vector<8x16xf32>
    %142 = arith.addf %141, %140 : vector<8x16xf32>
    %cst_56 = arith.constant dense<0.000000e+00> : vector<8x32xf32>
    %143 = tpu.matmul %142, %16, %cst_56 {dimension_numbers = #tpu.dot_dimension_numbers<[1], [0], [0], [1], [0, 0, 1, 1], [], []>} : vector<8x16xf32>, vector<16x32xf32>, vector<8x32xf32> -> vector<8x32xf32>
    %144 = arith.addf %143, %19 : vector<8x32xf32>
    %cst_57 = arith.constant 0.000000e+00 : f32
    %145 = vector.broadcast %cst_57 : f32 to vector<8x32xf32>
    %146 = arith.maximumf %144, %145 : vector<8x32xf32>
    %cst_58 = arith.constant 0.000000e+00 : f32
    %147 = vector.broadcast %cst_58 : f32 to vector<8x32xf32>
    %148 = arith.subf %147, %146 : vector<8x32xf32>
    %149 = math.exp %148 : vector<8x32xf32>
    %150 = arith.mulf %142, %3 : vector<8x16xf32>
    %151 = arith.addf %150, %6 : vector<8x16xf32>
    %cst_59 = arith.constant 0.000000e+00 : f32
    %152 = vector.broadcast %cst_59 : f32 to vector<8x16xf32>
    %153 = arith.maximumf %151, %152 : vector<8x16xf32>
    %cst_60 = arith.constant 0.000000e+00 : f32
    %154 = vector.broadcast %cst_60 : f32 to vector<8x16xf32>
    %155 = arith.subf %154, %153 : vector<8x16xf32>
    %156 = math.exp %155 : vector<8x16xf32>
    %157 = arith.mulf %122, %149 : vector<8x32xf32>
    %cst_61 = arith.constant dense<0.000000e+00> : vector<8x16xf32>
    %158 = tpu.matmul %157, %20, %cst_61 {dimension_numbers = #tpu.dot_dimension_numbers<[1], [0], [0], [1], [0, 0, 1, 1], [], []>} : vector<8x32xf32>, vector<32x16xf32>, vector<8x16xf32> -> vector<8x16xf32>
    %159 = arith.addf %158, %9 : vector<8x16xf32>
    %160 = arith.mulf %137, %134 : vector<8x16xf32>
    %cst_62 = arith.constant 1.000000e+00 : f32
    %161 = vector.broadcast %cst_62 : f32 to vector<8x16xf32>
    %162 = arith.subf %161, %137 : vector<8x16xf32>
    %163 = arith.mulf %162, %159 : vector<8x16xf32>
    %164 = arith.addf %160, %163 : vector<8x16xf32>
    %cst_63 = arith.constant dense<0.000000e+00> : vector<8x16xf32>
    %165 = tpu.matmul %164, %21, %cst_63 {dimension_numbers = #tpu.dot_dimension_numbers<[1], [0], [0], [1], [0, 0, 1, 1], [], []>} : vector<8x16xf32>, vector<16x16xf32>, vector<8x16xf32> -> vector<8x16xf32>
    %166 = arith.addf %165, %12 : vector<8x16xf32>
    %cst_64 = arith.constant dense<0.000000e+00> : vector<8x16xf32>
    %167 = tpu.matmul %156, %22, %cst_64 {dimension_numbers = #tpu.dot_dimension_numbers<[1], [0], [0], [1], [0, 0, 1, 1], [], []>} : vector<8x16xf32>, vector<16x16xf32>, vector<8x16xf32> -> vector<8x16xf32>
    %cst_65 = arith.constant dense<0.000000e+00> : vector<8x16xf32>
    %168 = tpu.matmul %137, %23, %cst_65 {dimension_numbers = #tpu.dot_dimension_numbers<[1], [0], [0], [1], [0, 0, 1, 1], [], []>} : vector<8x16xf32>, vector<16x16xf32>, vector<8x16xf32> -> vector<8x16xf32>
    %169 = arith.addf %167, %168 : vector<8x16xf32>
    %170 = arith.addf %169, %15 : vector<8x16xf32>
    %171 = arith.mulf %170, %166 : vector<8x16xf32>
    %cst_66 = arith.constant 1.000000e+00 : f32
    %172 = vector.broadcast %cst_66 : f32 to vector<8x16xf32>
    %173 = arith.subf %172, %170 : vector<8x16xf32>
    %174 = arith.mulf %173, %159 : vector<8x16xf32>
    %175 = arith.addf %171, %174 : vector<8x16xf32>
    %176 = arith.subf %134, %159 : vector<8x16xf32>
    %177 = math.absf %176 : vector<8x16xf32>
    %178 = arith.subf %134, %166 : vector<8x16xf32>
    %179 = math.absf %178 : vector<8x16xf32>
    %180 = arith.addf %177, %179 : vector<8x16xf32>
    %181 = arith.subf %134, %175 : vector<8x16xf32>
    %182 = math.absf %181 : vector<8x16xf32>
    %183 = arith.addf %180, %182 : vector<8x16xf32>
    %184 = arith.mulf %183, %137 : vector<8x16xf32>
    %cst_67 = arith.constant dense<0.000000e+00> : vector<8xf32>
    %185 = vector.multi_reduction <add>, %184, %cst_67 [1] : vector<8x16xf32> to vector<8xf32>
    %186 = vector.shape_cast %185 : vector<8xf32> to vector<8x1xf32>
    %187 = arith.addf %95, %186 : vector<8x1xf32>
    %188 = arith.mulf %137, %134 : vector<8x16xf32>
    %cst_68 = arith.constant 1.000000e+00 : f32
    %189 = vector.broadcast %cst_68 : f32 to vector<8x16xf32>
    %190 = arith.subf %189, %137 : vector<8x16xf32>
    %191 = arith.mulf %190, %175 : vector<8x16xf32>
    %192 = arith.addf %188, %191 : vector<8x16xf32>
    %cst_69 = arith.constant dense<0.000000e+00> : vector<8x128xf32>
    %193 = tpu.matmul %192, %24, %cst_69 {dimension_numbers = #tpu.dot_dimension_numbers<[1], [0], [0], [1], [0, 0, 1, 1], [], []>} : vector<8x16xf32>, vector<16x128xf32>, vector<8x128xf32> -> vector<8x128xf32>
    %cst_70 = arith.constant dense<0.000000e+00> : vector<8x128xf32>
    %194 = tpu.matmul %137, %25, %cst_70 {dimension_numbers = #tpu.dot_dimension_numbers<[1], [0], [0], [1], [0, 0, 1, 1], [], []>} : vector<8x16xf32>, vector<16x128xf32>, vector<8x128xf32> -> vector<8x128xf32>
    %195 = arith.addf %193, %194 : vector<8x128xf32>
    %cst_71 = arith.constant dense<0.000000e+00> : vector<8x128xf32>
    %196 = tpu.matmul %157, %26, %cst_71 {dimension_numbers = #tpu.dot_dimension_numbers<[1], [0], [0], [1], [0, 0, 1, 1], [], []>} : vector<8x32xf32>, vector<32x128xf32>, vector<8x128xf32> -> vector<8x128xf32>
    %197 = arith.addf %195, %196 : vector<8x128xf32>
    %198 = arith.addf %197, %29 : vector<8x128xf32>
    %199 = math.tanh %198 : vector<8x128xf32>
    %200 = arith.negf %198 : vector<8x128xf32>
    %201 = math.exp %200 : vector<8x128xf32>
    %cst_72 = arith.constant 1.000000e+00 : f32
    %202 = vector.broadcast %cst_72 : f32 to vector<8x128xf32>
    %203 = arith.addf %202, %201 : vector<8x128xf32>
    %204 = arith.divf %202, %203 : vector<8x128xf32>
    %205 = arith.select %35, %199, %204 : vector<8x128xi1>, vector<8x128xf32>
    %206 = vector.extract_strided_slice %205 {offsets = [0, 0], sizes = [8, 32], strides = [1, 1]} : vector<8x128xf32> to vector<8x32xf32>
    %207 = vector.extract_strided_slice %205 {offsets = [0, 32], sizes = [8, 32], strides = [1, 1]} : vector<8x128xf32> to vector<8x32xf32>
    %208 = vector.extract_strided_slice %205 {offsets = [0, 64], sizes = [8, 32], strides = [1, 1]} : vector<8x128xf32> to vector<8x32xf32>
    %209 = vector.extract_strided_slice %205 {offsets = [0, 96], sizes = [8, 32], strides = [1, 1]} : vector<8x128xf32> to vector<8x32xf32>
    %210 = arith.mulf %207, %120 : vector<8x32xf32>
    %211 = arith.mulf %206, %208 : vector<8x32xf32>
    %212 = arith.addf %210, %211 : vector<8x32xf32>
    %213 = math.tanh %212 : vector<8x32xf32>
    %214 = arith.mulf %209, %213 : vector<8x32xf32>
    %215 = arith.mulf %137, %134 : vector<8x16xf32>
    %cst_73 = arith.constant 1.000000e+00 : f32
    %216 = vector.broadcast %cst_73 : f32 to vector<8x16xf32>
    %217 = arith.subf %216, %137 : vector<8x16xf32>
    %218 = arith.mulf %217, %175 : vector<8x16xf32>
    %219 = arith.addf %215, %218 : vector<8x16xf32>
    %220 = arith.index_cast %c1_i32 : i32 to index
    %c0_74 = arith.constant 0 : index
    %c0_75 = arith.constant 0 : index
    %221 = vector.load %arg14[%220, %c0_74, %c0_75] : memref<8x8x16xf32, #tpu.memory_space<vmem>>, vector<1x8x16xf32>
    %222 = vector.shape_cast %221 : vector<1x8x16xf32> to vector<8x16xf32>
    %223 = vector.shape_cast %219 : vector<8x16xf32> to vector<1x8x16xf32>
    tpu.vector_store %arg14[%220, %c0_74, %c0_75], %223 {strides = array<i32>} : memref<8x8x16xf32, #tpu.memory_space<vmem>>, vector<1x8x16xf32>,
    %c2_i32 = arith.constant 2 : i32
    %224 = arith.index_cast %c2_i32 : i32 to index
    %c0_76 = arith.constant 0 : index
    %c0_77 = arith.constant 0 : index
    %225 = vector.load %arg1[%224, %c0_76, %c0_77] : memref<8x8x16xf32, #tpu.memory_space<vmem>>, vector<1x8x16xf32>
    %226 = vector.shape_cast %225 : vector<1x8x16xf32> to vector<8x16xf32>
    %227 = arith.index_cast %c2_i32 : i32 to index
    %c0_78 = arith.constant 0 : index
    %c0_79 = arith.constant 0 : index
    %228 = vector.load %arg2[%227, %c0_78, %c0_79] : memref<8x8x16xf32, #tpu.memory_space<vmem>>, vector<1x8x16xf32>
    %229 = vector.shape_cast %228 : vector<1x8x16xf32> to vector<8x16xf32>
    %cst_80 = arith.constant 1.000000e+00 : f32
    %230 = vector.broadcast %cst_80 : f32 to vector<8x16xf32>
    %231 = arith.subf %230, %229 : vector<8x16xf32>
    %232 = arith.mulf %231, %142 : vector<8x16xf32>
    %cst_81 = arith.constant 1.000000e+00 : f32
    %233 = vector.broadcast %cst_81 : f32 to vector<8x16xf32>
    %234 = arith.addf %233, %232 : vector<8x16xf32>
    %cst_82 = arith.constant dense<0.000000e+00> : vector<8x32xf32>
    %235 = tpu.matmul %234, %16, %cst_82 {dimension_numbers = #tpu.dot_dimension_numbers<[1], [0], [0], [1], [0, 0, 1, 1], [], []>} : vector<8x16xf32>, vector<16x32xf32>, vector<8x32xf32> -> vector<8x32xf32>
    %236 = arith.addf %235, %19 : vector<8x32xf32>
    %cst_83 = arith.constant 0.000000e+00 : f32
    %237 = vector.broadcast %cst_83 : f32 to vector<8x32xf32>
    %238 = arith.maximumf %236, %237 : vector<8x32xf32>
    %cst_84 = arith.constant 0.000000e+00 : f32
    %239 = vector.broadcast %cst_84 : f32 to vector<8x32xf32>
    %240 = arith.subf %239, %238 : vector<8x32xf32>
    %241 = math.exp %240 : vector<8x32xf32>
    %242 = arith.mulf %234, %3 : vector<8x16xf32>
    %243 = arith.addf %242, %6 : vector<8x16xf32>
    %cst_85 = arith.constant 0.000000e+00 : f32
    %244 = vector.broadcast %cst_85 : f32 to vector<8x16xf32>
    %245 = arith.maximumf %243, %244 : vector<8x16xf32>
    %cst_86 = arith.constant 0.000000e+00 : f32
    %246 = vector.broadcast %cst_86 : f32 to vector<8x16xf32>
    %247 = arith.subf %246, %245 : vector<8x16xf32>
    %248 = math.exp %247 : vector<8x16xf32>
    %249 = arith.mulf %214, %241 : vector<8x32xf32>
    %cst_87 = arith.constant dense<0.000000e+00> : vector<8x16xf32>
    %250 = tpu.matmul %249, %20, %cst_87 {dimension_numbers = #tpu.dot_dimension_numbers<[1], [0], [0], [1], [0, 0, 1, 1], [], []>} : vector<8x32xf32>, vector<32x16xf32>, vector<8x16xf32> -> vector<8x16xf32>
    %251 = arith.addf %250, %9 : vector<8x16xf32>
    %252 = arith.mulf %229, %226 : vector<8x16xf32>
    %cst_88 = arith.constant 1.000000e+00 : f32
    %253 = vector.broadcast %cst_88 : f32 to vector<8x16xf32>
    %254 = arith.subf %253, %229 : vector<8x16xf32>
    %255 = arith.mulf %254, %251 : vector<8x16xf32>
    %256 = arith.addf %252, %255 : vector<8x16xf32>
    %cst_89 = arith.constant dense<0.000000e+00> : vector<8x16xf32>
    %257 = tpu.matmul %256, %21, %cst_89 {dimension_numbers = #tpu.dot_dimension_numbers<[1], [0], [0], [1], [0, 0, 1, 1], [], []>} : vector<8x16xf32>, vector<16x16xf32>, vector<8x16xf32> -> vector<8x16xf32>
    %258 = arith.addf %257, %12 : vector<8x16xf32>
    %cst_90 = arith.constant dense<0.000000e+00> : vector<8x16xf32>
    %259 = tpu.matmul %248, %22, %cst_90 {dimension_numbers = #tpu.dot_dimension_numbers<[1], [0], [0], [1], [0, 0, 1, 1], [], []>} : vector<8x16xf32>, vector<16x16xf32>, vector<8x16xf32> -> vector<8x16xf32>
    %cst_91 = arith.constant dense<0.000000e+00> : vector<8x16xf32>
    %260 = tpu.matmul %229, %23, %cst_91 {dimension_numbers = #tpu.dot_dimension_numbers<[1], [0], [0], [1], [0, 0, 1, 1], [], []>} : vector<8x16xf32>, vector<16x16xf32>, vector<8x16xf32> -> vector<8x16xf32>
    %261 = arith.addf %259, %260 : vector<8x16xf32>
    %262 = arith.addf %261, %15 : vector<8x16xf32>
    %263 = arith.mulf %262, %258 : vector<8x16xf32>
    %cst_92 = arith.constant 1.000000e+00 : f32
    %264 = vector.broadcast %cst_92 : f32 to vector<8x16xf32>
    %265 = arith.subf %264, %262 : vector<8x16xf32>
    %266 = arith.mulf %265, %251 : vector<8x16xf32>
    %267 = arith.addf %263, %266 : vector<8x16xf32>
    %268 = arith.subf %226, %251 : vector<8x16xf32>
    %269 = math.absf %268 : vector<8x16xf32>
    %270 = arith.subf %226, %258 : vector<8x16xf32>
    %271 = math.absf %270 : vector<8x16xf32>
    %272 = arith.addf %269, %271 : vector<8x16xf32>
    %273 = arith.subf %226, %267 : vector<8x16xf32>
    %274 = math.absf %273 : vector<8x16xf32>
    %275 = arith.addf %272, %274 : vector<8x16xf32>
    %276 = arith.mulf %275, %229 : vector<8x16xf32>
    %cst_93 = arith.constant dense<0.000000e+00> : vector<8xf32>
    %277 = vector.multi_reduction <add>, %276, %cst_93 [1] : vector<8x16xf32> to vector<8xf32>
    %278 = vector.shape_cast %277 : vector<8xf32> to vector<8x1xf32>
    %279 = arith.addf %187, %278 : vector<8x1xf32>
    %280 = arith.mulf %229, %226 : vector<8x16xf32>
    %cst_94 = arith.constant 1.000000e+00 : f32
    %281 = vector.broadcast %cst_94 : f32 to vector<8x16xf32>
    %282 = arith.subf %281, %229 : vector<8x16xf32>
    %283 = arith.mulf %282, %267 : vector<8x16xf32>
    %284 = arith.addf %280, %283 : vector<8x16xf32>
    %cst_95 = arith.constant dense<0.000000e+00> : vector<8x128xf32>
    %285 = tpu.matmul %284, %24, %cst_95 {dimension_numbers = #tpu.dot_dimension_numbers<[1], [0], [0], [1], [0, 0, 1, 1], [], []>} : vector<8x16xf32>, vector<16x128xf32>, vector<8x128xf32> -> vector<8x128xf32>
    %cst_96 = arith.constant dense<0.000000e+00> : vector<8x128xf32>
    %286 = tpu.matmul %229, %25, %cst_96 {dimension_numbers = #tpu.dot_dimension_numbers<[1], [0], [0], [1], [0, 0, 1, 1], [], []>} : vector<8x16xf32>, vector<16x128xf32>, vector<8x128xf32> -> vector<8x128xf32>
    %287 = arith.addf %285, %286 : vector<8x128xf32>
    %cst_97 = arith.constant dense<0.000000e+00> : vector<8x128xf32>
    %288 = tpu.matmul %249, %26, %cst_97 {dimension_numbers = #tpu.dot_dimension_numbers<[1], [0], [0], [1], [0, 0, 1, 1], [], []>} : vector<8x32xf32>, vector<32x128xf32>, vector<8x128xf32> -> vector<8x128xf32>
    %289 = arith.addf %287, %288 : vector<8x128xf32>
    %290 = arith.addf %289, %29 : vector<8x128xf32>
    %291 = math.tanh %290 : vector<8x128xf32>
    %292 = arith.negf %290 : vector<8x128xf32>
    %293 = math.exp %292 : vector<8x128xf32>
    %cst_98 = arith.constant 1.000000e+00 : f32
    %294 = vector.broadcast %cst_98 : f32 to vector<8x128xf32>
    %295 = arith.addf %294, %293 : vector<8x128xf32>
    %296 = arith.divf %294, %295 : vector<8x128xf32>
    %297 = arith.select %35, %291, %296 : vector<8x128xi1>, vector<8x128xf32>
    %298 = vector.extract_strided_slice %297 {offsets = [0, 0], sizes = [8, 32], strides = [1, 1]} : vector<8x128xf32> to vector<8x32xf32>
    %299 = vector.extract_strided_slice %297 {offsets = [0, 32], sizes = [8, 32], strides = [1, 1]} : vector<8x128xf32> to vector<8x32xf32>
    %300 = vector.extract_strided_slice %297 {offsets = [0, 64], sizes = [8, 32], strides = [1, 1]} : vector<8x128xf32> to vector<8x32xf32>
    %301 = vector.extract_strided_slice %297 {offsets = [0, 96], sizes = [8, 32], strides = [1, 1]} : vector<8x128xf32> to vector<8x32xf32>
    %302 = arith.mulf %299, %212 : vector<8x32xf32>
    %303 = arith.mulf %298, %300 : vector<8x32xf32>
    %304 = arith.addf %302, %303 : vector<8x32xf32>
    %305 = math.tanh %304 : vector<8x32xf32>
    %306 = arith.mulf %301, %305 : vector<8x32xf32>
    %307 = arith.mulf %229, %226 : vector<8x16xf32>
    %cst_99 = arith.constant 1.000000e+00 : f32
    %308 = vector.broadcast %cst_99 : f32 to vector<8x16xf32>
    %309 = arith.subf %308, %229 : vector<8x16xf32>
    %310 = arith.mulf %309, %267 : vector<8x16xf32>
    %311 = arith.addf %307, %310 : vector<8x16xf32>
    %312 = arith.index_cast %c2_i32 : i32 to index
    %c0_100 = arith.constant 0 : index
    %c0_101 = arith.constant 0 : index
    %313 = vector.load %arg14[%312, %c0_100, %c0_101] : memref<8x8x16xf32, #tpu.memory_space<vmem>>, vector<1x8x16xf32>
    %314 = vector.shape_cast %313 : vector<1x8x16xf32> to vector<8x16xf32>
    %315 = vector.shape_cast %311 : vector<8x16xf32> to vector<1x8x16xf32>
    tpu.vector_store %arg14[%312, %c0_100, %c0_101], %315 {strides = array<i32>} : memref<8x8x16xf32, #tpu.memory_space<vmem>>, vector<1x8x16xf32>,
    %c3_i32 = arith.constant 3 : i32
    %316 = arith.index_cast %c3_i32 : i32 to index
    %c0_102 = arith.constant 0 : index
    %c0_103 = arith.constant 0 : index
    %317 = vector.load %arg1[%316, %c0_102, %c0_103] : memref<8x8x16xf32, #tpu.memory_space<vmem>>, vector<1x8x16xf32>
    %318 = vector.shape_cast %317 : vector<1x8x16xf32> to vector<8x16xf32>
    %319 = arith.index_cast %c3_i32 : i32 to index
    %c0_104 = arith.constant 0 : index
    %c0_105 = arith.constant 0 : index
    %320 = vector.load %arg2[%319, %c0_104, %c0_105] : memref<8x8x16xf32, #tpu.memory_space<vmem>>, vector<1x8x16xf32>
    %321 = vector.shape_cast %320 : vector<1x8x16xf32> to vector<8x16xf32>
    %cst_106 = arith.constant 1.000000e+00 : f32
    %322 = vector.broadcast %cst_106 : f32 to vector<8x16xf32>
    %323 = arith.subf %322, %321 : vector<8x16xf32>
    %324 = arith.mulf %323, %234 : vector<8x16xf32>
    %cst_107 = arith.constant 1.000000e+00 : f32
    %325 = vector.broadcast %cst_107 : f32 to vector<8x16xf32>
    %326 = arith.addf %325, %324 : vector<8x16xf32>
    %cst_108 = arith.constant dense<0.000000e+00> : vector<8x32xf32>
    %327 = tpu.matmul %326, %16, %cst_108 {dimension_numbers = #tpu.dot_dimension_numbers<[1], [0], [0], [1], [0, 0, 1, 1], [], []>} : vector<8x16xf32>, vector<16x32xf32>, vector<8x32xf32> -> vector<8x32xf32>
    %328 = arith.addf %327, %19 : vector<8x32xf32>
    %cst_109 = arith.constant 0.000000e+00 : f32
    %329 = vector.broadcast %cst_109 : f32 to vector<8x32xf32>
    %330 = arith.maximumf %328, %329 : vector<8x32xf32>
    %cst_110 = arith.constant 0.000000e+00 : f32
    %331 = vector.broadcast %cst_110 : f32 to vector<8x32xf32>
    %332 = arith.subf %331, %330 : vector<8x32xf32>
    %333 = math.exp %332 : vector<8x32xf32>
    %334 = arith.mulf %326, %3 : vector<8x16xf32>
    %335 = arith.addf %334, %6 : vector<8x16xf32>
    %cst_111 = arith.constant 0.000000e+00 : f32
    %336 = vector.broadcast %cst_111 : f32 to vector<8x16xf32>
    %337 = arith.maximumf %335, %336 : vector<8x16xf32>
    %cst_112 = arith.constant 0.000000e+00 : f32
    %338 = vector.broadcast %cst_112 : f32 to vector<8x16xf32>
    %339 = arith.subf %338, %337 : vector<8x16xf32>
    %340 = math.exp %339 : vector<8x16xf32>
    %341 = arith.mulf %306, %333 : vector<8x32xf32>
    %cst_113 = arith.constant dense<0.000000e+00> : vector<8x16xf32>
    %342 = tpu.matmul %341, %20, %cst_113 {dimension_numbers = #tpu.dot_dimension_numbers<[1], [0], [0], [1], [0, 0, 1, 1], [], []>} : vector<8x32xf32>, vector<32x16xf32>, vector<8x16xf32> -> vector<8x16xf32>
    %343 = arith.addf %342, %9 : vector<8x16xf32>
    %344 = arith.mulf %321, %318 : vector<8x16xf32>
    %cst_114 = arith.constant 1.000000e+00 : f32
    %345 = vector.broadcast %cst_114 : f32 to vector<8x16xf32>
    %346 = arith.subf %345, %321 : vector<8x16xf32>
    %347 = arith.mulf %346, %343 : vector<8x16xf32>
    %348 = arith.addf %344, %347 : vector<8x16xf32>
    %cst_115 = arith.constant dense<0.000000e+00> : vector<8x16xf32>
    %349 = tpu.matmul %348, %21, %cst_115 {dimension_numbers = #tpu.dot_dimension_numbers<[1], [0], [0], [1], [0, 0, 1, 1], [], []>} : vector<8x16xf32>, vector<16x16xf32>, vector<8x16xf32> -> vector<8x16xf32>
    %350 = arith.addf %349, %12 : vector<8x16xf32>
    %cst_116 = arith.constant dense<0.000000e+00> : vector<8x16xf32>
    %351 = tpu.matmul %340, %22, %cst_116 {dimension_numbers = #tpu.dot_dimension_numbers<[1], [0], [0], [1], [0, 0, 1, 1], [], []>} : vector<8x16xf32>, vector<16x16xf32>, vector<8x16xf32> -> vector<8x16xf32>
    %cst_117 = arith.constant dense<0.000000e+00> : vector<8x16xf32>
    %352 = tpu.matmul %321, %23, %cst_117 {dimension_numbers = #tpu.dot_dimension_numbers<[1], [0], [0], [1], [0, 0, 1, 1], [], []>} : vector<8x16xf32>, vector<16x16xf32>, vector<8x16xf32> -> vector<8x16xf32>
    %353 = arith.addf %351, %352 : vector<8x16xf32>
    %354 = arith.addf %353, %15 : vector<8x16xf32>
    %355 = arith.mulf %354, %350 : vector<8x16xf32>
    %cst_118 = arith.constant 1.000000e+00 : f32
    %356 = vector.broadcast %cst_118 : f32 to vector<8x16xf32>
    %357 = arith.subf %356, %354 : vector<8x16xf32>
    %358 = arith.mulf %357, %343 : vector<8x16xf32>
    %359 = arith.addf %355, %358 : vector<8x16xf32>
    %360 = arith.subf %318, %343 : vector<8x16xf32>
    %361 = math.absf %360 : vector<8x16xf32>
    %362 = arith.subf %318, %350 : vector<8x16xf32>
    %363 = math.absf %362 : vector<8x16xf32>
    %364 = arith.addf %361, %363 : vector<8x16xf32>
    %365 = arith.subf %318, %359 : vector<8x16xf32>
    %366 = math.absf %365 : vector<8x16xf32>
    %367 = arith.addf %364, %366 : vector<8x16xf32>
    %368 = arith.mulf %367, %321 : vector<8x16xf32>
    %cst_119 = arith.constant dense<0.000000e+00> : vector<8xf32>
    %369 = vector.multi_reduction <add>, %368, %cst_119 [1] : vector<8x16xf32> to vector<8xf32>
    %370 = vector.shape_cast %369 : vector<8xf32> to vector<8x1xf32>
    %371 = arith.addf %279, %370 : vector<8x1xf32>
    %372 = arith.mulf %321, %318 : vector<8x16xf32>
    %cst_120 = arith.constant 1.000000e+00 : f32
    %373 = vector.broadcast %cst_120 : f32 to vector<8x16xf32>
    %374 = arith.subf %373, %321 : vector<8x16xf32>
    %375 = arith.mulf %374, %359 : vector<8x16xf32>
    %376 = arith.addf %372, %375 : vector<8x16xf32>
    %cst_121 = arith.constant dense<0.000000e+00> : vector<8x128xf32>
    %377 = tpu.matmul %376, %24, %cst_121 {dimension_numbers = #tpu.dot_dimension_numbers<[1], [0], [0], [1], [0, 0, 1, 1], [], []>} : vector<8x16xf32>, vector<16x128xf32>, vector<8x128xf32> -> vector<8x128xf32>
    %cst_122 = arith.constant dense<0.000000e+00> : vector<8x128xf32>
    %378 = tpu.matmul %321, %25, %cst_122 {dimension_numbers = #tpu.dot_dimension_numbers<[1], [0], [0], [1], [0, 0, 1, 1], [], []>} : vector<8x16xf32>, vector<16x128xf32>, vector<8x128xf32> -> vector<8x128xf32>
    %379 = arith.addf %377, %378 : vector<8x128xf32>
    %cst_123 = arith.constant dense<0.000000e+00> : vector<8x128xf32>
    %380 = tpu.matmul %341, %26, %cst_123 {dimension_numbers = #tpu.dot_dimension_numbers<[1], [0], [0], [1], [0, 0, 1, 1], [], []>} : vector<8x32xf32>, vector<32x128xf32>, vector<8x128xf32> -> vector<8x128xf32>
    %381 = arith.addf %379, %380 : vector<8x128xf32>
    %382 = arith.addf %381, %29 : vector<8x128xf32>
    %383 = math.tanh %382 : vector<8x128xf32>
    %384 = arith.negf %382 : vector<8x128xf32>
    %385 = math.exp %384 : vector<8x128xf32>
    %cst_124 = arith.constant 1.000000e+00 : f32
    %386 = vector.broadcast %cst_124 : f32 to vector<8x128xf32>
    %387 = arith.addf %386, %385 : vector<8x128xf32>
    %388 = arith.divf %386, %387 : vector<8x128xf32>
    %389 = arith.select %35, %383, %388 : vector<8x128xi1>, vector<8x128xf32>
    %390 = vector.extract_strided_slice %389 {offsets = [0, 0], sizes = [8, 32], strides = [1, 1]} : vector<8x128xf32> to vector<8x32xf32>
    %391 = vector.extract_strided_slice %389 {offsets = [0, 32], sizes = [8, 32], strides = [1, 1]} : vector<8x128xf32> to vector<8x32xf32>
    %392 = vector.extract_strided_slice %389 {offsets = [0, 64], sizes = [8, 32], strides = [1, 1]} : vector<8x128xf32> to vector<8x32xf32>
    %393 = vector.extract_strided_slice %389 {offsets = [0, 96], sizes = [8, 32], strides = [1, 1]} : vector<8x128xf32> to vector<8x32xf32>
    %394 = arith.mulf %391, %304 : vector<8x32xf32>
    %395 = arith.mulf %390, %392 : vector<8x32xf32>
    %396 = arith.addf %394, %395 : vector<8x32xf32>
    %397 = math.tanh %396 : vector<8x32xf32>
    %398 = arith.mulf %393, %397 : vector<8x32xf32>
    %399 = arith.mulf %321, %318 : vector<8x16xf32>
    %cst_125 = arith.constant 1.000000e+00 : f32
    %400 = vector.broadcast %cst_125 : f32 to vector<8x16xf32>
    %401 = arith.subf %400, %321 : vector<8x16xf32>
    %402 = arith.mulf %401, %359 : vector<8x16xf32>
    %403 = arith.addf %399, %402 : vector<8x16xf32>
    %404 = arith.index_cast %c3_i32 : i32 to index
    %c0_126 = arith.constant 0 : index
    %c0_127 = arith.constant 0 : index
    %405 = vector.load %arg14[%404, %c0_126, %c0_127] : memref<8x8x16xf32, #tpu.memory_space<vmem>>, vector<1x8x16xf32>
    %406 = vector.shape_cast %405 : vector<1x8x16xf32> to vector<8x16xf32>
    %407 = vector.shape_cast %403 : vector<8x16xf32> to vector<1x8x16xf32>
    tpu.vector_store %arg14[%404, %c0_126, %c0_127], %407 {strides = array<i32>} : memref<8x8x16xf32, #tpu.memory_space<vmem>>, vector<1x8x16xf32>,
    %c4_i32 = arith.constant 4 : i32
    %408 = arith.index_cast %c4_i32 : i32 to index
    %c0_128 = arith.constant 0 : index
    %c0_129 = arith.constant 0 : index
    %409 = vector.load %arg1[%408, %c0_128, %c0_129] : memref<8x8x16xf32, #tpu.memory_space<vmem>>, vector<1x8x16xf32>
    %410 = vector.shape_cast %409 : vector<1x8x16xf32> to vector<8x16xf32>
    %411 = arith.index_cast %c4_i32 : i32 to index
    %c0_130 = arith.constant 0 : index
    %c0_131 = arith.constant 0 : index
    %412 = vector.load %arg2[%411, %c0_130, %c0_131] : memref<8x8x16xf32, #tpu.memory_space<vmem>>, vector<1x8x16xf32>
    %413 = vector.shape_cast %412 : vector<1x8x16xf32> to vector<8x16xf32>
    %cst_132 = arith.constant 1.000000e+00 : f32
    %414 = vector.broadcast %cst_132 : f32 to vector<8x16xf32>
    %415 = arith.subf %414, %413 : vector<8x16xf32>
    %416 = arith.mulf %415, %326 : vector<8x16xf32>
    %cst_133 = arith.constant 1.000000e+00 : f32
    %417 = vector.broadcast %cst_133 : f32 to vector<8x16xf32>
    %418 = arith.addf %417, %416 : vector<8x16xf32>
    %cst_134 = arith.constant dense<0.000000e+00> : vector<8x32xf32>
    %419 = tpu.matmul %418, %16, %cst_134 {dimension_numbers = #tpu.dot_dimension_numbers<[1], [0], [0], [1], [0, 0, 1, 1], [], []>} : vector<8x16xf32>, vector<16x32xf32>, vector<8x32xf32> -> vector<8x32xf32>
    %420 = arith.addf %419, %19 : vector<8x32xf32>
    %cst_135 = arith.constant 0.000000e+00 : f32
    %421 = vector.broadcast %cst_135 : f32 to vector<8x32xf32>
    %422 = arith.maximumf %420, %421 : vector<8x32xf32>
    %cst_136 = arith.constant 0.000000e+00 : f32
    %423 = vector.broadcast %cst_136 : f32 to vector<8x32xf32>
    %424 = arith.subf %423, %422 : vector<8x32xf32>
    %425 = math.exp %424 : vector<8x32xf32>
    %426 = arith.mulf %418, %3 : vector<8x16xf32>
    %427 = arith.addf %426, %6 : vector<8x16xf32>
    %cst_137 = arith.constant 0.000000e+00 : f32
    %428 = vector.broadcast %cst_137 : f32 to vector<8x16xf32>
    %429 = arith.maximumf %427, %428 : vector<8x16xf32>
    %cst_138 = arith.constant 0.000000e+00 : f32
    %430 = vector.broadcast %cst_138 : f32 to vector<8x16xf32>
    %431 = arith.subf %430, %429 : vector<8x16xf32>
    %432 = math.exp %431 : vector<8x16xf32>
    %433 = arith.mulf %398, %425 : vector<8x32xf32>
    %cst_139 = arith.constant dense<0.000000e+00> : vector<8x16xf32>
    %434 = tpu.matmul %433, %20, %cst_139 {dimension_numbers = #tpu.dot_dimension_numbers<[1], [0], [0], [1], [0, 0, 1, 1], [], []>} : vector<8x32xf32>, vector<32x16xf32>, vector<8x16xf32> -> vector<8x16xf32>
    %435 = arith.addf %434, %9 : vector<8x16xf32>
    %436 = arith.mulf %413, %410 : vector<8x16xf32>
    %cst_140 = arith.constant 1.000000e+00 : f32
    %437 = vector.broadcast %cst_140 : f32 to vector<8x16xf32>
    %438 = arith.subf %437, %413 : vector<8x16xf32>
    %439 = arith.mulf %438, %435 : vector<8x16xf32>
    %440 = arith.addf %436, %439 : vector<8x16xf32>
    %cst_141 = arith.constant dense<0.000000e+00> : vector<8x16xf32>
    %441 = tpu.matmul %440, %21, %cst_141 {dimension_numbers = #tpu.dot_dimension_numbers<[1], [0], [0], [1], [0, 0, 1, 1], [], []>} : vector<8x16xf32>, vector<16x16xf32>, vector<8x16xf32> -> vector<8x16xf32>
    %442 = arith.addf %441, %12 : vector<8x16xf32>
    %cst_142 = arith.constant dense<0.000000e+00> : vector<8x16xf32>
    %443 = tpu.matmul %432, %22, %cst_142 {dimension_numbers = #tpu.dot_dimension_numbers<[1], [0], [0], [1], [0, 0, 1, 1], [], []>} : vector<8x16xf32>, vector<16x16xf32>, vector<8x16xf32> -> vector<8x16xf32>
    %cst_143 = arith.constant dense<0.000000e+00> : vector<8x16xf32>
    %444 = tpu.matmul %413, %23, %cst_143 {dimension_numbers = #tpu.dot_dimension_numbers<[1], [0], [0], [1], [0, 0, 1, 1], [], []>} : vector<8x16xf32>, vector<16x16xf32>, vector<8x16xf32> -> vector<8x16xf32>
    %445 = arith.addf %443, %444 : vector<8x16xf32>
    %446 = arith.addf %445, %15 : vector<8x16xf32>
    %447 = arith.mulf %446, %442 : vector<8x16xf32>
    %cst_144 = arith.constant 1.000000e+00 : f32
    %448 = vector.broadcast %cst_144 : f32 to vector<8x16xf32>
    %449 = arith.subf %448, %446 : vector<8x16xf32>
    %450 = arith.mulf %449, %435 : vector<8x16xf32>
    %451 = arith.addf %447, %450 : vector<8x16xf32>
    %452 = arith.subf %410, %435 : vector<8x16xf32>
    %453 = math.absf %452 : vector<8x16xf32>
    %454 = arith.subf %410, %442 : vector<8x16xf32>
    %455 = math.absf %454 : vector<8x16xf32>
    %456 = arith.addf %453, %455 : vector<8x16xf32>
    %457 = arith.subf %410, %451 : vector<8x16xf32>
    %458 = math.absf %457 : vector<8x16xf32>
    %459 = arith.addf %456, %458 : vector<8x16xf32>
    %460 = arith.mulf %459, %413 : vector<8x16xf32>
    %cst_145 = arith.constant dense<0.000000e+00> : vector<8xf32>
    %461 = vector.multi_reduction <add>, %460, %cst_145 [1] : vector<8x16xf32> to vector<8xf32>
    %462 = vector.shape_cast %461 : vector<8xf32> to vector<8x1xf32>
    %463 = arith.addf %371, %462 : vector<8x1xf32>
    %464 = arith.mulf %413, %410 : vector<8x16xf32>
    %cst_146 = arith.constant 1.000000e+00 : f32
    %465 = vector.broadcast %cst_146 : f32 to vector<8x16xf32>
    %466 = arith.subf %465, %413 : vector<8x16xf32>
    %467 = arith.mulf %466, %451 : vector<8x16xf32>
    %468 = arith.addf %464, %467 : vector<8x16xf32>
    %cst_147 = arith.constant dense<0.000000e+00> : vector<8x128xf32>
    %469 = tpu.matmul %468, %24, %cst_147 {dimension_numbers = #tpu.dot_dimension_numbers<[1], [0], [0], [1], [0, 0, 1, 1], [], []>} : vector<8x16xf32>, vector<16x128xf32>, vector<8x128xf32> -> vector<8x128xf32>
    %cst_148 = arith.constant dense<0.000000e+00> : vector<8x128xf32>
    %470 = tpu.matmul %413, %25, %cst_148 {dimension_numbers = #tpu.dot_dimension_numbers<[1], [0], [0], [1], [0, 0, 1, 1], [], []>} : vector<8x16xf32>, vector<16x128xf32>, vector<8x128xf32> -> vector<8x128xf32>
    %471 = arith.addf %469, %470 : vector<8x128xf32>
    %cst_149 = arith.constant dense<0.000000e+00> : vector<8x128xf32>
    %472 = tpu.matmul %433, %26, %cst_149 {dimension_numbers = #tpu.dot_dimension_numbers<[1], [0], [0], [1], [0, 0, 1, 1], [], []>} : vector<8x32xf32>, vector<32x128xf32>, vector<8x128xf32> -> vector<8x128xf32>
    %473 = arith.addf %471, %472 : vector<8x128xf32>
    %474 = arith.addf %473, %29 : vector<8x128xf32>
    %475 = math.tanh %474 : vector<8x128xf32>
    %476 = arith.negf %474 : vector<8x128xf32>
    %477 = math.exp %476 : vector<8x128xf32>
    %cst_150 = arith.constant 1.000000e+00 : f32
    %478 = vector.broadcast %cst_150 : f32 to vector<8x128xf32>
    %479 = arith.addf %478, %477 : vector<8x128xf32>
    %480 = arith.divf %478, %479 : vector<8x128xf32>
    %481 = arith.select %35, %475, %480 : vector<8x128xi1>, vector<8x128xf32>
    %482 = vector.extract_strided_slice %481 {offsets = [0, 0], sizes = [8, 32], strides = [1, 1]} : vector<8x128xf32> to vector<8x32xf32>
    %483 = vector.extract_strided_slice %481 {offsets = [0, 32], sizes = [8, 32], strides = [1, 1]} : vector<8x128xf32> to vector<8x32xf32>
    %484 = vector.extract_strided_slice %481 {offsets = [0, 64], sizes = [8, 32], strides = [1, 1]} : vector<8x128xf32> to vector<8x32xf32>
    %485 = vector.extract_strided_slice %481 {offsets = [0, 96], sizes = [8, 32], strides = [1, 1]} : vector<8x128xf32> to vector<8x32xf32>
    %486 = arith.mulf %483, %396 : vector<8x32xf32>
    %487 = arith.mulf %482, %484 : vector<8x32xf32>
    %488 = arith.addf %486, %487 : vector<8x32xf32>
    %489 = math.tanh %488 : vector<8x32xf32>
    %490 = arith.mulf %485, %489 : vector<8x32xf32>
    %491 = arith.mulf %413, %410 : vector<8x16xf32>
    %cst_151 = arith.constant 1.000000e+00 : f32
    %492 = vector.broadcast %cst_151 : f32 to vector<8x16xf32>
    %493 = arith.subf %492, %413 : vector<8x16xf32>
    %494 = arith.mulf %493, %451 : vector<8x16xf32>
    %495 = arith.addf %491, %494 : vector<8x16xf32>
    %496 = arith.index_cast %c4_i32 : i32 to index
    %c0_152 = arith.constant 0 : index
    %c0_153 = arith.constant 0 : index
    %497 = vector.load %arg14[%496, %c0_152, %c0_153] : memref<8x8x16xf32, #tpu.memory_space<vmem>>, vector<1x8x16xf32>
    %498 = vector.shape_cast %497 : vector<1x8x16xf32> to vector<8x16xf32>
    %499 = vector.shape_cast %495 : vector<8x16xf32> to vector<1x8x16xf32>
    tpu.vector_store %arg14[%496, %c0_152, %c0_153], %499 {strides = array<i32>} : memref<8x8x16xf32, #tpu.memory_space<vmem>>, vector<1x8x16xf32>,
    %c5_i32 = arith.constant 5 : i32
    %500 = arith.index_cast %c5_i32 : i32 to index
    %c0_154 = arith.constant 0 : index
    %c0_155 = arith.constant 0 : index
    %501 = vector.load %arg1[%500, %c0_154, %c0_155] : memref<8x8x16xf32, #tpu.memory_space<vmem>>, vector<1x8x16xf32>
    %502 = vector.shape_cast %501 : vector<1x8x16xf32> to vector<8x16xf32>
    %503 = arith.index_cast %c5_i32 : i32 to index
    %c0_156 = arith.constant 0 : index
    %c0_157 = arith.constant 0 : index
    %504 = vector.load %arg2[%503, %c0_156, %c0_157] : memref<8x8x16xf32, #tpu.memory_space<vmem>>, vector<1x8x16xf32>
    %505 = vector.shape_cast %504 : vector<1x8x16xf32> to vector<8x16xf32>
    %cst_158 = arith.constant 1.000000e+00 : f32
    %506 = vector.broadcast %cst_158 : f32 to vector<8x16xf32>
    %507 = arith.subf %506, %505 : vector<8x16xf32>
    %508 = arith.mulf %507, %418 : vector<8x16xf32>
    %cst_159 = arith.constant 1.000000e+00 : f32
    %509 = vector.broadcast %cst_159 : f32 to vector<8x16xf32>
    %510 = arith.addf %509, %508 : vector<8x16xf32>
    %cst_160 = arith.constant dense<0.000000e+00> : vector<8x32xf32>
    %511 = tpu.matmul %510, %16, %cst_160 {dimension_numbers = #tpu.dot_dimension_numbers<[1], [0], [0], [1], [0, 0, 1, 1], [], []>} : vector<8x16xf32>, vector<16x32xf32>, vector<8x32xf32> -> vector<8x32xf32>
    %512 = arith.addf %511, %19 : vector<8x32xf32>
    %cst_161 = arith.constant 0.000000e+00 : f32
    %513 = vector.broadcast %cst_161 : f32 to vector<8x32xf32>
    %514 = arith.maximumf %512, %513 : vector<8x32xf32>
    %cst_162 = arith.constant 0.000000e+00 : f32
    %515 = vector.broadcast %cst_162 : f32 to vector<8x32xf32>
    %516 = arith.subf %515, %514 : vector<8x32xf32>
    %517 = math.exp %516 : vector<8x32xf32>
    %518 = arith.mulf %510, %3 : vector<8x16xf32>
    %519 = arith.addf %518, %6 : vector<8x16xf32>
    %cst_163 = arith.constant 0.000000e+00 : f32
    %520 = vector.broadcast %cst_163 : f32 to vector<8x16xf32>
    %521 = arith.maximumf %519, %520 : vector<8x16xf32>
    %cst_164 = arith.constant 0.000000e+00 : f32
    %522 = vector.broadcast %cst_164 : f32 to vector<8x16xf32>
    %523 = arith.subf %522, %521 : vector<8x16xf32>
    %524 = math.exp %523 : vector<8x16xf32>
    %525 = arith.mulf %490, %517 : vector<8x32xf32>
    %cst_165 = arith.constant dense<0.000000e+00> : vector<8x16xf32>
    %526 = tpu.matmul %525, %20, %cst_165 {dimension_numbers = #tpu.dot_dimension_numbers<[1], [0], [0], [1], [0, 0, 1, 1], [], []>} : vector<8x32xf32>, vector<32x16xf32>, vector<8x16xf32> -> vector<8x16xf32>
    %527 = arith.addf %526, %9 : vector<8x16xf32>
    %528 = arith.mulf %505, %502 : vector<8x16xf32>
    %cst_166 = arith.constant 1.000000e+00 : f32
    %529 = vector.broadcast %cst_166 : f32 to vector<8x16xf32>
    %530 = arith.subf %529, %505 : vector<8x16xf32>
    %531 = arith.mulf %530, %527 : vector<8x16xf32>
    %532 = arith.addf %528, %531 : vector<8x16xf32>
    %cst_167 = arith.constant dense<0.000000e+00> : vector<8x16xf32>
    %533 = tpu.matmul %532, %21, %cst_167 {dimension_numbers = #tpu.dot_dimension_numbers<[1], [0], [0], [1], [0, 0, 1, 1], [], []>} : vector<8x16xf32>, vector<16x16xf32>, vector<8x16xf32> -> vector<8x16xf32>
    %534 = arith.addf %533, %12 : vector<8x16xf32>
    %cst_168 = arith.constant dense<0.000000e+00> : vector<8x16xf32>
    %535 = tpu.matmul %524, %22, %cst_168 {dimension_numbers = #tpu.dot_dimension_numbers<[1], [0], [0], [1], [0, 0, 1, 1], [], []>} : vector<8x16xf32>, vector<16x16xf32>, vector<8x16xf32> -> vector<8x16xf32>
    %cst_169 = arith.constant dense<0.000000e+00> : vector<8x16xf32>
    %536 = tpu.matmul %505, %23, %cst_169 {dimension_numbers = #tpu.dot_dimension_numbers<[1], [0], [0], [1], [0, 0, 1, 1], [], []>} : vector<8x16xf32>, vector<16x16xf32>, vector<8x16xf32> -> vector<8x16xf32>
    %537 = arith.addf %535, %536 : vector<8x16xf32>
    %538 = arith.addf %537, %15 : vector<8x16xf32>
    %539 = arith.mulf %538, %534 : vector<8x16xf32>
    %cst_170 = arith.constant 1.000000e+00 : f32
    %540 = vector.broadcast %cst_170 : f32 to vector<8x16xf32>
    %541 = arith.subf %540, %538 : vector<8x16xf32>
    %542 = arith.mulf %541, %527 : vector<8x16xf32>
    %543 = arith.addf %539, %542 : vector<8x16xf32>
    %544 = arith.subf %502, %527 : vector<8x16xf32>
    %545 = math.absf %544 : vector<8x16xf32>
    %546 = arith.subf %502, %534 : vector<8x16xf32>
    %547 = math.absf %546 : vector<8x16xf32>
    %548 = arith.addf %545, %547 : vector<8x16xf32>
    %549 = arith.subf %502, %543 : vector<8x16xf32>
    %550 = math.absf %549 : vector<8x16xf32>
    %551 = arith.addf %548, %550 : vector<8x16xf32>
    %552 = arith.mulf %551, %505 : vector<8x16xf32>
    %cst_171 = arith.constant dense<0.000000e+00> : vector<8xf32>
    %553 = vector.multi_reduction <add>, %552, %cst_171 [1] : vector<8x16xf32> to vector<8xf32>
    %554 = vector.shape_cast %553 : vector<8xf32> to vector<8x1xf32>
    %555 = arith.addf %463, %554 : vector<8x1xf32>
    %556 = arith.mulf %505, %502 : vector<8x16xf32>
    %cst_172 = arith.constant 1.000000e+00 : f32
    %557 = vector.broadcast %cst_172 : f32 to vector<8x16xf32>
    %558 = arith.subf %557, %505 : vector<8x16xf32>
    %559 = arith.mulf %558, %543 : vector<8x16xf32>
    %560 = arith.addf %556, %559 : vector<8x16xf32>
    %cst_173 = arith.constant dense<0.000000e+00> : vector<8x128xf32>
    %561 = tpu.matmul %560, %24, %cst_173 {dimension_numbers = #tpu.dot_dimension_numbers<[1], [0], [0], [1], [0, 0, 1, 1], [], []>} : vector<8x16xf32>, vector<16x128xf32>, vector<8x128xf32> -> vector<8x128xf32>
    %cst_174 = arith.constant dense<0.000000e+00> : vector<8x128xf32>
    %562 = tpu.matmul %505, %25, %cst_174 {dimension_numbers = #tpu.dot_dimension_numbers<[1], [0], [0], [1], [0, 0, 1, 1], [], []>} : vector<8x16xf32>, vector<16x128xf32>, vector<8x128xf32> -> vector<8x128xf32>
    %563 = arith.addf %561, %562 : vector<8x128xf32>
    %cst_175 = arith.constant dense<0.000000e+00> : vector<8x128xf32>
    %564 = tpu.matmul %525, %26, %cst_175 {dimension_numbers = #tpu.dot_dimension_numbers<[1], [0], [0], [1], [0, 0, 1, 1], [], []>} : vector<8x32xf32>, vector<32x128xf32>, vector<8x128xf32> -> vector<8x128xf32>
    %565 = arith.addf %563, %564 : vector<8x128xf32>
    %566 = arith.addf %565, %29 : vector<8x128xf32>
    %567 = math.tanh %566 : vector<8x128xf32>
    %568 = arith.negf %566 : vector<8x128xf32>
    %569 = math.exp %568 : vector<8x128xf32>
    %cst_176 = arith.constant 1.000000e+00 : f32
    %570 = vector.broadcast %cst_176 : f32 to vector<8x128xf32>
    %571 = arith.addf %570, %569 : vector<8x128xf32>
    %572 = arith.divf %570, %571 : vector<8x128xf32>
    %573 = arith.select %35, %567, %572 : vector<8x128xi1>, vector<8x128xf32>
    %574 = vector.extract_strided_slice %573 {offsets = [0, 0], sizes = [8, 32], strides = [1, 1]} : vector<8x128xf32> to vector<8x32xf32>
    %575 = vector.extract_strided_slice %573 {offsets = [0, 32], sizes = [8, 32], strides = [1, 1]} : vector<8x128xf32> to vector<8x32xf32>
    %576 = vector.extract_strided_slice %573 {offsets = [0, 64], sizes = [8, 32], strides = [1, 1]} : vector<8x128xf32> to vector<8x32xf32>
    %577 = vector.extract_strided_slice %573 {offsets = [0, 96], sizes = [8, 32], strides = [1, 1]} : vector<8x128xf32> to vector<8x32xf32>
    %578 = arith.mulf %575, %488 : vector<8x32xf32>
    %579 = arith.mulf %574, %576 : vector<8x32xf32>
    %580 = arith.addf %578, %579 : vector<8x32xf32>
    %581 = math.tanh %580 : vector<8x32xf32>
    %582 = arith.mulf %577, %581 : vector<8x32xf32>
    %583 = arith.mulf %505, %502 : vector<8x16xf32>
    %cst_177 = arith.constant 1.000000e+00 : f32
    %584 = vector.broadcast %cst_177 : f32 to vector<8x16xf32>
    %585 = arith.subf %584, %505 : vector<8x16xf32>
    %586 = arith.mulf %585, %543 : vector<8x16xf32>
    %587 = arith.addf %583, %586 : vector<8x16xf32>
    %588 = arith.index_cast %c5_i32 : i32 to index
    %c0_178 = arith.constant 0 : index
    %c0_179 = arith.constant 0 : index
    %589 = vector.load %arg14[%588, %c0_178, %c0_179] : memref<8x8x16xf32, #tpu.memory_space<vmem>>, vector<1x8x16xf32>
    %590 = vector.shape_cast %589 : vector<1x8x16xf32> to vector<8x16xf32>
    %591 = vector.shape_cast %587 : vector<8x16xf32> to vector<1x8x16xf32>
    tpu.vector_store %arg14[%588, %c0_178, %c0_179], %591 {strides = array<i32>} : memref<8x8x16xf32, #tpu.memory_space<vmem>>, vector<1x8x16xf32>,
    %c6_i32 = arith.constant 6 : i32
    %592 = arith.index_cast %c6_i32 : i32 to index
    %c0_180 = arith.constant 0 : index
    %c0_181 = arith.constant 0 : index
    %593 = vector.load %arg1[%592, %c0_180, %c0_181] : memref<8x8x16xf32, #tpu.memory_space<vmem>>, vector<1x8x16xf32>
    %594 = vector.shape_cast %593 : vector<1x8x16xf32> to vector<8x16xf32>
    %595 = arith.index_cast %c6_i32 : i32 to index
    %c0_182 = arith.constant 0 : index
    %c0_183 = arith.constant 0 : index
    %596 = vector.load %arg2[%595, %c0_182, %c0_183] : memref<8x8x16xf32, #tpu.memory_space<vmem>>, vector<1x8x16xf32>
    %597 = vector.shape_cast %596 : vector<1x8x16xf32> to vector<8x16xf32>
    %cst_184 = arith.constant 1.000000e+00 : f32
    %598 = vector.broadcast %cst_184 : f32 to vector<8x16xf32>
    %599 = arith.subf %598, %597 : vector<8x16xf32>
    %600 = arith.mulf %599, %510 : vector<8x16xf32>
    %cst_185 = arith.constant 1.000000e+00 : f32
    %601 = vector.broadcast %cst_185 : f32 to vector<8x16xf32>
    %602 = arith.addf %601, %600 : vector<8x16xf32>
    %cst_186 = arith.constant dense<0.000000e+00> : vector<8x32xf32>
    %603 = tpu.matmul %602, %16, %cst_186 {dimension_numbers = #tpu.dot_dimension_numbers<[1], [0], [0], [1], [0, 0, 1, 1], [], []>} : vector<8x16xf32>, vector<16x32xf32>, vector<8x32xf32> -> vector<8x32xf32>
    %604 = arith.addf %603, %19 : vector<8x32xf32>
    %cst_187 = arith.constant 0.000000e+00 : f32
    %605 = vector.broadcast %cst_187 : f32 to vector<8x32xf32>
    %606 = arith.maximumf %604, %605 : vector<8x32xf32>
    %cst_188 = arith.constant 0.000000e+00 : f32
    %607 = vector.broadcast %cst_188 : f32 to vector<8x32xf32>
    %608 = arith.subf %607, %606 : vector<8x32xf32>
    %609 = math.exp %608 : vector<8x32xf32>
    %610 = arith.mulf %602, %3 : vector<8x16xf32>
    %611 = arith.addf %610, %6 : vector<8x16xf32>
    %cst_189 = arith.constant 0.000000e+00 : f32
    %612 = vector.broadcast %cst_189 : f32 to vector<8x16xf32>
    %613 = arith.maximumf %611, %612 : vector<8x16xf32>
    %cst_190 = arith.constant 0.000000e+00 : f32
    %614 = vector.broadcast %cst_190 : f32 to vector<8x16xf32>
    %615 = arith.subf %614, %613 : vector<8x16xf32>
    %616 = math.exp %615 : vector<8x16xf32>
    %617 = arith.mulf %582, %609 : vector<8x32xf32>
    %cst_191 = arith.constant dense<0.000000e+00> : vector<8x16xf32>
    %618 = tpu.matmul %617, %20, %cst_191 {dimension_numbers = #tpu.dot_dimension_numbers<[1], [0], [0], [1], [0, 0, 1, 1], [], []>} : vector<8x32xf32>, vector<32x16xf32>, vector<8x16xf32> -> vector<8x16xf32>
    %619 = arith.addf %618, %9 : vector<8x16xf32>
    %620 = arith.mulf %597, %594 : vector<8x16xf32>
    %cst_192 = arith.constant 1.000000e+00 : f32
    %621 = vector.broadcast %cst_192 : f32 to vector<8x16xf32>
    %622 = arith.subf %621, %597 : vector<8x16xf32>
    %623 = arith.mulf %622, %619 : vector<8x16xf32>
    %624 = arith.addf %620, %623 : vector<8x16xf32>
    %cst_193 = arith.constant dense<0.000000e+00> : vector<8x16xf32>
    %625 = tpu.matmul %624, %21, %cst_193 {dimension_numbers = #tpu.dot_dimension_numbers<[1], [0], [0], [1], [0, 0, 1, 1], [], []>} : vector<8x16xf32>, vector<16x16xf32>, vector<8x16xf32> -> vector<8x16xf32>
    %626 = arith.addf %625, %12 : vector<8x16xf32>
    %cst_194 = arith.constant dense<0.000000e+00> : vector<8x16xf32>
    %627 = tpu.matmul %616, %22, %cst_194 {dimension_numbers = #tpu.dot_dimension_numbers<[1], [0], [0], [1], [0, 0, 1, 1], [], []>} : vector<8x16xf32>, vector<16x16xf32>, vector<8x16xf32> -> vector<8x16xf32>
    %cst_195 = arith.constant dense<0.000000e+00> : vector<8x16xf32>
    %628 = tpu.matmul %597, %23, %cst_195 {dimension_numbers = #tpu.dot_dimension_numbers<[1], [0], [0], [1], [0, 0, 1, 1], [], []>} : vector<8x16xf32>, vector<16x16xf32>, vector<8x16xf32> -> vector<8x16xf32>
    %629 = arith.addf %627, %628 : vector<8x16xf32>
    %630 = arith.addf %629, %15 : vector<8x16xf32>
    %631 = arith.mulf %630, %626 : vector<8x16xf32>
    %cst_196 = arith.constant 1.000000e+00 : f32
    %632 = vector.broadcast %cst_196 : f32 to vector<8x16xf32>
    %633 = arith.subf %632, %630 : vector<8x16xf32>
    %634 = arith.mulf %633, %619 : vector<8x16xf32>
    %635 = arith.addf %631, %634 : vector<8x16xf32>
    %636 = arith.subf %594, %619 : vector<8x16xf32>
    %637 = math.absf %636 : vector<8x16xf32>
    %638 = arith.subf %594, %626 : vector<8x16xf32>
    %639 = math.absf %638 : vector<8x16xf32>
    %640 = arith.addf %637, %639 : vector<8x16xf32>
    %641 = arith.subf %594, %635 : vector<8x16xf32>
    %642 = math.absf %641 : vector<8x16xf32>
    %643 = arith.addf %640, %642 : vector<8x16xf32>
    %644 = arith.mulf %643, %597 : vector<8x16xf32>
    %cst_197 = arith.constant dense<0.000000e+00> : vector<8xf32>
    %645 = vector.multi_reduction <add>, %644, %cst_197 [1] : vector<8x16xf32> to vector<8xf32>
    %646 = vector.shape_cast %645 : vector<8xf32> to vector<8x1xf32>
    %647 = arith.addf %555, %646 : vector<8x1xf32>
    %648 = arith.mulf %597, %594 : vector<8x16xf32>
    %cst_198 = arith.constant 1.000000e+00 : f32
    %649 = vector.broadcast %cst_198 : f32 to vector<8x16xf32>
    %650 = arith.subf %649, %597 : vector<8x16xf32>
    %651 = arith.mulf %650, %635 : vector<8x16xf32>
    %652 = arith.addf %648, %651 : vector<8x16xf32>
    %cst_199 = arith.constant dense<0.000000e+00> : vector<8x128xf32>
    %653 = tpu.matmul %652, %24, %cst_199 {dimension_numbers = #tpu.dot_dimension_numbers<[1], [0], [0], [1], [0, 0, 1, 1], [], []>} : vector<8x16xf32>, vector<16x128xf32>, vector<8x128xf32> -> vector<8x128xf32>
    %cst_200 = arith.constant dense<0.000000e+00> : vector<8x128xf32>
    %654 = tpu.matmul %597, %25, %cst_200 {dimension_numbers = #tpu.dot_dimension_numbers<[1], [0], [0], [1], [0, 0, 1, 1], [], []>} : vector<8x16xf32>, vector<16x128xf32>, vector<8x128xf32> -> vector<8x128xf32>
    %655 = arith.addf %653, %654 : vector<8x128xf32>
    %cst_201 = arith.constant dense<0.000000e+00> : vector<8x128xf32>
    %656 = tpu.matmul %617, %26, %cst_201 {dimension_numbers = #tpu.dot_dimension_numbers<[1], [0], [0], [1], [0, 0, 1, 1], [], []>} : vector<8x32xf32>, vector<32x128xf32>, vector<8x128xf32> -> vector<8x128xf32>
    %657 = arith.addf %655, %656 : vector<8x128xf32>
    %658 = arith.addf %657, %29 : vector<8x128xf32>
    %659 = math.tanh %658 : vector<8x128xf32>
    %660 = arith.negf %658 : vector<8x128xf32>
    %661 = math.exp %660 : vector<8x128xf32>
    %cst_202 = arith.constant 1.000000e+00 : f32
    %662 = vector.broadcast %cst_202 : f32 to vector<8x128xf32>
    %663 = arith.addf %662, %661 : vector<8x128xf32>
    %664 = arith.divf %662, %663 : vector<8x128xf32>
    %665 = arith.select %35, %659, %664 : vector<8x128xi1>, vector<8x128xf32>
    %666 = vector.extract_strided_slice %665 {offsets = [0, 0], sizes = [8, 32], strides = [1, 1]} : vector<8x128xf32> to vector<8x32xf32>
    %667 = vector.extract_strided_slice %665 {offsets = [0, 32], sizes = [8, 32], strides = [1, 1]} : vector<8x128xf32> to vector<8x32xf32>
    %668 = vector.extract_strided_slice %665 {offsets = [0, 64], sizes = [8, 32], strides = [1, 1]} : vector<8x128xf32> to vector<8x32xf32>
    %669 = vector.extract_strided_slice %665 {offsets = [0, 96], sizes = [8, 32], strides = [1, 1]} : vector<8x128xf32> to vector<8x32xf32>
    %670 = arith.mulf %667, %580 : vector<8x32xf32>
    %671 = arith.mulf %666, %668 : vector<8x32xf32>
    %672 = arith.addf %670, %671 : vector<8x32xf32>
    %673 = math.tanh %672 : vector<8x32xf32>
    %674 = arith.mulf %669, %673 : vector<8x32xf32>
    %675 = arith.mulf %597, %594 : vector<8x16xf32>
    %cst_203 = arith.constant 1.000000e+00 : f32
    %676 = vector.broadcast %cst_203 : f32 to vector<8x16xf32>
    %677 = arith.subf %676, %597 : vector<8x16xf32>
    %678 = arith.mulf %677, %635 : vector<8x16xf32>
    %679 = arith.addf %675, %678 : vector<8x16xf32>
    %680 = arith.index_cast %c6_i32 : i32 to index
    %c0_204 = arith.constant 0 : index
    %c0_205 = arith.constant 0 : index
    %681 = vector.load %arg14[%680, %c0_204, %c0_205] : memref<8x8x16xf32, #tpu.memory_space<vmem>>, vector<1x8x16xf32>
    %682 = vector.shape_cast %681 : vector<1x8x16xf32> to vector<8x16xf32>
    %683 = vector.shape_cast %679 : vector<8x16xf32> to vector<1x8x16xf32>
    tpu.vector_store %arg14[%680, %c0_204, %c0_205], %683 {strides = array<i32>} : memref<8x8x16xf32, #tpu.memory_space<vmem>>, vector<1x8x16xf32>,
    %c7_i32 = arith.constant 7 : i32
    %684 = arith.index_cast %c7_i32 : i32 to index
    %c0_206 = arith.constant 0 : index
    %c0_207 = arith.constant 0 : index
    %685 = vector.load %arg1[%684, %c0_206, %c0_207] : memref<8x8x16xf32, #tpu.memory_space<vmem>>, vector<1x8x16xf32>
    %686 = vector.shape_cast %685 : vector<1x8x16xf32> to vector<8x16xf32>
    %687 = arith.index_cast %c7_i32 : i32 to index
    %c0_208 = arith.constant 0 : index
    %c0_209 = arith.constant 0 : index
    %688 = vector.load %arg2[%687, %c0_208, %c0_209] : memref<8x8x16xf32, #tpu.memory_space<vmem>>, vector<1x8x16xf32>
    %689 = vector.shape_cast %688 : vector<1x8x16xf32> to vector<8x16xf32>
    %cst_210 = arith.constant 1.000000e+00 : f32
    %690 = vector.broadcast %cst_210 : f32 to vector<8x16xf32>
    %691 = arith.subf %690, %689 : vector<8x16xf32>
    %692 = arith.mulf %691, %602 : vector<8x16xf32>
    %cst_211 = arith.constant 1.000000e+00 : f32
    %693 = vector.broadcast %cst_211 : f32 to vector<8x16xf32>
    %694 = arith.addf %693, %692 : vector<8x16xf32>
    %cst_212 = arith.constant dense<0.000000e+00> : vector<8x32xf32>
    %695 = tpu.matmul %694, %16, %cst_212 {dimension_numbers = #tpu.dot_dimension_numbers<[1], [0], [0], [1], [0, 0, 1, 1], [], []>} : vector<8x16xf32>, vector<16x32xf32>, vector<8x32xf32> -> vector<8x32xf32>
    %696 = arith.addf %695, %19 : vector<8x32xf32>
    %cst_213 = arith.constant 0.000000e+00 : f32
    %697 = vector.broadcast %cst_213 : f32 to vector<8x32xf32>
    %698 = arith.maximumf %696, %697 : vector<8x32xf32>
    %cst_214 = arith.constant 0.000000e+00 : f32
    %699 = vector.broadcast %cst_214 : f32 to vector<8x32xf32>
    %700 = arith.subf %699, %698 : vector<8x32xf32>
    %701 = math.exp %700 : vector<8x32xf32>
    %702 = arith.mulf %694, %3 : vector<8x16xf32>
    %703 = arith.addf %702, %6 : vector<8x16xf32>
    %cst_215 = arith.constant 0.000000e+00 : f32
    %704 = vector.broadcast %cst_215 : f32 to vector<8x16xf32>
    %705 = arith.maximumf %703, %704 : vector<8x16xf32>
    %cst_216 = arith.constant 0.000000e+00 : f32
    %706 = vector.broadcast %cst_216 : f32 to vector<8x16xf32>
    %707 = arith.subf %706, %705 : vector<8x16xf32>
    %708 = math.exp %707 : vector<8x16xf32>
    %709 = arith.mulf %674, %701 : vector<8x32xf32>
    %cst_217 = arith.constant dense<0.000000e+00> : vector<8x16xf32>
    %710 = tpu.matmul %709, %20, %cst_217 {dimension_numbers = #tpu.dot_dimension_numbers<[1], [0], [0], [1], [0, 0, 1, 1], [], []>} : vector<8x32xf32>, vector<32x16xf32>, vector<8x16xf32> -> vector<8x16xf32>
    %711 = arith.addf %710, %9 : vector<8x16xf32>
    %712 = arith.mulf %689, %686 : vector<8x16xf32>
    %cst_218 = arith.constant 1.000000e+00 : f32
    %713 = vector.broadcast %cst_218 : f32 to vector<8x16xf32>
    %714 = arith.subf %713, %689 : vector<8x16xf32>
    %715 = arith.mulf %714, %711 : vector<8x16xf32>
    %716 = arith.addf %712, %715 : vector<8x16xf32>
    %cst_219 = arith.constant dense<0.000000e+00> : vector<8x16xf32>
    %717 = tpu.matmul %716, %21, %cst_219 {dimension_numbers = #tpu.dot_dimension_numbers<[1], [0], [0], [1], [0, 0, 1, 1], [], []>} : vector<8x16xf32>, vector<16x16xf32>, vector<8x16xf32> -> vector<8x16xf32>
    %718 = arith.addf %717, %12 : vector<8x16xf32>
    %cst_220 = arith.constant dense<0.000000e+00> : vector<8x16xf32>
    %719 = tpu.matmul %708, %22, %cst_220 {dimension_numbers = #tpu.dot_dimension_numbers<[1], [0], [0], [1], [0, 0, 1, 1], [], []>} : vector<8x16xf32>, vector<16x16xf32>, vector<8x16xf32> -> vector<8x16xf32>
    %cst_221 = arith.constant dense<0.000000e+00> : vector<8x16xf32>
    %720 = tpu.matmul %689, %23, %cst_221 {dimension_numbers = #tpu.dot_dimension_numbers<[1], [0], [0], [1], [0, 0, 1, 1], [], []>} : vector<8x16xf32>, vector<16x16xf32>, vector<8x16xf32> -> vector<8x16xf32>
    %721 = arith.addf %719, %720 : vector<8x16xf32>
    %722 = arith.addf %721, %15 : vector<8x16xf32>
    %723 = arith.mulf %722, %718 : vector<8x16xf32>
    %cst_222 = arith.constant 1.000000e+00 : f32
    %724 = vector.broadcast %cst_222 : f32 to vector<8x16xf32>
    %725 = arith.subf %724, %722 : vector<8x16xf32>
    %726 = arith.mulf %725, %711 : vector<8x16xf32>
    %727 = arith.addf %723, %726 : vector<8x16xf32>
    %728 = arith.subf %686, %711 : vector<8x16xf32>
    %729 = math.absf %728 : vector<8x16xf32>
    %730 = arith.subf %686, %718 : vector<8x16xf32>
    %731 = math.absf %730 : vector<8x16xf32>
    %732 = arith.addf %729, %731 : vector<8x16xf32>
    %733 = arith.subf %686, %727 : vector<8x16xf32>
    %734 = math.absf %733 : vector<8x16xf32>
    %735 = arith.addf %732, %734 : vector<8x16xf32>
    %736 = arith.mulf %735, %689 : vector<8x16xf32>
    %cst_223 = arith.constant dense<0.000000e+00> : vector<8xf32>
    %737 = vector.multi_reduction <add>, %736, %cst_223 [1] : vector<8x16xf32> to vector<8xf32>
    %738 = vector.shape_cast %737 : vector<8xf32> to vector<8x1xf32>
    %739 = arith.addf %647, %738 : vector<8x1xf32>
    %740 = arith.mulf %689, %686 : vector<8x16xf32>
    %cst_224 = arith.constant 1.000000e+00 : f32
    %741 = vector.broadcast %cst_224 : f32 to vector<8x16xf32>
    %742 = arith.subf %741, %689 : vector<8x16xf32>
    %743 = arith.mulf %742, %727 : vector<8x16xf32>
    %744 = arith.addf %740, %743 : vector<8x16xf32>
    %cst_225 = arith.constant dense<0.000000e+00> : vector<8x128xf32>
    %745 = tpu.matmul %744, %24, %cst_225 {dimension_numbers = #tpu.dot_dimension_numbers<[1], [0], [0], [1], [0, 0, 1, 1], [], []>} : vector<8x16xf32>, vector<16x128xf32>, vector<8x128xf32> -> vector<8x128xf32>
    %cst_226 = arith.constant dense<0.000000e+00> : vector<8x128xf32>
    %746 = tpu.matmul %689, %25, %cst_226 {dimension_numbers = #tpu.dot_dimension_numbers<[1], [0], [0], [1], [0, 0, 1, 1], [], []>} : vector<8x16xf32>, vector<16x128xf32>, vector<8x128xf32> -> vector<8x128xf32>
    %747 = arith.addf %745, %746 : vector<8x128xf32>
    %cst_227 = arith.constant dense<0.000000e+00> : vector<8x128xf32>
    %748 = tpu.matmul %709, %26, %cst_227 {dimension_numbers = #tpu.dot_dimension_numbers<[1], [0], [0], [1], [0, 0, 1, 1], [], []>} : vector<8x32xf32>, vector<32x128xf32>, vector<8x128xf32> -> vector<8x128xf32>
    %749 = arith.addf %747, %748 : vector<8x128xf32>
    %750 = arith.addf %749, %29 : vector<8x128xf32>
    %751 = math.tanh %750 : vector<8x128xf32>
    %752 = arith.negf %750 : vector<8x128xf32>
    %753 = math.exp %752 : vector<8x128xf32>
    %cst_228 = arith.constant 1.000000e+00 : f32
    %754 = vector.broadcast %cst_228 : f32 to vector<8x128xf32>
    %755 = arith.addf %754, %753 : vector<8x128xf32>
    %756 = arith.divf %754, %755 : vector<8x128xf32>
    %757 = arith.select %35, %751, %756 : vector<8x128xi1>, vector<8x128xf32>
    %758 = vector.extract_strided_slice %757 {offsets = [0, 0], sizes = [8, 32], strides = [1, 1]} : vector<8x128xf32> to vector<8x32xf32>
    %759 = vector.extract_strided_slice %757 {offsets = [0, 32], sizes = [8, 32], strides = [1, 1]} : vector<8x128xf32> to vector<8x32xf32>
    %760 = vector.extract_strided_slice %757 {offsets = [0, 64], sizes = [8, 32], strides = [1, 1]} : vector<8x128xf32> to vector<8x32xf32>
    %761 = vector.extract_strided_slice %757 {offsets = [0, 96], sizes = [8, 32], strides = [1, 1]} : vector<8x128xf32> to vector<8x32xf32>
    %762 = arith.mulf %759, %672 : vector<8x32xf32>
    %763 = arith.mulf %758, %760 : vector<8x32xf32>
    %764 = arith.addf %762, %763 : vector<8x32xf32>
    %765 = math.tanh %764 : vector<8x32xf32>
    %766 = arith.mulf %761, %765 : vector<8x32xf32>
    %767 = arith.mulf %689, %686 : vector<8x16xf32>
    %cst_229 = arith.constant 1.000000e+00 : f32
    %768 = vector.broadcast %cst_229 : f32 to vector<8x16xf32>
    %769 = arith.subf %768, %689 : vector<8x16xf32>
    %770 = arith.mulf %769, %727 : vector<8x16xf32>
    %771 = arith.addf %767, %770 : vector<8x16xf32>
    %772 = arith.index_cast %c7_i32 : i32 to index
    %c0_230 = arith.constant 0 : index
    %c0_231 = arith.constant 0 : index
    %773 = vector.load %arg14[%772, %c0_230, %c0_231] : memref<8x8x16xf32, #tpu.memory_space<vmem>>, vector<1x8x16xf32>
    %774 = vector.shape_cast %773 : vector<1x8x16xf32> to vector<8x16xf32>
    %775 = vector.shape_cast %771 : vector<8x16xf32> to vector<1x8x16xf32>
    tpu.vector_store %arg14[%772, %c0_230, %c0_231], %775 {strides = array<i32>} : memref<8x8x16xf32, #tpu.memory_space<vmem>>, vector<1x8x16xf32>,
    %c8_i32 = arith.constant 8 : i32
    %c0_232 = arith.constant 0 : index
    %c0_233 = arith.constant 0 : index
    %776 = vector.load %arg15[%c0_232, %c0_233] : memref<8x1xf32, #tpu.memory_space<vmem>>, vector<8x1xf32>
    tpu.vector_store %arg15[%c0_232, %c0_233], %739 {strides = array<i32>} : memref<8x1xf32, #tpu.memory_space<vmem>>, vector<8x1xf32>,
    return
  }
  func.func @transform_0(%arg0: i32) -> (i32, i32, i32) {
    %c0_i32 = arith.constant 0 : i32
    %c0_i32_0 = arith.constant 0 : i32
    %c0_i32_1 = arith.constant 0 : i32
    return %c0_i32, %arg0, %c0_i32_0 : i32, i32, i32
  }
  func.func @transform_1(%arg0: i32) -> (i32, i32, i32) {
    %c0_i32 = arith.constant 0 : i32
    %c0_i32_0 = arith.constant 0 : i32
    %c0_i32_1 = arith.constant 0 : i32
    return %c0_i32, %arg0, %c0_i32_0 : i32, i32, i32
  }
  func.func @transform_2(%arg0: i32) -> (i32, i32) {
    %c0_i32 = arith.constant 0 : i32
    %c0_i32_0 = arith.constant 0 : i32
    %c0_i32_1 = arith.constant 0 : i32
    return %c0_i32, %c0_i32_0 : i32, i32
  }
  func.func @transform_3(%arg0: i32) -> (i32, i32) {
    %c0_i32 = arith.constant 0 : i32
    %c0_i32_0 = arith.constant 0 : i32
    %c0_i32_1 = arith.constant 0 : i32
    return %c0_i32, %c0_i32_0 : i32, i32
  }
  func.func @transform_4(%arg0: i32) -> (i32, i32) {
    %c0_i32 = arith.constant 0 : i32
    %c0_i32_0 = arith.constant 0 : i32
    %c0_i32_1 = arith.constant 0 : i32
    return %c0_i32, %c0_i32_0 : i32, i32
  }
  func.func @transform_5(%arg0: i32) -> (i32, i32) {
    %c0_i32 = arith.constant 0 : i32
    %c0_i32_0 = arith.constant 0 : i32
    %c0_i32_1 = arith.constant 0 : i32
    return %c0_i32, %c0_i32_0 : i32, i32
  }
  func.func @transform_6(%arg0: i32) -> (i32, i32) {
    %c0_i32 = arith.constant 0 : i32
    %c0_i32_0 = arith.constant 0 : i32
    %c0_i32_1 = arith.constant 0 : i32
    return %c0_i32, %c0_i32_0 : i32, i32
  }
  func.func @transform_7(%arg0: i32) -> (i32, i32) {
    %c0_i32 = arith.constant 0 : i32
    %c0_i32_0 = arith.constant 0 : i32
    %c0_i32_1 = arith.constant 0 : i32
    return %c0_i32, %c0_i32_0 : i32, i32
  }
  func.func @transform_8(%arg0: i32) -> (i32, i32) {
    %c0_i32 = arith.constant 0 : i32
    %c0_i32_0 = arith.constant 0 : i32
    %c0_i32_1 = arith.constant 0 : i32
    return %c0_i32, %c0_i32_0 : i32, i32
  }
  func.func @transform_9(%arg0: i32) -> (i32, i32) {
    %c0_i32 = arith.constant 0 : i32
    %c0_i32_0 = arith.constant 0 : i32
    %c0_i32_1 = arith.constant 0 : i32
    return %c0_i32, %c0_i32_0 : i32, i32
  }
  func.func @transform_10(%arg0: i32) -> (i32, i32) {
    %c0_i32 = arith.constant 0 : i32
    %c0_i32_0 = arith.constant 0 : i32
    %c0_i32_1 = arith.constant 0 : i32
    return %c0_i32, %c0_i32_0 : i32, i32
  }
  func.func @transform_11(%arg0: i32) -> (i32, i32) {
    %c0_i32 = arith.constant 0 : i32
    %c0_i32_0 = arith.constant 0 : i32
    %c0_i32_1 = arith.constant 0 : i32
    return %c0_i32, %c0_i32_0 : i32, i32
  }
  func.func @transform_12(%arg0: i32) -> (i32, i32) {
    %c0_i32 = arith.constant 0 : i32
    %c0_i32_0 = arith.constant 0 : i32
    %c0_i32_1 = arith.constant 0 : i32
    return %c0_i32, %c0_i32_0 : i32, i32
  }
  func.func @transform_13(%arg0: i32) -> (i32, i32, i32) {
    %c0_i32 = arith.constant 0 : i32
    %c0_i32_0 = arith.constant 0 : i32
    %c0_i32_1 = arith.constant 0 : i32
    return %c0_i32, %arg0, %c0_i32_0 : i32, i32, i32
  }
  func.func @transform_14(%arg0: i32) -> (i32, i32) {
    %c0_i32 = arith.constant 0 : i32
    %c0_i32_0 = arith.constant 0 : i32
    return %arg0, %c0_i32 : i32, i32
  }
}

</mosaic_0001>

<llo_original>
// kernel: rits_forward.1
$region0: #{rits_forward.1}
  #allocation0 [shape = 'u32[]', space=smem, size = 0x4, offset = 0x4, fixed_abs, tag = 'smem constant byte address 0x4 - core index']
  #allocation1 [shape = 'u32[144,128]{1,0:T(1,128)}', space=vmem, size = 0x12000, scoped, tag = 'internal scratch']
  %s0 = inlined_call_operand.vmem [shape: f32[8,8,16], index: 0, kind: input, shape index: {}]
  %s1 = inlined_call_operand.vmem [shape: f32[8,8,16], index: 1, kind: input, shape index: {}]
  %s2 = inlined_call_operand.vmem [shape: f32[8,16], index: 2, kind: input, shape index: {}]
  %s3 = inlined_call_operand.vmem [shape: f32[16,32], index: 3, kind: input, shape index: {}]
  %s4 = inlined_call_operand.vmem [shape: f32[1,32], index: 4, kind: input, shape index: {}]
  %s5 = inlined_call_operand.vmem [shape: f32[32,16], index: 5, kind: input, shape index: {}]
  %s6 = inlined_call_operand.vmem [shape: f32[16,16], index: 6, kind: input, shape index: {}]
  %s7 = inlined_call_operand.vmem [shape: f32[16,16], index: 7, kind: input, shape index: {}]
  %s8 = inlined_call_operand.vmem [shape: f32[16,16], index: 8, kind: input, shape index: {}]
  %s9 = inlined_call_operand.vmem [shape: f32[16,128], index: 9, kind: input, shape index: {}]
  %s10 = inlined_call_operand.vmem [shape: f32[16,128], index: 10, kind: input, shape index: {}]
  %s11 = inlined_call_operand.vmem [shape: f32[32,128], index: 11, kind: input, shape index: {}]
  %s12 = inlined_call_operand.vmem [shape: f32[1,128], index: 12, kind: input, shape index: {}]
  %s13 = inlined_call_operand.vmem [shape: f32[8,8,16], index: 13, kind: output, shape index: {0}]
  %s14 = inlined_call_operand.vmem [shape: f32[8,1], index: 14, kind: output, shape index: {1}]
  %15 = xla_tuple %s13, %s14
  %s16 = sld [smem:[#allocation0]]
  $region70: #{rits_forward.1} parent=0
    _
  %s18 = ssub.s32 1, %s16
  %s19 = scalar_select 0, %s18, %s16
  // Predicated region
  $region2: #{rits_forward.1} parent=0 // pred_check
    _
  $region3: #{rits_forward.1} parent=0 // pred_check_branch
    %21 = sbr.rel (0) target = $region5
  $region4: #{rits_forward.1} parent=0 // pred_region
    _
  $region5: #{rits_forward.1} parent=0 // pred_fallthru
    _
  // Predicated region
  $region6: #{rits_forward.1} parent=0 // pred_check
    _
  $region7: #{rits_forward.1} parent=0 // pred_check_branch
    %23 = sbr.rel (0) target = $region9
  $region8: #{rits_forward.1} parent=0 // pred_region
    _
  $region9: #{rits_forward.1} parent=0 // pred_fallthru
    _
  // Predicated region
  $region10: #{rits_forward.1} parent=0 // pred_check
    _
  $region11: #{rits_forward.1} parent=0 // pred_check_branch
    %25 = sbr.rel (0) target = $region13
  $region12: #{rits_forward.1} parent=0 // pred_region
    _
  $region13: #{rits_forward.1} parent=0 // pred_fallthru
    _
  // Predicated region
  $region14: #{rits_forward.1} parent=0 // pred_check
    _
  $region15: #{rits_forward.1} parent=0 // pred_check_branch
    %27 = sbr.rel (0) target = $region17
  $region16: #{rits_forward.1} parent=0 // pred_region
    _
  $region17: #{rits_forward.1} parent=0 // pred_fallthru
    _
  // Predicated region
  $region18: #{rits_forward.1} parent=0 // pred_check
    _
  $region19: #{rits_forward.1} parent=0 // pred_check_branch
    %29 = sbr.rel (0) target = $region21
  $region20: #{rits_forward.1} parent=0 // pred_region
    _
  $region21: #{rits_forward.1} parent=0 // pred_fallthru
    _
  // Predicated region
  $region22: #{rits_forward.1} parent=0 // pred_check
    _
  $region23: #{rits_forward.1} parent=0 // pred_check_branch
    %31 = sbr.rel (0) target = $region25
  $region24: #{rits_forward.1} parent=0 // pred_region
    _
  $region25: #{rits_forward.1} parent=0 // pred_fallthru
    _
  // Predicated region
  $region26: #{rits_forward.1} parent=0 // pred_check
    _
  $region27: #{rits_forward.1} parent=0 // pred_check_branch
    %33 = sbr.rel (0) target = $region29
  $region28: #{rits_forward.1} parent=0 // pred_region
    _
  $region29: #{rits_forward.1} parent=0 // pred_fallthru
    _
  // Predicated region
  $region30: #{rits_forward.1} parent=0 // pred_check
    _
  $region31: #{rits_forward.1} parent=0 // pred_check_branch
    %35 = sbr.rel (0) target = $region33
  $region32: #{rits_forward.1} parent=0 // pred_region
    _
  $region33: #{rits_forward.1} parent=0 // pred_fallthru
    _
  // Predicated region
  $region34: #{rits_forward.1} parent=0 // pred_check
    _
  $region35: #{rits_forward.1} parent=0 // pred_check_branch
    %37 = sbr.rel (0) target = $region37
  $region36: #{rits_forward.1} parent=0 // pred_region
    _
  $region37: #{rits_forward.1} parent=0 // pred_fallthru
    _
  // Predicated region
  $region38: #{rits_forward.1} parent=0 // pred_check
    _
  $region39: #{rits_forward.1} parent=0 // pred_check_branch
    %39 = sbr.rel (0) target = $region41
  $region40: #{rits_forward.1} parent=0 // pred_region
    _
  $region41: #{rits_forward.1} parent=0 // pred_fallthru
    _
  // Predicated region
  $region42: #{rits_forward.1} parent=0 // pred_check
    _
  $region43: #{rits_forward.1} parent=0 // pred_check_branch
    %41 = sbr.rel (0) target = $region45
  $region44: #{rits_forward.1} parent=0 // pred_region
    _
  $region45: #{rits_forward.1} parent=0 // pred_fallthru
    _
  // Predicated region
  $region46: #{rits_forward.1} parent=0 // pred_check
    _
  $region47: #{rits_forward.1} parent=0 // pred_check_branch
    %43 = sbr.rel (0) target = $region49
  $region48: #{rits_forward.1} parent=0 // pred_region
    _
  $region49: #{rits_forward.1} parent=0 // pred_fallthru
    _
  // Predicated region
  $region50: #{rits_forward.1} parent=0 // pred_check
    _
  $region51: #{rits_forward.1} parent=0 // pred_check_branch
    %45 = sbr.rel (0) target = $region53
  $region52: #{rits_forward.1} parent=0 // pred_region
    _
  $region53: #{rits_forward.1} parent=0 // pred_fallthru
    _
  %v46 = vld [vmem:[%s2] sm:$0xff]
  %v47 = vlaneseq
  %v48 = vshrl.u32 %v47, 7
  %v49 = vsub.s32 0, %v48
  %v50 = vrot.slane %v46, %v49
  %v51 = vlaneseq
  %v52 = vshrl.u32 %v51, 7
  %v53 = vsub.s32 1, %v52
  %v54 = vrot.slane %v46, %v53
  %v55 = vlaneseq
  %v56 = vshrl.u32 %v55, 7
  %v57 = vsub.s32 2, %v56
  %v58 = vrot.slane %v46, %v57
  %v59 = vlaneseq
  %v60 = vshrl.u32 %v59, 7
  %v61 = vsub.s32 3, %v60
  %v62 = vrot.slane %v46, %v61
  %v63 = vlaneseq
  %v64 = vshrl.u32 %v63, 7
  %v65 = vsub.s32 4, %v64
  %v66 = vrot.slane %v46, %v65
  %v67 = vld [vmem:[%s3] sm:$0xff]
  %v68 = vld [vmem:[%s3 + $0x8] sm:$0xff]
  %v69 = vld [vmem:[%s4] sm:$0x1]
  %v71 = vlaneseq
  %v72 = vshrl.u32 %v71, 7
  %v73 = vsub.s32 0, %v72
  %v74 = vrot.slane %v69, %v73
  %v76 = vld [vmem:[%s5] sm:$0xff]
  %v77 = vld [vmem:[%s5 + $0x8] sm:$0xff]
  %v78 = vld [vmem:[%s5 + $0x10] sm:$0xff]
  %v79 = vld [vmem:[%s5 + $0x18] sm:$0xff]
  %v80 = vld [vmem:[%s6] sm:$0xff]
  %v81 = vld [vmem:[%s6 + $0x8] sm:$0xff]
  %v82 = vld [vmem:[%s7] sm:$0xff]
  %v83 = vld [vmem:[%s7 + $0x8] sm:$0xff]
  %v84 = vld [vmem:[%s8] sm:$0xff]
  %v85 = vld [vmem:[%s8 + $0x8] sm:$0xff]
  %v86 = vld [vmem:[%s9] sm:$0xff]
  %v87 = vld [vmem:[%s9 + $0x8] sm:$0xff]
  %v88 = vld [vmem:[%s10] sm:$0xff]
  %v89 = vld [vmem:[%s10 + $0x8] sm:$0xff]
  %v90 = vld [vmem:[%s11] sm:$0xff]
  %v91 = vld [vmem:[%s11 + $0x8] sm:$0xff]
  %v92 = vld [vmem:[%s11 + $0x10] sm:$0xff]
  %v93 = vld [vmem:[%s11 + $0x18] sm:$0xff]
  %v94 = vld [vmem:[%s12] sm:$0x1]
  %v96 = vlaneseq
  %v97 = vshrl.u32 %v96, 7
  %v98 = vsub.s32 0, %v97
  %v99 = vrot.slane %v94, %v98
  %v101 = vlaneseq
  %v102 = vand.u32 %v101, 127
  %vm103 = vcmp.ge.s32.totalorder %v102, 64
  %vm104 = vcmp.lt.s32.totalorder %v102, 96
  %vm105 = vmand %vm103, %vm104
  %v106 = vld [vmem:[%s0] sm:$0xff]
  %v107 = vld [vmem:[%s1] sm:$0xff]
  %v108 = vsub.f32 1.0, %v107
  %v109 = vmul.f32 %v108, 0.0
  %v110 = vadd.f32 %v109, 1.0
  %vm111 = vcmask 130048
  %v113 = vsel %vm111, %v110, 0
  %115 = vmatprep.subr.mxu0 0.0
  %116 = vmatpush1.msra.mxu0 0.0
  %117 = vmatprep.subr.mxu0 0.0
  %118 = vmatpush1.msra.mxu0 0.0
  %119 = vmatprep.subr.mxu0 0.0
  %120 = vmatpush1.msra.mxu0 0.0
  %121 = vmatprep.subr.mxu0 0.0
  %122 = vmatpush1.msra.mxu0 0.0
  %123 = vmatprep.subr.mxu0 0.0
  %124 = vmatpush1.msra.mxu0 0.0
  %125 = vmatprep.subr.mxu0 0.0
  %126 = vmatpush1.msra.mxu0 0.0
  %127 = vmatprep.subr.mxu0 0.0
  %128 = vmatpush1.msra.mxu0 0.0
  %129 = vmatprep.subr.mxu0 0.0
  %130 = vmatpush1.msra.mxu0 0.0
  %131 = vmatprep.subr.mxu0 0.0
  %132 = vmatpush1.msra.mxu0 0.0
  %133 = vmatprep.subr.mxu0 0.0
  %134 = vmatpush1.msra.mxu0 0.0
  %135 = vmatprep.subr.mxu0 0.0
  %136 = vmatpush1.msra.mxu0 0.0
  %137 = vmatprep.subr.mxu0 0.0
  %138 = vmatpush1.msra.mxu0 0.0
  %139 = vmatprep.subr.mxu0 0.0
  %140 = vmatpush1.msra.mxu0 0.0
  %141 = vmatprep.subr.mxu0 0.0
  %142 = vmatpush1.msra.mxu0 0.0
  %143 = vmatprep.subr.mxu0 0.0
  %144 = vmatpush1.msra.mxu0 %v68
  %145 = vmatprep.subr.mxu0 0.0
  %146 = vmatpush1.msra.mxu0 %v67
  %147 = vmatprep.subr.mxu0 0.0
  %148 = vmatpush2.msra.mxu0 0.0
  %149 = vmatprep.subr.mxu0 0.0
  %150 = vmatpush2.msra.mxu0 0.0
  %151 = vmatprep.subr.mxu0 0.0
  %152 = vmatpush2.msra.mxu0 0.0
  %153 = vmatprep.subr.mxu0 0.0
  %154 = vmatpush2.msra.mxu0 0.0
  %155 = vmatprep.subr.mxu0 0.0
  %156 = vmatpush2.msra.mxu0 0.0
  %157 = vmatprep.subr.mxu0 0.0
  %158 = vmatpush2.msra.mxu0 0.0
  %159 = vmatprep.subr.mxu0 0.0
  %160 = vmatpush2.msra.mxu0 0.0
  %161 = vmatprep.subr.mxu0 0.0
  %162 = vmatpush2.msra.mxu0 0.0
  %163 = vmatprep.subr.mxu0 0.0
  %164 = vmatpush2.msra.mxu0 0.0
  %165 = vmatprep.subr.mxu0 0.0
  %166 = vmatpush2.msra.mxu0 0.0
  %167 = vmatprep.subr.mxu0 0.0
  %168 = vmatpush2.msra.mxu0 0.0
  %169 = vmatprep.subr.mxu0 0.0
  %170 = vmatpush2.msra.mxu0 0.0
  %171 = vmatprep.subr.mxu0 0.0
  %172 = vmatpush2.msra.mxu0 0.0
  %173 = vmatprep.subr.mxu0 0.0
  %174 = vmatpush2.msra.mxu0 0.0
  %175 = vmatprep.subr.mxu0 0.0
  %176 = vmatpush2.msra.mxu0 0.0
  %177 = vmatprep.subr.mxu0 0.0
  %178 = vmatpush2.msra.mxu0 0.0
  %179 = vmatprep.mubr.f32.mxu0 0.0
  %180 = vmatmul.mubr.f32.gmra.mxu0 %v113
  %v181 = vpop.f32.mrf.mxu0
  %v182 = vadd.f32 %v74, %v181
  %v183 = vpop.f32.mrf.mxu0
  %184 = vdwg.mxu0
  %v185 = vmax.f32 %v182, 0.0
  %v186 = vsub.f32 0.0, %v185
  %v187 = vmul.f32 %v186, 1.442695
  %v188 = vpow.pop %v187
  %v189 = vmul.f32 %v110, %v50
  %v190 = vadd.f32 %v189, %v54
  %v191 = vmax.f32 %v190, 0.0
  %v192 = vsub.f32 0.0, %v191
  %v193 = vmul.f32 %v192, 1.442695
  %v194 = vpow.pop %v193
  %v195 = vmul.f32 %v188, 0.0
  %vm196 = vcmask 261120
  %v198 = vsel %vm196, %v195, 0
  %200 = vmatprep.subr.mxu0 0.0
  %201 = vmatpush1.msra.mxu0 0.0
  %202 = vmatprep.subr.mxu0 0.0
  %203 = vmatpush1.msra.mxu0 0.0
  %204 = vmatprep.subr.mxu0 0.0
  %205 = vmatpush1.msra.mxu0 0.0
  %206 = vmatprep.subr.mxu0 0.0
  %207 = vmatpush1.msra.mxu0 0.0
  %208 = vmatprep.subr.mxu0 0.0
  %209 = vmatpush1.msra.mxu0 0.0
  %210 = vmatprep.subr.mxu0 0.0
  %211 = vmatpush1.msra.mxu0 0.0
  %212 = vmatprep.subr.mxu0 0.0
  %213 = vmatpush1.msra.mxu0 0.0
  %214 = vmatprep.subr.mxu0 0.0
  %215 = vmatpush1.msra.mxu0 0.0
  %216 = vmatprep.subr.mxu0 0.0
  %217 = vmatpush1.msra.mxu0 0.0
  %218 = vmatprep.subr.mxu0 0.0
  %219 = vmatpush1.msra.mxu0 0.0
  %220 = vmatprep.subr.mxu0 0.0
  %221 = vmatpush1.msra.mxu0 0.0
  %222 = vmatprep.subr.mxu0 0.0
  %223 = vmatpush1.msra.mxu0 0.0
  %224 = vmatprep.subr.mxu0 0.0
  %225 = vmatpush1.msra.mxu0 %v79
  %226 = vmatprep.subr.mxu0 0.0
  %227 = vmatpush1.msra.mxu0 %v78
  %228 = vmatprep.subr.mxu0 0.0
  %229 = vmatpush1.msra.mxu0 %v77
  %230 = vmatprep.subr.mxu0 0.0
  %231 = vmatpush1.msra.mxu0 %v76
  %232 = vmatprep.subr.mxu0 0.0
  %233 = vmatpush2.msra.mxu0 0.0
  %234 = vmatprep.subr.mxu0 0.0
  %235 = vmatpush2.msra.mxu0 0.0
  %236 = vmatprep.subr.mxu0 0.0
  %237 = vmatpush2.msra.mxu0 0.0
  %238 = vmatprep.subr.mxu0 0.0
  %239 = vmatpush2.msra.mxu0 0.0
  %240 = vmatprep.subr.mxu0 0.0
  %241 = vmatpush2.msra.mxu0 0.0
  %242 = vmatprep.subr.mxu0 0.0
  %243 = vmatpush2.msra.mxu0 0.0
  %244 = vmatprep.subr.mxu0 0.0
  %245 = vmatpush2.msra.mxu0 0.0
  %246 = vmatprep.subr.mxu0 0.0
  %247 = vmatpush2.msra.mxu0 0.0
  %248 = vmatprep.subr.mxu0 0.0
  %249 = vmatpush2.msra.mxu0 0.0
  %250 = vmatprep.subr.mxu0 0.0
  %251 = vmatpush2.msra.mxu0 0.0
  %252 = vmatprep.subr.mxu0 0.0
  %253 = vmatpush2.msra.mxu0 0.0
  %254 = vmatprep.subr.mxu0 0.0
  %255 = vmatpush2.msra.mxu0 0.0
  %256 = vmatprep.subr.mxu0 0.0
  %257 = vmatpush2.msra.mxu0 0.0
  %258 = vmatprep.subr.mxu0 0.0
  %259 = vmatpush2.msra.mxu0 0.0
  %260 = vmatprep.subr.mxu0 0.0
  %261 = vmatpush2.msra.mxu0 0.0
  %262 = vmatprep.subr.mxu0 0.0
  %263 = vmatpush2.msra.mxu0 0.0
  %264 = vmatprep.mubr.f32.mxu0 0.0
  %265 = vmatmul.mubr.f32.gmra.mxu0 %v198
  %v266 = vpop.f32.mrf.mxu0
  %v267 = vadd.f32 %v58, %v266
  %v268 = vpop.f32.mrf.mxu0
  %269 = vdwg.mxu0
  %v270 = vmul.f32 %v107, %v106
  %v271 = vmul.f32 %v108, %v267
  %v272 = vadd.f32 %v270, %v271
  %v274 = vsel %vm111, %v272, 0
  %276 = vmatprep.subr.mxu0 0.0
  %277 = vmatpush1.msra.mxu0 0.0
  %278 = vmatprep.subr.mxu0 0.0
  %279 = vmatpush1.msra.mxu0 0.0
  %280 = vmatprep.subr.mxu0 0.0
  %281 = vmatpush1.msra.mxu0 0.0
  %282 = vmatprep.subr.mxu0 0.0
  %283 = vmatpush1.msra.mxu0 0.0
  %284 = vmatprep.subr.mxu0 0.0
  %285 = vmatpush1.msra.mxu0 0.0
  %286 = vmatprep.subr.mxu0 0.0
  %287 = vmatpush1.msra.mxu0 0.0
  %288 = vmatprep.subr.mxu0 0.0
  %289 = vmatpush1.msra.mxu0 0.0
  %290 = vmatprep.subr.mxu0 0.0
  %291 = vmatpush1.msra.mxu0 0.0
  %292 = vmatprep.subr.mxu0 0.0
  %293 = vmatpush1.msra.mxu0 0.0
  %294 = vmatprep.subr.mxu0 0.0
  %295 = vmatpush1.msra.mxu0 0.0
  %296 = vmatprep.subr.mxu0 0.0
  %297 = vmatpush1.msra.mxu0 0.0
  %298 = vmatprep.subr.mxu0 0.0
  %299 = vmatpush1.msra.mxu0 0.0
  %300 = vmatprep.subr.mxu0 0.0
  %301 = vmatpush1.msra.mxu0 0.0
  %302 = vmatprep.subr.mxu0 0.0
  %303 = vmatpush1.msra.mxu0 0.0
  %304 = vmatprep.subr.mxu0 0.0
  %305 = vmatpush1.msra.mxu0 %v81
  %306 = vmatprep.subr.mxu0 0.0
  %307 = vmatpush1.msra.mxu0 %v80
  %308 = vmatprep.subr.mxu0 0.0
  %309 = vmatpush2.msra.mxu0 0.0
  %310 = vmatprep.subr.mxu0 0.0
  %311 = vmatpush2.msra.mxu0 0.0
  %312 = vmatprep.subr.mxu0 0.0
  %313 = vmatpush2.msra.mxu0 0.0
  %314 = vmatprep.subr.mxu0 0.0
  %315 = vmatpush2.msra.mxu0 0.0
  %316 = vmatprep.subr.mxu0 0.0
  %317 = vmatpush2.msra.mxu0 0.0
  %318 = vmatprep.subr.mxu0 0.0
  %319 = vmatpush2.msra.mxu0 0.0
  %320 = vmatprep.subr.mxu0 0.0
  %321 = vmatpush2.msra.mxu0 0.0
  %322 = vmatprep.subr.mxu0 0.0
  %323 = vmatpush2.msra.mxu0 0.0
  %324 = vmatprep.subr.mxu0 0.0
  %325 = vmatpush2.msra.mxu0 0.0
  %326 = vmatprep.subr.mxu0 0.0
  %327 = vmatpush2.msra.mxu0 0.0
  %328 = vmatprep.subr.mxu0 0.0
  %329 = vmatpush2.msra.mxu0 0.0
  %330 = vmatprep.subr.mxu0 0.0
  %331 = vmatpush2.msra.mxu0 0.0
  %332 = vmatprep.subr.mxu0 0.0
  %333 = vmatpush2.msra.mxu0 0.0
  %334 = vmatprep.subr.mxu0 0.0
  %335 = vmatpush2.msra.mxu0 0.0
  %336 = vmatprep.subr.mxu0 0.0
  %337 = vmatpush2.msra.mxu0 0.0
  %338 = vmatprep.subr.mxu0 0.0
  %339 = vmatpush2.msra.mxu0 0.0
  %340 = vmatprep.mubr.f32.mxu0 0.0
  %341 = vmatmul.mubr.f32.gmra.mxu0 %v274
  %v342 = vpop.f32.mrf.mxu0
  %v343 = vadd.f32 %v62, %v342
  %v344 = vpop.f32.mrf.mxu0
  %345 = vdwg.mxu0
  %v347 = vsel %vm111, %v107, 0
  %349 = vmatprep.subr.mxu0 0.0
  %350 = vmatpush1.msra.mxu0 0.0
  %351 = vmatprep.subr.mxu0 0.0
  %352 = vmatpush1.msra.mxu0 0.0
  %353 = vmatprep.subr.mxu0 0.0
  %354 = vmatpush1.msra.mxu0 0.0
  %355 = vmatprep.subr.mxu0 0.0
  %356 = vmatpush1.msra.mxu0 0.0
  %357 = vmatprep.subr.mxu0 0.0
  %358 = vmatpush1.msra.mxu0 0.0
  %359 = vmatprep.subr.mxu0 0.0
  %360 = vmatpush1.msra.mxu0 0.0
  %361 = vmatprep.subr.mxu0 0.0
  %362 = vmatpush1.msra.mxu0 0.0
  %363 = vmatprep.subr.mxu0 0.0
  %364 = vmatpush1.msra.mxu0 0.0
  %365 = vmatprep.subr.mxu0 0.0
  %366 = vmatpush1.msra.mxu0 0.0
  %367 = vmatprep.subr.mxu0 0.0
  %368 = vmatpush1.msra.mxu0 0.0
  %369 = vmatprep.subr.mxu0 0.0
  %370 = vmatpush1.msra.mxu0 0.0
  %371 = vmatprep.subr.mxu0 0.0
  %372 = vmatpush1.msra.mxu0 0.0
  %373 = vmatprep.subr.mxu0 0.0
  %374 = vmatpush1.msra.mxu0 0.0
  %375 = vmatprep.subr.mxu0 0.0
  %376 = vmatpush1.msra.mxu0 0.0
  %377 = vmatprep.subr.mxu0 0.0
  %378 = vmatpush1.msra.mxu0 %v85
  %379 = vmatprep.subr.mxu0 0.0
  %380 = vmatpush1.msra.mxu0 %v84
  %381 = vmatprep.subr.mxu0 0.0
  %382 = vmatpush2.msra.mxu0 0.0
  %383 = vmatprep.subr.mxu0 0.0
  %384 = vmatpush2.msra.mxu0 0.0
  %385 = vmatprep.subr.mxu0 0.0
  %386 = vmatpush2.msra.mxu0 0.0
  %387 = vmatprep.subr.mxu0 0.0
  %388 = vmatpush2.msra.mxu0 0.0
  %389 = vmatprep.subr.mxu0 0.0
  %390 = vmatpush2.msra.mxu0 0.0
  %391 = vmatprep.subr.mxu0 0.0
  %392 = vmatpush2.msra.mxu0 0.0
  %393 = vmatprep.subr.mxu0 0.0
  %394 = vmatpush2.msra.mxu0 0.0
  %395 = vmatprep.subr.mxu0 0.0
  %396 = vmatpush2.msra.mxu0 0.0
  %397 = vmatprep.subr.mxu0 0.0
  %398 = vmatpush2.msra.mxu0 0.0
  %399 = vmatprep.subr.mxu0 0.0
  %400 = vmatpush2.msra.mxu0 0.0
  %401 = vmatprep.subr.mxu0 0.0
  %402 = vmatpush2.msra.mxu0 0.0
  %403 = vmatprep.subr.mxu0 0.0
  %404 = vmatpush2.msra.mxu0 0.0
  %405 = vmatprep.subr.mxu0 0.0
  %406 = vmatpush2.msra.mxu0 0.0
  %407 = vmatprep.subr.mxu0 0.0
  %408 = vmatpush2.msra.mxu0 0.0
  %409 = vmatprep.subr.mxu0 0.0
  %410 = vmatpush2.msra.mxu0 0.0
  %411 = vmatprep.subr.mxu0 0.0
  %412 = vmatpush2.msra.mxu0 0.0
  %413 = vmatprep.mubr.f32.mxu0 0.0
  %414 = vmatmul.mubr.f32.gmra.mxu0 %v347
  %v415 = vpop.f32.mrf.mxu0
  %v416 = vadd.f32 0.0, %v415
  %v417 = vpop.f32.mrf.mxu0
  %418 = vdwg.mxu0
  %v420 = vsel %vm111, %v194, 0
  %422 = vmatprep.subr.mxu0 0.0
  %423 = vmatpush1.msra.mxu0 0.0
  %424 = vmatprep.subr.mxu0 0.0
  %425 = vmatpush1.msra.mxu0 0.0
  %426 = vmatprep.subr.mxu0 0.0
  %427 = vmatpush1.msra.mxu0 0.0
  %428 = vmatprep.subr.mxu0 0.0
  %429 = vmatpush1.msra.mxu0 0.0
  %430 = vmatprep.subr.mxu0 0.0
  %431 = vmatpush1.msra.mxu0 0.0
  %432 = vmatprep.subr.mxu0 0.0
  %433 = vmatpush1.msra.mxu0 0.0
  %434 = vmatprep.subr.mxu0 0.0
  %435 = vmatpush1.msra.mxu0 0.0
  %436 = vmatprep.subr.mxu0 0.0
  %437 = vmatpush1.msra.mxu0 0.0
  %438 = vmatprep.subr.mxu0 0.0
  %439 = vmatpush1.msra.mxu0 0.0
  %440 = vmatprep.subr.mxu0 0.0
  %441 = vmatpush1.msra.mxu0 0.0
  %442 = vmatprep.subr.mxu0 0.0
  %443 = vmatpush1.msra.mxu0 0.0
  %444 = vmatprep.subr.mxu0 0.0
  %445 = vmatpush1.msra.mxu0 0.0
  %446 = vmatprep.subr.mxu0 0.0
  %447 = vmatpush1.msra.mxu0 0.0
  %448 = vmatprep.subr.mxu0 0.0
  %449 = vmatpush1.msra.mxu0 0.0
  %450 = vmatprep.subr.mxu0 0.0
  %451 = vmatpush1.msra.mxu0 %v83
  %452 = vmatprep.subr.mxu0 0.0
  %453 = vmatpush1.msra.mxu0 %v82
  %454 = vmatprep.subr.mxu0 0.0
  %455 = vmatpush2.msra.mxu0 0.0
  %456 = vmatprep.subr.mxu0 0.0
  %457 = vmatpush2.msra.mxu0 0.0
  %458 = vmatprep.subr.mxu0 0.0
  %459 = vmatpush2.msra.mxu0 0.0
  %460 = vmatprep.subr.mxu0 0.0
  %461 = vmatpush2.msra.mxu0 0.0
  %462 = vmatprep.subr.mxu0 0.0
  %463 = vmatpush2.msra.mxu0 0.0
  %464 = vmatprep.subr.mxu0 0.0
  %465 = vmatpush2.msra.mxu0 0.0
  %466 = vmatprep.subr.mxu0 0.0
  %467 = vmatpush2.msra.mxu0 0.0
  %468 = vmatprep.subr.mxu0 0.0
  %469 = vmatpush2.msra.mxu0 0.0
  %470 = vmatprep.subr.mxu0 0.0
  %471 = vmatpush2.msra.mxu0 0.0
  %472 = vmatprep.subr.mxu0 0.0
  %473 = vmatpush2.msra.mxu0 0.0
  %474 = vmatprep.subr.mxu0 0.0
  %475 = vmatpush2.msra.mxu0 0.0
  %476 = vmatprep.subr.mxu0 0.0
  %477 = vmatpush2.msra.mxu0 0.0
  %478 = vmatprep.subr.mxu0 0.0
  %479 = vmatpush2.msra.mxu0 0.0
  %480 = vmatprep.subr.mxu0 0.0
  %481 = vmatpush2.msra.mxu0 0.0
  %482 = vmatprep.subr.mxu0 0.0
  %483 = vmatpush2.msra.mxu0 0.0
  %484 = vmatprep.subr.mxu0 0.0
  %485 = vmatpush2.msra.mxu0 0.0
  %486 = vmatprep.mubr.f32.mxu0 0.0
  %487 = vmatmul.mubr.f32.gmra.mxu0 %v420
  %v488 = vpop.f32.mrf.mxu0
  %v489 = vadd.f32 %v416, %v488
  %v490 = vpop.f32.mrf.mxu0
  %491 = vdwg.mxu0
  %v492 = vadd.f32 %v489, %v66
  %v493 = vmul.f32 %v492, %v343
  %v494 = vsub.f32 1.0, %v492
  %v495 = vmul.f32 %v494, %v267
  %v496 = vadd.f32 %v493, %v495
  %v497 = vsub.f32 %v106, %v267
  %v498 = vand.u32 2147483647, %v497
  %v499 = vsub.f32 %v106, %v343
  %v500 = vand.u32 2147483647, %v499
  %v501 = vadd.f32 %v498, %v500
  %v502 = vsub.f32 %v106, %v496
  %v503 = vand.u32 2147483647, %v502
  %v504 = vadd.f32 %v501, %v503
  %v505 = vmul.f32 %v504, %v107
  %v506 = vsel %vm111, %v505, 0.0
  %507 = vadd.xlane.f32.xlu0 %v506
  %v508 = vpop.xlane.xlu0 %507
  %v509 = vadd.f32 %v508, 0.0
  %v510 = vmul.f32 %v108, %v496
  %v511 = vadd.f32 %v270, %v510
  %512 = vmatprep.subr.mxu0 0.0
  %513 = vmatpush1.msra.mxu0 0.0
  %514 = vmatprep.subr.mxu0 0.0
  %515 = vmatpush1.msra.mxu0 0.0
  %516 = vmatprep.subr.mxu0 0.0
  %517 = vmatpush1.msra.mxu0 0.0
  %518 = vmatprep.subr.mxu0 0.0
  %519 = vmatpush1.msra.mxu0 0.0
  %520 = vmatprep.subr.mxu0 0.0
  %521 = vmatpush1.msra.mxu0 0.0
  %522 = vmatprep.subr.mxu0 0.0
  %523 = vmatpush1.msra.mxu0 0.0
  %524 = vmatprep.subr.mxu0 0.0
  %525 = vmatpush1.msra.mxu0 0.0
  %526 = vmatprep.subr.mxu0 0.0
  %527 = vmatpush1.msra.mxu0 0.0
  %528 = vmatprep.subr.mxu0 0.0
  %529 = vmatpush1.msra.mxu0 0.0
  %530 = vmatprep.subr.mxu0 0.0
  %531 = vmatpush1.msra.mxu0 0.0
  %532 = vmatprep.subr.mxu0 0.0
  %533 = vmatpush1.msra.mxu0 0.0
  %534 = vmatprep.subr.mxu0 0.0
  %535 = vmatpush1.msra.mxu0 0.0
  %536 = vmatprep.subr.mxu0 0.0
  %537 = vmatpush1.msra.mxu0 0.0
  %538 = vmatprep.subr.mxu0 0.0
  %539 = vmatpush1.msra.mxu0 0.0
  %540 = vmatprep.subr.mxu0 0.0
  %541 = vmatpush1.msra.mxu0 %v89
  %542 = vmatprep.subr.mxu0 0.0
  %543 = vmatpush1.msra.mxu0 %v88
  %544 = vmatprep.subr.mxu0 0.0
  %545 = vmatpush2.msra.mxu0 0.0
  %546 = vmatprep.subr.mxu0 0.0
  %547 = vmatpush2.msra.mxu0 0.0
  %548 = vmatprep.subr.mxu0 0.0
  %549 = vmatpush2.msra.mxu0 0.0
  %550 = vmatprep.subr.mxu0 0.0
  %551 = vmatpush2.msra.mxu0 0.0
  %552 = vmatprep.subr.mxu0 0.0
  %553 = vmatpush2.msra.mxu0 0.0
  %554 = vmatprep.subr.mxu0 0.0
  %555 = vmatpush2.msra.mxu0 0.0
  %556 = vmatprep.subr.mxu0 0.0
  %557 = vmatpush2.msra.mxu0 0.0
  %558 = vmatprep.subr.mxu0 0.0
  %559 = vmatpush2.msra.mxu0 0.0
  %560 = vmatprep.subr.mxu0 0.0
  %561 = vmatpush2.msra.mxu0 0.0
  %562 = vmatprep.subr.mxu0 0.0
  %563 = vmatpush2.msra.mxu0 0.0
  %564 = vmatprep.subr.mxu0 0.0
  %565 = vmatpush2.msra.mxu0 0.0
  %566 = vmatprep.subr.mxu0 0.0
  %567 = vmatpush2.msra.mxu0 0.0
  %568 = vmatprep.subr.mxu0 0.0
  %569 = vmatpush2.msra.mxu0 0.0
  %570 = vmatprep.subr.mxu0 0.0
  %571 = vmatpush2.msra.mxu0 0.0
  %572 = vmatprep.subr.mxu0 0.0
  %573 = vmatpush2.msra.mxu0 0.0
  %574 = vmatprep.subr.mxu0 0.0
  %575 = vmatpush2.msra.mxu0 0.0
  %576 = vmatprep.mubr.f32.mxu0 0.0
  %577 = vmatmul.mubr.f32.gmra.mxu0 %v347
  %v578 = vpop.f32.mrf.mxu0
  %v579 = vadd.f32 0.0, %v578
  %v580 = vpop.f32.mrf.mxu0
  %581 = vdwg.mxu0
  %v583 = vsel %vm111, %v511, 0
  %585 = vmatprep.subr.mxu0 0.0
  %586 = vmatpush1.msra.mxu0 0.0
  %587 = vmatprep.subr.mxu0 0.0
  %588 = vmatpush1.msra.mxu0 0.0
  %589 = vmatprep.subr.mxu0 0.0
  %590 = vmatpush1.msra.mxu0 0.0
  %591 = vmatprep.subr.mxu0 0.0
  %592 = vmatpush1.msra.mxu0 0.0
  %593 = vmatprep.subr.mxu0 0.0
  %594 = vmatpush1.msra.mxu0 0.0
  %595 = vmatprep.subr.mxu0 0.0
  %596 = vmatpush1.msra.mxu0 0.0
  %597 = vmatprep.subr.mxu0 0.0
  %598 = vmatpush1.msra.mxu0 0.0
  %599 = vmatprep.subr.mxu0 0.0
  %600 = vmatpush1.msra.mxu0 0.0
  %601 = vmatprep.subr.mxu0 0.0
  %602 = vmatpush1.msra.mxu0 0.0
  %603 = vmatprep.subr.mxu0 0.0
  %604 = vmatpush1.msra.mxu0 0.0
  %605 = vmatprep.subr.mxu0 0.0
  %606 = vmatpush1.msra.mxu0 0.0
  %607 = vmatprep.subr.mxu0 0.0
  %608 = vmatpush1.msra.mxu0 0.0
  %609 = vmatprep.subr.mxu0 0.0
  %610 = vmatpush1.msra.mxu0 0.0
  %611 = vmatprep.subr.mxu0 0.0
  %612 = vmatpush1.msra.mxu0 0.0
  %613 = vmatprep.subr.mxu0 0.0
  %614 = vmatpush1.msra.mxu0 %v87
  %615 = vmatprep.subr.mxu0 0.0
  %616 = vmatpush1.msra.mxu0 %v86
  %617 = vmatprep.subr.mxu0 0.0
  %618 = vmatpush2.msra.mxu0 0.0
  %619 = vmatprep.subr.mxu0 0.0
  %620 = vmatpush2.msra.mxu0 0.0
  %621 = vmatprep.subr.mxu0 0.0
  %622 = vmatpush2.msra.mxu0 0.0
  %623 = vmatprep.subr.mxu0 0.0
  %624 = vmatpush2.msra.mxu0 0.0
  %625 = vmatprep.subr.mxu0 0.0
  %626 = vmatpush2.msra.mxu0 0.0
  %627 = vmatprep.subr.mxu0 0.0
  %628 = vmatpush2.msra.mxu0 0.0
  %629 = vmatprep.subr.mxu0 0.0
  %630 = vmatpush2.msra.mxu0 0.0
  %631 = vmatprep.subr.mxu0 0.0
  %632 = vmatpush2.msra.mxu0 0.0
  %633 = vmatprep.subr.mxu0 0.0
  %634 = vmatpush2.msra.mxu0 0.0
  %635 = vmatprep.subr.mxu0 0.0
  %636 = vmatpush2.msra.mxu0 0.0
  %637 = vmatprep.subr.mxu0 0.0
  %638 = vmatpush2.msra.mxu0 0.0
  %639 = vmatprep.subr.mxu0 0.0
  %640 = vmatpush2.msra.mxu0 0.0
  %641 = vmatprep.subr.mxu0 0.0
  %642 = vmatpush2.msra.mxu0 0.0
  %643 = vmatprep.subr.mxu0 0.0
  %644 = vmatpush2.msra.mxu0 0.0
  %645 = vmatprep.subr.mxu0 0.0
  %646 = vmatpush2.msra.mxu0 0.0
  %647 = vmatprep.subr.mxu0 0.0
  %648 = vmatpush2.msra.mxu0 0.0
  %649 = vmatprep.mubr.f32.mxu0 0.0
  %650 = vmatmul.mubr.f32.gmra.mxu0 %v583
  %v651 = vpop.f32.mrf.mxu0
  %v652 = vadd.f32 %v579, %v651
  %v653 = vpop.f32.mrf.mxu0
  %654 = vdwg.mxu0
  %655 = vmatprep.subr.mxu0 0.0
  %656 = vmatpush1.msra.mxu0 0.0
  %657 = vmatprep.subr.mxu0 0.0
  %658 = vmatpush1.msra.mxu0 0.0
  %659 = vmatprep.subr.mxu0 0.0
  %660 = vmatpush1.msra.mxu0 0.0
  %661 = vmatprep.subr.mxu0 0.0
  %662 = vmatpush1.msra.mxu0 0.0
  %663 = vmatprep.subr.mxu0 0.0
  %664 = vmatpush1.msra.mxu0 0.0
  %665 = vmatprep.subr.mxu0 0.0
  %666 = vmatpush1.msra.mxu0 0.0
  %667 = vmatprep.subr.mxu0 0.0
  %668 = vmatpush1.msra.mxu0 0.0
  %669 = vmatprep.subr.mxu0 0.0
  %670 = vmatpush1.msra.mxu0 0.0
  %671 = vmatprep.subr.mxu0 0.0
  %672 = vmatpush1.msra.mxu0 0.0
  %673 = vmatprep.subr.mxu0 0.0
  %674 = vmatpush1.msra.mxu0 0.0
  %675 = vmatprep.subr.mxu0 0.0
  %676 = vmatpush1.msra.mxu0 0.0
  %677 = vmatprep.subr.mxu0 0.0
  %678 = vmatpush1.msra.mxu0 0.0
  %679 = vmatprep.subr.mxu0 0.0
  %680 = vmatpush1.msra.mxu0 %v93
  %681 = vmatprep.subr.mxu0 0.0
  %682 = vmatpush1.msra.mxu0 %v92
  %683 = vmatprep.subr.mxu0 0.0
  %684 = vmatpush1.msra.mxu0 %v91
  %685 = vmatprep.subr.mxu0 0.0
  %686 = vmatpush1.msra.mxu0 %v90
  %687 = vmatprep.subr.mxu0 0.0
  %688 = vmatpush2.msra.mxu0 0.0
  %689 = vmatprep.subr.mxu0 0.0
  %690 = vmatpush2.msra.mxu0 0.0
  %691 = vmatprep.subr.mxu0 0.0
  %692 = vmatpush2.msra.mxu0 0.0
  %693 = vmatprep.subr.mxu0 0.0
  %694 = vmatpush2.msra.mxu0 0.0
  %695 = vmatprep.subr.mxu0 0.0
  %696 = vmatpush2.msra.mxu0 0.0
  %697 = vmatprep.subr.mxu0 0.0
  %698 = vmatpush2.msra.mxu0 0.0
  %699 = vmatprep.subr.mxu0 0.0
  %700 = vmatpush2.msra.mxu0 0.0
  %701 = vmatprep.subr.mxu0 0.0
  %702 = vmatpush2.msra.mxu0 0.0
  %703 = vmatprep.subr.mxu0 0.0
  %704 = vmatpush2.msra.mxu0 0.0
  %705 = vmatprep.subr.mxu0 0.0
  %706 = vmatpush2.msra.mxu0 0.0
  %707 = vmatprep.subr.mxu0 0.0
  %708 = vmatpush2.msra.mxu0 0.0
  %709 = vmatprep.subr.mxu0 0.0
  %710 = vmatpush2.msra.mxu0 0.0
  %711 = vmatprep.subr.mxu0 0.0
  %712 = vmatpush2.msra.mxu0 0.0
  %713 = vmatprep.subr.mxu0 0.0
  %714 = vmatpush2.msra.mxu0 0.0
  %715 = vmatprep.subr.mxu0 0.0
  %716 = vmatpush2.msra.mxu0 0.0
  %717 = vmatprep.subr.mxu0 0.0
  %718 = vmatpush2.msra.mxu0 0.0
  %719 = vmatprep.mubr.f32.mxu0 0.0
  %720 = vmatmul.mubr.f32.gmra.mxu0 %v198
  %v721 = vpop.f32.mrf.mxu0
  %v722 = vadd.f32 0.0, %v721
  %v723 = vpop.f32.mrf.mxu0
  %724 = vdwg.mxu0
  %v725 = vadd.f32 %v652, %v722
  %v726 = vadd.f32 %v725, %v99
  %v727 = vtanh.pop %v726
  %v728 = vxor.u32 %v726, 2147483648
  %v729 = vmul.f32 %v728, 1.442695
  %v730 = vpow.pop %v729
  %v731 = vadd.f32 %v730, 1.0
  %v732 = vrcp.pop %v731
  %v733 = vmul.f32 1.0, %v732
  %v734 = vsel %vm105, %v727, %v733
  %v735 = vmul.f32 %v734, 0.0
  %737 = vrot.lane.b32.xlu0 %v734, 64
  %v738 = vpop.permute.xlu0 %737
  %v740 = vmul.f32 %v734, %v738
  %742 = vrot.lane.b32.xlu0 %v740, 32
  %v743 = vpop.permute.xlu0 %742
  %v745 = vadd.f32 %v735, %v743
  %v746 = vtanh.pop %v745
  %748 = vrot.lane.b32.xlu0 %v746, 64
  %v749 = vpop.permute.xlu0 %748
  %v751 = vmul.f32 %v734, %v749
  %752 = vst.msk [vmem:[%s13] sm:$0xff] %vm111, %v511
  %s753 = scalar_lea.vmem %s0, 8
  %v754 = vld [vmem:[%s753] sm:$0xff]
  %s755 = scalar_lea.vmem %s1, 8
  %v756 = vld [vmem:[%s755] sm:$0xff]
  %v757 = vsub.f32 1.0, %v756
  %v758 = vmul.f32 %v757, %v110
  %v759 = vadd.f32 %v758, 1.0
  %v761 = vsel %vm111, %v759, 0
  %763 = vmatprep.subr.mxu0 0.0
  %764 = vmatpush1.msra.mxu0 0.0
  %765 = vmatprep.subr.mxu0 0.0
  %766 = vmatpush1.msra.mxu0 0.0
  %767 = vmatprep.subr.mxu0 0.0
  %768 = vmatpush1.msra.mxu0 0.0
  %769 = vmatprep.subr.mxu0 0.0
  %770 = vmatpush1.msra.mxu0 0.0
  %771 = vmatprep.subr.mxu0 0.0
  %772 = vmatpush1.msra.mxu0 0.0
  %773 = vmatprep.subr.mxu0 0.0
  %774 = vmatpush1.msra.mxu0 0.0
  %775 = vmatprep.subr.mxu0 0.0
  %776 = vmatpush1.msra.mxu0 0.0
  %777 = vmatprep.subr.mxu0 0.0
  %778 = vmatpush1.msra.mxu0 0.0
  %779 = vmatprep.subr.mxu0 0.0
  %780 = vmatpush1.msra.mxu0 0.0
  %781 = vmatprep.subr.mxu0 0.0
  %782 = vmatpush1.msra.mxu0 0.0
  %783 = vmatprep.subr.mxu0 0.0
  %784 = vmatpush1.msra.mxu0 0.0
  %785 = vmatprep.subr.mxu0 0.0
  %786 = vmatpush1.msra.mxu0 0.0
  %787 = vmatprep.subr.mxu0 0.0
  %788 = vmatpush1.msra.mxu0 0.0
  %789 = vmatprep.subr.mxu0 0.0
  %790 = vmatpush1.msra.mxu0 0.0
  %791 = vmatprep.subr.mxu0 0.0
  %792 = vmatpush1.msra.mxu0 %v68
  %793 = vmatprep.subr.mxu0 0.0
  %794 = vmatpush1.msra.mxu0 %v67
  %795 = vmatprep.subr.mxu0 0.0
  %796 = vmatpush2.msra.mxu0 0.0
  %797 = vmatprep.subr.mxu0 0.0
  %798 = vmatpush2.msra.mxu0 0.0
  %799 = vmatprep.subr.mxu0 0.0
  %800 = vmatpush2.msra.mxu0 0.0
  %801 = vmatprep.subr.mxu0 0.0
  %802 = vmatpush2.msra.mxu0 0.0
  %803 = vmatprep.subr.mxu0 0.0
  %804 = vmatpush2.msra.mxu0 0.0
  %805 = vmatprep.subr.mxu0 0.0
  %806 = vmatpush2.msra.mxu0 0.0
  %807 = vmatprep.subr.mxu0 0.0
  %808 = vmatpush2.msra.mxu0 0.0
  %809 = vmatprep.subr.mxu0 0.0
  %810 = vmatpush2.msra.mxu0 0.0
  %811 = vmatprep.subr.mxu0 0.0
  %812 = vmatpush2.msra.mxu0 0.0
  %813 = vmatprep.subr.mxu0 0.0
  %814 = vmatpush2.msra.mxu0 0.0
  %815 = vmatprep.subr.mxu0 0.0
  %816 = vmatpush2.msra.mxu0 0.0
  %817 = vmatprep.subr.mxu0 0.0
  %818 = vmatpush2.msra.mxu0 0.0
  %819 = vmatprep.subr.mxu0 0.0
  %820 = vmatpush2.msra.mxu0 0.0
  %821 = vmatprep.subr.mxu0 0.0
  %822 = vmatpush2.msra.mxu0 0.0
  %823 = vmatprep.subr.mxu0 0.0
  %824 = vmatpush2.msra.mxu0 0.0
  %825 = vmatprep.subr.mxu0 0.0
  %826 = vmatpush2.msra.mxu0 0.0
  %827 = vmatprep.mubr.f32.mxu0 0.0
  %828 = vmatmul.mubr.f32.gmra.mxu0 %v761
  %v829 = vpop.f32.mrf.mxu0
  %v830 = vadd.f32 %v74, %v829
  %v831 = vpop.f32.mrf.mxu0
  %832 = vdwg.mxu0
  %v833 = vmax.f32 %v830, 0.0
  %v834 = vsub.f32 0.0, %v833
  %v835 = vmul.f32 %v834, 1.442695
  %v836 = vpow.pop %v835
  %v837 = vmul.f32 %v759, %v50
  %v838 = vadd.f32 %v837, %v54
  %v839 = vmax.f32 %v838, 0.0
  %v840 = vsub.f32 0.0, %v839
  %v841 = vmul.f32 %v840, 1.442695
  %v842 = vpow.pop %v841
  %844 = vrot.lane.b32.xlu0 %v836, 96
  %v845 = vpop.permute.xlu0 %844
  %v847 = vmul.f32 %v751, %v845
  %849 = vrot.lane.b32.xlu0 %v847, 32
  %v850 = vpop.permute.xlu0 %849
  %v851 = vsel %vm196, %v850, 0
  %853 = vmatprep.subr.mxu0 0.0
  %854 = vmatpush1.msra.mxu0 0.0
  %855 = vmatprep.subr.mxu0 0.0
  %856 = vmatpush1.msra.mxu0 0.0
  %857 = vmatprep.subr.mxu0 0.0
  %858 = vmatpush1.msra.mxu0 0.0
  %859 = vmatprep.subr.mxu0 0.0
  %860 = vmatpush1.msra.mxu0 0.0
  %861 = vmatprep.subr.mxu0 0.0
  %862 = vmatpush1.msra.mxu0 0.0
  %863 = vmatprep.subr.mxu0 0.0
  %864 = vmatpush1.msra.mxu0 0.0
  %865 = vmatprep.subr.mxu0 0.0
  %866 = vmatpush1.msra.mxu0 0.0
  %867 = vmatprep.subr.mxu0 0.0
  %868 = vmatpush1.msra.mxu0 0.0
  %869 = vmatprep.subr.mxu0 0.0
  %870 = vmatpush1.msra.mxu0 0.0
  %871 = vmatprep.subr.mxu0 0.0
  %872 = vmatpush1.msra.mxu0 0.0
  %873 = vmatprep.subr.mxu0 0.0
  %874 = vmatpush1.msra.mxu0 0.0
  %875 = vmatprep.subr.mxu0 0.0
  %876 = vmatpush1.msra.mxu0 0.0
  %877 = vmatprep.subr.mxu0 0.0
  %878 = vmatpush1.msra.mxu0 %v79
  %879 = vmatprep.subr.mxu0 0.0
  %880 = vmatpush1.msra.mxu0 %v78
  %881 = vmatprep.subr.mxu0 0.0
  %882 = vmatpush1.msra.mxu0 %v77
  %883 = vmatprep.subr.mxu0 0.0
  %884 = vmatpush1.msra.mxu0 %v76
  %885 = vmatprep.subr.mxu0 0.0
  %886 = vmatpush2.msra.mxu0 0.0
  %887 = vmatprep.subr.mxu0 0.0
  %888 = vmatpush2.msra.mxu0 0.0
  %889 = vmatprep.subr.mxu0 0.0
  %890 = vmatpush2.msra.mxu0 0.0
  %891 = vmatprep.subr.mxu0 0.0
  %892 = vmatpush2.msra.mxu0 0.0
  %893 = vmatprep.subr.mxu0 0.0
  %894 = vmatpush2.msra.mxu0 0.0
  %895 = vmatprep.subr.mxu0 0.0
  %896 = vmatpush2.msra.mxu0 0.0
  %897 = vmatprep.subr.mxu0 0.0
  %898 = vmatpush2.msra.mxu0 0.0
  %899 = vmatprep.subr.mxu0 0.0
  %900 = vmatpush2.msra.mxu0 0.0
  %901 = vmatprep.subr.mxu0 0.0
  %902 = vmatpush2.msra.mxu0 0.0
  %903 = vmatprep.subr.mxu0 0.0
  %904 = vmatpush2.msra.mxu0 0.0
  %905 = vmatprep.subr.mxu0 0.0
  %906 = vmatpush2.msra.mxu0 0.0
  %907 = vmatprep.subr.mxu0 0.0
  %908 = vmatpush2.msra.mxu0 0.0
  %909 = vmatprep.subr.mxu0 0.0
  %910 = vmatpush2.msra.mxu0 0.0
  %911 = vmatprep.subr.mxu0 0.0
  %912 = vmatpush2.msra.mxu0 0.0
  %913 = vmatprep.subr.mxu0 0.0
  %914 = vmatpush2.msra.mxu0 0.0
  %915 = vmatprep.subr.mxu0 0.0
  %916 = vmatpush2.msra.mxu0 0.0
  %917 = vmatprep.mubr.f32.mxu0 0.0
  %918 = vmatmul.mubr.f32.gmra.mxu0 %v851
  %v919 = vpop.f32.mrf.mxu0
  %v920 = vadd.f32 %v58, %v919
  %v921 = vpop.f32.mrf.mxu0
  %922 = vdwg.mxu0
  %v923 = vmul.f32 %v756, %v754
  %v924 = vmul.f32 %v757, %v920
  %v925 = vadd.f32 %v923, %v924
  %v927 = vsel %vm111, %v925, 0
  %929 = vmatprep.subr.mxu0 0.0
  %930 = vmatpush1.msra.mxu0 0.0
  %931 = vmatprep.subr.mxu0 0.0
  %932 = vmatpush1.msra.mxu0 0.0
  %933 = vmatprep.subr.mxu0 0.0
  %934 = vmatpush1.msra.mxu0 0.0
  %935 = vmatprep.subr.mxu0 0.0
  %936 = vmatpush1.msra.mxu0 0.0
  %937 = vmatprep.subr.mxu0 0.0
  %938 = vmatpush1.msra.mxu0 0.0
  %939 = vmatprep.subr.mxu0 0.0
  %940 = vmatpush1.msra.mxu0 0.0
  %941 = vmatprep.subr.mxu0 0.0
  %942 = vmatpush1.msra.mxu0 0.0
  %943 = vmatprep.subr.mxu0 0.0
  %944 = vmatpush1.msra.mxu0 0.0
  %945 = vmatprep.subr.mxu0 0.0
  %946 = vmatpush1.msra.mxu0 0.0
  %947 = vmatprep.subr.mxu0 0.0
  %948 = vmatpush1.msra.mxu0 0.0
  %949 = vmatprep.subr.mxu0 0.0
  %950 = vmatpush1.msra.mxu0 0.0
  %951 = vmatprep.subr.mxu0 0.0
  %952 = vmatpush1.msra.mxu0 0.0
  %953 = vmatprep.subr.mxu0 0.0
  %954 = vmatpush1.msra.mxu0 0.0
  %955 = vmatprep.subr.mxu0 0.0
  %956 = vmatpush1.msra.mxu0 0.0
  %957 = vmatprep.subr.mxu0 0.0
  %958 = vmatpush1.msra.mxu0 %v81
  %959 = vmatprep.subr.mxu0 0.0
  %960 = vmatpush1.msra.mxu0 %v80
  %961 = vmatprep.subr.mxu0 0.0
  %962 = vmatpush2.msra.mxu0 0.0
  %963 = vmatprep.subr.mxu0 0.0
  %964 = vmatpush2.msra.mxu0 0.0
  %965 = vmatprep.subr.mxu0 0.0
  %966 = vmatpush2.msra.mxu0 0.0
  %967 = vmatprep.subr.mxu0 0.0
  %968 = vmatpush2.msra.mxu0 0.0
  %969 = vmatprep.subr.mxu0 0.0
  %970 = vmatpush2.msra.mxu0 0.0
  %971 = vmatprep.subr.mxu0 0.0
  %972 = vmatpush2.msra.mxu0 0.0
  %973 = vmatprep.subr.mxu0 0.0
  %974 = vmatpush2.msra.mxu0 0.0
  %975 = vmatprep.subr.mxu0 0.0
  %976 = vmatpush2.msra.mxu0 0.0
  %977 = vmatprep.subr.mxu0 0.0
  %978 = vmatpush2.msra.mxu0 0.0
  %979 = vmatprep.subr.mxu0 0.0
  %980 = vmatpush2.msra.mxu0 0.0
  %981 = vmatprep.subr.mxu0 0.0
  %982 = vmatpush2.msra.mxu0 0.0
  %983 = vmatprep.subr.mxu0 0.0
  %984 = vmatpush2.msra.mxu0 0.0
  %985 = vmatprep.subr.mxu0 0.0
  %986 = vmatpush2.msra.mxu0 0.0
  %987 = vmatprep.subr.mxu0 0.0
  %988 = vmatpush2.msra.mxu0 0.0
  %989 = vmatprep.subr.mxu0 0.0
  %990 = vmatpush2.msra.mxu0 0.0
  %991 = vmatprep.subr.mxu0 0.0
  %992 = vmatpush2.msra.mxu0 0.0
  %993 = vmatprep.mubr.f32.mxu0 0.0
  %994 = vmatmul.mubr.f32.gmra.mxu0 %v927
  %v995 = vpop.f32.mrf.mxu0
  %v996 = vadd.f32 %v62, %v995
  %v997 = vpop.f32.mrf.mxu0
  %998 = vdwg.mxu0
  %v1000 = vsel %vm111, %v756, 0
  %1002 = vmatprep.subr.mxu0 0.0
  %1003 = vmatpush1.msra.mxu0 0.0
  %1004 = vmatprep.subr.mxu0 0.0
  %1005 = vmatpush1.msra.mxu0 0.0
  %1006 = vmatprep.subr.mxu0 0.0
  %1007 = vmatpush1.msra.mxu0 0.0
  %1008 = vmatprep.subr.mxu0 0.0
  %1009 = vmatpush1.msra.mxu0 0.0
  %1010 = vmatprep.subr.mxu0 0.0
  %1011 = vmatpush1.msra.mxu0 0.0
  %1012 = vmatprep.subr.mxu0 0.0
  %1013 = vmatpush1.msra.mxu0 0.0
  %1014 = vmatprep.subr.mxu0 0.0
  %1015 = vmatpush1.msra.mxu0 0.0
  %1016 = vmatprep.subr.mxu0 0.0
  %1017 = vmatpush1.msra.mxu0 0.0
  %1018 = vmatprep.subr.mxu0 0.0
  %1019 = vmatpush1.msra.mxu0 0.0
  %1020 = vmatprep.subr.mxu0 0.0
  %1021 = vmatpush1.msra.mxu0 0.0
  %1022 = vmatprep.subr.mxu0 0.0
  %1023 = vmatpush1.msra.mxu0 0.0
  %1024 = vmatprep.subr.mxu0 0.0
  %1025 = vmatpush1.msra.mxu0 0.0
  %1026 = vmatprep.subr.mxu0 0.0
  %1027 = vmatpush1.msra.mxu0 0.0
  %1028 = vmatprep.subr.mxu0 0.0
  %1029 = vmatpush1.msra.mxu0 0.0
  %1030 = vmatprep.subr.mxu0 0.0
  %1031 = vmatpush1.msra.mxu0 %v85
  %1032 = vmatprep.subr.mxu0 0.0
  %1033 = vmatpush1.msra.mxu0 %v84
  %1034 = vmatprep.subr.mxu0 0.0
  %1035 = vmatpush2.msra.mxu0 0.0
  %1036 = vmatprep.subr.mxu0 0.0
  %1037 = vmatpush2.msra.mxu0 0.0
  %1038 = vmatprep.subr.mxu0 0.0
  %1039 = vmatpush2.msra.mxu0 0.0
  %1040 = vmatprep.subr.mxu0 0.0
  %1041 = vmatpush2.msra.mxu0 0.0
  %1042 = vmatprep.subr.mxu0 0.0
  %1043 = vmatpush2.msra.mxu0 0.0
  %1044 = vmatprep.subr.mxu0 0.0
  %1045 = vmatpush2.msra.mxu0 0.0
  %1046 = vmatprep.subr.mxu0 0.0
  %1047 = vmatpush2.msra.mxu0 0.0
  %1048 = vmatprep.subr.mxu0 0.0
  %1049 = vmatpush2.msra.mxu0 0.0
  %1050 = vmatprep.subr.mxu0 0.0
  %1051 = vmatpush2.msra.mxu0 0.0
  %1052 = vmatprep.subr.mxu0 0.0
  %1053 = vmatpush2.msra.mxu0 0.0
  %1054 = vmatprep.subr.mxu0 0.0
  %1055 = vmatpush2.msra.mxu0 0.0
  %1056 = vmatprep.subr.mxu0 0.0
  %1057 = vmatpush2.msra.mxu0 0.0
  %1058 = vmatprep.subr.mxu0 0.0
  %1059 = vmatpush2.msra.mxu0 0.0
  %1060 = vmatprep.subr.mxu0 0.0
  %1061 = vmatpush2.msra.mxu0 0.0
  %1062 = vmatprep.subr.mxu0 0.0
  %1063 = vmatpush2.msra.mxu0 0.0
  %1064 = vmatprep.subr.mxu0 0.0
  %1065 = vmatpush2.msra.mxu0 0.0
  %1066 = vmatprep.mubr.f32.mxu0 0.0
  %1067 = vmatmul.mubr.f32.gmra.mxu0 %v1000
  %v1068 = vpop.f32.mrf.mxu0
  %v1069 = vadd.f32 0.0, %v1068
  %v1070 = vpop.f32.mrf.mxu0
  %1071 = vdwg.mxu0
  %v1073 = vsel %vm111, %v842, 0
  %1075 = vmatprep.subr.mxu0 0.0
  %1076 = vmatpush1.msra.mxu0 0.0
  %1077 = vmatprep.subr.mxu0 0.0
  %1078 = vmatpush1.msra.mxu0 0.0
  %1079 = vmatprep.subr.mxu0 0.0
  %1080 = vmatpush1.msra.mxu0 0.0
  %1081 = vmatprep.subr.mxu0 0.0
  %1082 = vmatpush1.msra.mxu0 0.0
  %1083 = vmatprep.subr.mxu0 0.0
  %1084 = vmatpush1.msra.mxu0 0.0
  %1085 = vmatprep.subr.mxu0 0.0
  %1086 = vmatpush1.msra.mxu0 0.0
  %1087 = vmatprep.subr.mxu0 0.0
  %1088 = vmatpush1.msra.mxu0 0.0
  %1089 = vmatprep.subr.mxu0 0.0
  %1090 = vmatpush1.msra.mxu0 0.0
  %1091 = vmatprep.subr.mxu0 0.0
  %1092 = vmatpush1.msra.mxu0 0.0
  %1093 = vmatprep.subr.mxu0 0.0
  %1094 = vmatpush1.msra.mxu0 0.0
  %1095 = vmatprep.subr.mxu0 0.0
  %1096 = vmatpush1.msra.mxu0 0.0
  %1097 = vmatprep.subr.mxu0 0.0
  %1098 = vmatpush1.msra.mxu0 0.0
  %1099 = vmatprep.subr.mxu0 0.0
  %1100 = vmatpush1.msra.mxu0 0.0
  %1101 = vmatprep.subr.mxu0 0.0
  %1102 = vmatpush1.msra.mxu0 0.0
  %1103 = vmatprep.subr.mxu0 0.0
  %1104 = vmatpush1.msra.mxu0 %v83
  %1105 = vmatprep.subr.mxu0 0.0
  %1106 = vmatpush1.msra.mxu0 %v82
  %1107 = vmatprep.subr.mxu0 0.0
  %1108 = vmatpush2.msra.mxu0 0.0
  %1109 = vmatprep.subr.mxu0 0.0
  %1110 = vmatpush2.msra.mxu0 0.0
  %1111 = vmatprep.subr.mxu0 0.0
  %1112 = vmatpush2.msra.mxu0 0.0
  %1113 = vmatprep.subr.mxu0 0.0
  %1114 = vmatpush2.msra.mxu0 0.0
  %1115 = vmatprep.subr.mxu0 0.0
  %1116 = vmatpush2.msra.mxu0 0.0
  %1117 = vmatprep.subr.mxu0 0.0
  %1118 = vmatpush2.msra.mxu0 0.0
  %1119 = vmatprep.subr.mxu0 0.0
  %1120 = vmatpush2.msra.mxu0 0.0
  %1121 = vmatprep.subr.mxu0 0.0
  %1122 = vmatpush2.msra.mxu0 0.0
  %1123 = vmatprep.subr.mxu0 0.0
  %1124 = vmatpush2.msra.mxu0 0.0
  %1125 = vmatprep.subr.mxu0 0.0
  %1126 = vmatpush2.msra.mxu0 0.0
  %1127 = vmatprep.subr.mxu0 0.0
  %1128 = vmatpush2.msra.mxu0 0.0
  %1129 = vmatprep.subr.mxu0 0.0
  %1130 = vmatpush2.msra.mxu0 0.0
  %1131 = vmatprep.subr.mxu0 0.0
  %1132 = vmatpush2.msra.mxu0 0.0
  %1133 = vmatprep.subr.mxu0 0.0
  %1134 = vmatpush2.msra.mxu0 0.0
  %1135 = vmatprep.subr.mxu0 0.0
  %1136 = vmatpush2.msra.mxu0 0.0
  %1137 = vmatprep.subr.mxu0 0.0
  %1138 = vmatpush2.msra.mxu0 0.0
  %1139 = vmatprep.mubr.f32.mxu0 0.0
  %1140 = vmatmul.mubr.f32.gmra.mxu0 %v1073
  %v1141 = vpop.f32.mrf.mxu0
  %v1142 = vadd.f32 %v1069, %v1141
  %v1143 = vpop.f32.mrf.mxu0
  %1144 = vdwg.mxu0
  %v1145 = vadd.f32 %v1142, %v66
  %v1146 = vmul.f32 %v1145, %v996
  %v1147 = vsub.f32 1.0, %v1145
  %v1148 = vmul.f32 %v1147, %v920
  %v1149 = vadd.f32 %v1146, %v1148
  %v1150 = vsub.f32 %v754, %v920
  %v1151 = vand.u32 2147483647, %v1150
  %v1152 = vsub.f32 %v754, %v996
  %v1153 = vand.u32 2147483647, %v1152
  %v1154 = vadd.f32 %v1151, %v1153
  %v1155 = vsub.f32 %v754, %v1149
  %v1156 = vand.u32 2147483647, %v1155
  %v1157 = vadd.f32 %v1154, %v1156
  %v1158 = vmul.f32 %v1157, %v756
  %v1159 = vsel %vm111, %v1158, 0.0
  %1160 = vadd.xlane.f32.xlu0 %v1159
  %v1161 = vpop.xlane.xlu0 %1160
  %v1162 = vadd.f32 %v509, %v1161
  %v1163 = vmul.f32 %v757, %v1149
  %v1164 = vadd.f32 %v923, %v1163
  %1165 = vmatprep.subr.mxu0 0.0
  %1166 = vmatpush1.msra.mxu0 0.0
  %1167 = vmatprep.subr.mxu0 0.0
  %1168 = vmatpush1.msra.mxu0 0.0
  %1169 = vmatprep.subr.mxu0 0.0
  %1170 = vmatpush1.msra.mxu0 0.0
  %1171 = vmatprep.subr.mxu0 0.0
  %1172 = vmatpush1.msra.mxu0 0.0
  %1173 = vmatprep.subr.mxu0 0.0
  %1174 = vmatpush1.msra.mxu0 0.0
  %1175 = vmatprep.subr.mxu0 0.0
  %1176 = vmatpush1.msra.mxu0 0.0
  %1177 = vmatprep.subr.mxu0 0.0
  %1178 = vmatpush1.msra.mxu0 0.0
  %1179 = vmatprep.subr.mxu0 0.0
  %1180 = vmatpush1.msra.mxu0 0.0
  %1181 = vmatprep.subr.mxu0 0.0
  %1182 = vmatpush1.msra.mxu0 0.0
  %1183 = vmatprep.subr.mxu0 0.0
  %1184 = vmatpush1.msra.mxu0 0.0
  %1185 = vmatprep.subr.mxu0 0.0
  %1186 = vmatpush1.msra.mxu0 0.0
  %1187 = vmatprep.subr.mxu0 0.0
  %1188 = vmatpush1.msra.mxu0 0.0
  %1189 = vmatprep.subr.mxu0 0.0
  %1190 = vmatpush1.msra.mxu0 0.0
  %1191 = vmatprep.subr.mxu0 0.0
  %1192 = vmatpush1.msra.mxu0 0.0
  %1193 = vmatprep.subr.mxu0 0.0
  %1194 = vmatpush1.msra.mxu0 %v89
  %1195 = vmatprep.subr.mxu0 0.0
  %1196 = vmatpush1.msra.mxu0 %v88
  %1197 = vmatprep.subr.mxu0 0.0
  %1198 = vmatpush2.msra.mxu0 0.0
  %1199 = vmatprep.subr.mxu0 0.0
  %1200 = vmatpush2.msra.mxu0 0.0
  %1201 = vmatprep.subr.mxu0 0.0
  %1202 = vmatpush2.msra.mxu0 0.0
  %1203 = vmatprep.subr.mxu0 0.0
  %1204 = vmatpush2.msra.mxu0 0.0
  %1205 = vmatprep.subr.mxu0 0.0
  %1206 = vmatpush2.msra.mxu0 0.0
  %1207 = vmatprep.subr.mxu0 0.0
  %1208 = vmatpush2.msra.mxu0 0.0
  %1209 = vmatprep.subr.mxu0 0.0
  %1210 = vmatpush2.msra.mxu0 0.0
  %1211 = vmatprep.subr.mxu0 0.0
  %1212 = vmatpush2.msra.mxu0 0.0
  %1213 = vmatprep.subr.mxu0 0.0
  %1214 = vmatpush2.msra.mxu0 0.0
  %1215 = vmatprep.subr.mxu0 0.0
  %1216 = vmatpush2.msra.mxu0 0.0
  %1217 = vmatprep.subr.mxu0 0.0
  %1218 = vmatpush2.msra.mxu0 0.0
  %1219 = vmatprep.subr.mxu0 0.0
  %1220 = vmatpush2.msra.mxu0 0.0
  %1221 = vmatprep.subr.mxu0 0.0
  %1222 = vmatpush2.msra.mxu0 0.0
  %1223 = vmatprep.subr.mxu0 0.0
  %1224 = vmatpush2.msra.mxu0 0.0
  %1225 = vmatprep.subr.mxu0 0.0
  %1226 = vmatpush2.msra.mxu0 0.0
  %1227 = vmatprep.subr.mxu0 0.0
  %1228 = vmatpush2.msra.mxu0 0.0
  %1229 = vmatprep.mubr.f32.mxu0 0.0
  %1230 = vmatmul.mubr.f32.gmra.mxu0 %v1000
  %v1231 = vpop.f32.mrf.mxu0
  %v1232 = vadd.f32 0.0, %v1231
  %v1233 = vpop.f32.mrf.mxu0
  %1234 = vdwg.mxu0
  %v1236 = vsel %vm111, %v1164, 0
  %1238 = vmatprep.subr.mxu0 0.0
  %1239 = vmatpush1.msra.mxu0 0.0
  %1240 = vmatprep.subr.mxu0 0.0
  %1241 = vmatpush1.msra.mxu0 0.0
  %1242 = vmatprep.subr.mxu0 0.0
  %1243 = vmatpush1.msra.mxu0 0.0
  %1244 = vmatprep.subr.mxu0 0.0
  %1245 = vmatpush1.msra.mxu0 0.0
  %1246 = vmatprep.subr.mxu0 0.0
  %1247 = vmatpush1.msra.mxu0 0.0
  %1248 = vmatprep.subr.mxu0 0.0
  %1249 = vmatpush1.msra.mxu0 0.0
  %1250 = vmatprep.subr.mxu0 0.0
  %1251 = vmatpush1.msra.mxu0 0.0
  %1252 = vmatprep.subr.mxu0 0.0
  %1253 = vmatpush1.msra.mxu0 0.0
  %1254 = vmatprep.subr.mxu0 0.0
  %1255 = vmatpush1.msra.mxu0 0.0
  %1256 = vmatprep.subr.mxu0 0.0
  %1257 = vmatpush1.msra.mxu0 0.0
  %1258 = vmatprep.subr.mxu0 0.0
  %1259 = vmatpush1.msra.mxu0 0.0
  %1260 = vmatprep.subr.mxu0 0.0
  %1261 = vmatpush1.msra.mxu0 0.0
  %1262 = vmatprep.subr.mxu0 0.0
  %1263 = vmatpush1.msra.mxu0 0.0
  %1264 = vmatprep.subr.mxu0 0.0
  %1265 = vmatpush1.msra.mxu0 0.0
  %1266 = vmatprep.subr.mxu0 0.0
  %1267 = vmatpush1.msra.mxu0 %v87
  %1268 = vmatprep.subr.mxu0 0.0
  %1269 = vmatpush1.msra.mxu0 %v86
  %1270 = vmatprep.subr.mxu0 0.0
  %1271 = vmatpush2.msra.mxu0 0.0
  %1272 = vmatprep.subr.mxu0 0.0
  %1273 = vmatpush2.msra.mxu0 0.0
  %1274 = vmatprep.subr.mxu0 0.0
  %1275 = vmatpush2.msra.mxu0 0.0
  %1276 = vmatprep.subr.mxu0 0.0
  %1277 = vmatpush2.msra.mxu0 0.0
  %1278 = vmatprep.subr.mxu0 0.0
  %1279 = vmatpush2.msra.mxu0 0.0
  %1280 = vmatprep.subr.mxu0 0.0
  %1281 = vmatpush2.msra.mxu0 0.0
  %1282 = vmatprep.subr.mxu0 0.0
  %1283 = vmatpush2.msra.mxu0 0.0
  %1284 = vmatprep.subr.mxu0 0.0
  %1285 = vmatpush2.msra.mxu0 0.0
  %1286 = vmatprep.subr.mxu0 0.0
  %1287 = vmatpush2.msra.mxu0 0.0
  %1288 = vmatprep.subr.mxu0 0.0
  %1289 = vmatpush2.msra.mxu0 0.0
  %1290 = vmatprep.subr.mxu0 0.0
  %1291 = vmatpush2.msra.mxu0 0.0
  %1292 = vmatprep.subr.mxu0 0.0
  %1293 = vmatpush2.msra.mxu0 0.0
  %1294 = vmatprep.subr.mxu0 0.0
  %1295 = vmatpush2.msra.mxu0 0.0
  %1296 = vmatprep.subr.mxu0 0.0
  %1297 = vmatpush2.msra.mxu0 0.0
  %1298 = vmatprep.subr.mxu0 0.0
  %1299 = vmatpush2.msra.mxu0 0.0
  %1300 = vmatprep.subr.mxu0 0.0
  %1301 = vmatpush2.msra.mxu0 0.0
  %1302 = vmatprep.mubr.f32.mxu0 0.0
  %1303 = vmatmul.mubr.f32.gmra.mxu0 %v1236
  %v1304 = vpop.f32.mrf.mxu0
  %v1305 = vadd.f32 %v1232, %v1304
  %v1306 = vpop.f32.mrf.mxu0
  %1307 = vdwg.mxu0
  %1308 = vmatprep.subr.mxu0 0.0
  %1309 = vmatpush1.msra.mxu0 0.0
  %1310 = vmatprep.subr.mxu0 0.0
  %1311 = vmatpush1.msra.mxu0 0.0
  %1312 = vmatprep.subr.mxu0 0.0
  %1313 = vmatpush1.msra.mxu0 0.0
  %1314 = vmatprep.subr.mxu0 0.0
  %1315 = vmatpush1.msra.mxu0 0.0
  %1316 = vmatprep.subr.mxu0 0.0
  %1317 = vmatpush1.msra.mxu0 0.0
  %1318 = vmatprep.subr.mxu0 0.0
  %1319 = vmatpush1.msra.mxu0 0.0
  %1320 = vmatprep.subr.mxu0 0.0
  %1321 = vmatpush1.msra.mxu0 0.0
  %1322 = vmatprep.subr.mxu0 0.0
  %1323 = vmatpush1.msra.mxu0 0.0
  %1324 = vmatprep.subr.mxu0 0.0
  %1325 = vmatpush1.msra.mxu0 0.0
  %1326 = vmatprep.subr.mxu0 0.0
  %1327 = vmatpush1.msra.mxu0 0.0
  %1328 = vmatprep.subr.mxu0 0.0
  %1329 = vmatpush1.msra.mxu0 0.0
  %1330 = vmatprep.subr.mxu0 0.0
  %1331 = vmatpush1.msra.mxu0 0.0
  %1332 = vmatprep.subr.mxu0 0.0
  %1333 = vmatpush1.msra.mxu0 %v93
  %1334 = vmatprep.subr.mxu0 0.0
  %1335 = vmatpush1.msra.mxu0 %v92
  %1336 = vmatprep.subr.mxu0 0.0
  %1337 = vmatpush1.msra.mxu0 %v91
  %1338 = vmatprep.subr.mxu0 0.0
  %1339 = vmatpush1.msra.mxu0 %v90
  %1340 = vmatprep.subr.mxu0 0.0
  %1341 = vmatpush2.msra.mxu0 0.0
  %1342 = vmatprep.subr.mxu0 0.0
  %1343 = vmatpush2.msra.mxu0 0.0
  %1344 = vmatprep.subr.mxu0 0.0
  %1345 = vmatpush2.msra.mxu0 0.0
  %1346 = vmatprep.subr.mxu0 0.0
  %1347 = vmatpush2.msra.mxu0 0.0
  %1348 = vmatprep.subr.mxu0 0.0
  %1349 = vmatpush2.msra.mxu0 0.0
  %1350 = vmatprep.subr.mxu0 0.0
  %1351 = vmatpush2.msra.mxu0 0.0
  %1352 = vmatprep.subr.mxu0 0.0
  %1353 = vmatpush2.msra.mxu0 0.0
  %1354 = vmatprep.subr.mxu0 0.0
  %1355 = vmatpush2.msra.mxu0 0.0
  %1356 = vmatprep.subr.mxu0 0.0
  %1357 = vmatpush2.msra.mxu0 0.0
  %1358 = vmatprep.subr.mxu0 0.0
  %1359 = vmatpush2.msra.mxu0 0.0
  %1360 = vmatprep.subr.mxu0 0.0
  %1361 = vmatpush2.msra.mxu0 0.0
  %1362 = vmatprep.subr.mxu0 0.0
  %1363 = vmatpush2.msra.mxu0 0.0
  %1364 = vmatprep.subr.mxu0 0.0
  %1365 = vmatpush2.msra.mxu0 0.0
  %1366 = vmatprep.subr.mxu0 0.0
  %1367 = vmatpush2.msra.mxu0 0.0
  %1368 = vmatprep.subr.mxu0 0.0
  %1369 = vmatpush2.msra.mxu0 0.0
  %1370 = vmatprep.subr.mxu0 0.0
  %1371 = vmatpush2.msra.mxu0 0.0
  %1372 = vmatprep.mubr.f32.mxu0 0.0
  %1373 = vmatmul.mubr.f32.gmra.mxu0 %v851
  %v1374 = vpop.f32.mrf.mxu0
  %v1375 = vadd.f32 0.0, %v1374
  %v1376 = vpop.f32.mrf.mxu0
  %1377 = vdwg.mxu0
  %v1378 = vadd.f32 %v1305, %v1375
  %v1379 = vadd.f32 %v1378, %v99
  %v1380 = vtanh.pop %v1379
  %v1381 = vxor.u32 %v1379, 2147483648
  %v1382 = vmul.f32 %v1381, 1.442695
  %v1383 = vpow.pop %v1382
  %v1384 = vadd.f32 %v1383, 1.0
  %v1385 = vrcp.pop %v1384
  %v1386 = vmul.f32 1.0, %v1385
  %v1387 = vsel %vm105, %v1380, %v1386
  %v1388 = vmul.f32 %v1387, %v745
  %1390 = vrot.lane.b32.xlu0 %v1387, 64
  %v1391 = vpop.permute.xlu0 %1390
  %v1393 = vmul.f32 %v1387, %v1391
  %1395 = vrot.lane.b32.xlu0 %v1393, 32
  %v1396 = vpop.permute.xlu0 %1395
  %v1398 = vadd.f32 %v1388, %v1396
  %v1399 = vtanh.pop %v1398
  %1401 = vrot.lane.b32.xlu0 %v1399, 64
  %v1402 = vpop.permute.xlu0 %1401
  %v1404 = vmul.f32 %v1387, %v1402
  %s1405 = scalar_lea.vmem %s13, 8
  %1406 = vst.msk [vmem:[%s1405] sm:$0xff] %vm111, %v1164
  %s1407 = scalar_lea.vmem %s0, 16
  %v1408 = vld [vmem:[%s1407] sm:$0xff]
  %s1409 = scalar_lea.vmem %s1, 16
  %v1410 = vld [vmem:[%s1409] sm:$0xff]
  %v1411 = vsub.f32 1.0, %v1410
  %v1412 = vmul.f32 %v1411, %v759
  %v1413 = vadd.f32 %v1412, 1.0
  %v1415 = vsel %vm111, %v1413, 0
  %1417 = vmatprep.subr.mxu0 0.0
  %1418 = vmatpush1.msra.mxu0 0.0
  %1419 = vmatprep.subr.mxu0 0.0
  %1420 = vmatpush1.msra.mxu0 0.0
  %1421 = vmatprep.subr.mxu0 0.0
  %1422 = vmatpush1.msra.mxu0 0.0
  %1423 = vmatprep.subr.mxu0 0.0
  %1424 = vmatpush1.msra.mxu0 0.0
  %1425 = vmatprep.subr.mxu0 0.0
  %1426 = vmatpush1.msra.mxu0 0.0
  %1427 = vmatprep.subr.mxu0 0.0
  %1428 = vmatpush1.msra.mxu0 0.0
  %1429 = vmatprep.subr.mxu0 0.0
  %1430 = vmatpush1.msra.mxu0 0.0
  %1431 = vmatprep.subr.mxu0 0.0
  %1432 = vmatpush1.msra.mxu0 0.0
  %1433 = vmatprep.subr.mxu0 0.0
  %1434 = vmatpush1.msra.mxu0 0.0
  %1435 = vmatprep.subr.mxu0 0.0
  %1436 = vmatpush1.msra.mxu0 0.0
  %1437 = vmatprep.subr.mxu0 0.0
  %1438 = vmatpush1.msra.mxu0 0.0
  %1439 = vmatprep.subr.mxu0 0.0
  %1440 = vmatpush1.msra.mxu0 0.0
  %1441 = vmatprep.subr.mxu0 0.0
  %1442 = vmatpush1.msra.mxu0 0.0
  %1443 = vmatprep.subr.mxu0 0.0
  %1444 = vmatpush1.msra.mxu0 0.0
  %1445 = vmatprep.subr.mxu0 0.0
  %1446 = vmatpush1.msra.mxu0 %v68
  %1447 = vmatprep.subr.mxu0 0.0
  %1448 = vmatpush1.msra.mxu0 %v67
  %1449 = vmatprep.subr.mxu0 0.0
  %1450 = vmatpush2.msra.mxu0 0.0
  %1451 = vmatprep.subr.mxu0 0.0
  %1452 = vmatpush2.msra.mxu0 0.0
  %1453 = vmatprep.subr.mxu0 0.0
  %1454 = vmatpush2.msra.mxu0 0.0
  %1455 = vmatprep.subr.mxu0 0.0
  %1456 = vmatpush2.msra.mxu0 0.0
  %1457 = vmatprep.subr.mxu0 0.0
  %1458 = vmatpush2.msra.mxu0 0.0
  %1459 = vmatprep.subr.mxu0 0.0
  %1460 = vmatpush2.msra.mxu0 0.0
  %1461 = vmatprep.subr.mxu0 0.0
  %1462 = vmatpush2.msra.mxu0 0.0
  %1463 = vmatprep.subr.mxu0 0.0
  %1464 = vmatpush2.msra.mxu0 0.0
  %1465 = vmatprep.subr.mxu0 0.0
  %1466 = vmatpush2.msra.mxu0 0.0
  %1467 = vmatprep.subr.mxu0 0.0
  %1468 = vmatpush2.msra.mxu0 0.0
  %1469 = vmatprep.subr.mxu0 0.0
  %1470 = vmatpush2.msra.mxu0 0.0
  %1471 = vmatprep.subr.mxu0 0.0
  %1472 = vmatpush2.msra.mxu0 0.0
  %1473 = vmatprep.subr.mxu0 0.0
  %1474 = vmatpush2.msra.mxu0 0.0
  %1475 = vmatprep.subr.mxu0 0.0
  %1476 = vmatpush2.msra.mxu0 0.0
  %1477 = vmatprep.subr.mxu0 0.0
  %1478 = vmatpush2.msra.mxu0 0.0
  %1479 = vmatprep.subr.mxu0 0.0
  %1480 = vmatpush2.msra.mxu0 0.0
  %1481 = vmatprep.mubr.f32.mxu0 0.0
  %1482 = vmatmul.mubr.f32.gmra.mxu0 %v1415
  %v1483 = vpop.f32.mrf.mxu0
  %v1484 = vadd.f32 %v74, %v1483
  %v1485 = vpop.f32.mrf.mxu0
  %1486 = vdwg.mxu0
  %v1487 = vmax.f32 %v1484, 0.0
  %v1488 = vsub.f32 0.0, %v1487
  %v1489 = vmul.f32 %v1488, 1.442695
  %v1490 = vpow.pop %v1489
  %v1491 = vmul.f32 %v1413, %v50
  %v1492 = vadd.f32 %v1491, %v54
  %v1493 = vmax.f32 %v1492, 0.0
  %v1494 = vsub.f32 0.0, %v1493
  %v1495 = vmul.f32 %v1494, 1.442695
  %v1496 = vpow.pop %v1495
  %1498 = vrot.lane.b32.xlu0 %v1490, 96
  %v1499 = vpop.permute.xlu0 %1498
  %v1501 = vmul.f32 %v1404, %v1499
  %1503 = vrot.lane.b32.xlu0 %v1501, 32
  %v1504 = vpop.permute.xlu0 %1503
  %v1505 = vsel %vm196, %v1504, 0
  %1507 = vmatprep.subr.mxu0 0.0
  %1508 = vmatpush1.msra.mxu0 0.0
  %1509 = vmatprep.subr.mxu0 0.0
  %1510 = vmatpush1.msra.mxu0 0.0
  %1511 = vmatprep.subr.mxu0 0.0
  %1512 = vmatpush1.msra.mxu0 0.0
  %1513 = vmatprep.subr.mxu0 0.0
  %1514 = vmatpush1.msra.mxu0 0.0
  %1515 = vmatprep.subr.mxu0 0.0
  %1516 = vmatpush1.msra.mxu0 0.0
  %1517 = vmatprep.subr.mxu0 0.0
  %1518 = vmatpush1.msra.mxu0 0.0
  %1519 = vmatprep.subr.mxu0 0.0
  %1520 = vmatpush1.msra.mxu0 0.0
  %1521 = vmatprep.subr.mxu0 0.0
  %1522 = vmatpush1.msra.mxu0 0.0
  %1523 = vmatprep.subr.mxu0 0.0
  %1524 = vmatpush1.msra.mxu0 0.0
  %1525 = vmatprep.subr.mxu0 0.0
  %1526 = vmatpush1.msra.mxu0 0.0
  %1527 = vmatprep.subr.mxu0 0.0
  %1528 = vmatpush1.msra.mxu0 0.0
  %1529 = vmatprep.subr.mxu0 0.0
  %1530 = vmatpush1.msra.mxu0 0.0
  %1531 = vmatprep.subr.mxu0 0.0
  %1532 = vmatpush1.msra.mxu0 %v79
  %1533 = vmatprep.subr.mxu0 0.0
  %1534 = vmatpush1.msra.mxu0 %v78
  %1535 = vmatprep.subr.mxu0 0.0
  %1536 = vmatpush1.msra.mxu0 %v77
  %1537 = vmatprep.subr.mxu0 0.0
  %1538 = vmatpush1.msra.mxu0 %v76
  %1539 = vmatprep.subr.mxu0 0.0
  %1540 = vmatpush2.msra.mxu0 0.0
  %1541 = vmatprep.subr.mxu0 0.0
  %1542 = vmatpush2.msra.mxu0 0.0
  %1543 = vmatprep.subr.mxu0 0.0
  %1544 = vmatpush2.msra.mxu0 0.0
  %1545 = vmatprep.subr.mxu0 0.0
  %1546 = vmatpush2.msra.mxu0 0.0
  %1547 = vmatprep.subr.mxu0 0.0
  %1548 = vmatpush2.msra.mxu0 0.0
  %1549 = vmatprep.subr.mxu0 0.0
  %1550 = vmatpush2.msra.mxu0 0.0
  %1551 = vmatprep.subr.mxu0 0.0
  %1552 = vmatpush2.msra.mxu0 0.0
  %1553 = vmatprep.subr.mxu0 0.0
  %1554 = vmatpush2.msra.mxu0 0.0
  %1555 = vmatprep.subr.mxu0 0.0
  %1556 = vmatpush2.msra.mxu0 0.0
  %1557 = vmatprep.subr.mxu0 0.0
  %1558 = vmatpush2.msra.mxu0 0.0
  %1559 = vmatprep.subr.mxu0 0.0
  %1560 = vmatpush2.msra.mxu0 0.0
  %1561 = vmatprep.subr.mxu0 0.0
  %1562 = vmatpush2.msra.mxu0 0.0
  %1563 = vmatprep.subr.mxu0 0.0
  %1564 = vmatpush2.msra.mxu0 0.0
  %1565 = vmatprep.subr.mxu0 0.0
  %1566 = vmatpush2.msra.mxu0 0.0
  %1567 = vmatprep.subr.mxu0 0.0
  %1568 = vmatpush2.msra.mxu0 0.0
  %1569 = vmatprep.subr.mxu0 0.0
  %1570 = vmatpush2.msra.mxu0 0.0
  %1571 = vmatprep.mubr.f32.mxu0 0.0
  %1572 = vmatmul.mubr.f32.gmra.mxu0 %v1505
  %v1573 = vpop.f32.mrf.mxu0
  %v1574 = vadd.f32 %v58, %v1573
  %v1575 = vpop.f32.mrf.mxu0
  %1576 = vdwg.mxu0
  %v1577 = vmul.f32 %v1410, %v1408
  %v1578 = vmul.f32 %v1411, %v1574
  %v1579 = vadd.f32 %v1577, %v1578
  %v1581 = vsel %vm111, %v1579, 0
  %1583 = vmatprep.subr.mxu0 0.0
  %1584 = vmatpush1.msra.mxu0 0.0
  %1585 = vmatprep.subr.mxu0 0.0
  %1586 = vmatpush1.msra.mxu0 0.0
  %1587 = vmatprep.subr.mxu0 0.0
  %1588 = vmatpush1.msra.mxu0 0.0
  %1589 = vmatprep.subr.mxu0 0.0
  %1590 = vmatpush1.msra.mxu0 0.0
  %1591 = vmatprep.subr.mxu0 0.0
  %1592 = vmatpush1.msra.mxu0 0.0
  %1593 = vmatprep.subr.mxu0 0.0
  %1594 = vmatpush1.msra.mxu0 0.0
  %1595 = vmatprep.subr.mxu0 0.0
  %1596 = vmatpush1.msra.mxu0 0.0
  %1597 = vmatprep.subr.mxu0 0.0
  %1598 = vmatpush1.msra.mxu0 0.0
  %1599 = vmatprep.subr.mxu0 0.0
  %1600 = vmatpush1.msra.mxu0 0.0
  %1601 = vmatprep.subr.mxu0 0.0
  %1602 = vmatpush1.msra.mxu0 0.0
  %1603 = vmatprep.subr.mxu0 0.0
  %1604 = vmatpush1.msra.mxu0 0.0
  %1605 = vmatprep.subr.mxu0 0.0
  %1606 = vmatpush1.msra.mxu0 0.0
  %1607 = vmatprep.subr.mxu0 0.0
  %1608 = vmatpush1.msra.mxu0 0.0
  %1609 = vmatprep.subr.mxu0 0.0
  %1610 = vmatpush1.msra.mxu0 0.0
  %1611 = vmatprep.subr.mxu0 0.0
  %1612 = vmatpush1.msra.mxu0 %v81
  %1613 = vmatprep.subr.mxu0 0.0
  %1614 = vmatpush1.msra.mxu0 %v80
  %1615 = vmatprep.subr.mxu0 0.0
  %1616 = vmatpush2.msra.mxu0 0.0
  %1617 = vmatprep.subr.mxu0 0.0
  %1618 = vmatpush2.msra.mxu0 0.0
  %1619 = vmatprep.subr.mxu0 0.0
  %1620 = vmatpush2.msra.mxu0 0.0
  %1621 = vmatprep.subr.mxu0 0.0
  %1622 = vmatpush2.msra.mxu0 0.0
  %1623 = vmatprep.subr.mxu0 0.0
  %1624 = vmatpush2.msra.mxu0 0.0
  %1625 = vmatprep.subr.mxu0 0.0
  %1626 = vmatpush2.msra.mxu0 0.0
  %1627 = vmatprep.subr.mxu0 0.0
  %1628 = vmatpush2.msra.mxu0 0.0
  %1629 = vmatprep.subr.mxu0 0.0
  %1630 = vmatpush2.msra.mxu0 0.0
  %1631 = vmatprep.subr.mxu0 0.0
  %1632 = vmatpush2.msra.mxu0 0.0
  %1633 = vmatprep.subr.mxu0 0.0
  %1634 = vmatpush2.msra.mxu0 0.0
  %1635 = vmatprep.subr.mxu0 0.0
  %1636 = vmatpush2.msra.mxu0 0.0
  %1637 = vmatprep.subr.mxu0 0.0
  %1638 = vmatpush2.msra.mxu0 0.0
  %1639 = vmatprep.subr.mxu0 0.0
  %1640 = vmatpush2.msra.mxu0 0.0
  %1641 = vmatprep.subr.mxu0 0.0
  %1642 = vmatpush2.msra.mxu0 0.0
  %1643 = vmatprep.subr.mxu0 0.0
  %1644 = vmatpush2.msra.mxu0 0.0
  %1645 = vmatprep.subr.mxu0 0.0
  %1646 = vmatpush2.msra.mxu0 0.0
  %1647 = vmatprep.mubr.f32.mxu0 0.0
  %1648 = vmatmul.mubr.f32.gmra.mxu0 %v1581
  %v1649 = vpop.f32.mrf.mxu0
  %v1650 = vadd.f32 %v62, %v1649
  %v1651 = vpop.f32.mrf.mxu0
  %1652 = vdwg.mxu0
  %v1654 = vsel %vm111, %v1410, 0
  %1656 = vmatprep.subr.mxu0 0.0
  %1657 = vmatpush1.msra.mxu0 0.0
  %1658 = vmatprep.subr.mxu0 0.0
  %1659 = vmatpush1.msra.mxu0 0.0
  %1660 = vmatprep.subr.mxu0 0.0
  %1661 = vmatpush1.msra.mxu0 0.0
  %1662 = vmatprep.subr.mxu0 0.0
  %1663 = vmatpush1.msra.mxu0 0.0
  %1664 = vmatprep.subr.mxu0 0.0
  %1665 = vmatpush1.msra.mxu0 0.0
  %1666 = vmatprep.subr.mxu0 0.0
  %1667 = vmatpush1.msra.mxu0 0.0
  %1668 = vmatprep.subr.mxu0 0.0
  %1669 = vmatpush1.msra.mxu0 0.0
  %1670 = vmatprep.subr.mxu0 0.0
  %1671 = vmatpush1.msra.mxu0 0.0
  %1672 = vmatprep.subr.mxu0 0.0
  %1673 = vmatpush1.msra.mxu0 0.0
  %1674 = vmatprep.subr.mxu0 0.0
  %1675 = vmatpush1.msra.mxu0 0.0
  %1676 = vmatprep.subr.mxu0 0.0
  %1677 = vmatpush1.msra.mxu0 0.0
  %1678 = vmatprep.subr.mxu0 0.0
  %1679 = vmatpush1.msra.mxu0 0.0
  %1680 = vmatprep.subr.mxu0 0.0
  %1681 = vmatpush1.msra.mxu0 0.0
  %1682 = vmatprep.subr.mxu0 0.0
  %1683 = vmatpush1.msra.mxu0 0.0
  %1684 = vmatprep.subr.mxu0 0.0
  %1685 = vmatpush1.msra.mxu0 %v85
  %1686 = vmatprep.subr.mxu0 0.0
  %1687 = vmatpush1.msra.mxu0 %v84
  %1688 = vmatprep.subr.mxu0 0.0
  %1689 = vmatpush2.msra.mxu0 0.0
  %1690 = vmatprep.subr.mxu0 0.0
  %1691 = vmatpush2.msra.mxu0 0.0
  %1692 = vmatprep.subr.mxu0 0.0
  %1693 = vmatpush2.msra.mxu0 0.0
  %1694 = vmatprep.subr.mxu0 0.0
  %1695 = vmatpush2.msra.mxu0 0.0
  %1696 = vmatprep.subr.mxu0 0.0
  %1697 = vmatpush2.msra.mxu0 0.0
  %1698 = vmatprep.subr.mxu0 0.0
  %1699 = vmatpush2.msra.mxu0 0.0
  %1700 = vmatprep.subr.mxu0 0.0
  %1701 = vmatpush2.msra.mxu0 0.0
  %1702 = vmatprep.subr.mxu0 0.0
  %1703 = vmatpush2.msra.mxu0 0.0
  %1704 = vmatprep.subr.mxu0 0.0
  %1705 = vmatpush2.msra.mxu0 0.0
  %1706 = vmatprep.subr.mxu0 0.0
  %1707 = vmatpush2.msra.mxu0 0.0
  %1708 = vmatprep.subr.mxu0 0.0
  %1709 = vmatpush2.msra.mxu0 0.0
  %1710 = vmatprep.subr.mxu0 0.0
  %1711 = vmatpush2.msra.mxu0 0.0
  %1712 = vmatprep.subr.mxu0 0.0
  %1713 = vmatpush2.msra.mxu0 0.0
  %1714 = vmatprep.subr.mxu0 0.0
  %1715 = vmatpush2.msra.mxu0 0.0
  %1716 = vmatprep.subr.mxu0 0.0
  %1717 = vmatpush2.msra.mxu0 0.0
  %1718 = vmatprep.subr.mxu0 0.0
  %1719 = vmatpush2.msra.mxu0 0.0
  %1720 = vmatprep.mubr.f32.mxu0 0.0
  %1721 = vmatmul.mubr.f32.gmra.mxu0 %v1654
  %v1722 = vpop.f32.mrf.mxu0
  %v1723 = vadd.f32 0.0, %v1722
  %v1724 = vpop.f32.mrf.mxu0
  %1725 = vdwg.mxu0
  %v1727 = vsel %vm111, %v1496, 0
  %1729 = vmatprep.subr.mxu0 0.0
  %1730 = vmatpush1.msra.mxu0 0.0
  %1731 = vmatprep.subr.mxu0 0.0
  %1732 = vmatpush1.msra.mxu0 0.0
  %1733 = vmatprep.subr.mxu0 0.0
  %1734 = vmatpush1.msra.mxu0 0.0
  %1735 = vmatprep.subr.mxu0 0.0
  %1736 = vmatpush1.msra.mxu0 0.0
  %1737 = vmatprep.subr.mxu0 0.0
  %1738 = vmatpush1.msra.mxu0 0.0
  %1739 = vmatprep.subr.mxu0 0.0
  %1740 = vmatpush1.msra.mxu0 0.0
  %1741 = vmatprep.subr.mxu0 0.0
  %1742 = vmatpush1.msra.mxu0 0.0
  %1743 = vmatprep.subr.mxu0 0.0
  %1744 = vmatpush1.msra.mxu0 0.0
  %1745 = vmatprep.subr.mxu0 0.0
  %1746 = vmatpush1.msra.mxu0 0.0
  %1747 = vmatprep.subr.mxu0 0.0
  %1748 = vmatpush1.msra.mxu0 0.0
  %1749 = vmatprep.subr.mxu0 0.0
  %1750 = vmatpush1.msra.mxu0 0.0
  %1751 = vmatprep.subr.mxu0 0.0
  %1752 = vmatpush1.msra.mxu0 0.0
  %1753 = vmatprep.subr.mxu0 0.0
  %1754 = vmatpush1.msra.mxu0 0.0
  %1755 = vmatprep.subr.mxu0 0.0
  %1756 = vmatpush1.msra.mxu0 0.0
  %1757 = vmatprep.subr.mxu0 0.0
  %1758 = vmatpush1.msra.mxu0 %v83
  %1759 = vmatprep.subr.mxu0 0.0
  %1760 = vmatpush1.msra.mxu0 %v82
  %1761 = vmatprep.subr.mxu0 0.0
  %1762 = vmatpush2.msra.mxu0 0.0
  %1763 = vmatprep.subr.mxu0 0.0
  %1764 = vmatpush2.msra.mxu0 0.0
  %1765 = vmatprep.subr.mxu0 0.0
  %1766 = vmatpush2.msra.mxu0 0.0
  %1767 = vmatprep.subr.mxu0 0.0
  %1768 = vmatpush2.msra.mxu0 0.0
  %1769 = vmatprep.subr.mxu0 0.0
  %1770 = vmatpush2.msra.mxu0 0.0
  %1771 = vmatprep.subr.mxu0 0.0
  %1772 = vmatpush2.msra.mxu0 0.0
  %1773 = vmatprep.subr.mxu0 0.0
  %1774 = vmatpush2.msra.mxu0 0.0
  %1775 = vmatprep.subr.mxu0 0.0
  %1776 = vmatpush2.msra.mxu0 0.0
  %1777 = vmatprep.subr.mxu0 0.0
  %1778 = vmatpush2.msra.mxu0 0.0
  %1779 = vmatprep.subr.mxu0 0.0
  %1780 = vmatpush2.msra.mxu0 0.0
  %1781 = vmatprep.subr.mxu0 0.0
  %1782 = vmatpush2.msra.mxu0 0.0
  %1783 = vmatprep.subr.mxu0 0.0
  %1784 = vmatpush2.msra.mxu0 0.0
  %1785 = vmatprep.subr.mxu0 0.0
  %1786 = vmatpush2.msra.mxu0 0.0
  %1787 = vmatprep.subr.mxu0 0.0
  %1788 = vmatpush2.msra.mxu0 0.0
  %1789 = vmatprep.subr.mxu0 0.0
  %1790 = vmatpush2.msra.mxu0 0.0
  %1791 = vmatprep.subr.mxu0 0.0
  %1792 = vmatpush2.msra.mxu0 0.0
  %1793 = vmatprep.mubr.f32.mxu0 0.0
  %1794 = vmatmul.mubr.f32.gmra.mxu0 %v1727
  %v1795 = vpop.f32.mrf.mxu0
  %v1796 = vadd.f32 %v1723, %v1795
  %v1797 = vpop.f32.mrf.mxu0
  %1798 = vdwg.mxu0
  %v1799 = vadd.f32 %v1796, %v66
  %v1800 = vmul.f32 %v1799, %v1650
  %v1801 = vsub.f32 1.0, %v1799
  %v1802 = vmul.f32 %v1801, %v1574
  %v1803 = vadd.f32 %v1800, %v1802
  %v1804 = vsub.f32 %v1408, %v1574
  %v1805 = vand.u32 2147483647, %v1804
  %v1806 = vsub.f32 %v1408, %v1650
  %v1807 = vand.u32 2147483647, %v1806
  %v1808 = vadd.f32 %v1805, %v1807
  %v1809 = vsub.f32 %v1408, %v1803
  %v1810 = vand.u32 2147483647, %v1809
  %v1811 = vadd.f32 %v1808, %v1810
  %v1812 = vmul.f32 %v1811, %v1410
  %v1813 = vsel %vm111, %v1812, 0.0
  %1814 = vadd.xlane.f32.xlu0 %v1813
  %v1815 = vpop.xlane.xlu0 %1814
  %v1816 = vadd.f32 %v1162, %v1815
  %v1817 = vmul.f32 %v1411, %v1803
  %v1818 = vadd.f32 %v1577, %v1817
  %1819 = vmatprep.subr.mxu0 0.0
  %1820 = vmatpush1.msra.mxu0 0.0
  %1821 = vmatprep.subr.mxu0 0.0
  %1822 = vmatpush1.msra.mxu0 0.0
  %1823 = vmatprep.subr.mxu0 0.0
  %1824 = vmatpush1.msra.mxu0 0.0
  %1825 = vmatprep.subr.mxu0 0.0
  %1826 = vmatpush1.msra.mxu0 0.0
  %1827 = vmatprep.subr.mxu0 0.0
  %1828 = vmatpush1.msra.mxu0 0.0
  %1829 = vmatprep.subr.mxu0 0.0
  %1830 = vmatpush1.msra.mxu0 0.0
  %1831 = vmatprep.subr.mxu0 0.0
  %1832 = vmatpush1.msra.mxu0 0.0
  %1833 = vmatprep.subr.mxu0 0.0
  %1834 = vmatpush1.msra.mxu0 0.0
  %1835 = vmatprep.subr.mxu0 0.0
  %1836 = vmatpush1.msra.mxu0 0.0
  %1837 = vmatprep.subr.mxu0 0.0
  %1838 = vmatpush1.msra.mxu0 0.0
  %1839 = vmatprep.subr.mxu0 0.0
  %1840 = vmatpush1.msra.mxu0 0.0
  %1841 = vmatprep.subr.mxu0 0.0
  %1842 = vmatpush1.msra.mxu0 0.0
  %1843 = vmatprep.subr.mxu0 0.0
  %1844 = vmatpush1.msra.mxu0 0.0
  %1845 = vmatprep.subr.mxu0 0.0
  %1846 = vmatpush1.msra.mxu0 0.0
  %1847 = vmatprep.subr.mxu0 0.0
  %1848 = vmatpush1.msra.mxu0 %v89
  %1849 = vmatprep.subr.mxu0 0.0
  %1850 = vmatpush1.msra.mxu0 %v88
  %1851 = vmatprep.subr.mxu0 0.0
  %1852 = vmatpush2.msra.mxu0 0.0
  %1853 = vmatprep.subr.mxu0 0.0
  %1854 = vmatpush2.msra.mxu0 0.0
  %1855 = vmatprep.subr.mxu0 0.0
  %1856 = vmatpush2.msra.mxu0 0.0
  %1857 = vmatprep.subr.mxu0 0.0
  %1858 = vmatpush2.msra.mxu0 0.0
  %1859 = vmatprep.subr.mxu0 0.0
  %1860 = vmatpush2.msra.mxu0 0.0
  %1861 = vmatprep.subr.mxu0 0.0
  %1862 = vmatpush2.msra.mxu0 0.0
  %1863 = vmatprep.subr.mxu0 0.0
  %1864 = vmatpush2.msra.mxu0 0.0
  %1865 = vmatprep.subr.mxu0 0.0
  %1866 = vmatpush2.msra.mxu0 0.0
  %1867 = vmatprep.subr.mxu0 0.0
  %1868 = vmatpush2.msra.mxu0 0.0
  %1869 = vmatprep.subr.mxu0 0.0
  %1870 = vmatpush2.msra.mxu0 0.0
  %1871 = vmatprep.subr.mxu0 0.0
  %1872 = vmatpush2.msra.mxu0 0.0
  %1873 = vmatprep.subr.mxu0 0.0
  %1874 = vmatpush2.msra.mxu0 0.0
  %1875 = vmatprep.subr.mxu0 0.0
  %1876 = vmatpush2.msra.mxu0 0.0
  %1877 = vmatprep.subr.mxu0 0.0
  %1878 = vmatpush2.msra.mxu0 0.0
  %1879 = vmatprep.subr.mxu0 0.0
  %1880 = vmatpush2.msra.mxu0 0.0
  %1881 = vmatprep.subr.mxu0 0.0
  %1882 = vmatpush2.msra.mxu0 0.0
  %1883 = vmatprep.mubr.f32.mxu0 0.0
  %1884 = vmatmul.mubr.f32.gmra.mxu0 %v1654
  %v1885 = vpop.f32.mrf.mxu0
  %v1886 = vadd.f32 0.0, %v1885
  %v1887 = vpop.f32.mrf.mxu0
  %1888 = vdwg.mxu0
  %v1890 = vsel %vm111, %v1818, 0
  %1892 = vmatprep.subr.mxu0 0.0
  %1893 = vmatpush1.msra.mxu0 0.0
  %1894 = vmatprep.subr.mxu0 0.0
  %1895 = vmatpush1.msra.mxu0 0.0
  %1896 = vmatprep.subr.mxu0 0.0
  %1897 = vmatpush1.msra.mxu0 0.0
  %1898 = vmatprep.subr.mxu0 0.0
  %1899 = vmatpush1.msra.mxu0 0.0
  %1900 = vmatprep.subr.mxu0 0.0
  %1901 = vmatpush1.msra.mxu0 0.0
  %1902 = vmatprep.subr.mxu0 0.0
  %1903 = vmatpush1.msra.mxu0 0.0
  %1904 = vmatprep.subr.mxu0 0.0
  %1905 = vmatpush1.msra.mxu0 0.0
  %1906 = vmatprep.subr.mxu0 0.0
  %1907 = vmatpush1.msra.mxu0 0.0
  %1908 = vmatprep.subr.mxu0 0.0
  %1909 = vmatpush1.msra.mxu0 0.0
  %1910 = vmatprep.subr.mxu0 0.0
  %1911 = vmatpush1.msra.mxu0 0.0
  %1912 = vmatprep.subr.mxu0 0.0
  %1913 = vmatpush1.msra.mxu0 0.0
  %1914 = vmatprep.subr.mxu0 0.0
  %1915 = vmatpush1.msra.mxu0 0.0
  %1916 = vmatprep.subr.mxu0 0.0
  %1917 = vmatpush1.msra.mxu0 0.0
  %1918 = vmatprep.subr.mxu0 0.0
  %1919 = vmatpush1.msra.mxu0 0.0
  %1920 = vmatprep.subr.mxu0 0.0
  %1921 = vmatpush1.msra.mxu0 %v87
  %1922 = vmatprep.subr.mxu0 0.0
  %1923 = vmatpush1.msra.mxu0 %v86
  %1924 = vmatprep.subr.mxu0 0.0
  %1925 = vmatpush2.msra.mxu0 0.0
  %1926 = vmatprep.subr.mxu0 0.0
  %1927 = vmatpush2.msra.mxu0 0.0
  %1928 = vmatprep.subr.mxu0 0.0
  %1929 = vmatpush2.msra.mxu0 0.0
  %1930 = vmatprep.subr.mxu0 0.0
  %1931 = vmatpush2.msra.mxu0 0.0
  %1932 = vmatprep.subr.mxu0 0.0
  %1933 = vmatpush2.msra.mxu0 0.0
  %1934 = vmatprep.subr.mxu0 0.0
  %1935 = vmatpush2.msra.mxu0 0.0
  %1936 = vmatprep.subr.mxu0 0.0
  %1937 = vmatpush2.msra.mxu0 0.0
  %1938 = vmatprep.subr.mxu0 0.0
  %1939 = vmatpush2.msra.mxu0 0.0
  %1940 = vmatprep.subr.mxu0 0.0
  %1941 = vmatpush2.msra.mxu0 0.0
  %1942 = vmatprep.subr.mxu0 0.0
  %1943 = vmatpush2.msra.mxu0 0.0
  %1944 = vmatprep.subr.mxu0 0.0
  %1945 = vmatpush2.msra.mxu0 0.0
  %1946 = vmatprep.subr.mxu0 0.0
  %1947 = vmatpush2.msra.mxu0 0.0
  %1948 = vmatprep.subr.mxu0 0.0
  %1949 = vmatpush2.msra.mxu0 0.0
  %1950 = vmatprep.subr.mxu0 0.0
  %1951 = vmatpush2.msra.mxu0 0.0
  %1952 = vmatprep.subr.mxu0 0.0
  %1953 = vmatpush2.msra.mxu0 0.0
  %1954 = vmatprep.subr.mxu0 0.0
  %1955 = vmatpush2.msra.mxu0 0.0
  %1956 = vmatprep.mubr.f32.mxu0 0.0
  %1957 = vmatmul.mubr.f32.gmra.mxu0 %v1890
  %v1958 = vpop.f32.mrf.mxu0
  %v1959 = vadd.f32 %v1886, %v1958
  %v1960 = vpop.f32.mrf.mxu0
  %1961 = vdwg.mxu0
  %1962 = vmatprep.subr.mxu0 0.0
  %1963 = vmatpush1.msra.mxu0 0.0
  %1964 = vmatprep.subr.mxu0 0.0
  %1965 = vmatpush1.msra.mxu0 0.0
  %1966 = vmatprep.subr.mxu0 0.0
  %1967 = vmatpush1.msra.mxu0 0.0
  %1968 = vmatprep.subr.mxu0 0.0
  %1969 = vmatpush1.msra.mxu0 0.0
  %1970 = vmatprep.subr.mxu0 0.0
  %1971 = vmatpush1.msra.mxu0 0.0
  %1972 = vmatprep.subr.mxu0 0.0
  %1973 = vmatpush1.msra.mxu0 0.0
  %1974 = vmatprep.subr.mxu0 0.0
  %1975 = vmatpush1.msra.mxu0 0.0
  %1976 = vmatprep.subr.mxu0 0.0
  %1977 = vmatpush1.msra.mxu0 0.0
  %1978 = vmatprep.subr.mxu0 0.0
  %1979 = vmatpush1.msra.mxu0 0.0
  %1980 = vmatprep.subr.mxu0 0.0
  %1981 = vmatpush1.msra.mxu0 0.0
  %1982 = vmatprep.subr.mxu0 0.0
  %1983 = vmatpush1.msra.mxu0 0.0
  %1984 = vmatprep.subr.mxu0 0.0
  %1985 = vmatpush1.msra.mxu0 0.0
  %1986 = vmatprep.subr.mxu0 0.0
  %1987 = vmatpush1.msra.mxu0 %v93
  %1988 = vmatprep.subr.mxu0 0.0
  %1989 = vmatpush1.msra.mxu0 %v92
  %1990 = vmatprep.subr.mxu0 0.0
  %1991 = vmatpush1.msra.mxu0 %v91
  %1992 = vmatprep.subr.mxu0 0.0
  %1993 = vmatpush1.msra.mxu0 %v90
  %1994 = vmatprep.subr.mxu0 0.0
  %1995 = vmatpush2.msra.mxu0 0.0
  %1996 = vmatprep.subr.mxu0 0.0
  %1997 = vmatpush2.msra.mxu0 0.0
  %1998 = vmatprep.subr.mxu0 0.0
  %1999 = vmatpush2.msra.mxu0 0.0
  %2000 = vmatprep.subr.mxu0 0.0
  %2001 = vmatpush2.msra.mxu0 0.0
  %2002 = vmatprep.subr.mxu0 0.0
  %2003 = vmatpush2.msra.mxu0 0.0
  %2004 = vmatprep.subr.mxu0 0.0
  %2005 = vmatpush2.msra.mxu0 0.0
  %2006 = vmatprep.subr.mxu0 0.0
  %2007 = vmatpush2.msra.mxu0 0.0
  %2008 = vmatprep.subr.mxu0 0.0
  %2009 = vmatpush2.msra.mxu0 0.0
  %2010 = vmatprep.subr.mxu0 0.0
  %2011 = vmatpush2.msra.mxu0 0.0
  %2012 = vmatprep.subr.mxu0 0.0
  %2013 = vmatpush2.msra.mxu0 0.0
  %2014 = vmatprep.subr.mxu0 0.0
  %2015 = vmatpush2.msra.mxu0 0.0
  %2016 = vmatprep.subr.mxu0 0.0
  %2017 = vmatpush2.msra.mxu0 0.0
  %2018 = vmatprep.subr.mxu0 0.0
  %2019 = vmatpush2.msra.mxu0 0.0
  %2020 = vmatprep.subr.mxu0 0.0
  %2021 = vmatpush2.msra.mxu0 0.0
  %2022 = vmatprep.subr.mxu0 0.0
  %2023 = vmatpush2.msra.mxu0 0.0
  %2024 = vmatprep.subr.mxu0 0.0
  %2025 = vmatpush2.msra.mxu0 0.0
  %2026 = vmatprep.mubr.f32.mxu0 0.0
  %2027 = vmatmul.mubr.f32.gmra.mxu0 %v1505
  %v2028 = vpop.f32.mrf.mxu0
  %v2029 = vadd.f32 0.0, %v2028
  %v2030 = vpop.f32.mrf.mxu0
  %2031 = vdwg.mxu0
  %v2032 = vadd.f32 %v1959, %v2029
  %v2033 = vadd.f32 %v2032, %v99
  %v2034 = vtanh.pop %v2033
  %v2035 = vxor.u32 %v2033, 2147483648
  %v2036 = vmul.f32 %v2035, 1.442695
  %v2037 = vpow.pop %v2036
  %v2038 = vadd.f32 %v2037, 1.0
  %v2039 = vrcp.pop %v2038
  %v2040 = vmul.f32 1.0, %v2039
  %v2041 = vsel %vm105, %v2034, %v2040
  %v2042 = vmul.f32 %v2041, %v1398
  %2044 = vrot.lane.b32.xlu0 %v2041, 64
  %v2045 = vpop.permute.xlu0 %2044
  %v2047 = vmul.f32 %v2041, %v2045
  %2049 = vrot.lane.b32.xlu0 %v2047, 32
  %v2050 = vpop.permute.xlu0 %2049
  %v2052 = vadd.f32 %v2042, %v2050
  %v2053 = vtanh.pop %v2052
  %2055 = vrot.lane.b32.xlu0 %v2053, 64
  %v2056 = vpop.permute.xlu0 %2055
  %v2058 = vmul.f32 %v2041, %v2056
  %s2059 = scalar_lea.vmem %s13, 16
  %2060 = vst.msk [vmem:[%s2059] sm:$0xff] %vm111, %v1818
  %s2061 = scalar_lea.vmem %s0, 24
  %v2062 = vld [vmem:[%s2061] sm:$0xff]
  %s2063 = scalar_lea.vmem %s1, 24
  %v2064 = vld [vmem:[%s2063] sm:$0xff]
  %v2065 = vsub.f32 1.0, %v2064
  %v2066 = vmul.f32 %v2065, %v1413
  %v2067 = vadd.f32 %v2066, 1.0
  %v2069 = vsel %vm111, %v2067, 0
  %2071 = vmatprep.subr.mxu0 0.0
  %2072 = vmatpush1.msra.mxu0 0.0
  %2073 = vmatprep.subr.mxu0 0.0
  %2074 = vmatpush1.msra.mxu0 0.0
  %2075 = vmatprep.subr.mxu0 0.0
  %2076 = vmatpush1.msra.mxu0 0.0
  %2077 = vmatprep.subr.mxu0 0.0
  %2078 = vmatpush1.msra.mxu0 0.0
  %2079 = vmatprep.subr.mxu0 0.0
  %2080 = vmatpush1.msra.mxu0 0.0
  %2081 = vmatprep.subr.mxu0 0.0
  %2082 = vmatpush1.msra.mxu0 0.0
  %2083 = vmatprep.subr.mxu0 0.0
  %2084 = vmatpush1.msra.mxu0 0.0
  %2085 = vmatprep.subr.mxu0 0.0
  %2086 = vmatpush1.msra.mxu0 0.0
  %2087 = vmatprep.subr.mxu0 0.0
  %2088 = vmatpush1.msra.mxu0 0.0
  %2089 = vmatprep.subr.mxu0 0.0
  %2090 = vmatpush1.msra.mxu0 0.0
  %2091 = vmatprep.subr.mxu0 0.0
  %2092 = vmatpush1.msra.mxu0 0.0
  %2093 = vmatprep.subr.mxu0 0.0
  %2094 = vmatpush1.msra.mxu0 0.0
  %2095 = vmatprep.subr.mxu0 0.0
  %2096 = vmatpush1.msra.mxu0 0.0
  %2097 = vmatprep.subr.mxu0 0.0
  %2098 = vmatpush1.msra.mxu0 0.0
  %2099 = vmatprep.subr.mxu0 0.0
  %2100 = vmatpush1.msra.mxu0 %v68
  %2101 = vmatprep.subr.mxu0 0.0
  %2102 = vmatpush1.msra.mxu0 %v67
  %2103 = vmatprep.subr.mxu0 0.0
  %2104 = vmatpush2.msra.mxu0 0.0
  %2105 = vmatprep.subr.mxu0 0.0
  %2106 = vmatpush2.msra.mxu0 0.0
  %2107 = vmatprep.subr.mxu0 0.0
  %2108 = vmatpush2.msra.mxu0 0.0
  %2109 = vmatprep.subr.mxu0 0.0
  %2110 = vmatpush2.msra.mxu0 0.0
  %2111 = vmatprep.subr.mxu0 0.0
  %2112 = vmatpush2.msra.mxu0 0.0
  %2113 = vmatprep.subr.mxu0 0.0
  %2114 = vmatpush2.msra.mxu0 0.0
  %2115 = vmatprep.subr.mxu0 0.0
  %2116 = vmatpush2.msra.mxu0 0.0
  %2117 = vmatprep.subr.mxu0 0.0
  %2118 = vmatpush2.msra.mxu0 0.0
  %2119 = vmatprep.subr.mxu0 0.0
  %2120 = vmatpush2.msra.mxu0 0.0
  %2121 = vmatprep.subr.mxu0 0.0
  %2122 = vmatpush2.msra.mxu0 0.0
  %2123 = vmatprep.subr.mxu0 0.0
  %2124 = vmatpush2.msra.mxu0 0.0
  %2125 = vmatprep.subr.mxu0 0.0
  %2126 = vmatpush2.msra.mxu0 0.0
  %2127 = vmatprep.subr.mxu0 0.0
  %2128 = vmatpush2.msra.mxu0 0.0
  %2129 = vmatprep.subr.mxu0 0.0
  %2130 = vmatpush2.msra.mxu0 0.0
  %2131 = vmatprep.subr.mxu0 0.0
  %2132 = vmatpush2.msra.mxu0 0.0
  %2133 = vmatprep.subr.mxu0 0.0
  %2134 = vmatpush2.msra.mxu0 0.0
  %2135 = vmatprep.mubr.f32.mxu0 0.0
  %2136 = vmatmul.mubr.f32.gmra.mxu0 %v2069
  %v2137 = vpop.f32.mrf.mxu0
  %v2138 = vadd.f32 %v74, %v2137
  %v2139 = vpop.f32.mrf.mxu0
  %2140 = vdwg.mxu0
  %v2141 = vmax.f32 %v2138, 0.0
  %v2142 = vsub.f32 0.0, %v2141
  %v2143 = vmul.f32 %v2142, 1.442695
  %v2144 = vpow.pop %v2143
  %v2145 = vmul.f32 %v2067, %v50
  %v2146 = vadd.f32 %v2145, %v54
  %v2147 = vmax.f32 %v2146, 0.0
  %v2148 = vsub.f32 0.0, %v2147
  %v2149 = vmul.f32 %v2148, 1.442695
  %v2150 = vpow.pop %v2149
  %2152 = vrot.lane.b32.xlu0 %v2144, 96
  %v2153 = vpop.permute.xlu0 %2152
  %v2155 = vmul.f32 %v2058, %v2153
  %2157 = vrot.lane.b32.xlu0 %v2155, 32
  %v2158 = vpop.permute.xlu0 %2157
  %v2159 = vsel %vm196, %v2158, 0
  %2161 = vmatprep.subr.mxu0 0.0
  %2162 = vmatpush1.msra.mxu0 0.0
  %2163 = vmatprep.subr.mxu0 0.0
  %2164 = vmatpush1.msra.mxu0 0.0
  %2165 = vmatprep.subr.mxu0 0.0
  %2166 = vmatpush1.msra.mxu0 0.0
  %2167 = vmatprep.subr.mxu0 0.0
  %2168 = vmatpush1.msra.mxu0 0.0
  %2169 = vmatprep.subr.mxu0 0.0
  %2170 = vmatpush1.msra.mxu0 0.0
  %2171 = vmatprep.subr.mxu0 0.0
  %2172 = vmatpush1.msra.mxu0 0.0
  %2173 = vmatprep.subr.mxu0 0.0
  %2174 = vmatpush1.msra.mxu0 0.0
  %2175 = vmatprep.subr.mxu0 0.0
  %2176 = vmatpush1.msra.mxu0 0.0
  %2177 = vmatprep.subr.mxu0 0.0
  %2178 = vmatpush1.msra.mxu0 0.0
  %2179 = vmatprep.subr.mxu0 0.0
  %2180 = vmatpush1.msra.mxu0 0.0
  %2181 = vmatprep.subr.mxu0 0.0
  %2182 = vmatpush1.msra.mxu0 0.0
  %2183 = vmatprep.subr.mxu0 0.0
  %2184 = vmatpush1.msra.mxu0 0.0
  %2185 = vmatprep.subr.mxu0 0.0
  %2186 = vmatpush1.msra.mxu0 %v79
  %2187 = vmatprep.subr.mxu0 0.0
  %2188 = vmatpush1.msra.mxu0 %v78
  %2189 = vmatprep.subr.mxu0 0.0
  %2190 = vmatpush1.msra.mxu0 %v77
  %2191 = vmatprep.subr.mxu0 0.0
  %2192 = vmatpush1.msra.mxu0 %v76
  %2193 = vmatprep.subr.mxu0 0.0
  %2194 = vmatpush2.msra.mxu0 0.0
  %2195 = vmatprep.subr.mxu0 0.0
  %2196 = vmatpush2.msra.mxu0 0.0
  %2197 = vmatprep.subr.mxu0 0.0
  %2198 = vmatpush2.msra.mxu0 0.0
  %2199 = vmatprep.subr.mxu0 0.0
  %2200 = vmatpush2.msra.mxu0 0.0
  %2201 = vmatprep.subr.mxu0 0.0
  %2202 = vmatpush2.msra.mxu0 0.0
  %2203 = vmatprep.subr.mxu0 0.0
  %2204 = vmatpush2.msra.mxu0 0.0
  %2205 = vmatprep.subr.mxu0 0.0
  %2206 = vmatpush2.msra.mxu0 0.0
  %2207 = vmatprep.subr.mxu0 0.0
  %2208 = vmatpush2.msra.mxu0 0.0
  %2209 = vmatprep.subr.mxu0 0.0
  %2210 = vmatpush2.msra.mxu0 0.0
  %2211 = vmatprep.subr.mxu0 0.0
  %2212 = vmatpush2.msra.mxu0 0.0
  %2213 = vmatprep.subr.mxu0 0.0
  %2214 = vmatpush2.msra.mxu0 0.0
  %2215 = vmatprep.subr.mxu0 0.0
  %2216 = vmatpush2.msra.mxu0 0.0
  %2217 = vmatprep.subr.mxu0 0.0
  %2218 = vmatpush2.msra.mxu0 0.0
  %2219 = vmatprep.subr.mxu0 0.0
  %2220 = vmatpush2.msra.mxu0 0.0
  %2221 = vmatprep.subr.mxu0 0.0
  %2222 = vmatpush2.msra.mxu0 0.0
  %2223 = vmatprep.subr.mxu0 0.0
  %2224 = vmatpush2.msra.mxu0 0.0
  %2225 = vmatprep.mubr.f32.mxu0 0.0
  %2226 = vmatmul.mubr.f32.gmra.mxu0 %v2159
  %v2227 = vpop.f32.mrf.mxu0
  %v2228 = vadd.f32 %v58, %v2227
  %v2229 = vpop.f32.mrf.mxu0
  %2230 = vdwg.mxu0
  %v2231 = vmul.f32 %v2064, %v2062
  %v2232 = vmul.f32 %v2065, %v2228
  %v2233 = vadd.f32 %v2231, %v2232
  %v2235 = vsel %vm111, %v2233, 0
  %2237 = vmatprep.subr.mxu0 0.0
  %2238 = vmatpush1.msra.mxu0 0.0
  %2239 = vmatprep.subr.mxu0 0.0
  %2240 = vmatpush1.msra.mxu0 0.0
  %2241 = vmatprep.subr.mxu0 0.0
  %2242 = vmatpush1.msra.mxu0 0.0
  %2243 = vmatprep.subr.mxu0 0.0
  %2244 = vmatpush1.msra.mxu0 0.0
  %2245 = vmatprep.subr.mxu0 0.0
  %2246 = vmatpush1.msra.mxu0 0.0
  %2247 = vmatprep.subr.mxu0 0.0
  %2248 = vmatpush1.msra.mxu0 0.0
  %2249 = vmatprep.subr.mxu0 0.0
  %2250 = vmatpush1.msra.mxu0 0.0
  %2251 = vmatprep.subr.mxu0 0.0
  %2252 = vmatpush1.msra.mxu0 0.0
  %2253 = vmatprep.subr.mxu0 0.0
  %2254 = vmatpush1.msra.mxu0 0.0
  %2255 = vmatprep.subr.mxu0 0.0
  %2256 = vmatpush1.msra.mxu0 0.0
  %2257 = vmatprep.subr.mxu0 0.0
  %2258 = vmatpush1.msra.mxu0 0.0
  %2259 = vmatprep.subr.mxu0 0.0
  %2260 = vmatpush1.msra.mxu0 0.0
  %2261 = vmatprep.subr.mxu0 0.0
  %2262 = vmatpush1.msra.mxu0 0.0
  %2263 = vmatprep.subr.mxu0 0.0
  %2264 = vmatpush1.msra.mxu0 0.0
  %2265 = vmatprep.subr.mxu0 0.0
  %2266 = vmatpush1.msra.mxu0 %v81
  %2267 = vmatprep.subr.mxu0 0.0
  %2268 = vmatpush1.msra.mxu0 %v80
  %2269 = vmatprep.subr.mxu0 0.0
  %2270 = vmatpush2.msra.mxu0 0.0
  %2271 = vmatprep.subr.mxu0 0.0
  %2272 = vmatpush2.msra.mxu0 0.0
  %2273 = vmatprep.subr.mxu0 0.0
  %2274 = vmatpush2.msra.mxu0 0.0
  %2275 = vmatprep.subr.mxu0 0.0
  %2276 = vmatpush2.msra.mxu0 0.0
  %2277 = vmatprep.subr.mxu0 0.0
  %2278 = vmatpush2.msra.mxu0 0.0
  %2279 = vmatprep.subr.mxu0 0.0
  %2280 = vmatpush2.msra.mxu0 0.0
  %2281 = vmatprep.subr.mxu0 0.0
  %2282 = vmatpush2.msra.mxu0 0.0
  %2283 = vmatprep.subr.mxu0 0.0
  %2284 = vmatpush2.msra.mxu0 0.0
  %2285 = vmatprep.subr.mxu0 0.0
  %2286 = vmatpush2.msra.mxu0 0.0
  %2287 = vmatprep.subr.mxu0 0.0
  %2288 = vmatpush2.msra.mxu0 0.0
  %2289 = vmatprep.subr.mxu0 0.0
  %2290 = vmatpush2.msra.mxu0 0.0
  %2291 = vmatprep.subr.mxu0 0.0
  %2292 = vmatpush2.msra.mxu0 0.0
  %2293 = vmatprep.subr.mxu0 0.0
  %2294 = vmatpush2.msra.mxu0 0.0
  %2295 = vmatprep.subr.mxu0 0.0
  %2296 = vmatpush2.msra.mxu0 0.0
  %2297 = vmatprep.subr.mxu0 0.0
  %2298 = vmatpush2.msra.mxu0 0.0
  %2299 = vmatprep.subr.mxu0 0.0
  %2300 = vmatpush2.msra.mxu0 0.0
  %2301 = vmatprep.mubr.f32.mxu0 0.0
  %2302 = vmatmul.mubr.f32.gmra.mxu0 %v2235
  %v2303 = vpop.f32.mrf.mxu0
  %v2304 = vadd.f32 %v62, %v2303
  %v2305 = vpop.f32.mrf.mxu0
  %2306 = vdwg.mxu0
  %v2308 = vsel %vm111, %v2064, 0
  %2310 = vmatprep.subr.mxu0 0.0
  %2311 = vmatpush1.msra.mxu0 0.0
  %2312 = vmatprep.subr.mxu0 0.0
  %2313 = vmatpush1.msra.mxu0 0.0
  %2314 = vmatprep.subr.mxu0 0.0
  %2315 = vmatpush1.msra.mxu0 0.0
  %2316 = vmatprep.subr.mxu0 0.0
  %2317 = vmatpush1.msra.mxu0 0.0
  %2318 = vmatprep.subr.mxu0 0.0
  %2319 = vmatpush1.msra.mxu0 0.0
  %2320 = vmatprep.subr.mxu0 0.0
  %2321 = vmatpush1.msra.mxu0 0.0
  %2322 = vmatprep.subr.mxu0 0.0
  %2323 = vmatpush1.msra.mxu0 0.0
  %2324 = vmatprep.subr.mxu0 0.0
  %2325 = vmatpush1.msra.mxu0 0.0
  %2326 = vmatprep.subr.mxu0 0.0
  %2327 = vmatpush1.msra.mxu0 0.0
  %2328 = vmatprep.subr.mxu0 0.0
  %2329 = vmatpush1.msra.mxu0 0.0
  %2330 = vmatprep.subr.mxu0 0.0
  %2331 = vmatpush1.msra.mxu0 0.0
  %2332 = vmatprep.subr.mxu0 0.0
  %2333 = vmatpush1.msra.mxu0 0.0
  %2334 = vmatprep.subr.mxu0 0.0
  %2335 = vmatpush1.msra.mxu0 0.0
  %2336 = vmatprep.subr.mxu0 0.0
  %2337 = vmatpush1.msra.mxu0 0.0
  %2338 = vmatprep.subr.mxu0 0.0
  %2339 = vmatpush1.msra.mxu0 %v85
  %2340 = vmatprep.subr.mxu0 0.0
  %2341 = vmatpush1.msra.mxu0 %v84
  %2342 = vmatprep.subr.mxu0 0.0
  %2343 = vmatpush2.msra.mxu0 0.0
  %2344 = vmatprep.subr.mxu0 0.0
  %2345 = vmatpush2.msra.mxu0 0.0
  %2346 = vmatprep.subr.mxu0 0.0
  %2347 = vmatpush2.msra.mxu0 0.0
  %2348 = vmatprep.subr.mxu0 0.0
  %2349 = vmatpush2.msra.mxu0 0.0
  %2350 = vmatprep.subr.mxu0 0.0
  %2351 = vmatpush2.msra.mxu0 0.0
  %2352 = vmatprep.subr.mxu0 0.0
  %2353 = vmatpush2.msra.mxu0 0.0
  %2354 = vmatprep.subr.mxu0 0.0
  %2355 = vmatpush2.msra.mxu0 0.0
  %2356 = vmatprep.subr.mxu0 0.0
  %2357 = vmatpush2.msra.mxu0 0.0
  %2358 = vmatprep.subr.mxu0 0.0
  %2359 = vmatpush2.msra.mxu0 0.0
  %2360 = vmatprep.subr.mxu0 0.0
  %2361 = vmatpush2.msra.mxu0 0.0
  %2362 = vmatprep.subr.mxu0 0.0
  %2363 = vmatpush2.msra.mxu0 0.0
  %2364 = vmatprep.subr.mxu0 0.0
  %2365 = vmatpush2.msra.mxu0 0.0
  %2366 = vmatprep.subr.mxu0 0.0
  %2367 = vmatpush2.msra.mxu0 0.0
  %2368 = vmatprep.subr.mxu0 0.0
  %2369 = vmatpush2.msra.mxu0 0.0
  %2370 = vmatprep.subr.mxu0 0.0
  %2371 = vmatpush2.msra.mxu0 0.0
  %2372 = vmatprep.subr.mxu0 0.0
  %2373 = vmatpush2.msra.mxu0 0.0
  %2374 = vmatprep.mubr.f32.mxu0 0.0
  %2375 = vmatmul.mubr.f32.gmra.mxu0 %v2308
  %v2376 = vpop.f32.mrf.mxu0
  %v2377 = vadd.f32 0.0, %v2376
  %v2378 = vpop.f32.mrf.mxu0
  %2379 = vdwg.mxu0
  %v2381 = vsel %vm111, %v2150, 0
  %2383 = vmatprep.subr.mxu0 0.0
  %2384 = vmatpush1.msra.mxu0 0.0
  %2385 = vmatprep.subr.mxu0 0.0
  %2386 = vmatpush1.msra.mxu0 0.0
  %2387 = vmatprep.subr.mxu0 0.0
  %2388 = vmatpush1.msra.mxu0 0.0
  %2389 = vmatprep.subr.mxu0 0.0
  %2390 = vmatpush1.msra.mxu0 0.0
  %2391 = vmatprep.subr.mxu0 0.0
  %2392 = vmatpush1.msra.mxu0 0.0
  %2393 = vmatprep.subr.mxu0 0.0
  %2394 = vmatpush1.msra.mxu0 0.0
  %2395 = vmatprep.subr.mxu0 0.0
  %2396 = vmatpush1.msra.mxu0 0.0
  %2397 = vmatprep.subr.mxu0 0.0
  %2398 = vmatpush1.msra.mxu0 0.0
  %2399 = vmatprep.subr.mxu0 0.0
  %2400 = vmatpush1.msra.mxu0 0.0
  %2401 = vmatprep.subr.mxu0 0.0
  %2402 = vmatpush1.msra.mxu0 0.0
  %2403 = vmatprep.subr.mxu0 0.0
  %2404 = vmatpush1.msra.mxu0 0.0
  %2405 = vmatprep.subr.mxu0 0.0
  %2406 = vmatpush1.msra.mxu0 0.0
  %2407 = vmatprep.subr.mxu0 0.0
  %2408 = vmatpush1.msra.mxu0 0.0
  %2409 = vmatprep.subr.mxu0 0.0
  %2410 = vmatpush1.msra.mxu0 0.0
  %2411 = vmatprep.subr.mxu0 0.0
  %2412 = vmatpush1.msra.mxu0 %v83
  %2413 = vmatprep.subr.mxu0 0.0
  %2414 = vmatpush1.msra.mxu0 %v82
  %2415 = vmatprep.subr.mxu0 0.0
  %2416 = vmatpush2.msra.mxu0 0.0
  %2417 = vmatprep.subr.mxu0 0.0
  %2418 = vmatpush2.msra.mxu0 0.0
  %2419 = vmatprep.subr.mxu0 0.0
  %2420 = vmatpush2.msra.mxu0 0.0
  %2421 = vmatprep.subr.mxu0 0.0
  %2422 = vmatpush2.msra.mxu0 0.0
  %2423 = vmatprep.subr.mxu0 0.0
  %2424 = vmatpush2.msra.mxu0 0.0
  %2425 = vmatprep.subr.mxu0 0.0
  %2426 = vmatpush2.msra.mxu0 0.0
  %2427 = vmatprep.subr.mxu0 0.0
  %2428 = vmatpush2.msra.mxu0 0.0
  %2429 = vmatprep.subr.mxu0 0.0
  %2430 = vmatpush2.msra.mxu0 0.0
  %2431 = vmatprep.subr.mxu0 0.0
  %2432 = vmatpush2.msra.mxu0 0.0
  %2433 = vmatprep.subr.mxu0 0.0
  %2434 = vmatpush2.msra.mxu0 0.0
  %2435 = vmatprep.subr.mxu0 0.0
  %2436 = vmatpush2.msra.mxu0 0.0
  %2437 = vmatprep.subr.mxu0 0.0
  %2438 = vmatpush2.msra.mxu0 0.0
  %2439 = vmatprep.subr.mxu0 0.0
  %2440 = vmatpush2.msra.mxu0 0.0
  %2441 = vmatprep.subr.mxu0 0.0
  %2442 = vmatpush2.msra.mxu0 0.0
  %2443 = vmatprep.subr.mxu0 0.0
  %2444 = vmatpush2.msra.mxu0 0.0
  %2445 = vmatprep.subr.mxu0 0.0
  %2446 = vmatpush2.msra.mxu0 0.0
  %2447 = vmatprep.mubr.f32.mxu0 0.0
  %2448 = vmatmul.mubr.f32.gmra.mxu0 %v2381
  %v2449 = vpop.f32.mrf.mxu0
  %v2450 = vadd.f32 %v2377, %v2449
  %v2451 = vpop.f32.mrf.mxu0
  %2452 = vdwg.mxu0
  %v2453 = vadd.f32 %v2450, %v66
  %v2454 = vmul.f32 %v2453, %v2304
  %v2455 = vsub.f32 1.0, %v2453
  %v2456 = vmul.f32 %v2455, %v2228
  %v2457 = vadd.f32 %v2454, %v2456
  %v2458 = vsub.f32 %v2062, %v2228
  %v2459 = vand.u32 2147483647, %v2458
  %v2460 = vsub.f32 %v2062, %v2304
  %v2461 = vand.u32 2147483647, %v2460
  %v2462 = vadd.f32 %v2459, %v2461
  %v2463 = vsub.f32 %v2062, %v2457
  %v2464 = vand.u32 2147483647, %v2463
  %v2465 = vadd.f32 %v2462, %v2464
  %v2466 = vmul.f32 %v2465, %v2064
  %v2467 = vsel %vm111, %v2466, 0.0
  %2468 = vadd.xlane.f32.xlu0 %v2467
  %v2469 = vpop.xlane.xlu0 %2468
  %v2470 = vadd.f32 %v1816, %v2469
  %v2471 = vmul.f32 %v2065, %v2457
  %v2472 = vadd.f32 %v2231, %v2471
  %2473 = vmatprep.subr.mxu0 0.0
  %2474 = vmatpush1.msra.mxu0 0.0
  %2475 = vmatprep.subr.mxu0 0.0
  %2476 = vmatpush1.msra.mxu0 0.0
  %2477 = vmatprep.subr.mxu0 0.0
  %2478 = vmatpush1.msra.mxu0 0.0
  %2479 = vmatprep.subr.mxu0 0.0
  %2480 = vmatpush1.msra.mxu0 0.0
  %2481 = vmatprep.subr.mxu0 0.0
  %2482 = vmatpush1.msra.mxu0 0.0
  %2483 = vmatprep.subr.mxu0 0.0
  %2484 = vmatpush1.msra.mxu0 0.0
  %2485 = vmatprep.subr.mxu0 0.0
  %2486 = vmatpush1.msra.mxu0 0.0
  %2487 = vmatprep.subr.mxu0 0.0
  %2488 = vmatpush1.msra.mxu0 0.0
  %2489 = vmatprep.subr.mxu0 0.0
  %2490 = vmatpush1.msra.mxu0 0.0
  %2491 = vmatprep.subr.mxu0 0.0
  %2492 = vmatpush1.msra.mxu0 0.0
  %2493 = vmatprep.subr.mxu0 0.0
  %2494 = vmatpush1.msra.mxu0 0.0
  %2495 = vmatprep.subr.mxu0 0.0
  %2496 = vmatpush1.msra.mxu0 0.0
  %2497 = vmatprep.subr.mxu0 0.0
  %2498 = vmatpush1.msra.mxu0 0.0
  %2499 = vmatprep.subr.mxu0 0.0
  %2500 = vmatpush1.msra.mxu0 0.0
  %2501 = vmatprep.subr.mxu0 0.0
  %2502 = vmatpush1.msra.mxu0 %v89
  %2503 = vmatprep.subr.mxu0 0.0
  %2504 = vmatpush1.msra.mxu0 %v88
  %2505 = vmatprep.subr.mxu0 0.0
  %2506 = vmatpush2.msra.mxu0 0.0
  %2507 = vmatprep.subr.mxu0 0.0
  %2508 = vmatpush2.msra.mxu0 0.0
  %2509 = vmatprep.subr.mxu0 0.0
  %2510 = vmatpush2.msra.mxu0 0.0
  %2511 = vmatprep.subr.mxu0 0.0
  %2512 = vmatpush2.msra.mxu0 0.0
  %2513 = vmatprep.subr.mxu0 0.0
  %2514 = vmatpush2.msra.mxu0 0.0
  %2515 = vmatprep.subr.mxu0 0.0
  %2516 = vmatpush2.msra.mxu0 0.0
  %2517 = vmatprep.subr.mxu0 0.0
  %2518 = vmatpush2.msra.mxu0 0.0
  %2519 = vmatprep.subr.mxu0 0.0
  %2520 = vmatpush2.msra.mxu0 0.0
  %2521 = vmatprep.subr.mxu0 0.0
  %2522 = vmatpush2.msra.mxu0 0.0
  %2523 = vmatprep.subr.mxu0 0.0
  %2524 = vmatpush2.msra.mxu0 0.0
  %2525 = vmatprep.subr.mxu0 0.0
  %2526 = vmatpush2.msra.mxu0 0.0
  %2527 = vmatprep.subr.mxu0 0.0
  %2528 = vmatpush2.msra.mxu0 0.0
  %2529 = vmatprep.subr.mxu0 0.0
  %2530 = vmatpush2.msra.mxu0 0.0
  %2531 = vmatprep.subr.mxu0 0.0
  %2532 = vmatpush2.msra.mxu0 0.0
  %2533 = vmatprep.subr.mxu0 0.0
  %2534 = vmatpush2.msra.mxu0 0.0
  %2535 = vmatprep.subr.mxu0 0.0
  %2536 = vmatpush2.msra.mxu0 0.0
  %2537 = vmatprep.mubr.f32.mxu0 0.0
  %2538 = vmatmul.mubr.f32.gmra.mxu0 %v2308
  %v2539 = vpop.f32.mrf.mxu0
  %v2540 = vadd.f32 0.0, %v2539
  %v2541 = vpop.f32.mrf.mxu0
  %2542 = vdwg.mxu0
  %v2544 = vsel %vm111, %v2472, 0
  %2546 = vmatprep.subr.mxu0 0.0
  %2547 = vmatpush1.msra.mxu0 0.0
  %2548 = vmatprep.subr.mxu0 0.0
  %2549 = vmatpush1.msra.mxu0 0.0
  %2550 = vmatprep.subr.mxu0 0.0
  %2551 = vmatpush1.msra.mxu0 0.0
  %2552 = vmatprep.subr.mxu0 0.0
  %2553 = vmatpush1.msra.mxu0 0.0
  %2554 = vmatprep.subr.mxu0 0.0
  %2555 = vmatpush1.msra.mxu0 0.0
  %2556 = vmatprep.subr.mxu0 0.0
  %2557 = vmatpush1.msra.mxu0 0.0
  %2558 = vmatprep.subr.mxu0 0.0
  %2559 = vmatpush1.msra.mxu0 0.0
  %2560 = vmatprep.subr.mxu0 0.0
  %2561 = vmatpush1.msra.mxu0 0.0
  %2562 = vmatprep.subr.mxu0 0.0
  %2563 = vmatpush1.msra.mxu0 0.0
  %2564 = vmatprep.subr.mxu0 0.0
  %2565 = vmatpush1.msra.mxu0 0.0
  %2566 = vmatprep.subr.mxu0 0.0
  %2567 = vmatpush1.msra.mxu0 0.0
  %2568 = vmatprep.subr.mxu0 0.0
  %2569 = vmatpush1.msra.mxu0 0.0
  %2570 = vmatprep.subr.mxu0 0.0
  %2571 = vmatpush1.msra.mxu0 0.0
  %2572 = vmatprep.subr.mxu0 0.0
  %2573 = vmatpush1.msra.mxu0 0.0
  %2574 = vmatprep.subr.mxu0 0.0
  %2575 = vmatpush1.msra.mxu0 %v87
  %2576 = vmatprep.subr.mxu0 0.0
  %2577 = vmatpush1.msra.mxu0 %v86
  %2578 = vmatprep.subr.mxu0 0.0
  %2579 = vmatpush2.msra.mxu0 0.0
  %2580 = vmatprep.subr.mxu0 0.0
  %2581 = vmatpush2.msra.mxu0 0.0
  %2582 = vmatprep.subr.mxu0 0.0
  %2583 = vmatpush2.msra.mxu0 0.0
  %2584 = vmatprep.subr.mxu0 0.0
  %2585 = vmatpush2.msra.mxu0 0.0
  %2586 = vmatprep.subr.mxu0 0.0
  %2587 = vmatpush2.msra.mxu0 0.0
  %2588 = vmatprep.subr.mxu0 0.0
  %2589 = vmatpush2.msra.mxu0 0.0
  %2590 = vmatprep.subr.mxu0 0.0
  %2591 = vmatpush2.msra.mxu0 0.0
  %2592 = vmatprep.subr.mxu0 0.0
  %2593 = vmatpush2.msra.mxu0 0.0
  %2594 = vmatprep.subr.mxu0 0.0
  %2595 = vmatpush2.msra.mxu0 0.0
  %2596 = vmatprep.subr.mxu0 0.0
  %2597 = vmatpush2.msra.mxu0 0.0
  %2598 = vmatprep.subr.mxu0 0.0
  %2599 = vmatpush2.msra.mxu0 0.0
  %2600 = vmatprep.subr.mxu0 0.0
  %2601 = vmatpush2.msra.mxu0 0.0
  %2602 = vmatprep.subr.mxu0 0.0
  %2603 = vmatpush2.msra.mxu0 0.0
  %2604 = vmatprep.subr.mxu0 0.0
  %2605 = vmatpush2.msra.mxu0 0.0
  %2606 = vmatprep.subr.mxu0 0.0
  %2607 = vmatpush2.msra.mxu0 0.0
  %2608 = vmatprep.subr.mxu0 0.0
  %2609 = vmatpush2.msra.mxu0 0.0
  %2610 = vmatprep.mubr.f32.mxu0 0.0
  %2611 = vmatmul.mubr.f32.gmra.mxu0 %v2544
  %v2612 = vpop.f32.mrf.mxu0
  %v2613 = vadd.f32 %v2540, %v2612
  %v2614 = vpop.f32.mrf.mxu0
  %2615 = vdwg.mxu0
  %2616 = vmatprep.subr.mxu0 0.0
  %2617 = vmatpush1.msra.mxu0 0.0
  %2618 = vmatprep.subr.mxu0 0.0
  %2619 = vmatpush1.msra.mxu0 0.0
  %2620 = vmatprep.subr.mxu0 0.0
  %2621 = vmatpush1.msra.mxu0 0.0
  %2622 = vmatprep.subr.mxu0 0.0
  %2623 = vmatpush1.msra.mxu0 0.0
  %2624 = vmatprep.subr.mxu0 0.0
  %2625 = vmatpush1.msra.mxu0 0.0
  %2626 = vmatprep.subr.mxu0 0.0
  %2627 = vmatpush1.msra.mxu0 0.0
  %2628 = vmatprep.subr.mxu0 0.0
  %2629 = vmatpush1.msra.mxu0 0.0
  %2630 = vmatprep.subr.mxu0 0.0
  %2631 = vmatpush1.msra.mxu0 0.0
  %2632 = vmatprep.subr.mxu0 0.0
  %2633 = vmatpush1.msra.mxu0 0.0
  %2634 = vmatprep.subr.mxu0 0.0
  %2635 = vmatpush1.msra.mxu0 0.0
  %2636 = vmatprep.subr.mxu0 0.0
  %2637 = vmatpush1.msra.mxu0 0.0
  %2638 = vmatprep.subr.mxu0 0.0
  %2639 = vmatpush1.msra.mxu0 0.0
  %2640 = vmatprep.subr.mxu0 0.0
  %2641 = vmatpush1.msra.mxu0 %v93
  %2642 = vmatprep.subr.mxu0 0.0
  %2643 = vmatpush1.msra.mxu0 %v92
  %2644 = vmatprep.subr.mxu0 0.0
  %2645 = vmatpush1.msra.mxu0 %v91
  %2646 = vmatprep.subr.mxu0 0.0
  %2647 = vmatpush1.msra.mxu0 %v90
  %2648 = vmatprep.subr.mxu0 0.0
  %2649 = vmatpush2.msra.mxu0 0.0
  %2650 = vmatprep.subr.mxu0 0.0
  %2651 = vmatpush2.msra.mxu0 0.0
  %2652 = vmatprep.subr.mxu0 0.0
  %2653 = vmatpush2.msra.mxu0 0.0
  %2654 = vmatprep.subr.mxu0 0.0
  %2655 = vmatpush2.msra.mxu0 0.0
  %2656 = vmatprep.subr.mxu0 0.0
  %2657 = vmatpush2.msra.mxu0 0.0
  %2658 = vmatprep.subr.mxu0 0.0
  %2659 = vmatpush2.msra.mxu0 0.0
  %2660 = vmatprep.subr.mxu0 0.0
  %2661 = vmatpush2.msra.mxu0 0.0
  %2662 = vmatprep.subr.mxu0 0.0
  %2663 = vmatpush2.msra.mxu0 0.0
  %2664 = vmatprep.subr.mxu0 0.0
  %2665 = vmatpush2.msra.mxu0 0.0
  %2666 = vmatprep.subr.mxu0 0.0
  %2667 = vmatpush2.msra.mxu0 0.0
  %2668 = vmatprep.subr.mxu0 0.0
  %2669 = vmatpush2.msra.mxu0 0.0
  %2670 = vmatprep.subr.mxu0 0.0
  %2671 = vmatpush2.msra.mxu0 0.0
  %2672 = vmatprep.subr.mxu0 0.0
  %2673 = vmatpush2.msra.mxu0 0.0
  %2674 = vmatprep.subr.mxu0 0.0
  %2675 = vmatpush2.msra.mxu0 0.0
  %2676 = vmatprep.subr.mxu0 0.0
  %2677 = vmatpush2.msra.mxu0 0.0
  %2678 = vmatprep.subr.mxu0 0.0
  %2679 = vmatpush2.msra.mxu0 0.0
  %2680 = vmatprep.mubr.f32.mxu0 0.0
  %2681 = vmatmul.mubr.f32.gmra.mxu0 %v2159
  %v2682 = vpop.f32.mrf.mxu0
  %v2683 = vadd.f32 0.0, %v2682
  %v2684 = vpop.f32.mrf.mxu0
  %2685 = vdwg.mxu0
  %v2686 = vadd.f32 %v2613, %v2683
  %v2687 = vadd.f32 %v2686, %v99
  %v2688 = vtanh.pop %v2687
  %v2689 = vxor.u32 %v2687, 2147483648
  %v2690 = vmul.f32 %v2689, 1.442695
  %v2691 = vpow.pop %v2690
  %v2692 = vadd.f32 %v2691, 1.0
  %v2693 = vrcp.pop %v2692
  %v2694 = vmul.f32 1.0, %v2693
  %v2695 = vsel %vm105, %v2688, %v2694
  %v2696 = vmul.f32 %v2695, %v2052
  %2698 = vrot.lane.b32.xlu0 %v2695, 64
  %v2699 = vpop.permute.xlu0 %2698
  %v2701 = vmul.f32 %v2695, %v2699
  %2703 = vrot.lane.b32.xlu0 %v2701, 32
  %v2704 = vpop.permute.xlu0 %2703
  %v2706 = vadd.f32 %v2696, %v2704
  %v2707 = vtanh.pop %v2706
  %2709 = vrot.lane.b32.xlu0 %v2707, 64
  %v2710 = vpop.permute.xlu0 %2709
  %v2712 = vmul.f32 %v2695, %v2710
  %s2713 = scalar_lea.vmem %s13, 24
  %2714 = vst.msk [vmem:[%s2713] sm:$0xff] %vm111, %v2472
  %s2715 = scalar_lea.vmem %s0, 32
  %v2716 = vld [vmem:[%s2715] sm:$0xff]
  %s2717 = scalar_lea.vmem %s1, 32
  %v2718 = vld [vmem:[%s2717] sm:$0xff]
  %v2719 = vsub.f32 1.0, %v2718
  %v2720 = vmul.f32 %v2719, %v2067
  %v2721 = vadd.f32 %v2720, 1.0
  %v2723 = vsel %vm111, %v2721, 0
  %2725 = vmatprep.subr.mxu0 0.0
  %2726 = vmatpush1.msra.mxu0 0.0
  %2727 = vmatprep.subr.mxu0 0.0
  %2728 = vmatpush1.msra.mxu0 0.0
  %2729 = vmatprep.subr.mxu0 0.0
  %2730 = vmatpush1.msra.mxu0 0.0
  %2731 = vmatprep.subr.mxu0 0.0
  %2732 = vmatpush1.msra.mxu0 0.0
  %2733 = vmatprep.subr.mxu0 0.0
  %2734 = vmatpush1.msra.mxu0 0.0
  %2735 = vmatprep.subr.mxu0 0.0
  %2736 = vmatpush1.msra.mxu0 0.0
  %2737 = vmatprep.subr.mxu0 0.0
  %2738 = vmatpush1.msra.mxu0 0.0
  %2739 = vmatprep.subr.mxu0 0.0
  %2740 = vmatpush1.msra.mxu0 0.0
  %2741 = vmatprep.subr.mxu0 0.0
  %2742 = vmatpush1.msra.mxu0 0.0
  %2743 = vmatprep.subr.mxu0 0.0
  %2744 = vmatpush1.msra.mxu0 0.0
  %2745 = vmatprep.subr.mxu0 0.0
  %2746 = vmatpush1.msra.mxu0 0.0
  %2747 = vmatprep.subr.mxu0 0.0
  %2748 = vmatpush1.msra.mxu0 0.0
  %2749 = vmatprep.subr.mxu0 0.0
  %2750 = vmatpush1.msra.mxu0 0.0
  %2751 = vmatprep.subr.mxu0 0.0
  %2752 = vmatpush1.msra.mxu0 0.0
  %2753 = vmatprep.subr.mxu0 0.0
  %2754 = vmatpush1.msra.mxu0 %v68
  %2755 = vmatprep.subr.mxu0 0.0
  %2756 = vmatpush1.msra.mxu0 %v67
  %2757 = vmatprep.subr.mxu0 0.0
  %2758 = vmatpush2.msra.mxu0 0.0
  %2759 = vmatprep.subr.mxu0 0.0
  %2760 = vmatpush2.msra.mxu0 0.0
  %2761 = vmatprep.subr.mxu0 0.0
  %2762 = vmatpush2.msra.mxu0 0.0
  %2763 = vmatprep.subr.mxu0 0.0
  %2764 = vmatpush2.msra.mxu0 0.0
  %2765 = vmatprep.subr.mxu0 0.0
  %2766 = vmatpush2.msra.mxu0 0.0
  %2767 = vmatprep.subr.mxu0 0.0
  %2768 = vmatpush2.msra.mxu0 0.0
  %2769 = vmatprep.subr.mxu0 0.0
  %2770 = vmatpush2.msra.mxu0 0.0
  %2771 = vmatprep.subr.mxu0 0.0
  %2772 = vmatpush2.msra.mxu0 0.0
  %2773 = vmatprep.subr.mxu0 0.0
  %2774 = vmatpush2.msra.mxu0 0.0
  %2775 = vmatprep.subr.mxu0 0.0
  %2776 = vmatpush2.msra.mxu0 0.0
  %2777 = vmatprep.subr.mxu0 0.0
  %2778 = vmatpush2.msra.mxu0 0.0
  %2779 = vmatprep.subr.mxu0 0.0
  %2780 = vmatpush2.msra.mxu0 0.0
  %2781 = vmatprep.subr.mxu0 0.0
  %2782 = vmatpush2.msra.mxu0 0.0
  %2783 = vmatprep.subr.mxu0 0.0
  %2784 = vmatpush2.msra.mxu0 0.0
  %2785 = vmatprep.subr.mxu0 0.0
  %2786 = vmatpush2.msra.mxu0 0.0
  %2787 = vmatprep.subr.mxu0 0.0
  %2788 = vmatpush2.msra.mxu0 0.0
  %2789 = vmatprep.mubr.f32.mxu0 0.0
  %2790 = vmatmul.mubr.f32.gmra.mxu0 %v2723
  %v2791 = vpop.f32.mrf.mxu0
  %v2792 = vadd.f32 %v74, %v2791
  %v2793 = vpop.f32.mrf.mxu0
  %2794 = vdwg.mxu0
  %v2795 = vmax.f32 %v2792, 0.0
  %v2796 = vsub.f32 0.0, %v2795
  %v2797 = vmul.f32 %v2796, 1.442695
  %v2798 = vpow.pop %v2797
  %v2799 = vmul.f32 %v2721, %v50
  %v2800 = vadd.f32 %v2799, %v54
  %v2801 = vmax.f32 %v2800, 0.0
  %v2802 = vsub.f32 0.0, %v2801
  %v2803 = vmul.f32 %v2802, 1.442695
  %v2804 = vpow.pop %v2803
  %2806 = vrot.lane.b32.xlu0 %v2798, 96
  %v2807 = vpop.permute.xlu0 %2806
  %v2809 = vmul.f32 %v2712, %v2807
  %2811 = vrot.lane.b32.xlu0 %v2809, 32
  %v2812 = vpop.permute.xlu0 %2811
  %v2813 = vsel %vm196, %v2812, 0
  %2815 = vmatprep.subr.mxu0 0.0
  %2816 = vmatpush1.msra.mxu0 0.0
  %2817 = vmatprep.subr.mxu0 0.0
  %2818 = vmatpush1.msra.mxu0 0.0
  %2819 = vmatprep.subr.mxu0 0.0
  %2820 = vmatpush1.msra.mxu0 0.0
  %2821 = vmatprep.subr.mxu0 0.0
  %2822 = vmatpush1.msra.mxu0 0.0
  %2823 = vmatprep.subr.mxu0 0.0
  %2824 = vmatpush1.msra.mxu0 0.0
  %2825 = vmatprep.subr.mxu0 0.0
  %2826 = vmatpush1.msra.mxu0 0.0
  %2827 = vmatprep.subr.mxu0 0.0
  %2828 = vmatpush1.msra.mxu0 0.0
  %2829 = vmatprep.subr.mxu0 0.0
  %2830 = vmatpush1.msra.mxu0 0.0
  %2831 = vmatprep.subr.mxu0 0.0
  %2832 = vmatpush1.msra.mxu0 0.0
  %2833 = vmatprep.subr.mxu0 0.0
  %2834 = vmatpush1.msra.mxu0 0.0
  %2835 = vmatprep.subr.mxu0 0.0
  %2836 = vmatpush1.msra.mxu0 0.0
  %2837 = vmatprep.subr.mxu0 0.0
  %2838 = vmatpush1.msra.mxu0 0.0
  %2839 = vmatprep.subr.mxu0 0.0
  %2840 = vmatpush1.msra.mxu0 %v79
  %2841 = vmatprep.subr.mxu0 0.0
  %2842 = vmatpush1.msra.mxu0 %v78
  %2843 = vmatprep.subr.mxu0 0.0
  %2844 = vmatpush1.msra.mxu0 %v77
  %2845 = vmatprep.subr.mxu0 0.0
  %2846 = vmatpush1.msra.mxu0 %v76
  %2847 = vmatprep.subr.mxu0 0.0
  %2848 = vmatpush2.msra.mxu0 0.0
  %2849 = vmatprep.subr.mxu0 0.0
  %2850 = vmatpush2.msra.mxu0 0.0
  %2851 = vmatprep.subr.mxu0 0.0
  %2852 = vmatpush2.msra.mxu0 0.0
  %2853 = vmatprep.subr.mxu0 0.0
  %2854 = vmatpush2.msra.mxu0 0.0
  %2855 = vmatprep.subr.mxu0 0.0
  %2856 = vmatpush2.msra.mxu0 0.0
  %2857 = vmatprep.subr.mxu0 0.0
  %2858 = vmatpush2.msra.mxu0 0.0
  %2859 = vmatprep.subr.mxu0 0.0
  %2860 = vmatpush2.msra.mxu0 0.0
  %2861 = vmatprep.subr.mxu0 0.0
  %2862 = vmatpush2.msra.mxu0 0.0
  %2863 = vmatprep.subr.mxu0 0.0
  %2864 = vmatpush2.msra.mxu0 0.0
  %2865 = vmatprep.subr.mxu0 0.0
  %2866 = vmatpush2.msra.mxu0 0.0
  %2867 = vmatprep.subr.mxu0 0.0
  %2868 = vmatpush2.msra.mxu0 0.0
  %2869 = vmatprep.subr.mxu0 0.0
  %2870 = vmatpush2.msra.mxu0 0.0
  %2871 = vmatprep.subr.mxu0 0.0
  %2872 = vmatpush2.msra.mxu0 0.0
  %2873 = vmatprep.subr.mxu0 0.0
  %2874 = vmatpush2.msra.mxu0 0.0
  %2875 = vmatprep.subr.mxu0 0.0
  %2876 = vmatpush2.msra.mxu0 0.0
  %2877 = vmatprep.subr.mxu0 0.0
  %2878 = vmatpush2.msra.mxu0 0.0
  %2879 = vmatprep.mubr.f32.mxu0 0.0
  %2880 = vmatmul.mubr.f32.gmra.mxu0 %v2813
  %v2881 = vpop.f32.mrf.mxu0
  %v2882 = vadd.f32 %v58, %v2881
  %v2883 = vpop.f32.mrf.mxu0
  %2884 = vdwg.mxu0
  %v2885 = vmul.f32 %v2718, %v2716
  %v2886 = vmul.f32 %v2719, %v2882
  %v2887 = vadd.f32 %v2885, %v2886
  %v2889 = vsel %vm111, %v2887, 0
  %2891 = vmatprep.subr.mxu0 0.0
  %2892 = vmatpush1.msra.mxu0 0.0
  %2893 = vmatprep.subr.mxu0 0.0
  %2894 = vmatpush1.msra.mxu0 0.0
  %2895 = vmatprep.subr.mxu0 0.0
  %2896 = vmatpush1.msra.mxu0 0.0
  %2897 = vmatprep.subr.mxu0 0.0
  %2898 = vmatpush1.msra.mxu0 0.0
  %2899 = vmatprep.subr.mxu0 0.0
  %2900 = vmatpush1.msra.mxu0 0.0
  %2901 = vmatprep.subr.mxu0 0.0
  %2902 = vmatpush1.msra.mxu0 0.0
  %2903 = vmatprep.subr.mxu0 0.0
  %2904 = vmatpush1.msra.mxu0 0.0
  %2905 = vmatprep.subr.mxu0 0.0
  %2906 = vmatpush1.msra.mxu0 0.0
  %2907 = vmatprep.subr.mxu0 0.0
  %2908 = vmatpush1.msra.mxu0 0.0
  %2909 = vmatprep.subr.mxu0 0.0
  %2910 = vmatpush1.msra.mxu0 0.0
  %2911 = vmatprep.subr.mxu0 0.0
  %2912 = vmatpush1.msra.mxu0 0.0
  %2913 = vmatprep.subr.mxu0 0.0
  %2914 = vmatpush1.msra.mxu0 0.0
  %2915 = vmatprep.subr.mxu0 0.0
  %2916 = vmatpush1.msra.mxu0 0.0
  %2917 = vmatprep.subr.mxu0 0.0
  %2918 = vmatpush1.msra.mxu0 0.0
  %2919 = vmatprep.subr.mxu0 0.0
  %2920 = vmatpush1.msra.mxu0 %v81
  %2921 = vmatprep.subr.mxu0 0.0
  %2922 = vmatpush1.msra.mxu0 %v80
  %2923 = vmatprep.subr.mxu0 0.0
  %2924 = vmatpush2.msra.mxu0 0.0
  %2925 = vmatprep.subr.mxu0 0.0
  %2926 = vmatpush2.msra.mxu0 0.0
  %2927 = vmatprep.subr.mxu0 0.0
  %2928 = vmatpush2.msra.mxu0 0.0
  %2929 = vmatprep.subr.mxu0 0.0
  %2930 = vmatpush2.msra.mxu0 0.0
  %2931 = vmatprep.subr.mxu0 0.0
  %2932 = vmatpush2.msra.mxu0 0.0
  %2933 = vmatprep.subr.mxu0 0.0
  %2934 = vmatpush2.msra.mxu0 0.0
  %2935 = vmatprep.subr.mxu0 0.0
  %2936 = vmatpush2.msra.mxu0 0.0
  %2937 = vmatprep.subr.mxu0 0.0
  %2938 = vmatpush2.msra.mxu0 0.0
  %2939 = vmatprep.subr.mxu0 0.0
  %2940 = vmatpush2.msra.mxu0 0.0
  %2941 = vmatprep.subr.mxu0 0.0
  %2942 = vmatpush2.msra.mxu0 0.0
  %2943 = vmatprep.subr.mxu0 0.0
  %2944 = vmatpush2.msra.mxu0 0.0
  %2945 = vmatprep.subr.mxu0 0.0
  %2946 = vmatpush2.msra.mxu0 0.0
  %2947 = vmatprep.subr.mxu0 0.0
  %2948 = vmatpush2.msra.mxu0 0.0
  %2949 = vmatprep.subr.mxu0 0.0
  %2950 = vmatpush2.msra.mxu0 0.0
  %2951 = vmatprep.subr.mxu0 0.0
  %2952 = vmatpush2.msra.mxu0 0.0
  %2953 = vmatprep.subr.mxu0 0.0
  %2954 = vmatpush2.msra.mxu0 0.0
  %2955 = vmatprep.mubr.f32.mxu0 0.0
  %2956 = vmatmul.mubr.f32.gmra.mxu0 %v2889
  %v2957 = vpop.f32.mrf.mxu0
  %v2958 = vadd.f32 %v62, %v2957
  %v2959 = vpop.f32.mrf.mxu0
  %2960 = vdwg.mxu0
  %v2962 = vsel %vm111, %v2718, 0
  %2964 = vmatprep.subr.mxu0 0.0
  %2965 = vmatpush1.msra.mxu0 0.0
  %2966 = vmatprep.subr.mxu0 0.0
  %2967 = vmatpush1.msra.mxu0 0.0
  %2968 = vmatprep.subr.mxu0 0.0
  %2969 = vmatpush1.msra.mxu0 0.0
  %2970 = vmatprep.subr.mxu0 0.0
  %2971 = vmatpush1.msra.mxu0 0.0
  %2972 = vmatprep.subr.mxu0 0.0
  %2973 = vmatpush1.msra.mxu0 0.0
  %2974 = vmatprep.subr.mxu0 0.0
  %2975 = vmatpush1.msra.mxu0 0.0
  %2976 = vmatprep.subr.mxu0 0.0
  %2977 = vmatpush1.msra.mxu0 0.0
  %2978 = vmatprep.subr.mxu0 0.0
  %2979 = vmatpush1.msra.mxu0 0.0
  %2980 = vmatprep.subr.mxu0 0.0
  %2981 = vmatpush1.msra.mxu0 0.0
  %2982 = vmatprep.subr.mxu0 0.0
  %2983 = vmatpush1.msra.mxu0 0.0
  %2984 = vmatprep.subr.mxu0 0.0
  %2985 = vmatpush1.msra.mxu0 0.0
  %2986 = vmatprep.subr.mxu0 0.0
  %2987 = vmatpush1.msra.mxu0 0.0
  %2988 = vmatprep.subr.mxu0 0.0
  %2989 = vmatpush1.msra.mxu0 0.0
  %2990 = vmatprep.subr.mxu0 0.0
  %2991 = vmatpush1.msra.mxu0 0.0
  %2992 = vmatprep.subr.mxu0 0.0
  %2993 = vmatpush1.msra.mxu0 %v85
  %2994 = vmatprep.subr.mxu0 0.0
  %2995 = vmatpush1.msra.mxu0 %v84
  %2996 = vmatprep.subr.mxu0 0.0
  %2997 = vmatpush2.msra.mxu0 0.0
  %2998 = vmatprep.subr.mxu0 0.0
  %2999 = vmatpush2.msra.mxu0 0.0
  %3000 = vmatprep.subr.mxu0 0.0
  %3001 = vmatpush2.msra.mxu0 0.0
  %3002 = vmatprep.subr.mxu0 0.0
  %3003 = vmatpush2.msra.mxu0 0.0
  %3004 = vmatprep.subr.mxu0 0.0
  %3005 = vmatpush2.msra.mxu0 0.0
  %3006 = vmatprep.subr.mxu0 0.0
  %3007 = vmatpush2.msra.mxu0 0.0
  %3008 = vmatprep.subr.mxu0 0.0
  %3009 = vmatpush2.msra.mxu0 0.0
  %3010 = vmatprep.subr.mxu0 0.0
  %3011 = vmatpush2.msra.mxu0 0.0
  %3012 = vmatprep.subr.mxu0 0.0
  %3013 = vmatpush2.msra.mxu0 0.0
  %3014 = vmatprep.subr.mxu0 0.0
  %3015 = vmatpush2.msra.mxu0 0.0
  %3016 = vmatprep.subr.mxu0 0.0
  %3017 = vmatpush2.msra.mxu0 0.0
  %3018 = vmatprep.subr.mxu0 0.0
  %3019 = vmatpush2.msra.mxu0 0.0
  %3020 = vmatprep.subr.mxu0 0.0
  %3021 = vmatpush2.msra.mxu0 0.0
  %3022 = vmatprep.subr.mxu0 0.0
  %3023 = vmatpush2.msra.mxu0 0.0
  %3024 = vmatprep.subr.mxu0 0.0
  %3025 = vmatpush2.msra.mxu0 0.0
  %3026 = vmatprep.subr.mxu0 0.0
  %3027 = vmatpush2.msra.mxu0 0.0
  %3028 = vmatprep.mubr.f32.mxu0 0.0
  %3029 = vmatmul.mubr.f32.gmra.mxu0 %v2962
  %v3030 = vpop.f32.mrf.mxu0
  %v3031 = vadd.f32 0.0, %v3030
  %v3032 = vpop.f32.mrf.mxu0
  %3033 = vdwg.mxu0
  %v3035 = vsel %vm111, %v2804, 0
  %3037 = vmatprep.subr.mxu0 0.0
  %3038 = vmatpush1.msra.mxu0 0.0
  %3039 = vmatprep.subr.mxu0 0.0
  %3040 = vmatpush1.msra.mxu0 0.0
  %3041 = vmatprep.subr.mxu0 0.0
  %3042 = vmatpush1.msra.mxu0 0.0
  %3043 = vmatprep.subr.mxu0 0.0
  %3044 = vmatpush1.msra.mxu0 0.0
  %3045 = vmatprep.subr.mxu0 0.0
  %3046 = vmatpush1.msra.mxu0 0.0
  %3047 = vmatprep.subr.mxu0 0.0
  %3048 = vmatpush1.msra.mxu0 0.0
  %3049 = vmatprep.subr.mxu0 0.0
  %3050 = vmatpush1.msra.mxu0 0.0
  %3051 = vmatprep.subr.mxu0 0.0
  %3052 = vmatpush1.msra.mxu0 0.0
  %3053 = vmatprep.subr.mxu0 0.0
  %3054 = vmatpush1.msra.mxu0 0.0
  %3055 = vmatprep.subr.mxu0 0.0
  %3056 = vmatpush1.msra.mxu0 0.0
  %3057 = vmatprep.subr.mxu0 0.0
  %3058 = vmatpush1.msra.mxu0 0.0
  %3059 = vmatprep.subr.mxu0 0.0
  %3060 = vmatpush1.msra.mxu0 0.0
  %3061 = vmatprep.subr.mxu0 0.0
  %3062 = vmatpush1.msra.mxu0 0.0
  %3063 = vmatprep.subr.mxu0 0.0
  %3064 = vmatpush1.msra.mxu0 0.0
  %3065 = vmatprep.subr.mxu0 0.0
  %3066 = vmatpush1.msra.mxu0 %v83
  %3067 = vmatprep.subr.mxu0 0.0
  %3068 = vmatpush1.msra.mxu0 %v82
  %3069 = vmatprep.subr.mxu0 0.0
  %3070 = vmatpush2.msra.mxu0 0.0
  %3071 = vmatprep.subr.mxu0 0.0
  %3072 = vmatpush2.msra.mxu0 0.0
  %3073 = vmatprep.subr.mxu0 0.0
  %3074 = vmatpush2.msra.mxu0 0.0
  %3075 = vmatprep.subr.mxu0 0.0
  %3076 = vmatpush2.msra.mxu0 0.0
  %3077 = vmatprep.subr.mxu0 0.0
  %3078 = vmatpush2.msra.mxu0 0.0
  %3079 = vmatprep.subr.mxu0 0.0
  %3080 = vmatpush2.msra.mxu0 0.0
  %3081 = vmatprep.subr.mxu0 0.0
  %3082 = vmatpush2.msra.mxu0 0.0
  %3083 = vmatprep.subr.mxu0 0.0
  %3084 = vmatpush2.msra.mxu0 0.0
  %3085 = vmatprep.subr.mxu0 0.0
  %3086 = vmatpush2.msra.mxu0 0.0
  %3087 = vmatprep.subr.mxu0 0.0
  %3088 = vmatpush2.msra.mxu0 0.0
  %3089 = vmatprep.subr.mxu0 0.0
  %3090 = vmatpush2.msra.mxu0 0.0
  %3091 = vmatprep.subr.mxu0 0.0
  %3092 = vmatpush2.msra.mxu0 0.0
  %3093 = vmatprep.subr.mxu0 0.0
  %3094 = vmatpush2.msra.mxu0 0.0
  %3095 = vmatprep.subr.mxu0 0.0
  %3096 = vmatpush2.msra.mxu0 0.0
  %3097 = vmatprep.subr.mxu0 0.0
  %3098 = vmatpush2.msra.mxu0 0.0
  %3099 = vmatprep.subr.mxu0 0.0
  %3100 = vmatpush2.msra.mxu0 0.0
  %3101 = vmatprep.mubr.f32.mxu0 0.0
  %3102 = vmatmul.mubr.f32.gmra.mxu0 %v3035
  %v3103 = vpop.f32.mrf.mxu0
  %v3104 = vadd.f32 %v3031, %v3103
  %v3105 = vpop.f32.mrf.mxu0
  %3106 = vdwg.mxu0
  %v3107 = vadd.f32 %v3104, %v66
  %v3108 = vmul.f32 %v3107, %v2958
  %v3109 = vsub.f32 1.0, %v3107
  %v3110 = vmul.f32 %v3109, %v2882
  %v3111 = vadd.f32 %v3108, %v3110
  %v3112 = vsub.f32 %v2716, %v2882
  %v3113 = vand.u32 2147483647, %v3112
  %v3114 = vsub.f32 %v2716, %v2958
  %v3115 = vand.u32 2147483647, %v3114
  %v3116 = vadd.f32 %v3113, %v3115
  %v3117 = vsub.f32 %v2716, %v3111
  %v3118 = vand.u32 2147483647, %v3117
  %v3119 = vadd.f32 %v3116, %v3118
  %v3120 = vmul.f32 %v3119, %v2718
  %v3121 = vsel %vm111, %v3120, 0.0
  %3122 = vadd.xlane.f32.xlu0 %v3121
  %v3123 = vpop.xlane.xlu0 %3122
  %v3124 = vadd.f32 %v2470, %v3123
  %v3125 = vmul.f32 %v2719, %v3111
  %v3126 = vadd.f32 %v2885, %v3125
  %3127 = vmatprep.subr.mxu0 0.0
  %3128 = vmatpush1.msra.mxu0 0.0
  %3129 = vmatprep.subr.mxu0 0.0
  %3130 = vmatpush1.msra.mxu0 0.0
  %3131 = vmatprep.subr.mxu0 0.0
  %3132 = vmatpush1.msra.mxu0 0.0
  %3133 = vmatprep.subr.mxu0 0.0
  %3134 = vmatpush1.msra.mxu0 0.0
  %3135 = vmatprep.subr.mxu0 0.0
  %3136 = vmatpush1.msra.mxu0 0.0
  %3137 = vmatprep.subr.mxu0 0.0
  %3138 = vmatpush1.msra.mxu0 0.0
  %3139 = vmatprep.subr.mxu0 0.0
  %3140 = vmatpush1.msra.mxu0 0.0
  %3141 = vmatprep.subr.mxu0 0.0
  %3142 = vmatpush1.msra.mxu0 0.0
  %3143 = vmatprep.subr.mxu0 0.0
  %3144 = vmatpush1.msra.mxu0 0.0
  %3145 = vmatprep.subr.mxu0 0.0
  %3146 = vmatpush1.msra.mxu0 0.0
  %3147 = vmatprep.subr.mxu0 0.0
  %3148 = vmatpush1.msra.mxu0 0.0
  %3149 = vmatprep.subr.mxu0 0.0
  %3150 = vmatpush1.msra.mxu0 0.0
  %3151 = vmatprep.subr.mxu0 0.0
  %3152 = vmatpush1.msra.mxu0 0.0
  %3153 = vmatprep.subr.mxu0 0.0
  %3154 = vmatpush1.msra.mxu0 0.0
  %3155 = vmatprep.subr.mxu0 0.0
  %3156 = vmatpush1.msra.mxu0 %v89
  %3157 = vmatprep.subr.mxu0 0.0
  %3158 = vmatpush1.msra.mxu0 %v88
  %3159 = vmatprep.subr.mxu0 0.0
  %3160 = vmatpush2.msra.mxu0 0.0
  %3161 = vmatprep.subr.mxu0 0.0
  %3162 = vmatpush2.msra.mxu0 0.0
  %3163 = vmatprep.subr.mxu0 0.0
  %3164 = vmatpush2.msra.mxu0 0.0
  %3165 = vmatprep.subr.mxu0 0.0
  %3166 = vmatpush2.msra.mxu0 0.0
  %3167 = vmatprep.subr.mxu0 0.0
  %3168 = vmatpush2.msra.mxu0 0.0
  %3169 = vmatprep.subr.mxu0 0.0
  %3170 = vmatpush2.msra.mxu0 0.0
  %3171 = vmatprep.subr.mxu0 0.0
  %3172 = vmatpush2.msra.mxu0 0.0
  %3173 = vmatprep.subr.mxu0 0.0
  %3174 = vmatpush2.msra.mxu0 0.0
  %3175 = vmatprep.subr.mxu0 0.0
  %3176 = vmatpush2.msra.mxu0 0.0
  %3177 = vmatprep.subr.mxu0 0.0
  %3178 = vmatpush2.msra.mxu0 0.0
  %3179 = vmatprep.subr.mxu0 0.0
  %3180 = vmatpush2.msra.mxu0 0.0
  %3181 = vmatprep.subr.mxu0 0.0
  %3182 = vmatpush2.msra.mxu0 0.0
  %3183 = vmatprep.subr.mxu0 0.0
  %3184 = vmatpush2.msra.mxu0 0.0
  %3185 = vmatprep.subr.mxu0 0.0
  %3186 = vmatpush2.msra.mxu0 0.0
  %3187 = vmatprep.subr.mxu0 0.0
  %3188 = vmatpush2.msra.mxu0 0.0
  %3189 = vmatprep.subr.mxu0 0.0
  %3190 = vmatpush2.msra.mxu0 0.0
  %3191 = vmatprep.mubr.f32.mxu0 0.0
  %3192 = vmatmul.mubr.f32.gmra.mxu0 %v2962
  %v3193 = vpop.f32.mrf.mxu0
  %v3194 = vadd.f32 0.0, %v3193
  %v3195 = vpop.f32.mrf.mxu0
  %3196 = vdwg.mxu0
  %v3198 = vsel %vm111, %v3126, 0
  %3200 = vmatprep.subr.mxu0 0.0
  %3201 = vmatpush1.msra.mxu0 0.0
  %3202 = vmatprep.subr.mxu0 0.0
  %3203 = vmatpush1.msra.mxu0 0.0
  %3204 = vmatprep.subr.mxu0 0.0
  %3205 = vmatpush1.msra.mxu0 0.0
  %3206 = vmatprep.subr.mxu0 0.0
  %3207 = vmatpush1.msra.mxu0 0.0
  %3208 = vmatprep.subr.mxu0 0.0
  %3209 = vmatpush1.msra.mxu0 0.0
  %3210 = vmatprep.subr.mxu0 0.0
  %3211 = vmatpush1.msra.mxu0 0.0
  %3212 = vmatprep.subr.mxu0 0.0
  %3213 = vmatpush1.msra.mxu0 0.0
  %3214 = vmatprep.subr.mxu0 0.0
  %3215 = vmatpush1.msra.mxu0 0.0
  %3216 = vmatprep.subr.mxu0 0.0
  %3217 = vmatpush1.msra.mxu0 0.0
  %3218 = vmatprep.subr.mxu0 0.0
  %3219 = vmatpush1.msra.mxu0 0.0
  %3220 = vmatprep.subr.mxu0 0.0
  %3221 = vmatpush1.msra.mxu0 0.0
  %3222 = vmatprep.subr.mxu0 0.0
  %3223 = vmatpush1.msra.mxu0 0.0
  %3224 = vmatprep.subr.mxu0 0.0
  %3225 = vmatpush1.msra.mxu0 0.0
  %3226 = vmatprep.subr.mxu0 0.0
  %3227 = vmatpush1.msra.mxu0 0.0
  %3228 = vmatprep.subr.mxu0 0.0
  %3229 = vmatpush1.msra.mxu0 %v87
  %3230 = vmatprep.subr.mxu0 0.0
  %3231 = vmatpush1.msra.mxu0 %v86
  %3232 = vmatprep.subr.mxu0 0.0
  %3233 = vmatpush2.msra.mxu0 0.0
  %3234 = vmatprep.subr.mxu0 0.0
  %3235 = vmatpush2.msra.mxu0 0.0
  %3236 = vmatprep.subr.mxu0 0.0
  %3237 = vmatpush2.msra.mxu0 0.0
  %3238 = vmatprep.subr.mxu0 0.0
  %3239 = vmatpush2.msra.mxu0 0.0
  %3240 = vmatprep.subr.mxu0 0.0
  %3241 = vmatpush2.msra.mxu0 0.0
  %3242 = vmatprep.subr.mxu0 0.0
  %3243 = vmatpush2.msra.mxu0 0.0
  %3244 = vmatprep.subr.mxu0 0.0
  %3245 = vmatpush2.msra.mxu0 0.0
  %3246 = vmatprep.subr.mxu0 0.0
  %3247 = vmatpush2.msra.mxu0 0.0
  %3248 = vmatprep.subr.mxu0 0.0
  %3249 = vmatpush2.msra.mxu0 0.0
  %3250 = vmatprep.subr.mxu0 0.0
  %3251 = vmatpush2.msra.mxu0 0.0
  %3252 = vmatprep.subr.mxu0 0.0
  %3253 = vmatpush2.msra.mxu0 0.0
  %3254 = vmatprep.subr.mxu0 0.0
  %3255 = vmatpush2.msra.mxu0 0.0
  %3256 = vmatprep.subr.mxu0 0.0
  %3257 = vmatpush2.msra.mxu0 0.0
  %3258 = vmatprep.subr.mxu0 0.0
  %3259 = vmatpush2.msra.mxu0 0.0
  %3260 = vmatprep.subr.mxu0 0.0
  %3261 = vmatpush2.msra.mxu0 0.0
  %3262 = vmatprep.subr.mxu0 0.0
  %3263 = vmatpush2.msra.mxu0 0.0
  %3264 = vmatprep.mubr.f32.mxu0 0.0
  %3265 = vmatmul.mubr.f32.gmra.mxu0 %v3198
  %v3266 = vpop.f32.mrf.mxu0
  %v3267 = vadd.f32 %v3194, %v3266
  %v3268 = vpop.f32.mrf.mxu0
  %3269 = vdwg.mxu0
  %3270 = vmatprep.subr.mxu0 0.0
  %3271 = vmatpush1.msra.mxu0 0.0
  %3272 = vmatprep.subr.mxu0 0.0
  %3273 = vmatpush1.msra.mxu0 0.0
  %3274 = vmatprep.subr.mxu0 0.0
  %3275 = vmatpush1.msra.mxu0 0.0
  %3276 = vmatprep.subr.mxu0 0.0
  %3277 = vmatpush1.msra.mxu0 0.0
  %3278 = vmatprep.subr.mxu0 0.0
  %3279 = vmatpush1.msra.mxu0 0.0
  %3280 = vmatprep.subr.mxu0 0.0
  %3281 = vmatpush1.msra.mxu0 0.0
  %3282 = vmatprep.subr.mxu0 0.0
  %3283 = vmatpush1.msra.mxu0 0.0
  %3284 = vmatprep.subr.mxu0 0.0
  %3285 = vmatpush1.msra.mxu0 0.0
  %3286 = vmatprep.subr.mxu0 0.0
  %3287 = vmatpush1.msra.mxu0 0.0
  %3288 = vmatprep.subr.mxu0 0.0
  %3289 = vmatpush1.msra.mxu0 0.0
  %3290 = vmatprep.subr.mxu0 0.0
  %3291 = vmatpush1.msra.mxu0 0.0
  %3292 = vmatprep.subr.mxu0 0.0
  %3293 = vmatpush1.msra.mxu0 0.0
  %3294 = vmatprep.subr.mxu0 0.0
  %3295 = vmatpush1.msra.mxu0 %v93
  %3296 = vmatprep.subr.mxu0 0.0
  %3297 = vmatpush1.msra.mxu0 %v92
  %3298 = vmatprep.subr.mxu0 0.0
  %3299 = vmatpush1.msra.mxu0 %v91
  %3300 = vmatprep.subr.mxu0 0.0
  %3301 = vmatpush1.msra.mxu0 %v90
  %3302 = vmatprep.subr.mxu0 0.0
  %3303 = vmatpush2.msra.mxu0 0.0
  %3304 = vmatprep.subr.mxu0 0.0
  %3305 = vmatpush2.msra.mxu0 0.0
  %3306 = vmatprep.subr.mxu0 0.0
  %3307 = vmatpush2.msra.mxu0 0.0
  %3308 = vmatprep.subr.mxu0 0.0
  %3309 = vmatpush2.msra.mxu0 0.0
  %3310 = vmatprep.subr.mxu0 0.0
  %3311 = vmatpush2.msra.mxu0 0.0
  %3312 = vmatprep.subr.mxu0 0.0
  %3313 = vmatpush2.msra.mxu0 0.0
  %3314 = vmatprep.subr.mxu0 0.0
  %3315 = vmatpush2.msra.mxu0 0.0
  %3316 = vmatprep.subr.mxu0 0.0
  %3317 = vmatpush2.msra.mxu0 0.0
  %3318 = vmatprep.subr.mxu0 0.0
  %3319 = vmatpush2.msra.mxu0 0.0
  %3320 = vmatprep.subr.mxu0 0.0
  %3321 = vmatpush2.msra.mxu0 0.0
  %3322 = vmatprep.subr.mxu0 0.0
  %3323 = vmatpush2.msra.mxu0 0.0
  %3324 = vmatprep.subr.mxu0 0.0
  %3325 = vmatpush2.msra.mxu0 0.0
  %3326 = vmatprep.subr.mxu0 0.0
  %3327 = vmatpush2.msra.mxu0 0.0
  %3328 = vmatprep.subr.mxu0 0.0
  %3329 = vmatpush2.msra.mxu0 0.0
  %3330 = vmatprep.subr.mxu0 0.0
  %3331 = vmatpush2.msra.mxu0 0.0
  %3332 = vmatprep.subr.mxu0 0.0
  %3333 = vmatpush2.msra.mxu0 0.0
  %3334 = vmatprep.mubr.f32.mxu0 0.0
  %3335 = vmatmul.mubr.f32.gmra.mxu0 %v2813
  %v3336 = vpop.f32.mrf.mxu0
  %v3337 = vadd.f32 0.0, %v3336
  %v3338 = vpop.f32.mrf.mxu0
  %3339 = vdwg.mxu0
  %v3340 = vadd.f32 %v3267, %v3337
  %v3341 = vadd.f32 %v3340, %v99
  %v3342 = vtanh.pop %v3341
  %v3343 = vxor.u32 %v3341, 2147483648
  %v3344 = vmul.f32 %v3343, 1.442695
  %v3345 = vpow.pop %v3344
  %v3346 = vadd.f32 %v3345, 1.0
  %v3347 = vrcp.pop %v3346
  %v3348 = vmul.f32 1.0, %v3347
  %v3349 = vsel %vm105, %v3342, %v3348
  %v3350 = vmul.f32 %v3349, %v2706
  %3352 = vrot.lane.b32.xlu0 %v3349, 64
  %v3353 = vpop.permute.xlu0 %3352
  %v3355 = vmul.f32 %v3349, %v3353
  %3357 = vrot.lane.b32.xlu0 %v3355, 32
  %v3358 = vpop.permute.xlu0 %3357
  %v3360 = vadd.f32 %v3350, %v3358
  %v3361 = vtanh.pop %v3360
  %3363 = vrot.lane.b32.xlu0 %v3361, 64
  %v3364 = vpop.permute.xlu0 %3363
  %v3366 = vmul.f32 %v3349, %v3364
  %s3367 = scalar_lea.vmem %s13, 32
  %3368 = vst.msk [vmem:[%s3367] sm:$0xff] %vm111, %v3126
  %s3369 = scalar_lea.vmem %s0, 40
  %v3370 = vld [vmem:[%s3369] sm:$0xff]
  %s3371 = scalar_lea.vmem %s1, 40
  %v3372 = vld [vmem:[%s3371] sm:$0xff]
  %v3373 = vsub.f32 1.0, %v3372
  %v3374 = vmul.f32 %v3373, %v2721
  %v3375 = vadd.f32 %v3374, 1.0
  %v3377 = vsel %vm111, %v3375, 0
  %3379 = vmatprep.subr.mxu0 0.0
  %3380 = vmatpush1.msra.mxu0 0.0
  %3381 = vmatprep.subr.mxu0 0.0
  %3382 = vmatpush1.msra.mxu0 0.0
  %3383 = vmatprep.subr.mxu0 0.0
  %3384 = vmatpush1.msra.mxu0 0.0
  %3385 = vmatprep.subr.mxu0 0.0
  %3386 = vmatpush1.msra.mxu0 0.0
  %3387 = vmatprep.subr.mxu0 0.0
  %3388 = vmatpush1.msra.mxu0 0.0
  %3389 = vmatprep.subr.mxu0 0.0
  %3390 = vmatpush1.msra.mxu0 0.0
  %3391 = vmatprep.subr.mxu0 0.0
  %3392 = vmatpush1.msra.mxu0 0.0
  %3393 = vmatprep.subr.mxu0 0.0
  %3394 = vmatpush1.msra.mxu0 0.0
  %3395 = vmatprep.subr.mxu0 0.0
  %3396 = vmatpush1.msra.mxu0 0.0
  %3397 = vmatprep.subr.mxu0 0.0
  %3398 = vmatpush1.msra.mxu0 0.0
  %3399 = vmatprep.subr.mxu0 0.0
  %3400 = vmatpush1.msra.mxu0 0.0
  %3401 = vmatprep.subr.mxu0 0.0
  %3402 = vmatpush1.msra.mxu0 0.0
  %3403 = vmatprep.subr.mxu0 0.0
  %3404 = vmatpush1.msra.mxu0 0.0
  %3405 = vmatprep.subr.mxu0 0.0
  %3406 = vmatpush1.msra.mxu0 0.0
  %3407 = vmatprep.subr.mxu0 0.0
  %3408 = vmatpush1.msra.mxu0 %v68
  %3409 = vmatprep.subr.mxu0 0.0
  %3410 = vmatpush1.msra.mxu0 %v67
  %3411 = vmatprep.subr.mxu0 0.0
  %3412 = vmatpush2.msra.mxu0 0.0
  %3413 = vmatprep.subr.mxu0 0.0
  %3414 = vmatpush2.msra.mxu0 0.0
  %3415 = vmatprep.subr.mxu0 0.0
  %3416 = vmatpush2.msra.mxu0 0.0
  %3417 = vmatprep.subr.mxu0 0.0
  %3418 = vmatpush2.msra.mxu0 0.0
  %3419 = vmatprep.subr.mxu0 0.0
  %3420 = vmatpush2.msra.mxu0 0.0
  %3421 = vmatprep.subr.mxu0 0.0
  %3422 = vmatpush2.msra.mxu0 0.0
  %3423 = vmatprep.subr.mxu0 0.0
  %3424 = vmatpush2.msra.mxu0 0.0
  %3425 = vmatprep.subr.mxu0 0.0
  %3426 = vmatpush2.msra.mxu0 0.0
  %3427 = vmatprep.subr.mxu0 0.0
  %3428 = vmatpush2.msra.mxu0 0.0
  %3429 = vmatprep.subr.mxu0 0.0
  %3430 = vmatpush2.msra.mxu0 0.0
  %3431 = vmatprep.subr.mxu0 0.0
  %3432 = vmatpush2.msra.mxu0 0.0
  %3433 = vmatprep.subr.mxu0 0.0
  %3434 = vmatpush2.msra.mxu0 0.0
  %3435 = vmatprep.subr.mxu0 0.0
  %3436 = vmatpush2.msra.mxu0 0.0
  %3437 = vmatprep.subr.mxu0 0.0
  %3438 = vmatpush2.msra.mxu0 0.0
  %3439 = vmatprep.subr.mxu0 0.0
  %3440 = vmatpush2.msra.mxu0 0.0
  %3441 = vmatprep.subr.mxu0 0.0
  %3442 = vmatpush2.msra.mxu0 0.0
  %3443 = vmatprep.mubr.f32.mxu0 0.0
  %3444 = vmatmul.mubr.f32.gmra.mxu0 %v3377
  %v3445 = vpop.f32.mrf.mxu0
  %v3446 = vadd.f32 %v74, %v3445
  %v3447 = vpop.f32.mrf.mxu0
  %3448 = vdwg.mxu0
  %v3449 = vmax.f32 %v3446, 0.0
  %v3450 = vsub.f32 0.0, %v3449
  %v3451 = vmul.f32 %v3450, 1.442695
  %v3452 = vpow.pop %v3451
  %v3453 = vmul.f32 %v3375, %v50
  %v3454 = vadd.f32 %v3453, %v54
  %v3455 = vmax.f32 %v3454, 0.0
  %v3456 = vsub.f32 0.0, %v3455
  %v3457 = vmul.f32 %v3456, 1.442695
  %v3458 = vpow.pop %v3457
  %3460 = vrot.lane.b32.xlu0 %v3452, 96
  %v3461 = vpop.permute.xlu0 %3460
  %v3463 = vmul.f32 %v3366, %v3461
  %3465 = vrot.lane.b32.xlu0 %v3463, 32
  %v3466 = vpop.permute.xlu0 %3465
  %v3467 = vsel %vm196, %v3466, 0
  %3469 = vmatprep.subr.mxu0 0.0
  %3470 = vmatpush1.msra.mxu0 0.0
  %3471 = vmatprep.subr.mxu0 0.0
  %3472 = vmatpush1.msra.mxu0 0.0
  %3473 = vmatprep.subr.mxu0 0.0
  %3474 = vmatpush1.msra.mxu0 0.0
  %3475 = vmatprep.subr.mxu0 0.0
  %3476 = vmatpush1.msra.mxu0 0.0
  %3477 = vmatprep.subr.mxu0 0.0
  %3478 = vmatpush1.msra.mxu0 0.0
  %3479 = vmatprep.subr.mxu0 0.0
  %3480 = vmatpush1.msra.mxu0 0.0
  %3481 = vmatprep.subr.mxu0 0.0
  %3482 = vmatpush1.msra.mxu0 0.0
  %3483 = vmatprep.subr.mxu0 0.0
  %3484 = vmatpush1.msra.mxu0 0.0
  %3485 = vmatprep.subr.mxu0 0.0
  %3486 = vmatpush1.msra.mxu0 0.0
  %3487 = vmatprep.subr.mxu0 0.0
  %3488 = vmatpush1.msra.mxu0 0.0
  %3489 = vmatprep.subr.mxu0 0.0
  %3490 = vmatpush1.msra.mxu0 0.0
  %3491 = vmatprep.subr.mxu0 0.0
  %3492 = vmatpush1.msra.mxu0 0.0
  %3493 = vmatprep.subr.mxu0 0.0
  %3494 = vmatpush1.msra.mxu0 %v79
  %3495 = vmatprep.subr.mxu0 0.0
  %3496 = vmatpush1.msra.mxu0 %v78
  %3497 = vmatprep.subr.mxu0 0.0
  %3498 = vmatpush1.msra.mxu0 %v77
  %3499 = vmatprep.subr.mxu0 0.0
  %3500 = vmatpush1.msra.mxu0 %v76
  %3501 = vmatprep.subr.mxu0 0.0
  %3502 = vmatpush2.msra.mxu0 0.0
  %3503 = vmatprep.subr.mxu0 0.0
  %3504 = vmatpush2.msra.mxu0 0.0
  %3505 = vmatprep.subr.mxu0 0.0
  %3506 = vmatpush2.msra.mxu0 0.0
  %3507 = vmatprep.subr.mxu0 0.0
  %3508 = vmatpush2.msra.mxu0 0.0
  %3509 = vmatprep.subr.mxu0 0.0
  %3510 = vmatpush2.msra.mxu0 0.0
  %3511 = vmatprep.subr.mxu0 0.0
  %3512 = vmatpush2.msra.mxu0 0.0
  %3513 = vmatprep.subr.mxu0 0.0
  %3514 = vmatpush2.msra.mxu0 0.0
  %3515 = vmatprep.subr.mxu0 0.0
  %3516 = vmatpush2.msra.mxu0 0.0
  %3517 = vmatprep.subr.mxu0 0.0
  %3518 = vmatpush2.msra.mxu0 0.0
  %3519 = vmatprep.subr.mxu0 0.0
  %3520 = vmatpush2.msra.mxu0 0.0
  %3521 = vmatprep.subr.mxu0 0.0
  %3522 = vmatpush2.msra.mxu0 0.0
  %3523 = vmatprep.subr.mxu0 0.0
  %3524 = vmatpush2.msra.mxu0 0.0
  %3525 = vmatprep.subr.mxu0 0.0
  %3526 = vmatpush2.msra.mxu0 0.0
  %3527 = vmatprep.subr.mxu0 0.0
  %3528 = vmatpush2.msra.mxu0 0.0
  %3529 = vmatprep.subr.mxu0 0.0
  %3530 = vmatpush2.msra.mxu0 0.0
  %3531 = vmatprep.subr.mxu0 0.0
  %3532 = vmatpush2.msra.mxu0 0.0
  %3533 = vmatprep.mubr.f32.mxu0 0.0
  %3534 = vmatmul.mubr.f32.gmra.mxu0 %v3467
  %v3535 = vpop.f32.mrf.mxu0
  %v3536 = vadd.f32 %v58, %v3535
  %v3537 = vpop.f32.mrf.mxu0
  %3538 = vdwg.mxu0
  %v3539 = vmul.f32 %v3372, %v3370
  %v3540 = vmul.f32 %v3373, %v3536
  %v3541 = vadd.f32 %v3539, %v3540
  %v3543 = vsel %vm111, %v3541, 0
  %3545 = vmatprep.subr.mxu0 0.0
  %3546 = vmatpush1.msra.mxu0 0.0
  %3547 = vmatprep.subr.mxu0 0.0
  %3548 = vmatpush1.msra.mxu0 0.0
  %3549 = vmatprep.subr.mxu0 0.0
  %3550 = vmatpush1.msra.mxu0 0.0
  %3551 = vmatprep.subr.mxu0 0.0
  %3552 = vmatpush1.msra.mxu0 0.0
  %3553 = vmatprep.subr.mxu0 0.0
  %3554 = vmatpush1.msra.mxu0 0.0
  %3555 = vmatprep.subr.mxu0 0.0
  %3556 = vmatpush1.msra.mxu0 0.0
  %3557 = vmatprep.subr.mxu0 0.0
  %3558 = vmatpush1.msra.mxu0 0.0
  %3559 = vmatprep.subr.mxu0 0.0
  %3560 = vmatpush1.msra.mxu0 0.0
  %3561 = vmatprep.subr.mxu0 0.0
  %3562 = vmatpush1.msra.mxu0 0.0
  %3563 = vmatprep.subr.mxu0 0.0
  %3564 = vmatpush1.msra.mxu0 0.0
  %3565 = vmatprep.subr.mxu0 0.0
  %3566 = vmatpush1.msra.mxu0 0.0
  %3567 = vmatprep.subr.mxu0 0.0
  %3568 = vmatpush1.msra.mxu0 0.0
  %3569 = vmatprep.subr.mxu0 0.0
  %3570 = vmatpush1.msra.mxu0 0.0
  %3571 = vmatprep.subr.mxu0 0.0
  %3572 = vmatpush1.msra.mxu0 0.0
  %3573 = vmatprep.subr.mxu0 0.0
  %3574 = vmatpush1.msra.mxu0 %v81
  %3575 = vmatprep.subr.mxu0 0.0
  %3576 = vmatpush1.msra.mxu0 %v80
  %3577 = vmatprep.subr.mxu0 0.0
  %3578 = vmatpush2.msra.mxu0 0.0
  %3579 = vmatprep.subr.mxu0 0.0
  %3580 = vmatpush2.msra.mxu0 0.0
  %3581 = vmatprep.subr.mxu0 0.0
  %3582 = vmatpush2.msra.mxu0 0.0
  %3583 = vmatprep.subr.mxu0 0.0
  %3584 = vmatpush2.msra.mxu0 0.0
  %3585 = vmatprep.subr.mxu0 0.0
  %3586 = vmatpush2.msra.mxu0 0.0
  %3587 = vmatprep.subr.mxu0 0.0
  %3588 = vmatpush2.msra.mxu0 0.0
  %3589 = vmatprep.subr.mxu0 0.0
  %3590 = vmatpush2.msra.mxu0 0.0
  %3591 = vmatprep.subr.mxu0 0.0
  %3592 = vmatpush2.msra.mxu0 0.0
  %3593 = vmatprep.subr.mxu0 0.0
  %3594 = vmatpush2.msra.mxu0 0.0
  %3595 = vmatprep.subr.mxu0 0.0
  %3596 = vmatpush2.msra.mxu0 0.0
  %3597 = vmatprep.subr.mxu0 0.0
  %3598 = vmatpush2.msra.mxu0 0.0
  %3599 = vmatprep.subr.mxu0 0.0
  %3600 = vmatpush2.msra.mxu0 0.0
  %3601 = vmatprep.subr.mxu0 0.0
  %3602 = vmatpush2.msra.mxu0 0.0
  %3603 = vmatprep.subr.mxu0 0.0
  %3604 = vmatpush2.msra.mxu0 0.0
  %3605 = vmatprep.subr.mxu0 0.0
  %3606 = vmatpush2.msra.mxu0 0.0
  %3607 = vmatprep.subr.mxu0 0.0
  %3608 = vmatpush2.msra.mxu0 0.0
  %3609 = vmatprep.mubr.f32.mxu0 0.0
  %3610 = vmatmul.mubr.f32.gmra.mxu0 %v3543
  %v3611 = vpop.f32.mrf.mxu0
  %v3612 = vadd.f32 %v62, %v3611
  %v3613 = vpop.f32.mrf.mxu0
  %3614 = vdwg.mxu0
  %v3616 = vsel %vm111, %v3372, 0
  %3618 = vmatprep.subr.mxu0 0.0
  %3619 = vmatpush1.msra.mxu0 0.0
  %3620 = vmatprep.subr.mxu0 0.0
  %3621 = vmatpush1.msra.mxu0 0.0
  %3622 = vmatprep.subr.mxu0 0.0
  %3623 = vmatpush1.msra.mxu0 0.0
  %3624 = vmatprep.subr.mxu0 0.0
  %3625 = vmatpush1.msra.mxu0 0.0
  %3626 = vmatprep.subr.mxu0 0.0
  %3627 = vmatpush1.msra.mxu0 0.0
  %3628 = vmatprep.subr.mxu0 0.0
  %3629 = vmatpush1.msra.mxu0 0.0
  %3630 = vmatprep.subr.mxu0 0.0
  %3631 = vmatpush1.msra.mxu0 0.0
  %3632 = vmatprep.subr.mxu0 0.0
  %3633 = vmatpush1.msra.mxu0 0.0
  %3634 = vmatprep.subr.mxu0 0.0
  %3635 = vmatpush1.msra.mxu0 0.0
  %3636 = vmatprep.subr.mxu0 0.0
  %3637 = vmatpush1.msra.mxu0 0.0
  %3638 = vmatprep.subr.mxu0 0.0
  %3639 = vmatpush1.msra.mxu0 0.0
  %3640 = vmatprep.subr.mxu0 0.0
  %3641 = vmatpush1.msra.mxu0 0.0
  %3642 = vmatprep.subr.mxu0 0.0
  %3643 = vmatpush1.msra.mxu0 0.0
  %3644 = vmatprep.subr.mxu0 0.0
  %3645 = vmatpush1.msra.mxu0 0.0
  %3646 = vmatprep.subr.mxu0 0.0
  %3647 = vmatpush1.msra.mxu0 %v85
  %3648 = vmatprep.subr.mxu0 0.0
  %3649 = vmatpush1.msra.mxu0 %v84
  %3650 = vmatprep.subr.mxu0 0.0
  %3651 = vmatpush2.msra.mxu0 0.0
  %3652 = vmatprep.subr.mxu0 0.0
  %3653 = vmatpush2.msra.mxu0 0.0
  %3654 = vmatprep.subr.mxu0 0.0
  %3655 = vmatpush2.msra.mxu0 0.0
  %3656 = vmatprep.subr.mxu0 0.0
  %3657 = vmatpush2.msra.mxu0 0.0
  %3658 = vmatprep.subr.mxu0 0.0
  %3659 = vmatpush2.msra.mxu0 0.0
  %3660 = vmatprep.subr.mxu0 0.0
  %3661 = vmatpush2.msra.mxu0 0.0
  %3662 = vmatprep.subr.mxu0 0.0
  %3663 = vmatpush2.msra.mxu0 0.0
  %3664 = vmatprep.subr.mxu0 0.0
  %3665 = vmatpush2.msra.mxu0 0.0
  %3666 = vmatprep.subr.mxu0 0.0
  %3667 = vmatpush2.msra.mxu0 0.0
  %3668 = vmatprep.subr.mxu0 0.0
  %3669 = vmatpush2.msra.mxu0 0.0
  %3670 = vmatprep.subr.mxu0 0.0
  %3671 = vmatpush2.msra.mxu0 0.0
  %3672 = vmatprep.subr.mxu0 0.0
  %3673 = vmatpush2.msra.mxu0 0.0
  %3674 = vmatprep.subr.mxu0 0.0
  %3675 = vmatpush2.msra.mxu0 0.0
  %3676 = vmatprep.subr.mxu0 0.0
  %3677 = vmatpush2.msra.mxu0 0.0
  %3678 = vmatprep.subr.mxu0 0.0
  %3679 = vmatpush2.msra.mxu0 0.0
  %3680 = vmatprep.subr.mxu0 0.0
  %3681 = vmatpush2.msra.mxu0 0.0
  %3682 = vmatprep.mubr.f32.mxu0 0.0
  %3683 = vmatmul.mubr.f32.gmra.mxu0 %v3616
  %v3684 = vpop.f32.mrf.mxu0
  %v3685 = vadd.f32 0.0, %v3684
  %v3686 = vpop.f32.mrf.mxu0
  %3687 = vdwg.mxu0
  %v3689 = vsel %vm111, %v3458, 0
  %3691 = vmatprep.subr.mxu0 0.0
  %3692 = vmatpush1.msra.mxu0 0.0
  %3693 = vmatprep.subr.mxu0 0.0
  %3694 = vmatpush1.msra.mxu0 0.0
  %3695 = vmatprep.subr.mxu0 0.0
  %3696 = vmatpush1.msra.mxu0 0.0
  %3697 = vmatprep.subr.mxu0 0.0
  %3698 = vmatpush1.msra.mxu0 0.0
  %3699 = vmatprep.subr.mxu0 0.0
  %3700 = vmatpush1.msra.mxu0 0.0
  %3701 = vmatprep.subr.mxu0 0.0
  %3702 = vmatpush1.msra.mxu0 0.0
  %3703 = vmatprep.subr.mxu0 0.0
  %3704 = vmatpush1.msra.mxu0 0.0
  %3705 = vmatprep.subr.mxu0 0.0
  %3706 = vmatpush1.msra.mxu0 0.0
  %3707 = vmatprep.subr.mxu0 0.0
  %3708 = vmatpush1.msra.mxu0 0.0
  %3709 = vmatprep.subr.mxu0 0.0
  %3710 = vmatpush1.msra.mxu0 0.0
  %3711 = vmatprep.subr.mxu0 0.0
  %3712 = vmatpush1.msra.mxu0 0.0
  %3713 = vmatprep.subr.mxu0 0.0
  %3714 = vmatpush1.msra.mxu0 0.0
  %3715 = vmatprep.subr.mxu0 0.0
  %3716 = vmatpush1.msra.mxu0 0.0
  %3717 = vmatprep.subr.mxu0 0.0
  %3718 = vmatpush1.msra.mxu0 0.0
  %3719 = vmatprep.subr.mxu0 0.0
  %3720 = vmatpush1.msra.mxu0 %v83
  %3721 = vmatprep.subr.mxu0 0.0
  %3722 = vmatpush1.msra.mxu0 %v82
  %3723 = vmatprep.subr.mxu0 0.0
  %3724 = vmatpush2.msra.mxu0 0.0
  %3725 = vmatprep.subr.mxu0 0.0
  %3726 = vmatpush2.msra.mxu0 0.0
  %3727 = vmatprep.subr.mxu0 0.0
  %3728 = vmatpush2.msra.mxu0 0.0
  %3729 = vmatprep.subr.mxu0 0.0
  %3730 = vmatpush2.msra.mxu0 0.0
  %3731 = vmatprep.subr.mxu0 0.0
  %3732 = vmatpush2.msra.mxu0 0.0
  %3733 = vmatprep.subr.mxu0 0.0
  %3734 = vmatpush2.msra.mxu0 0.0
  %3735 = vmatprep.subr.mxu0 0.0
  %3736 = vmatpush2.msra.mxu0 0.0
  %3737 = vmatprep.subr.mxu0 0.0
  %3738 = vmatpush2.msra.mxu0 0.0
  %3739 = vmatprep.subr.mxu0 0.0
  %3740 = vmatpush2.msra.mxu0 0.0
  %3741 = vmatprep.subr.mxu0 0.0
  %3742 = vmatpush2.msra.mxu0 0.0
  %3743 = vmatprep.subr.mxu0 0.0
  %3744 = vmatpush2.msra.mxu0 0.0
  %3745 = vmatprep.subr.mxu0 0.0
  %3746 = vmatpush2.msra.mxu0 0.0
  %3747 = vmatprep.subr.mxu0 0.0
  %3748 = vmatpush2.msra.mxu0 0.0
  %3749 = vmatprep.subr.mxu0 0.0
  %3750 = vmatpush2.msra.mxu0 0.0
  %3751 = vmatprep.subr.mxu0 0.0
  %3752 = vmatpush2.msra.mxu0 0.0
  %3753 = vmatprep.subr.mxu0 0.0
  %3754 = vmatpush2.msra.mxu0 0.0
  %3755 = vmatprep.mubr.f32.mxu0 0.0
  %3756 = vmatmul.mubr.f32.gmra.mxu0 %v3689
  %v3757 = vpop.f32.mrf.mxu0
  %v3758 = vadd.f32 %v3685, %v3757
  %v3759 = vpop.f32.mrf.mxu0
  %3760 = vdwg.mxu0
  %v3761 = vadd.f32 %v3758, %v66
  %v3762 = vmul.f32 %v3761, %v3612
  %v3763 = vsub.f32 1.0, %v3761
  %v3764 = vmul.f32 %v3763, %v3536
  %v3765 = vadd.f32 %v3762, %v3764
  %v3766 = vsub.f32 %v3370, %v3536
  %v3767 = vand.u32 2147483647, %v3766
  %v3768 = vsub.f32 %v3370, %v3612
  %v3769 = vand.u32 2147483647, %v3768
  %v3770 = vadd.f32 %v3767, %v3769
  %v3771 = vsub.f32 %v3370, %v3765
  %v3772 = vand.u32 2147483647, %v3771
  %v3773 = vadd.f32 %v3770, %v3772
  %v3774 = vmul.f32 %v3773, %v3372
  %v3775 = vsel %vm111, %v3774, 0.0
  %3776 = vadd.xlane.f32.xlu0 %v3775
  %v3777 = vpop.xlane.xlu0 %3776
  %v3778 = vadd.f32 %v3124, %v3777
  %v3779 = vmul.f32 %v3373, %v3765
  %v3780 = vadd.f32 %v3539, %v3779
  %3781 = vmatprep.subr.mxu0 0.0
  %3782 = vmatpush1.msra.mxu0 0.0
  %3783 = vmatprep.subr.mxu0 0.0
  %3784 = vmatpush1.msra.mxu0 0.0
  %3785 = vmatprep.subr.mxu0 0.0
  %3786 = vmatpush1.msra.mxu0 0.0
  %3787 = vmatprep.subr.mxu0 0.0
  %3788 = vmatpush1.msra.mxu0 0.0
  %3789 = vmatprep.subr.mxu0 0.0
  %3790 = vmatpush1.msra.mxu0 0.0
  %3791 = vmatprep.subr.mxu0 0.0
  %3792 = vmatpush1.msra.mxu0 0.0
  %3793 = vmatprep.subr.mxu0 0.0
  %3794 = vmatpush1.msra.mxu0 0.0
  %3795 = vmatprep.subr.mxu0 0.0
  %3796 = vmatpush1.msra.mxu0 0.0
  %3797 = vmatprep.subr.mxu0 0.0
  %3798 = vmatpush1.msra.mxu0 0.0
  %3799 = vmatprep.subr.mxu0 0.0
  %3800 = vmatpush1.msra.mxu0 0.0
  %3801 = vmatprep.subr.mxu0 0.0
  %3802 = vmatpush1.msra.mxu0 0.0
  %3803 = vmatprep.subr.mxu0 0.0
  %3804 = vmatpush1.msra.mxu0 0.0
  %3805 = vmatprep.subr.mxu0 0.0
  %3806 = vmatpush1.msra.mxu0 0.0
  %3807 = vmatprep.subr.mxu0 0.0
  %3808 = vmatpush1.msra.mxu0 0.0
  %3809 = vmatprep.subr.mxu0 0.0
  %3810 = vmatpush1.msra.mxu0 %v89
  %3811 = vmatprep.subr.mxu0 0.0
  %3812 = vmatpush1.msra.mxu0 %v88
  %3813 = vmatprep.subr.mxu0 0.0
  %3814 = vmatpush2.msra.mxu0 0.0
  %3815 = vmatprep.subr.mxu0 0.0
  %3816 = vmatpush2.msra.mxu0 0.0
  %3817 = vmatprep.subr.mxu0 0.0
  %3818 = vmatpush2.msra.mxu0 0.0
  %3819 = vmatprep.subr.mxu0 0.0
  %3820 = vmatpush2.msra.mxu0 0.0
  %3821 = vmatprep.subr.mxu0 0.0
  %3822 = vmatpush2.msra.mxu0 0.0
  %3823 = vmatprep.subr.mxu0 0.0
  %3824 = vmatpush2.msra.mxu0 0.0
  %3825 = vmatprep.subr.mxu0 0.0
  %3826 = vmatpush2.msra.mxu0 0.0
  %3827 = vmatprep.subr.mxu0 0.0
  %3828 = vmatpush2.msra.mxu0 0.0
  %3829 = vmatprep.subr.mxu0 0.0
  %3830 = vmatpush2.msra.mxu0 0.0
  %3831 = vmatprep.subr.mxu0 0.0
  %3832 = vmatpush2.msra.mxu0 0.0
  %3833 = vmatprep.subr.mxu0 0.0
  %3834 = vmatpush2.msra.mxu0 0.0
  %3835 = vmatprep.subr.mxu0 0.0
  %3836 = vmatpush2.msra.mxu0 0.0
  %3837 = vmatprep.subr.mxu0 0.0
  %3838 = vmatpush2.msra.mxu0 0.0
  %3839 = vmatprep.subr.mxu0 0.0
  %3840 = vmatpush2.msra.mxu0 0.0
  %3841 = vmatprep.subr.mxu0 0.0
  %3842 = vmatpush2.msra.mxu0 0.0
  %3843 = vmatprep.subr.mxu0 0.0
  %3844 = vmatpush2.msra.mxu0 0.0
  %3845 = vmatprep.mubr.f32.mxu0 0.0
  %3846 = vmatmul.mubr.f32.gmra.mxu0 %v3616
  %v3847 = vpop.f32.mrf.mxu0
  %v3848 = vadd.f32 0.0, %v3847
  %v3849 = vpop.f32.mrf.mxu0
  %3850 = vdwg.mxu0
  %v3852 = vsel %vm111, %v3780, 0
  %3854 = vmatprep.subr.mxu0 0.0
  %3855 = vmatpush1.msra.mxu0 0.0
  %3856 = vmatprep.subr.mxu0 0.0
  %3857 = vmatpush1.msra.mxu0 0.0
  %3858 = vmatprep.subr.mxu0 0.0
  %3859 = vmatpush1.msra.mxu0 0.0
  %3860 = vmatprep.subr.mxu0 0.0
  %3861 = vmatpush1.msra.mxu0 0.0
  %3862 = vmatprep.subr.mxu0 0.0
  %3863 = vmatpush1.msra.mxu0 0.0
  %3864 = vmatprep.subr.mxu0 0.0
  %3865 = vmatpush1.msra.mxu0 0.0
  %3866 = vmatprep.subr.mxu0 0.0
  %3867 = vmatpush1.msra.mxu0 0.0
  %3868 = vmatprep.subr.mxu0 0.0
  %3869 = vmatpush1.msra.mxu0 0.0
  %3870 = vmatprep.subr.mxu0 0.0
  %3871 = vmatpush1.msra.mxu0 0.0
  %3872 = vmatprep.subr.mxu0 0.0
  %3873 = vmatpush1.msra.mxu0 0.0
  %3874 = vmatprep.subr.mxu0 0.0
  %3875 = vmatpush1.msra.mxu0 0.0
  %3876 = vmatprep.subr.mxu0 0.0
  %3877 = vmatpush1.msra.mxu0 0.0
  %3878 = vmatprep.subr.mxu0 0.0
  %3879 = vmatpush1.msra.mxu0 0.0
  %3880 = vmatprep.subr.mxu0 0.0
  %3881 = vmatpush1.msra.mxu0 0.0
  %3882 = vmatprep.subr.mxu0 0.0
  %3883 = vmatpush1.msra.mxu0 %v87
  %3884 = vmatprep.subr.mxu0 0.0
  %3885 = vmatpush1.msra.mxu0 %v86
  %3886 = vmatprep.subr.mxu0 0.0
  %3887 = vmatpush2.msra.mxu0 0.0
  %3888 = vmatprep.subr.mxu0 0.0
  %3889 = vmatpush2.msra.mxu0 0.0
  %3890 = vmatprep.subr.mxu0 0.0
  %3891 = vmatpush2.msra.mxu0 0.0
  %3892 = vmatprep.subr.mxu0 0.0
  %3893 = vmatpush2.msra.mxu0 0.0
  %3894 = vmatprep.subr.mxu0 0.0
  %3895 = vmatpush2.msra.mxu0 0.0
  %3896 = vmatprep.subr.mxu0 0.0
  %3897 = vmatpush2.msra.mxu0 0.0
  %3898 = vmatprep.subr.mxu0 0.0
  %3899 = vmatpush2.msra.mxu0 0.0
  %3900 = vmatprep.subr.mxu0 0.0
  %3901 = vmatpush2.msra.mxu0 0.0
  %3902 = vmatprep.subr.mxu0 0.0
  %3903 = vmatpush2.msra.mxu0 0.0
  %3904 = vmatprep.subr.mxu0 0.0
  %3905 = vmatpush2.msra.mxu0 0.0
  %3906 = vmatprep.subr.mxu0 0.0
  %3907 = vmatpush2.msra.mxu0 0.0
  %3908 = vmatprep.subr.mxu0 0.0
  %3909 = vmatpush2.msra.mxu0 0.0
  %3910 = vmatprep.subr.mxu0 0.0
  %3911 = vmatpush2.msra.mxu0 0.0
  %3912 = vmatprep.subr.mxu0 0.0
  %3913 = vmatpush2.msra.mxu0 0.0
  %3914 = vmatprep.subr.mxu0 0.0
  %3915 = vmatpush2.msra.mxu0 0.0
  %3916 = vmatprep.subr.mxu0 0.0
  %3917 = vmatpush2.msra.mxu0 0.0
  %3918 = vmatprep.mubr.f32.mxu0 0.0
  %3919 = vmatmul.mubr.f32.gmra.mxu0 %v3852
  %v3920 = vpop.f32.mrf.mxu0
  %v3921 = vadd.f32 %v3848, %v3920
  %v3922 = vpop.f32.mrf.mxu0
  %3923 = vdwg.mxu0
  %3924 = vmatprep.subr.mxu0 0.0
  %3925 = vmatpush1.msra.mxu0 0.0
  %3926 = vmatprep.subr.mxu0 0.0
  %3927 = vmatpush1.msra.mxu0 0.0
  %3928 = vmatprep.subr.mxu0 0.0
  %3929 = vmatpush1.msra.mxu0 0.0
  %3930 = vmatprep.subr.mxu0 0.0
  %3931 = vmatpush1.msra.mxu0 0.0
  %3932 = vmatprep.subr.mxu0 0.0
  %3933 = vmatpush1.msra.mxu0 0.0
  %3934 = vmatprep.subr.mxu0 0.0
  %3935 = vmatpush1.msra.mxu0 0.0
  %3936 = vmatprep.subr.mxu0 0.0
  %3937 = vmatpush1.msra.mxu0 0.0
  %3938 = vmatprep.subr.mxu0 0.0
  %3939 = vmatpush1.msra.mxu0 0.0
  %3940 = vmatprep.subr.mxu0 0.0
  %3941 = vmatpush1.msra.mxu0 0.0
  %3942 = vmatprep.subr.mxu0 0.0
  %3943 = vmatpush1.msra.mxu0 0.0
  %3944 = vmatprep.subr.mxu0 0.0
  %3945 = vmatpush1.msra.mxu0 0.0
  %3946 = vmatprep.subr.mxu0 0.0
  %3947 = vmatpush1.msra.mxu0 0.0
  %3948 = vmatprep.subr.mxu0 0.0
  %3949 = vmatpush1.msra.mxu0 %v93
  %3950 = vmatprep.subr.mxu0 0.0
  %3951 = vmatpush1.msra.mxu0 %v92
  %3952 = vmatprep.subr.mxu0 0.0
  %3953 = vmatpush1.msra.mxu0 %v91
  %3954 = vmatprep.subr.mxu0 0.0
  %3955 = vmatpush1.msra.mxu0 %v90
  %3956 = vmatprep.subr.mxu0 0.0
  %3957 = vmatpush2.msra.mxu0 0.0
  %3958 = vmatprep.subr.mxu0 0.0
  %3959 = vmatpush2.msra.mxu0 0.0
  %3960 = vmatprep.subr.mxu0 0.0
  %3961 = vmatpush2.msra.mxu0 0.0
  %3962 = vmatprep.subr.mxu0 0.0
  %3963 = vmatpush2.msra.mxu0 0.0
  %3964 = vmatprep.subr.mxu0 0.0
  %3965 = vmatpush2.msra.mxu0 0.0
  %3966 = vmatprep.subr.mxu0 0.0
  %3967 = vmatpush2.msra.mxu0 0.0
  %3968 = vmatprep.subr.mxu0 0.0
  %3969 = vmatpush2.msra.mxu0 0.0
  %3970 = vmatprep.subr.mxu0 0.0
  %3971 = vmatpush2.msra.mxu0 0.0
  %3972 = vmatprep.subr.mxu0 0.0
  %3973 = vmatpush2.msra.mxu0 0.0
  %3974 = vmatprep.subr.mxu0 0.0
  %3975 = vmatpush2.msra.mxu0 0.0
  %3976 = vmatprep.subr.mxu0 0.0
  %3977 = vmatpush2.msra.mxu0 0.0
  %3978 = vmatprep.subr.mxu0 0.0
  %3979 = vmatpush2.msra.mxu0 0.0
  %3980 = vmatprep.subr.mxu0 0.0
  %3981 = vmatpush2.msra.mxu0 0.0
  %3982 = vmatprep.subr.mxu0 0.0
  %3983 = vmatpush2.msra.mxu0 0.0
  %3984 = vmatprep.subr.mxu0 0.0
  %3985 = vmatpush2.msra.mxu0 0.0
  %3986 = vmatprep.subr.mxu0 0.0
  %3987 = vmatpush2.msra.mxu0 0.0
  %3988 = vmatprep.mubr.f32.mxu0 0.0
  %3989 = vmatmul.mubr.f32.gmra.mxu0 %v3467
  %v3990 = vpop.f32.mrf.mxu0
  %v3991 = vadd.f32 0.0, %v3990
  %v3992 = vpop.f32.mrf.mxu0
  %3993 = vdwg.mxu0
  %v3994 = vadd.f32 %v3921, %v3991
  %v3995 = vadd.f32 %v3994, %v99
  %v3996 = vtanh.pop %v3995
  %v3997 = vxor.u32 %v3995, 2147483648
  %v3998 = vmul.f32 %v3997, 1.442695
  %v3999 = vpow.pop %v3998
  %v4000 = vadd.f32 %v3999, 1.0
  %v4001 = vrcp.pop %v4000
  %v4002 = vmul.f32 1.0, %v4001
  %v4003 = vsel %vm105, %v3996, %v4002
  %v4004 = vmul.f32 %v4003, %v3360
  %4006 = vrot.lane.b32.xlu0 %v4003, 64
  %v4007 = vpop.permute.xlu0 %4006
  %v4009 = vmul.f32 %v4003, %v4007
  %4011 = vrot.lane.b32.xlu0 %v4009, 32
  %v4012 = vpop.permute.xlu0 %4011
  %v4014 = vadd.f32 %v4004, %v4012
  %v4015 = vtanh.pop %v4014
  %4017 = vrot.lane.b32.xlu0 %v4015, 64
  %v4018 = vpop.permute.xlu0 %4017
  %v4020 = vmul.f32 %v4003, %v4018
  %s4021 = scalar_lea.vmem %s13, 40
  %4022 = vst.msk [vmem:[%s4021] sm:$0xff] %vm111, %v3780
  %s4023 = scalar_lea.vmem %s0, 48
  %v4024 = vld [vmem:[%s4023] sm:$0xff]
  %s4025 = scalar_lea.vmem %s1, 48
  %v4026 = vld [vmem:[%s4025] sm:$0xff]
  %v4027 = vsub.f32 1.0, %v4026
  %v4028 = vmul.f32 %v4027, %v3375
  %v4029 = vadd.f32 %v4028, 1.0
  %v4031 = vsel %vm111, %v4029, 0
  %4033 = vmatprep.subr.mxu0 0.0
  %4034 = vmatpush1.msra.mxu0 0.0
  %4035 = vmatprep.subr.mxu0 0.0
  %4036 = vmatpush1.msra.mxu0 0.0
  %4037 = vmatprep.subr.mxu0 0.0
  %4038 = vmatpush1.msra.mxu0 0.0
  %4039 = vmatprep.subr.mxu0 0.0
  %4040 = vmatpush1.msra.mxu0 0.0
  %4041 = vmatprep.subr.mxu0 0.0
  %4042 = vmatpush1.msra.mxu0 0.0
  %4043 = vmatprep.subr.mxu0 0.0
  %4044 = vmatpush1.msra.mxu0 0.0
  %4045 = vmatprep.subr.mxu0 0.0
  %4046 = vmatpush1.msra.mxu0 0.0
  %4047 = vmatprep.subr.mxu0 0.0
  %4048 = vmatpush1.msra.mxu0 0.0
  %4049 = vmatprep.subr.mxu0 0.0
  %4050 = vmatpush1.msra.mxu0 0.0
  %4051 = vmatprep.subr.mxu0 0.0
  %4052 = vmatpush1.msra.mxu0 0.0
  %4053 = vmatprep.subr.mxu0 0.0
  %4054 = vmatpush1.msra.mxu0 0.0
  %4055 = vmatprep.subr.mxu0 0.0
  %4056 = vmatpush1.msra.mxu0 0.0
  %4057 = vmatprep.subr.mxu0 0.0
  %4058 = vmatpush1.msra.mxu0 0.0
  %4059 = vmatprep.subr.mxu0 0.0
  %4060 = vmatpush1.msra.mxu0 0.0
  %4061 = vmatprep.subr.mxu0 0.0
  %4062 = vmatpush1.msra.mxu0 %v68
  %4063 = vmatprep.subr.mxu0 0.0
  %4064 = vmatpush1.msra.mxu0 %v67
  %4065 = vmatprep.subr.mxu0 0.0
  %4066 = vmatpush2.msra.mxu0 0.0
  %4067 = vmatprep.subr.mxu0 0.0
  %4068 = vmatpush2.msra.mxu0 0.0
  %4069 = vmatprep.subr.mxu0 0.0
  %4070 = vmatpush2.msra.mxu0 0.0
  %4071 = vmatprep.subr.mxu0 0.0
  %4072 = vmatpush2.msra.mxu0 0.0
  %4073 = vmatprep.subr.mxu0 0.0
  %4074 = vmatpush2.msra.mxu0 0.0
  %4075 = vmatprep.subr.mxu0 0.0
  %4076 = vmatpush2.msra.mxu0 0.0
  %4077 = vmatprep.subr.mxu0 0.0
  %4078 = vmatpush2.msra.mxu0 0.0
  %4079 = vmatprep.subr.mxu0 0.0
  %4080 = vmatpush2.msra.mxu0 0.0
  %4081 = vmatprep.subr.mxu0 0.0
  %4082 = vmatpush2.msra.mxu0 0.0
  %4083 = vmatprep.subr.mxu0 0.0
  %4084 = vmatpush2.msra.mxu0 0.0
  %4085 = vmatprep.subr.mxu0 0.0
  %4086 = vmatpush2.msra.mxu0 0.0
  %4087 = vmatprep.subr.mxu0 0.0
  %4088 = vmatpush2.msra.mxu0 0.0
  %4089 = vmatprep.subr.mxu0 0.0
  %4090 = vmatpush2.msra.mxu0 0.0
  %4091 = vmatprep.subr.mxu0 0.0
  %4092 = vmatpush2.msra.mxu0 0.0
  %4093 = vmatprep.subr.mxu0 0.0
  %4094 = vmatpush2.msra.mxu0 0.0
  %4095 = vmatprep.subr.mxu0 0.0
  %4096 = vmatpush2.msra.mxu0 0.0
  %4097 = vmatprep.mubr.f32.mxu0 0.0
  %4098 = vmatmul.mubr.f32.gmra.mxu0 %v4031
  %v4099 = vpop.f32.mrf.mxu0
  %v4100 = vadd.f32 %v74, %v4099
  %v4101 = vpop.f32.mrf.mxu0
  %4102 = vdwg.mxu0
  %v4103 = vmax.f32 %v4100, 0.0
  %v4104 = vsub.f32 0.0, %v4103
  %v4105 = vmul.f32 %v4104, 1.442695
  %v4106 = vpow.pop %v4105
  %v4107 = vmul.f32 %v4029, %v50
  %v4108 = vadd.f32 %v4107, %v54
  %v4109 = vmax.f32 %v4108, 0.0
  %v4110 = vsub.f32 0.0, %v4109
  %v4111 = vmul.f32 %v4110, 1.442695
  %v4112 = vpow.pop %v4111
  %4114 = vrot.lane.b32.xlu0 %v4106, 96
  %v4115 = vpop.permute.xlu0 %4114
  %v4117 = vmul.f32 %v4020, %v4115
  %4119 = vrot.lane.b32.xlu0 %v4117, 32
  %v4120 = vpop.permute.xlu0 %4119
  %v4121 = vsel %vm196, %v4120, 0
  %4123 = vmatprep.subr.mxu0 0.0
  %4124 = vmatpush1.msra.mxu0 0.0
  %4125 = vmatprep.subr.mxu0 0.0
  %4126 = vmatpush1.msra.mxu0 0.0
  %4127 = vmatprep.subr.mxu0 0.0
  %4128 = vmatpush1.msra.mxu0 0.0
  %4129 = vmatprep.subr.mxu0 0.0
  %4130 = vmatpush1.msra.mxu0 0.0
  %4131 = vmatprep.subr.mxu0 0.0
  %4132 = vmatpush1.msra.mxu0 0.0
  %4133 = vmatprep.subr.mxu0 0.0
  %4134 = vmatpush1.msra.mxu0 0.0
  %4135 = vmatprep.subr.mxu0 0.0
  %4136 = vmatpush1.msra.mxu0 0.0
  %4137 = vmatprep.subr.mxu0 0.0
  %4138 = vmatpush1.msra.mxu0 0.0
  %4139 = vmatprep.subr.mxu0 0.0
  %4140 = vmatpush1.msra.mxu0 0.0
  %4141 = vmatprep.subr.mxu0 0.0
  %4142 = vmatpush1.msra.mxu0 0.0
  %4143 = vmatprep.subr.mxu0 0.0
  %4144 = vmatpush1.msra.mxu0 0.0
  %4145 = vmatprep.subr.mxu0 0.0
  %4146 = vmatpush1.msra.mxu0 0.0
  %4147 = vmatprep.subr.mxu0 0.0
  %4148 = vmatpush1.msra.mxu0 %v79
  %4149 = vmatprep.subr.mxu0 0.0
  %4150 = vmatpush1.msra.mxu0 %v78
  %4151 = vmatprep.subr.mxu0 0.0
  %4152 = vmatpush1.msra.mxu0 %v77
  %4153 = vmatprep.subr.mxu0 0.0
  %4154 = vmatpush1.msra.mxu0 %v76
  %4155 = vmatprep.subr.mxu0 0.0
  %4156 = vmatpush2.msra.mxu0 0.0
  %4157 = vmatprep.subr.mxu0 0.0
  %4158 = vmatpush2.msra.mxu0 0.0
  %4159 = vmatprep.subr.mxu0 0.0
  %4160 = vmatpush2.msra.mxu0 0.0
  %4161 = vmatprep.subr.mxu0 0.0
  %4162 = vmatpush2.msra.mxu0 0.0
  %4163 = vmatprep.subr.mxu0 0.0
  %4164 = vmatpush2.msra.mxu0 0.0
  %4165 = vmatprep.subr.mxu0 0.0
  %4166 = vmatpush2.msra.mxu0 0.0
  %4167 = vmatprep.subr.mxu0 0.0
  %4168 = vmatpush2.msra.mxu0 0.0
  %4169 = vmatprep.subr.mxu0 0.0
  %4170 = vmatpush2.msra.mxu0 0.0
  %4171 = vmatprep.subr.mxu0 0.0
  %4172 = vmatpush2.msra.mxu0 0.0
  %4173 = vmatprep.subr.mxu0 0.0
  %4174 = vmatpush2.msra.mxu0 0.0
  %4175 = vmatprep.subr.mxu0 0.0
  %4176 = vmatpush2.msra.mxu0 0.0
  %4177 = vmatprep.subr.mxu0 0.0
  %4178 = vmatpush2.msra.mxu0 0.0
  %4179 = vmatprep.subr.mxu0 0.0
  %4180 = vmatpush2.msra.mxu0 0.0
  %4181 = vmatprep.subr.mxu0 0.0
  %4182 = vmatpush2.msra.mxu0 0.0
  %4183 = vmatprep.subr.mxu0 0.0
  %4184 = vmatpush2.msra.mxu0 0.0
  %4185 = vmatprep.subr.mxu0 0.0
  %4186 = vmatpush2.msra.mxu0 0.0
  %4187 = vmatprep.mubr.f32.mxu0 0.0
  %4188 = vmatmul.mubr.f32.gmra.mxu0 %v4121
  %v4189 = vpop.f32.mrf.mxu0
  %v4190 = vadd.f32 %v58, %v4189
  %v4191 = vpop.f32.mrf.mxu0
  %4192 = vdwg.mxu0
  %v4193 = vmul.f32 %v4026, %v4024
  %v4194 = vmul.f32 %v4027, %v4190
  %v4195 = vadd.f32 %v4193, %v4194
  %v4197 = vsel %vm111, %v4195, 0
  %4199 = vmatprep.subr.mxu0 0.0
  %4200 = vmatpush1.msra.mxu0 0.0
  %4201 = vmatprep.subr.mxu0 0.0
  %4202 = vmatpush1.msra.mxu0 0.0
  %4203 = vmatprep.subr.mxu0 0.0
  %4204 = vmatpush1.msra.mxu0 0.0
  %4205 = vmatprep.subr.mxu0 0.0
  %4206 = vmatpush1.msra.mxu0 0.0
  %4207 = vmatprep.subr.mxu0 0.0
  %4208 = vmatpush1.msra.mxu0 0.0
  %4209 = vmatprep.subr.mxu0 0.0
  %4210 = vmatpush1.msra.mxu0 0.0
  %4211 = vmatprep.subr.mxu0 0.0
  %4212 = vmatpush1.msra.mxu0 0.0
  %4213 = vmatprep.subr.mxu0 0.0
  %4214 = vmatpush1.msra.mxu0 0.0
  %4215 = vmatprep.subr.mxu0 0.0
  %4216 = vmatpush1.msra.mxu0 0.0
  %4217 = vmatprep.subr.mxu0 0.0
  %4218 = vmatpush1.msra.mxu0 0.0
  %4219 = vmatprep.subr.mxu0 0.0
  %4220 = vmatpush1.msra.mxu0 0.0
  %4221 = vmatprep.subr.mxu0 0.0
  %4222 = vmatpush1.msra.mxu0 0.0
  %4223 = vmatprep.subr.mxu0 0.0
  %4224 = vmatpush1.msra.mxu0 0.0
  %4225 = vmatprep.subr.mxu0 0.0
  %4226 = vmatpush1.msra.mxu0 0.0
  %4227 = vmatprep.subr.mxu0 0.0
  %4228 = vmatpush1.msra.mxu0 %v81
  %4229 = vmatprep.subr.mxu0 0.0
  %4230 = vmatpush1.msra.mxu0 %v80
  %4231 = vmatprep.subr.mxu0 0.0
  %4232 = vmatpush2.msra.mxu0 0.0
  %4233 = vmatprep.subr.mxu0 0.0
  %4234 = vmatpush2.msra.mxu0 0.0
  %4235 = vmatprep.subr.mxu0 0.0
  %4236 = vmatpush2.msra.mxu0 0.0
  %4237 = vmatprep.subr.mxu0 0.0
  %4238 = vmatpush2.msra.mxu0 0.0
  %4239 = vmatprep.subr.mxu0 0.0
  %4240 = vmatpush2.msra.mxu0 0.0
  %4241 = vmatprep.subr.mxu0 0.0
  %4242 = vmatpush2.msra.mxu0 0.0
  %4243 = vmatprep.subr.mxu0 0.0
  %4244 = vmatpush2.msra.mxu0 0.0
  %4245 = vmatprep.subr.mxu0 0.0
  %4246 = vmatpush2.msra.mxu0 0.0
  %4247 = vmatprep.subr.mxu0 0.0
  %4248 = vmatpush2.msra.mxu0 0.0
  %4249 = vmatprep.subr.mxu0 0.0
  %4250 = vmatpush2.msra.mxu0 0.0
  %4251 = vmatprep.subr.mxu0 0.0
  %4252 = vmatpush2.msra.mxu0 0.0
  %4253 = vmatprep.subr.mxu0 0.0
  %4254 = vmatpush2.msra.mxu0 0.0
  %4255 = vmatprep.subr.mxu0 0.0
  %4256 = vmatpush2.msra.mxu0 0.0
  %4257 = vmatprep.subr.mxu0 0.0
  %4258 = vmatpush2.msra.mxu0 0.0
  %4259 = vmatprep.subr.mxu0 0.0
  %4260 = vmatpush2.msra.mxu0 0.0
  %4261 = vmatprep.subr.mxu0 0.0
  %4262 = vmatpush2.msra.mxu0 0.0
  %4263 = vmatprep.mubr.f32.mxu0 0.0
  %4264 = vmatmul.mubr.f32.gmra.mxu0 %v4197
  %v4265 = vpop.f32.mrf.mxu0
  %v4266 = vadd.f32 %v62, %v4265
  %v4267 = vpop.f32.mrf.mxu0
  %4268 = vdwg.mxu0
  %v4270 = vsel %vm111, %v4026, 0
  %4272 = vmatprep.subr.mxu0 0.0
  %4273 = vmatpush1.msra.mxu0 0.0
  %4274 = vmatprep.subr.mxu0 0.0
  %4275 = vmatpush1.msra.mxu0 0.0
  %4276 = vmatprep.subr.mxu0 0.0
  %4277 = vmatpush1.msra.mxu0 0.0
  %4278 = vmatprep.subr.mxu0 0.0
  %4279 = vmatpush1.msra.mxu0 0.0
  %4280 = vmatprep.subr.mxu0 0.0
  %4281 = vmatpush1.msra.mxu0 0.0
  %4282 = vmatprep.subr.mxu0 0.0
  %4283 = vmatpush1.msra.mxu0 0.0
  %4284 = vmatprep.subr.mxu0 0.0
  %4285 = vmatpush1.msra.mxu0 0.0
  %4286 = vmatprep.subr.mxu0 0.0
  %4287 = vmatpush1.msra.mxu0 0.0
  %4288 = vmatprep.subr.mxu0 0.0
  %4289 = vmatpush1.msra.mxu0 0.0
  %4290 = vmatprep.subr.mxu0 0.0
  %4291 = vmatpush1.msra.mxu0 0.0
  %4292 = vmatprep.subr.mxu0 0.0
  %4293 = vmatpush1.msra.mxu0 0.0
  %4294 = vmatprep.subr.mxu0 0.0
  %4295 = vmatpush1.msra.mxu0 0.0
  %4296 = vmatprep.subr.mxu0 0.0
  %4297 = vmatpush1.msra.mxu0 0.0
  %4298 = vmatprep.subr.mxu0 0.0
  %4299 = vmatpush1.msra.mxu0 0.0
  %4300 = vmatprep.subr.mxu0 0.0
  %4301 = vmatpush1.msra.mxu0 %v85
  %4302 = vmatprep.subr.mxu0 0.0
  %4303 = vmatpush1.msra.mxu0 %v84
  %4304 = vmatprep.subr.mxu0 0.0
  %4305 = vmatpush2.msra.mxu0 0.0
  %4306 = vmatprep.subr.mxu0 0.0
  %4307 = vmatpush2.msra.mxu0 0.0
  %4308 = vmatprep.subr.mxu0 0.0
  %4309 = vmatpush2.msra.mxu0 0.0
  %4310 = vmatprep.subr.mxu0 0.0
  %4311 = vmatpush2.msra.mxu0 0.0
  %4312 = vmatprep.subr.mxu0 0.0
  %4313 = vmatpush2.msra.mxu0 0.0
  %4314 = vmatprep.subr.mxu0 0.0
  %4315 = vmatpush2.msra.mxu0 0.0
  %4316 = vmatprep.subr.mxu0 0.0
  %4317 = vmatpush2.msra.mxu0 0.0
  %4318 = vmatprep.subr.mxu0 0.0
  %4319 = vmatpush2.msra.mxu0 0.0
  %4320 = vmatprep.subr.mxu0 0.0
  %4321 = vmatpush2.msra.mxu0 0.0
  %4322 = vmatprep.subr.mxu0 0.0
  %4323 = vmatpush2.msra.mxu0 0.0
  %4324 = vmatprep.subr.mxu0 0.0
  %4325 = vmatpush2.msra.mxu0 0.0
  %4326 = vmatprep.subr.mxu0 0.0
  %4327 = vmatpush2.msra.mxu0 0.0
  %4328 = vmatprep.subr.mxu0 0.0
  %4329 = vmatpush2.msra.mxu0 0.0
  %4330 = vmatprep.subr.mxu0 0.0
  %4331 = vmatpush2.msra.mxu0 0.0
  %4332 = vmatprep.subr.mxu0 0.0
  %4333 = vmatpush2.msra.mxu0 0.0
  %4334 = vmatprep.subr.mxu0 0.0
  %4335 = vmatpush2.msra.mxu0 0.0
  %4336 = vmatprep.mubr.f32.mxu0 0.0
  %4337 = vmatmul.mubr.f32.gmra.mxu0 %v4270
  %v4338 = vpop.f32.mrf.mxu0
  %v4339 = vadd.f32 0.0, %v4338
  %v4340 = vpop.f32.mrf.mxu0
  %4341 = vdwg.mxu0
  %v4343 = vsel %vm111, %v4112, 0
  %4345 = vmatprep.subr.mxu0 0.0
  %4346 = vmatpush1.msra.mxu0 0.0
  %4347 = vmatprep.subr.mxu0 0.0
  %4348 = vmatpush1.msra.mxu0 0.0
  %4349 = vmatprep.subr.mxu0 0.0
  %4350 = vmatpush1.msra.mxu0 0.0
  %4351 = vmatprep.subr.mxu0 0.0
  %4352 = vmatpush1.msra.mxu0 0.0
  %4353 = vmatprep.subr.mxu0 0.0
  %4354 = vmatpush1.msra.mxu0 0.0
  %4355 = vmatprep.subr.mxu0 0.0
  %4356 = vmatpush1.msra.mxu0 0.0
  %4357 = vmatprep.subr.mxu0 0.0
  %4358 = vmatpush1.msra.mxu0 0.0
  %4359 = vmatprep.subr.mxu0 0.0
  %4360 = vmatpush1.msra.mxu0 0.0
  %4361 = vmatprep.subr.mxu0 0.0
  %4362 = vmatpush1.msra.mxu0 0.0
  %4363 = vmatprep.subr.mxu0 0.0
  %4364 = vmatpush1.msra.mxu0 0.0
  %4365 = vmatprep.subr.mxu0 0.0
  %4366 = vmatpush1.msra.mxu0 0.0
  %4367 = vmatprep.subr.mxu0 0.0
  %4368 = vmatpush1.msra.mxu0 0.0
  %4369 = vmatprep.subr.mxu0 0.0
  %4370 = vmatpush1.msra.mxu0 0.0
  %4371 = vmatprep.subr.mxu0 0.0
  %4372 = vmatpush1.msra.mxu0 0.0
  %4373 = vmatprep.subr.mxu0 0.0
  %4374 = vmatpush1.msra.mxu0 %v83
  %4375 = vmatprep.subr.mxu0 0.0
  %4376 = vmatpush1.msra.mxu0 %v82
  %4377 = vmatprep.subr.mxu0 0.0
  %4378 = vmatpush2.msra.mxu0 0.0
  %4379 = vmatprep.subr.mxu0 0.0
  %4380 = vmatpush2.msra.mxu0 0.0
  %4381 = vmatprep.subr.mxu0 0.0
  %4382 = vmatpush2.msra.mxu0 0.0
  %4383 = vmatprep.subr.mxu0 0.0
  %4384 = vmatpush2.msra.mxu0 0.0
  %4385 = vmatprep.subr.mxu0 0.0
  %4386 = vmatpush2.msra.mxu0 0.0
  %4387 = vmatprep.subr.mxu0 0.0
  %4388 = vmatpush2.msra.mxu0 0.0
  %4389 = vmatprep.subr.mxu0 0.0
  %4390 = vmatpush2.msra.mxu0 0.0
  %4391 = vmatprep.subr.mxu0 0.0
  %4392 = vmatpush2.msra.mxu0 0.0
  %4393 = vmatprep.subr.mxu0 0.0
  %4394 = vmatpush2.msra.mxu0 0.0
  %4395 = vmatprep.subr.mxu0 0.0
  %4396 = vmatpush2.msra.mxu0 0.0
  %4397 = vmatprep.subr.mxu0 0.0
  %4398 = vmatpush2.msra.mxu0 0.0
  %4399 = vmatprep.subr.mxu0 0.0
  %4400 = vmatpush2.msra.mxu0 0.0
  %4401 = vmatprep.subr.mxu0 0.0
  %4402 = vmatpush2.msra.mxu0 0.0
  %4403 = vmatprep.subr.mxu0 0.0
  %4404 = vmatpush2.msra.mxu0 0.0
  %4405 = vmatprep.subr.mxu0 0.0
  %4406 = vmatpush2.msra.mxu0 0.0
  %4407 = vmatprep.subr.mxu0 0.0
  %4408 = vmatpush2.msra.mxu0 0.0
  %4409 = vmatprep.mubr.f32.mxu0 0.0
  %4410 = vmatmul.mubr.f32.gmra.mxu0 %v4343
  %v4411 = vpop.f32.mrf.mxu0
  %v4412 = vadd.f32 %v4339, %v4411
  %v4413 = vpop.f32.mrf.mxu0
  %4414 = vdwg.mxu0
  %v4415 = vadd.f32 %v4412, %v66
  %v4416 = vmul.f32 %v4415, %v4266
  %v4417 = vsub.f32 1.0, %v4415
  %v4418 = vmul.f32 %v4417, %v4190
  %v4419 = vadd.f32 %v4416, %v4418
  %v4420 = vsub.f32 %v4024, %v4190
  %v4421 = vand.u32 2147483647, %v4420
  %v4422 = vsub.f32 %v4024, %v4266
  %v4423 = vand.u32 2147483647, %v4422
  %v4424 = vadd.f32 %v4421, %v4423
  %v4425 = vsub.f32 %v4024, %v4419
  %v4426 = vand.u32 2147483647, %v4425
  %v4427 = vadd.f32 %v4424, %v4426
  %v4428 = vmul.f32 %v4427, %v4026
  %v4429 = vsel %vm111, %v4428, 0.0
  %4430 = vadd.xlane.f32.xlu0 %v4429
  %v4431 = vpop.xlane.xlu0 %4430
  %v4432 = vadd.f32 %v3778, %v4431
  %v4433 = vmul.f32 %v4027, %v4419
  %v4434 = vadd.f32 %v4193, %v4433
  %4435 = vmatprep.subr.mxu0 0.0
  %4436 = vmatpush1.msra.mxu0 0.0
  %4437 = vmatprep.subr.mxu0 0.0
  %4438 = vmatpush1.msra.mxu0 0.0
  %4439 = vmatprep.subr.mxu0 0.0
  %4440 = vmatpush1.msra.mxu0 0.0
  %4441 = vmatprep.subr.mxu0 0.0
  %4442 = vmatpush1.msra.mxu0 0.0
  %4443 = vmatprep.subr.mxu0 0.0
  %4444 = vmatpush1.msra.mxu0 0.0
  %4445 = vmatprep.subr.mxu0 0.0
  %4446 = vmatpush1.msra.mxu0 0.0
  %4447 = vmatprep.subr.mxu0 0.0
  %4448 = vmatpush1.msra.mxu0 0.0
  %4449 = vmatprep.subr.mxu0 0.0
  %4450 = vmatpush1.msra.mxu0 0.0
  %4451 = vmatprep.subr.mxu0 0.0
  %4452 = vmatpush1.msra.mxu0 0.0
  %4453 = vmatprep.subr.mxu0 0.0
  %4454 = vmatpush1.msra.mxu0 0.0
  %4455 = vmatprep.subr.mxu0 0.0
  %4456 = vmatpush1.msra.mxu0 0.0
  %4457 = vmatprep.subr.mxu0 0.0
  %4458 = vmatpush1.msra.mxu0 0.0
  %4459 = vmatprep.subr.mxu0 0.0
  %4460 = vmatpush1.msra.mxu0 0.0
  %4461 = vmatprep.subr.mxu0 0.0
  %4462 = vmatpush1.msra.mxu0 0.0
  %4463 = vmatprep.subr.mxu0 0.0
  %4464 = vmatpush1.msra.mxu0 %v89
  %4465 = vmatprep.subr.mxu0 0.0
  %4466 = vmatpush1.msra.mxu0 %v88
  %4467 = vmatprep.subr.mxu0 0.0
  %4468 = vmatpush2.msra.mxu0 0.0
  %4469 = vmatprep.subr.mxu0 0.0
  %4470 = vmatpush2.msra.mxu0 0.0
  %4471 = vmatprep.subr.mxu0 0.0
  %4472 = vmatpush2.msra.mxu0 0.0
  %4473 = vmatprep.subr.mxu0 0.0
  %4474 = vmatpush2.msra.mxu0 0.0
  %4475 = vmatprep.subr.mxu0 0.0
  %4476 = vmatpush2.msra.mxu0 0.0
  %4477 = vmatprep.subr.mxu0 0.0
  %4478 = vmatpush2.msra.mxu0 0.0
  %4479 = vmatprep.subr.mxu0 0.0
  %4480 = vmatpush2.msra.mxu0 0.0
  %4481 = vmatprep.subr.mxu0 0.0
  %4482 = vmatpush2.msra.mxu0 0.0
  %4483 = vmatprep.subr.mxu0 0.0
  %4484 = vmatpush2.msra.mxu0 0.0
  %4485 = vmatprep.subr.mxu0 0.0
  %4486 = vmatpush2.msra.mxu0 0.0
  %4487 = vmatprep.subr.mxu0 0.0
  %4488 = vmatpush2.msra.mxu0 0.0
  %4489 = vmatprep.subr.mxu0 0.0
  %4490 = vmatpush2.msra.mxu0 0.0
  %4491 = vmatprep.subr.mxu0 0.0
  %4492 = vmatpush2.msra.mxu0 0.0
  %4493 = vmatprep.subr.mxu0 0.0
  %4494 = vmatpush2.msra.mxu0 0.0
  %4495 = vmatprep.subr.mxu0 0.0
  %4496 = vmatpush2.msra.mxu0 0.0
  %4497 = vmatprep.subr.mxu0 0.0
  %4498 = vmatpush2.msra.mxu0 0.0
  %4499 = vmatprep.mubr.f32.mxu0 0.0
  %4500 = vmatmul.mubr.f32.gmra.mxu0 %v4270
  %v4501 = vpop.f32.mrf.mxu0
  %v4502 = vadd.f32 0.0, %v4501
  %v4503 = vpop.f32.mrf.mxu0
  %4504 = vdwg.mxu0
  %v4506 = vsel %vm111, %v4434, 0
  %4508 = vmatprep.subr.mxu0 0.0
  %4509 = vmatpush1.msra.mxu0 0.0
  %4510 = vmatprep.subr.mxu0 0.0
  %4511 = vmatpush1.msra.mxu0 0.0
  %4512 = vmatprep.subr.mxu0 0.0
  %4513 = vmatpush1.msra.mxu0 0.0
  %4514 = vmatprep.subr.mxu0 0.0
  %4515 = vmatpush1.msra.mxu0 0.0
  %4516 = vmatprep.subr.mxu0 0.0
  %4517 = vmatpush1.msra.mxu0 0.0
  %4518 = vmatprep.subr.mxu0 0.0
  %4519 = vmatpush1.msra.mxu0 0.0
  %4520 = vmatprep.subr.mxu0 0.0
  %4521 = vmatpush1.msra.mxu0 0.0
  %4522 = vmatprep.subr.mxu0 0.0
  %4523 = vmatpush1.msra.mxu0 0.0
  %4524 = vmatprep.subr.mxu0 0.0
  %4525 = vmatpush1.msra.mxu0 0.0
  %4526 = vmatprep.subr.mxu0 0.0
  %4527 = vmatpush1.msra.mxu0 0.0
  %4528 = vmatprep.subr.mxu0 0.0
  %4529 = vmatpush1.msra.mxu0 0.0
  %4530 = vmatprep.subr.mxu0 0.0
  %4531 = vmatpush1.msra.mxu0 0.0
  %4532 = vmatprep.subr.mxu0 0.0
  %4533 = vmatpush1.msra.mxu0 0.0
  %4534 = vmatprep.subr.mxu0 0.0
  %4535 = vmatpush1.msra.mxu0 0.0
  %4536 = vmatprep.subr.mxu0 0.0
  %4537 = vmatpush1.msra.mxu0 %v87
  %4538 = vmatprep.subr.mxu0 0.0
  %4539 = vmatpush1.msra.mxu0 %v86
  %4540 = vmatprep.subr.mxu0 0.0
  %4541 = vmatpush2.msra.mxu0 0.0
  %4542 = vmatprep.subr.mxu0 0.0
  %4543 = vmatpush2.msra.mxu0 0.0
  %4544 = vmatprep.subr.mxu0 0.0
  %4545 = vmatpush2.msra.mxu0 0.0
  %4546 = vmatprep.subr.mxu0 0.0
  %4547 = vmatpush2.msra.mxu0 0.0
  %4548 = vmatprep.subr.mxu0 0.0
  %4549 = vmatpush2.msra.mxu0 0.0
  %4550 = vmatprep.subr.mxu0 0.0
  %4551 = vmatpush2.msra.mxu0 0.0
  %4552 = vmatprep.subr.mxu0 0.0
  %4553 = vmatpush2.msra.mxu0 0.0
  %4554 = vmatprep.subr.mxu0 0.0
  %4555 = vmatpush2.msra.mxu0 0.0
  %4556 = vmatprep.subr.mxu0 0.0
  %4557 = vmatpush2.msra.mxu0 0.0
  %4558 = vmatprep.subr.mxu0 0.0
  %4559 = vmatpush2.msra.mxu0 0.0
  %4560 = vmatprep.subr.mxu0 0.0
  %4561 = vmatpush2.msra.mxu0 0.0
  %4562 = vmatprep.subr.mxu0 0.0
  %4563 = vmatpush2.msra.mxu0 0.0
  %4564 = vmatprep.subr.mxu0 0.0
  %4565 = vmatpush2.msra.mxu0 0.0
  %4566 = vmatprep.subr.mxu0 0.0
  %4567 = vmatpush2.msra.mxu0 0.0
  %4568 = vmatprep.subr.mxu0 0.0
  %4569 = vmatpush2.msra.mxu0 0.0
  %4570 = vmatprep.subr.mxu0 0.0
  %4571 = vmatpush2.msra.mxu0 0.0
  %4572 = vmatprep.mubr.f32.mxu0 0.0
  %4573 = vmatmul.mubr.f32.gmra.mxu0 %v4506
  %v4574 = vpop.f32.mrf.mxu0
  %v4575 = vadd.f32 %v4502, %v4574
  %v4576 = vpop.f32.mrf.mxu0
  %4577 = vdwg.mxu0
  %4578 = vmatprep.subr.mxu0 0.0
  %4579 = vmatpush1.msra.mxu0 0.0
  %4580 = vmatprep.subr.mxu0 0.0
  %4581 = vmatpush1.msra.mxu0 0.0
  %4582 = vmatprep.subr.mxu0 0.0
  %4583 = vmatpush1.msra.mxu0 0.0
  %4584 = vmatprep.subr.mxu0 0.0
  %4585 = vmatpush1.msra.mxu0 0.0
  %4586 = vmatprep.subr.mxu0 0.0
  %4587 = vmatpush1.msra.mxu0 0.0
  %4588 = vmatprep.subr.mxu0 0.0
  %4589 = vmatpush1.msra.mxu0 0.0
  %4590 = vmatprep.subr.mxu0 0.0
  %4591 = vmatpush1.msra.mxu0 0.0
  %4592 = vmatprep.subr.mxu0 0.0
  %4593 = vmatpush1.msra.mxu0 0.0
  %4594 = vmatprep.subr.mxu0 0.0
  %4595 = vmatpush1.msra.mxu0 0.0
  %4596 = vmatprep.subr.mxu0 0.0
  %4597 = vmatpush1.msra.mxu0 0.0
  %4598 = vmatprep.subr.mxu0 0.0
  %4599 = vmatpush1.msra.mxu0 0.0
  %4600 = vmatprep.subr.mxu0 0.0
  %4601 = vmatpush1.msra.mxu0 0.0
  %4602 = vmatprep.subr.mxu0 0.0
  %4603 = vmatpush1.msra.mxu0 %v93
  %4604 = vmatprep.subr.mxu0 0.0
  %4605 = vmatpush1.msra.mxu0 %v92
  %4606 = vmatprep.subr.mxu0 0.0
  %4607 = vmatpush1.msra.mxu0 %v91
  %4608 = vmatprep.subr.mxu0 0.0
  %4609 = vmatpush1.msra.mxu0 %v90
  %4610 = vmatprep.subr.mxu0 0.0
  %4611 = vmatpush2.msra.mxu0 0.0
  %4612 = vmatprep.subr.mxu0 0.0
  %4613 = vmatpush2.msra.mxu0 0.0
  %4614 = vmatprep.subr.mxu0 0.0
  %4615 = vmatpush2.msra.mxu0 0.0
  %4616 = vmatprep.subr.mxu0 0.0
  %4617 = vmatpush2.msra.mxu0 0.0
  %4618 = vmatprep.subr.mxu0 0.0
  %4619 = vmatpush2.msra.mxu0 0.0
  %4620 = vmatprep.subr.mxu0 0.0
  %4621 = vmatpush2.msra.mxu0 0.0
  %4622 = vmatprep.subr.mxu0 0.0
  %4623 = vmatpush2.msra.mxu0 0.0
  %4624 = vmatprep.subr.mxu0 0.0
  %4625 = vmatpush2.msra.mxu0 0.0
  %4626 = vmatprep.subr.mxu0 0.0
  %4627 = vmatpush2.msra.mxu0 0.0
  %4628 = vmatprep.subr.mxu0 0.0
  %4629 = vmatpush2.msra.mxu0 0.0
  %4630 = vmatprep.subr.mxu0 0.0
  %4631 = vmatpush2.msra.mxu0 0.0
  %4632 = vmatprep.subr.mxu0 0.0
  %4633 = vmatpush2.msra.mxu0 0.0
  %4634 = vmatprep.subr.mxu0 0.0
  %4635 = vmatpush2.msra.mxu0 0.0
  %4636 = vmatprep.subr.mxu0 0.0
  %4637 = vmatpush2.msra.mxu0 0.0
  %4638 = vmatprep.subr.mxu0 0.0
  %4639 = vmatpush2.msra.mxu0 0.0
  %4640 = vmatprep.subr.mxu0 0.0
  %4641 = vmatpush2.msra.mxu0 0.0
  %4642 = vmatprep.mubr.f32.mxu0 0.0
  %4643 = vmatmul.mubr.f32.gmra.mxu0 %v4121
  %v4644 = vpop.f32.mrf.mxu0
  %v4645 = vadd.f32 0.0, %v4644
  %v4646 = vpop.f32.mrf.mxu0
  %4647 = vdwg.mxu0
  %v4648 = vadd.f32 %v4575, %v4645
  %v4649 = vadd.f32 %v4648, %v99
  %v4650 = vtanh.pop %v4649
  %v4651 = vxor.u32 %v4649, 2147483648
  %v4652 = vmul.f32 %v4651, 1.442695
  %v4653 = vpow.pop %v4652
  %v4654 = vadd.f32 %v4653, 1.0
  %v4655 = vrcp.pop %v4654
  %v4656 = vmul.f32 1.0, %v4655
  %v4657 = vsel %vm105, %v4650, %v4656
  %v4658 = vmul.f32 %v4657, %v4014
  %4660 = vrot.lane.b32.xlu0 %v4657, 64
  %v4661 = vpop.permute.xlu0 %4660
  %v4663 = vmul.f32 %v4657, %v4661
  %4665 = vrot.lane.b32.xlu0 %v4663, 32
  %v4666 = vpop.permute.xlu0 %4665
  %v4668 = vadd.f32 %v4658, %v4666
  %v4669 = vtanh.pop %v4668
  %4671 = vrot.lane.b32.xlu0 %v4669, 64
  %v4672 = vpop.permute.xlu0 %4671
  %v4674 = vmul.f32 %v4657, %v4672
  %s4675 = scalar_lea.vmem %s13, 48
  %4676 = vst.msk [vmem:[%s4675] sm:$0xff] %vm111, %v4434
  %s4677 = scalar_lea.vmem %s0, 56
  %v4678 = vld [vmem:[%s4677] sm:$0xff]
  %s4679 = scalar_lea.vmem %s1, 56
  %v4680 = vld [vmem:[%s4679] sm:$0xff]
  %v4681 = vsub.f32 1.0, %v4680
  %v4682 = vmul.f32 %v4681, %v4029
  %v4683 = vadd.f32 %v4682, 1.0
  %v4685 = vsel %vm111, %v4683, 0
  %4687 = vmatprep.subr.mxu0 0.0
  %4688 = vmatpush1.msra.mxu0 0.0
  %4689 = vmatprep.subr.mxu0 0.0
  %4690 = vmatpush1.msra.mxu0 0.0
  %4691 = vmatprep.subr.mxu0 0.0
  %4692 = vmatpush1.msra.mxu0 0.0
  %4693 = vmatprep.subr.mxu0 0.0
  %4694 = vmatpush1.msra.mxu0 0.0
  %4695 = vmatprep.subr.mxu0 0.0
  %4696 = vmatpush1.msra.mxu0 0.0
  %4697 = vmatprep.subr.mxu0 0.0
  %4698 = vmatpush1.msra.mxu0 0.0
  %4699 = vmatprep.subr.mxu0 0.0
  %4700 = vmatpush1.msra.mxu0 0.0
  %4701 = vmatprep.subr.mxu0 0.0
  %4702 = vmatpush1.msra.mxu0 0.0
  %4703 = vmatprep.subr.mxu0 0.0
  %4704 = vmatpush1.msra.mxu0 0.0
  %4705 = vmatprep.subr.mxu0 0.0
  %4706 = vmatpush1.msra.mxu0 0.0
  %4707 = vmatprep.subr.mxu0 0.0
  %4708 = vmatpush1.msra.mxu0 0.0
  %4709 = vmatprep.subr.mxu0 0.0
  %4710 = vmatpush1.msra.mxu0 0.0
  %4711 = vmatprep.subr.mxu0 0.0
  %4712 = vmatpush1.msra.mxu0 0.0
  %4713 = vmatprep.subr.mxu0 0.0
  %4714 = vmatpush1.msra.mxu0 0.0
  %4715 = vmatprep.subr.mxu0 0.0
  %4716 = vmatpush1.msra.mxu0 %v68
  %4717 = vmatprep.subr.mxu0 0.0
  %4718 = vmatpush1.msra.mxu0 %v67
  %4719 = vmatprep.subr.mxu0 0.0
  %4720 = vmatpush2.msra.mxu0 0.0
  %4721 = vmatprep.subr.mxu0 0.0
  %4722 = vmatpush2.msra.mxu0 0.0
  %4723 = vmatprep.subr.mxu0 0.0
  %4724 = vmatpush2.msra.mxu0 0.0
  %4725 = vmatprep.subr.mxu0 0.0
  %4726 = vmatpush2.msra.mxu0 0.0
  %4727 = vmatprep.subr.mxu0 0.0
  %4728 = vmatpush2.msra.mxu0 0.0
  %4729 = vmatprep.subr.mxu0 0.0
  %4730 = vmatpush2.msra.mxu0 0.0
  %4731 = vmatprep.subr.mxu0 0.0
  %4732 = vmatpush2.msra.mxu0 0.0
  %4733 = vmatprep.subr.mxu0 0.0
  %4734 = vmatpush2.msra.mxu0 0.0
  %4735 = vmatprep.subr.mxu0 0.0
  %4736 = vmatpush2.msra.mxu0 0.0
  %4737 = vmatprep.subr.mxu0 0.0
  %4738 = vmatpush2.msra.mxu0 0.0
  %4739 = vmatprep.subr.mxu0 0.0
  %4740 = vmatpush2.msra.mxu0 0.0
  %4741 = vmatprep.subr.mxu0 0.0
  %4742 = vmatpush2.msra.mxu0 0.0
  %4743 = vmatprep.subr.mxu0 0.0
  %4744 = vmatpush2.msra.mxu0 0.0
  %4745 = vmatprep.subr.mxu0 0.0
  %4746 = vmatpush2.msra.mxu0 0.0
  %4747 = vmatprep.subr.mxu0 0.0
  %4748 = vmatpush2.msra.mxu0 0.0
  %4749 = vmatprep.subr.mxu0 0.0
  %4750 = vmatpush2.msra.mxu0 0.0
  %4751 = vmatprep.mubr.f32.mxu0 0.0
  %4752 = vmatmul.mubr.f32.gmra.mxu0 %v4685
  %v4753 = vpop.f32.mrf.mxu0
  %v4754 = vadd.f32 %v74, %v4753
  %v4755 = vpop.f32.mrf.mxu0
  %4756 = vdwg.mxu0
  %v4757 = vmax.f32 %v4754, 0.0
  %v4758 = vsub.f32 0.0, %v4757
  %v4759 = vmul.f32 %v4758, 1.442695
  %v4760 = vpow.pop %v4759
  %v4761 = vmul.f32 %v4683, %v50
  %v4762 = vadd.f32 %v4761, %v54
  %v4763 = vmax.f32 %v4762, 0.0
  %v4764 = vsub.f32 0.0, %v4763
  %v4765 = vmul.f32 %v4764, 1.442695
  %v4766 = vpow.pop %v4765
  %4768 = vrot.lane.b32.xlu0 %v4760, 96
  %v4769 = vpop.permute.xlu0 %4768
  %v4771 = vmul.f32 %v4674, %v4769
  %4773 = vrot.lane.b32.xlu0 %v4771, 32
  %v4774 = vpop.permute.xlu0 %4773
  %v4775 = vsel %vm196, %v4774, 0
  %4777 = vmatprep.subr.mxu0 0.0
  %4778 = vmatpush1.msra.mxu0 0.0
  %4779 = vmatprep.subr.mxu0 0.0
  %4780 = vmatpush1.msra.mxu0 0.0
  %4781 = vmatprep.subr.mxu0 0.0
  %4782 = vmatpush1.msra.mxu0 0.0
  %4783 = vmatprep.subr.mxu0 0.0
  %4784 = vmatpush1.msra.mxu0 0.0
  %4785 = vmatprep.subr.mxu0 0.0
  %4786 = vmatpush1.msra.mxu0 0.0
  %4787 = vmatprep.subr.mxu0 0.0
  %4788 = vmatpush1.msra.mxu0 0.0
  %4789 = vmatprep.subr.mxu0 0.0
  %4790 = vmatpush1.msra.mxu0 0.0
  %4791 = vmatprep.subr.mxu0 0.0
  %4792 = vmatpush1.msra.mxu0 0.0
  %4793 = vmatprep.subr.mxu0 0.0
  %4794 = vmatpush1.msra.mxu0 0.0
  %4795 = vmatprep.subr.mxu0 0.0
  %4796 = vmatpush1.msra.mxu0 0.0
  %4797 = vmatprep.subr.mxu0 0.0
  %4798 = vmatpush1.msra.mxu0 0.0
  %4799 = vmatprep.subr.mxu0 0.0
  %4800 = vmatpush1.msra.mxu0 0.0
  %4801 = vmatprep.subr.mxu0 0.0
  %4802 = vmatpush1.msra.mxu0 %v79
  %4803 = vmatprep.subr.mxu0 0.0
  %4804 = vmatpush1.msra.mxu0 %v78
  %4805 = vmatprep.subr.mxu0 0.0
  %4806 = vmatpush1.msra.mxu0 %v77
  %4807 = vmatprep.subr.mxu0 0.0
  %4808 = vmatpush1.msra.mxu0 %v76
  %4809 = vmatprep.subr.mxu0 0.0
  %4810 = vmatpush2.msra.mxu0 0.0
  %4811 = vmatprep.subr.mxu0 0.0
  %4812 = vmatpush2.msra.mxu0 0.0
  %4813 = vmatprep.subr.mxu0 0.0
  %4814 = vmatpush2.msra.mxu0 0.0
  %4815 = vmatprep.subr.mxu0 0.0
  %4816 = vmatpush2.msra.mxu0 0.0
  %4817 = vmatprep.subr.mxu0 0.0
  %4818 = vmatpush2.msra.mxu0 0.0
  %4819 = vmatprep.subr.mxu0 0.0
  %4820 = vmatpush2.msra.mxu0 0.0
  %4821 = vmatprep.subr.mxu0 0.0
  %4822 = vmatpush2.msra.mxu0 0.0
  %4823 = vmatprep.subr.mxu0 0.0
  %4824 = vmatpush2.msra.mxu0 0.0
  %4825 = vmatprep.subr.mxu0 0.0
  %4826 = vmatpush2.msra.mxu0 0.0
  %4827 = vmatprep.subr.mxu0 0.0
  %4828 = vmatpush2.msra.mxu0 0.0
  %4829 = vmatprep.subr.mxu0 0.0
  %4830 = vmatpush2.msra.mxu0 0.0
  %4831 = vmatprep.subr.mxu0 0.0
  %4832 = vmatpush2.msra.mxu0 0.0
  %4833 = vmatprep.subr.mxu0 0.0
  %4834 = vmatpush2.msra.mxu0 0.0
  %4835 = vmatprep.subr.mxu0 0.0
  %4836 = vmatpush2.msra.mxu0 0.0
  %4837 = vmatprep.subr.mxu0 0.0
  %4838 = vmatpush2.msra.mxu0 0.0
  %4839 = vmatprep.subr.mxu0 0.0
  %4840 = vmatpush2.msra.mxu0 0.0
  %4841 = vmatprep.mubr.f32.mxu0 0.0
  %4842 = vmatmul.mubr.f32.gmra.mxu0 %v4775
  %v4843 = vpop.f32.mrf.mxu0
  %v4844 = vadd.f32 %v58, %v4843
  %v4845 = vpop.f32.mrf.mxu0
  %4846 = vdwg.mxu0
  %v4847 = vmul.f32 %v4680, %v4678
  %v4848 = vmul.f32 %v4681, %v4844
  %v4849 = vadd.f32 %v4847, %v4848
  %v4851 = vsel %vm111, %v4849, 0
  %4853 = vmatprep.subr.mxu0 0.0
  %4854 = vmatpush1.msra.mxu0 0.0
  %4855 = vmatprep.subr.mxu0 0.0
  %4856 = vmatpush1.msra.mxu0 0.0
  %4857 = vmatprep.subr.mxu0 0.0
  %4858 = vmatpush1.msra.mxu0 0.0
  %4859 = vmatprep.subr.mxu0 0.0
  %4860 = vmatpush1.msra.mxu0 0.0
  %4861 = vmatprep.subr.mxu0 0.0
  %4862 = vmatpush1.msra.mxu0 0.0
  %4863 = vmatprep.subr.mxu0 0.0
  %4864 = vmatpush1.msra.mxu0 0.0
  %4865 = vmatprep.subr.mxu0 0.0
  %4866 = vmatpush1.msra.mxu0 0.0
  %4867 = vmatprep.subr.mxu0 0.0
  %4868 = vmatpush1.msra.mxu0 0.0
  %4869 = vmatprep.subr.mxu0 0.0
  %4870 = vmatpush1.msra.mxu0 0.0
  %4871 = vmatprep.subr.mxu0 0.0
  %4872 = vmatpush1.msra.mxu0 0.0
  %4873 = vmatprep.subr.mxu0 0.0
  %4874 = vmatpush1.msra.mxu0 0.0
  %4875 = vmatprep.subr.mxu0 0.0
  %4876 = vmatpush1.msra.mxu0 0.0
  %4877 = vmatprep.subr.mxu0 0.0
  %4878 = vmatpush1.msra.mxu0 0.0
  %4879 = vmatprep.subr.mxu0 0.0
  %4880 = vmatpush1.msra.mxu0 0.0
  %4881 = vmatprep.subr.mxu0 0.0
  %4882 = vmatpush1.msra.mxu0 %v81
  %4883 = vmatprep.subr.mxu0 0.0
  %4884 = vmatpush1.msra.mxu0 %v80
  %4885 = vmatprep.subr.mxu0 0.0
  %4886 = vmatpush2.msra.mxu0 0.0
  %4887 = vmatprep.subr.mxu0 0.0
  %4888 = vmatpush2.msra.mxu0 0.0
  %4889 = vmatprep.subr.mxu0 0.0
  %4890 = vmatpush2.msra.mxu0 0.0
  %4891 = vmatprep.subr.mxu0 0.0
  %4892 = vmatpush2.msra.mxu0 0.0
  %4893 = vmatprep.subr.mxu0 0.0
  %4894 = vmatpush2.msra.mxu0 0.0
  %4895 = vmatprep.subr.mxu0 0.0
  %4896 = vmatpush2.msra.mxu0 0.0
  %4897 = vmatprep.subr.mxu0 0.0
  %4898 = vmatpush2.msra.mxu0 0.0
  %4899 = vmatprep.subr.mxu0 0.0
  %4900 = vmatpush2.msra.mxu0 0.0
  %4901 = vmatprep.subr.mxu0 0.0
  %4902 = vmatpush2.msra.mxu0 0.0
  %4903 = vmatprep.subr.mxu0 0.0
  %4904 = vmatpush2.msra.mxu0 0.0
  %4905 = vmatprep.subr.mxu0 0.0
  %4906 = vmatpush2.msra.mxu0 0.0
  %4907 = vmatprep.subr.mxu0 0.0
  %4908 = vmatpush2.msra.mxu0 0.0
  %4909 = vmatprep.subr.mxu0 0.0
  %4910 = vmatpush2.msra.mxu0 0.0
  %4911 = vmatprep.subr.mxu0 0.0
  %4912 = vmatpush2.msra.mxu0 0.0
  %4913 = vmatprep.subr.mxu0 0.0
  %4914 = vmatpush2.msra.mxu0 0.0
  %4915 = vmatprep.subr.mxu0 0.0
  %4916 = vmatpush2.msra.mxu0 0.0
  %4917 = vmatprep.mubr.f32.mxu0 0.0
  %4918 = vmatmul.mubr.f32.gmra.mxu0 %v4851
  %v4919 = vpop.f32.mrf.mxu0
  %v4920 = vadd.f32 %v62, %v4919
  %v4921 = vpop.f32.mrf.mxu0
  %4922 = vdwg.mxu0
  %v4924 = vsel %vm111, %v4680, 0
  %4926 = vmatprep.subr.mxu0 0.0
  %4927 = vmatpush1.msra.mxu0 0.0
  %4928 = vmatprep.subr.mxu0 0.0
  %4929 = vmatpush1.msra.mxu0 0.0
  %4930 = vmatprep.subr.mxu0 0.0
  %4931 = vmatpush1.msra.mxu0 0.0
  %4932 = vmatprep.subr.mxu0 0.0
  %4933 = vmatpush1.msra.mxu0 0.0
  %4934 = vmatprep.subr.mxu0 0.0
  %4935 = vmatpush1.msra.mxu0 0.0
  %4936 = vmatprep.subr.mxu0 0.0
  %4937 = vmatpush1.msra.mxu0 0.0
  %4938 = vmatprep.subr.mxu0 0.0
  %4939 = vmatpush1.msra.mxu0 0.0
  %4940 = vmatprep.subr.mxu0 0.0
  %4941 = vmatpush1.msra.mxu0 0.0
  %4942 = vmatprep.subr.mxu0 0.0
  %4943 = vmatpush1.msra.mxu0 0.0
  %4944 = vmatprep.subr.mxu0 0.0
  %4945 = vmatpush1.msra.mxu0 0.0
  %4946 = vmatprep.subr.mxu0 0.0
  %4947 = vmatpush1.msra.mxu0 0.0
  %4948 = vmatprep.subr.mxu0 0.0
  %4949 = vmatpush1.msra.mxu0 0.0
  %4950 = vmatprep.subr.mxu0 0.0
  %4951 = vmatpush1.msra.mxu0 0.0
  %4952 = vmatprep.subr.mxu0 0.0
  %4953 = vmatpush1.msra.mxu0 0.0
  %4954 = vmatprep.subr.mxu0 0.0
  %4955 = vmatpush1.msra.mxu0 %v85
  %4956 = vmatprep.subr.mxu0 0.0
  %4957 = vmatpush1.msra.mxu0 %v84
  %4958 = vmatprep.subr.mxu0 0.0
  %4959 = vmatpush2.msra.mxu0 0.0
  %4960 = vmatprep.subr.mxu0 0.0
  %4961 = vmatpush2.msra.mxu0 0.0
  %4962 = vmatprep.subr.mxu0 0.0
  %4963 = vmatpush2.msra.mxu0 0.0
  %4964 = vmatprep.subr.mxu0 0.0
  %4965 = vmatpush2.msra.mxu0 0.0
  %4966 = vmatprep.subr.mxu0 0.0
  %4967 = vmatpush2.msra.mxu0 0.0
  %4968 = vmatprep.subr.mxu0 0.0
  %4969 = vmatpush2.msra.mxu0 0.0
  %4970 = vmatprep.subr.mxu0 0.0
  %4971 = vmatpush2.msra.mxu0 0.0
  %4972 = vmatprep.subr.mxu0 0.0
  %4973 = vmatpush2.msra.mxu0 0.0
  %4974 = vmatprep.subr.mxu0 0.0
  %4975 = vmatpush2.msra.mxu0 0.0
  %4976 = vmatprep.subr.mxu0 0.0
  %4977 = vmatpush2.msra.mxu0 0.0
  %4978 = vmatprep.subr.mxu0 0.0
  %4979 = vmatpush2.msra.mxu0 0.0
  %4980 = vmatprep.subr.mxu0 0.0
  %4981 = vmatpush2.msra.mxu0 0.0
  %4982 = vmatprep.subr.mxu0 0.0
  %4983 = vmatpush2.msra.mxu0 0.0
  %4984 = vmatprep.subr.mxu0 0.0
  %4985 = vmatpush2.msra.mxu0 0.0
  %4986 = vmatprep.subr.mxu0 0.0
  %4987 = vmatpush2.msra.mxu0 0.0
  %4988 = vmatprep.subr.mxu0 0.0
  %4989 = vmatpush2.msra.mxu0 0.0
  %4990 = vmatprep.mubr.f32.mxu0 0.0
  %4991 = vmatmul.mubr.f32.gmra.mxu0 %v4924
  %v4992 = vpop.f32.mrf.mxu0
  %v4993 = vadd.f32 0.0, %v4992
  %v4994 = vpop.f32.mrf.mxu0
  %4995 = vdwg.mxu0
  %v4997 = vsel %vm111, %v4766, 0
  %4999 = vmatprep.subr.mxu0 0.0
  %5000 = vmatpush1.msra.mxu0 0.0
  %5001 = vmatprep.subr.mxu0 0.0
  %5002 = vmatpush1.msra.mxu0 0.0
  %5003 = vmatprep.subr.mxu0 0.0
  %5004 = vmatpush1.msra.mxu0 0.0
  %5005 = vmatprep.subr.mxu0 0.0
  %5006 = vmatpush1.msra.mxu0 0.0
  %5007 = vmatprep.subr.mxu0 0.0
  %5008 = vmatpush1.msra.mxu0 0.0
  %5009 = vmatprep.subr.mxu0 0.0
  %5010 = vmatpush1.msra.mxu0 0.0
  %5011 = vmatprep.subr.mxu0 0.0
  %5012 = vmatpush1.msra.mxu0 0.0
  %5013 = vmatprep.subr.mxu0 0.0
  %5014 = vmatpush1.msra.mxu0 0.0
  %5015 = vmatprep.subr.mxu0 0.0
  %5016 = vmatpush1.msra.mxu0 0.0
  %5017 = vmatprep.subr.mxu0 0.0
  %5018 = vmatpush1.msra.mxu0 0.0
  %5019 = vmatprep.subr.mxu0 0.0
  %5020 = vmatpush1.msra.mxu0 0.0
  %5021 = vmatprep.subr.mxu0 0.0
  %5022 = vmatpush1.msra.mxu0 0.0
  %5023 = vmatprep.subr.mxu0 0.0
  %5024 = vmatpush1.msra.mxu0 0.0
  %5025 = vmatprep.subr.mxu0 0.0
  %5026 = vmatpush1.msra.mxu0 0.0
  %5027 = vmatprep.subr.mxu0 0.0
  %5028 = vmatpush1.msra.mxu0 %v83
  %5029 = vmatprep.subr.mxu0 0.0
  %5030 = vmatpush1.msra.mxu0 %v82
  %5031 = vmatprep.subr.mxu0 0.0
  %5032 = vmatpush2.msra.mxu0 0.0
  %5033 = vmatprep.subr.mxu0 0.0
  %5034 = vmatpush2.msra.mxu0 0.0
  %5035 = vmatprep.subr.mxu0 0.0
  %5036 = vmatpush2.msra.mxu0 0.0
  %5037 = vmatprep.subr.mxu0 0.0
  %5038 = vmatpush2.msra.mxu0 0.0
  %5039 = vmatprep.subr.mxu0 0.0
  %5040 = vmatpush2.msra.mxu0 0.0
  %5041 = vmatprep.subr.mxu0 0.0
  %5042 = vmatpush2.msra.mxu0 0.0
  %5043 = vmatprep.subr.mxu0 0.0
  %5044 = vmatpush2.msra.mxu0 0.0
  %5045 = vmatprep.subr.mxu0 0.0
  %5046 = vmatpush2.msra.mxu0 0.0
  %5047 = vmatprep.subr.mxu0 0.0
  %5048 = vmatpush2.msra.mxu0 0.0
  %5049 = vmatprep.subr.mxu0 0.0
  %5050 = vmatpush2.msra.mxu0 0.0
  %5051 = vmatprep.subr.mxu0 0.0
  %5052 = vmatpush2.msra.mxu0 0.0
  %5053 = vmatprep.subr.mxu0 0.0
  %5054 = vmatpush2.msra.mxu0 0.0
  %5055 = vmatprep.subr.mxu0 0.0
  %5056 = vmatpush2.msra.mxu0 0.0
  %5057 = vmatprep.subr.mxu0 0.0
  %5058 = vmatpush2.msra.mxu0 0.0
  %5059 = vmatprep.subr.mxu0 0.0
  %5060 = vmatpush2.msra.mxu0 0.0
  %5061 = vmatprep.subr.mxu0 0.0
  %5062 = vmatpush2.msra.mxu0 0.0
  %5063 = vmatprep.mubr.f32.mxu0 0.0
  %5064 = vmatmul.mubr.f32.gmra.mxu0 %v4997
  %v5065 = vpop.f32.mrf.mxu0
  %v5066 = vadd.f32 %v4993, %v5065
  %v5067 = vpop.f32.mrf.mxu0
  %5068 = vdwg.mxu0
  %v5069 = vadd.f32 %v5066, %v66
  %v5070 = vmul.f32 %v5069, %v4920
  %v5071 = vsub.f32 1.0, %v5069
  %v5072 = vmul.f32 %v5071, %v4844
  %v5073 = vadd.f32 %v5070, %v5072
  %v5074 = vsub.f32 %v4678, %v4844
  %v5075 = vand.u32 2147483647, %v5074
  %v5076 = vsub.f32 %v4678, %v4920
  %v5077 = vand.u32 2147483647, %v5076
  %v5078 = vadd.f32 %v5075, %v5077
  %v5079 = vsub.f32 %v4678, %v5073
  %v5080 = vand.u32 2147483647, %v5079
  %v5081 = vadd.f32 %v5078, %v5080
  %v5082 = vmul.f32 %v5081, %v4680
  %v5083 = vsel %vm111, %v5082, 0.0
  %5084 = vadd.xlane.f32.xlu0 %v5083
  %v5085 = vpop.xlane.xlu0 %5084
  %v5086 = vadd.f32 %v4432, %v5085
  %v5087 = vmul.f32 %v4681, %v5073
  %v5088 = vadd.f32 %v4847, %v5087
  %s5089 = scalar_lea.vmem %s13, 56
  %5090 = vst.msk [vmem:[%s5089] sm:$0xff] %vm111, %v5088
  %vm5091 = vcmask 7168
  %5092 = vst.msk [vmem:[%s14] sm:$0xff] %vm5091, %v5086
  // Predicated region
  $region54: #{rits_forward.1} parent=0 // pred_check
    _
  $region55: #{rits_forward.1} parent=0 // pred_check_branch
    %5094 = sbr.rel (0) target = $region57
  $region56: #{rits_forward.1} parent=0 // pred_region
    _
  $region57: #{rits_forward.1} parent=0 // pred_fallthru
    _
  // Predicated region
  $region58: #{rits_forward.1} parent=0 // pred_check
    _
  $region59: #{rits_forward.1} parent=0 // pred_check_branch
    %5096 = sbr.rel (0) target = $region61
  $region60: #{rits_forward.1} parent=0 // pred_region
    _
  $region61: #{rits_forward.1} parent=0 // pred_fallthru
    _
  // Predicated region
  $region62: #{rits_forward.1} parent=0 // pred_check
    _
  $region63: #{rits_forward.1} parent=0 // pred_check_branch
    %5098 = sbr.rel (0) target = $region65
  $region64: #{rits_forward.1} parent=0 // pred_region
    _
  $region65: #{rits_forward.1} parent=0 // pred_fallthru
    _
  // Predicated region
  $region66: #{rits_forward.1} parent=0 // pred_check
    _
  $region67: #{rits_forward.1} parent=0 // pred_check_branch
    %5100 = sbr.rel (0) target = $region69
  $region68: #{rits_forward.1} parent=0 // pred_region
    _
  $region69: #{rits_forward.1} parent=0 // pred_fallthru
    _

</llo_original>
